<compile_context>
chip_gen: v7x
topology: tpu7x:2x2x1
jax: 0.10.0
libtpu: 0.0.40
codegen_flags: <defaults>
</compile_context>

<pallas_src>
import jax
import jax.numpy as jnp
from jax.experimental import pallas as pl
from jax.experimental.pallas import tpu as pltpu

# ---- Module hyper-parameters (match MLPDecoder; W=128 fills the lane dim) ----
D = 8             # number of hidden layers
W = 128           # hidden width (module default 256; 128 keeps the test small)
INPUT_CH = 3
OUTPUT_CH = 3
SKIPS = (4,)      # after relu of layer i in SKIPS, h = concat([input, h], -1)
OUT_RESCALE = 1.0
# act_fn = None (identity), init_zero_output = False (init-time only)


def _in_dims():
    # pts_linears[0]: Linear(input_ch, W)
    # pts_linears[j] (j>=1): Linear(W + input_ch, W) if (j-1) in skips else Linear(W, W)
    dims = [INPUT_CH]
    for j in range(1, D):
        dims.append(W + INPUT_CH if (j - 1) in SKIPS else W)
    return dims


def mlp_decoder_kernel(x_ref, *refs):
    """refs = (w0,b0, w1,b1, ..., w_skip_x,w_skip_h,b_skip, ..., w_out,b_out, out_ref)."""
    out_ref = refs[-1]
    params = refs[:-1]
    idx = 0

    def nxt():
        nonlocal idx
        r = params[idx]
        idx += 1
        return r

    x = x_ref[...]                                  # (tile_n, INPUT_CH) f32

    def x_proj(w):                                  # x @ w with K=INPUT_CH on the VPU
        acc = x[:, 0:1] * w[0:1, :]
        for c in range(1, INPUT_CH):
            acc = acc + x[:, c:c + 1] * w[c:c + 1, :]
        return acc                                  # (tile_n, W) f32

    # Layer 0: Linear(input_ch, W) -- K=3, keep it off the MXU.
    w0 = nxt()[...]                                 # (INPUT_CH, W) f32
    b0 = nxt()[...]                                 # (1, W)        f32
    h = jnp.maximum(x_proj(w0) + b0, 0.0)

    for i in range(1, D):
        if (i - 1) in SKIPS:
            # Previous iteration's torch.cat([input, h], -1) folded into a
            # split matmul: concat([x, h]) @ w == x @ w[:ic] + h @ w[ic:].
            wx = nxt()[...]                         # (INPUT_CH, W) f32  (VPU part)
            wh = nxt()[...]                         # (W, W)        f32  (MXU part)
            b = nxt()[...]                          # (1, W)        f32
            h = (jnp.dot(h, wh, preferred_element_type=jnp.float32)
                 + x_proj(wx) + b)
        else:
            w = nxt()[...]                          # (W, W) f32
            b = nxt()[...]                          # (1, W) f32
            h = jnp.dot(h, w, preferred_element_type=jnp.float32) + b
        h = jnp.maximum(h, 0.0)                     # F.relu

    w_out = nxt()[...]                              # (W, OUTPUT_CH) f32
    b_out = nxt()[...]                              # (1, OUTPUT_CH) f32
    out = jnp.dot(h, w_out, preferred_element_type=jnp.float32) + b_out
    out = out * OUT_RESCALE                         # act_fn is None -> identity
    out_ref[...] = out.astype(out_ref.dtype)


def mlp_decoder(x, weights, biases, w_out, b_out, *, tile_n=512):
    """weights[i]: (in_i, W); biases[i]: (W,); w_out: (W, OUTPUT_CH); b_out: (OUTPUT_CH,)."""
    N, in_ch = x.shape
    assert in_ch == INPUT_CH
    assert N % tile_n == 0, "pad N to a multiple of tile_n"

    def vmem_spec():
        # Whole array resident in VMEM for the kernel's lifetime:
        # single instance, no per-grid-step double buffering.
        return pl.BlockSpec(memory_space=pltpu.MemorySpace.VMEM)

    args = []
    in_specs = [pl.BlockSpec((tile_n, INPUT_CH), lambda i: (i, 0))]

    for i in range(D):
        w = weights[i].astype(jnp.float32)
        b = biases[i].reshape(1, -1).astype(jnp.float32)
        if i >= 1 and (i - 1) in SKIPS:
            # Pre-split the skip weight at trace time -> no unaligned slice in-kernel.
            args += [w[:INPUT_CH, :], w[INPUT_CH:, :], b]
            in_specs += [vmem_spec(), vmem_spec(), vmem_spec()]
        else:
            args += [w, b]
            in_specs += [vmem_spec(), vmem_spec()]

    args += [w_out.astype(jnp.float32),
             b_out.reshape(1, -1).astype(jnp.float32)]
    in_specs += [vmem_spec(), vmem_spec()]

    in_dims = _in_dims()
    flops = 2 * N * (sum(d * W for d in in_dims) + W * OUTPUT_CH)
    bytes_accessed = (x.size * x.dtype.itemsize
                      + N * OUTPUT_CH * x.dtype.itemsize
                      + sum(int(a.size) * a.dtype.itemsize for a in args))

    return pl.pallas_call(
        mlp_decoder_kernel,
        out_shape=jax.ShapeDtypeStruct((N, OUTPUT_CH), x.dtype),
        grid_spec=pltpu.PrefetchScalarGridSpec(
            num_scalar_prefetch=0,
            grid=(N // tile_n,),
            in_specs=in_specs,
            out_specs=pl.BlockSpec((tile_n, OUTPUT_CH), lambda i: (i, 0)),
        ),
        compiler_params=pltpu.CompilerParams(
            dimension_semantics=("parallel",),
            vmem_limit_bytes=32 * 1024 * 1024,
        ),
        cost_estimate=pl.CostEstimate(
            flops=int(flops), transcendentals=0,
            bytes_accessed=int(bytes_accessed)),
    )(x, *args)


def ref_forward(x, weights, biases, w_out, b_out):
    """Full-precision f32 JAX reference mirroring the PyTorch forward exactly."""
    hp = jax.lax.Precision.HIGHEST
    inp = x
    h = inp
    for i in range(D):
        h = jnp.maximum(
            jnp.dot(h, weights[i], precision=hp,
                    preferred_element_type=jnp.float32) + biases[i], 0.0)
        if i in SKIPS:
            h = jnp.concatenate([inp, h], axis=-1)
    out = jnp.dot(h, w_out, precision=hp,
                  preferred_element_type=jnp.float32) + b_out
    return out * OUT_RESCALE


if __name__ == "__main__":
    key = jax.random.PRNGKey(0)

    # Deterministic synthetic parameters (shapes follow MLPDecoder.__init__),
    # He-style scaling so activations stay O(1) through the relu chain.
    in_dims = _in_dims()
    weights, biases = [], []
    for d_in in in_dims:
        key, kw, kb = jax.random.split(key, 3)
        weights.append(jax.random.normal(kw, (d_in, W), jnp.float32)
                       * (2.0 / d_in) ** 0.5)
        biases.append(jax.random.normal(kb, (W,), jnp.float32) * 0.01)
    key, kw, kb = jax.random.split(key, 3)
    w_out = jax.random.normal(kw, (W, OUTPUT_CH), jnp.float32) * (1.0 / W) ** 0.5
    b_out = jax.random.normal(kb, (OUTPUT_CH,), jnp.float32) * 0.01

    key, kx = jax.random.split(key)
    N = 2048                      # 4 grid steps at tile_n=512 (feeds both v7x TCs)
    x = jax.random.normal(kx, (N, INPUT_CH), jnp.float32)

    out = jax.block_until_ready(
        mlp_decoder(x, weights, biases, w_out, b_out, tile_n=512))
    assert out.shape == (N, OUTPUT_CH)

    ref = ref_forward(x, weights, biases, w_out, b_out)
    err = float(jnp.max(jnp.abs(out - ref)))
    assert jnp.allclose(out, ref, atol=5e-2, rtol=5e-2), \
        f"reference mismatch: max abs err {err}"

    print("KERNEL_OK")
</pallas_src>

<mosaic_0001>
module attributes {stable_mosaic.version = 11 : i64} {
  func.func @mlp_decoder_kernel(%arg0: i32, %arg1: memref<512x3xf32, #tpu.memory_space<vmem>>, %arg2: memref<3x128xf32, #tpu.memory_space<vmem>>, %arg3: memref<1x128xf32, #tpu.memory_space<vmem>>, %arg4: memref<128x128xf32, #tpu.memory_space<vmem>>, %arg5: memref<1x128xf32, #tpu.memory_space<vmem>>, %arg6: memref<128x128xf32, #tpu.memory_space<vmem>>, %arg7: memref<1x128xf32, #tpu.memory_space<vmem>>, %arg8: memref<128x128xf32, #tpu.memory_space<vmem>>, %arg9: memref<1x128xf32, #tpu.memory_space<vmem>>, %arg10: memref<128x128xf32, #tpu.memory_space<vmem>>, %arg11: memref<1x128xf32, #tpu.memory_space<vmem>>, %arg12: memref<3x128xf32, #tpu.memory_space<vmem>>, %arg13: memref<128x128xf32, #tpu.memory_space<vmem>>, %arg14: memref<1x128xf32, #tpu.memory_space<vmem>>, %arg15: memref<128x128xf32, #tpu.memory_space<vmem>>, %arg16: memref<1x128xf32, #tpu.memory_space<vmem>>, %arg17: memref<128x128xf32, #tpu.memory_space<vmem>>, %arg18: memref<1x128xf32, #tpu.memory_space<vmem>>, %arg19: memref<128x3xf32, #tpu.memory_space<vmem>>, %arg20: memref<1x3xf32, #tpu.memory_space<vmem>>, %arg21: memref<512x3xf32, #tpu.memory_space<vmem>>) attributes {dimension_semantics = [#tpu.dimension_semantics<parallel>], iteration_bounds = array<i64: 4>, scalar_prefetch = 0 : i64, scratch_operands = 0 : i64, tpu.core_type = #tpu.core_type<tc>, window_params = [{transform_indices = @transform_0, window_bounds = array<i64: 512, 3>}, {pipeline_mode = #tpu.pipeline_mode<synchronous>, transform_indices = @transform_1, window_bounds = array<i64: 3, 128>}, {pipeline_mode = #tpu.pipeline_mode<synchronous>, transform_indices = @transform_2, window_bounds = array<i64: 1, 128>}, {pipeline_mode = #tpu.pipeline_mode<synchronous>, transform_indices = @transform_3, window_bounds = array<i64: 128, 128>}, {pipeline_mode = #tpu.pipeline_mode<synchronous>, transform_indices = @transform_4, window_bounds = array<i64: 1, 128>}, {pipeline_mode = #tpu.pipeline_mode<synchronous>, transform_indices = @transform_5, window_bounds = array<i64: 128, 128>}, {pipeline_mode = #tpu.pipeline_mode<synchronous>, transform_indices = @transform_6, window_bounds = array<i64: 1, 128>}, {pipeline_mode = #tpu.pipeline_mode<synchronous>, transform_indices = @transform_7, window_bounds = array<i64: 128, 128>}, {pipeline_mode = #tpu.pipeline_mode<synchronous>, transform_indices = @transform_8, window_bounds = array<i64: 1, 128>}, {pipeline_mode = #tpu.pipeline_mode<synchronous>, transform_indices = @transform_9, window_bounds = array<i64: 128, 128>}, {pipeline_mode = #tpu.pipeline_mode<synchronous>, transform_indices = @transform_10, window_bounds = array<i64: 1, 128>}, {pipeline_mode = #tpu.pipeline_mode<synchronous>, transform_indices = @transform_11, window_bounds = array<i64: 3, 128>}, {pipeline_mode = #tpu.pipeline_mode<synchronous>, transform_indices = @transform_12, window_bounds = array<i64: 128, 128>}, {pipeline_mode = #tpu.pipeline_mode<synchronous>, transform_indices = @transform_13, window_bounds = array<i64: 1, 128>}, {pipeline_mode = #tpu.pipeline_mode<synchronous>, transform_indices = @transform_14, window_bounds = array<i64: 128, 128>}, {pipeline_mode = #tpu.pipeline_mode<synchronous>, transform_indices = @transform_15, window_bounds = array<i64: 1, 128>}, {pipeline_mode = #tpu.pipeline_mode<synchronous>, transform_indices = @transform_16, window_bounds = array<i64: 128, 128>}, {pipeline_mode = #tpu.pipeline_mode<synchronous>, transform_indices = @transform_17, window_bounds = array<i64: 1, 128>}, {pipeline_mode = #tpu.pipeline_mode<synchronous>, transform_indices = @transform_18, window_bounds = array<i64: 128, 3>}, {pipeline_mode = #tpu.pipeline_mode<synchronous>, transform_indices = @transform_19, window_bounds = array<i64: 1, 3>}, {transform_indices = @transform_20, window_bounds = array<i64: 512, 3>}]} {
    %c0 = arith.constant 0 : index
    %c0_0 = arith.constant 0 : index
    %0 = vector.load %arg1[%c0, %c0_0] : memref<512x3xf32, #tpu.memory_space<vmem>>, vector<512x3xf32>
    %c0_1 = arith.constant 0 : index
    %c0_2 = arith.constant 0 : index
    %1 = vector.load %arg2[%c0_1, %c0_2] : memref<3x128xf32, #tpu.memory_space<vmem>>, vector<3x128xf32>
    %c0_3 = arith.constant 0 : index
    %c0_4 = arith.constant 0 : index
    %2 = vector.load %arg3[%c0_3, %c0_4] : memref<1x128xf32, #tpu.memory_space<vmem>>, vector<1x128xf32>
    %3 = vector.extract_strided_slice %0 {offsets = [0, 0], sizes = [512, 1], strides = [1, 1]} : vector<512x3xf32> to vector<512x1xf32>
    %4 = vector.extract_strided_slice %1 {offsets = [0, 0], sizes = [1, 128], strides = [1, 1]} : vector<3x128xf32> to vector<1x128xf32>
    %5 = vector.broadcast %3 : vector<512x1xf32> to vector<512x128xf32>
    %6 = vector.broadcast %4 : vector<1x128xf32> to vector<512x128xf32>
    %7 = arith.mulf %5, %6 : vector<512x128xf32>
    %8 = vector.extract_strided_slice %0 {offsets = [0, 1], sizes = [512, 1], strides = [1, 1]} : vector<512x3xf32> to vector<512x1xf32>
    %9 = vector.extract_strided_slice %1 {offsets = [1, 0], sizes = [1, 128], strides = [1, 1]} : vector<3x128xf32> to vector<1x128xf32>
    %10 = vector.broadcast %8 : vector<512x1xf32> to vector<512x128xf32>
    %11 = vector.broadcast %9 : vector<1x128xf32> to vector<512x128xf32>
    %12 = arith.mulf %10, %11 : vector<512x128xf32>
    %13 = arith.addf %7, %12 : vector<512x128xf32>
    %14 = vector.extract_strided_slice %0 {offsets = [0, 2], sizes = [512, 1], strides = [1, 1]} : vector<512x3xf32> to vector<512x1xf32>
    %15 = vector.extract_strided_slice %1 {offsets = [2, 0], sizes = [1, 128], strides = [1, 1]} : vector<3x128xf32> to vector<1x128xf32>
    %16 = vector.broadcast %14 : vector<512x1xf32> to vector<512x128xf32>
    %17 = vector.broadcast %15 : vector<1x128xf32> to vector<512x128xf32>
    %18 = arith.mulf %16, %17 : vector<512x128xf32>
    %19 = arith.addf %13, %18 : vector<512x128xf32>
    %20 = vector.broadcast %2 : vector<1x128xf32> to vector<512x128xf32>
    %21 = arith.addf %19, %20 : vector<512x128xf32>
    %cst = arith.constant 0.000000e+00 : f32
    %22 = vector.broadcast %cst : f32 to vector<512x128xf32>
    %23 = arith.maximumf %21, %22 : vector<512x128xf32>
    %c0_5 = arith.constant 0 : index
    %c0_6 = arith.constant 0 : index
    %24 = vector.load %arg4[%c0_5, %c0_6] : memref<128x128xf32, #tpu.memory_space<vmem>>, vector<128x128xf32>
    %c0_7 = arith.constant 0 : index
    %c0_8 = arith.constant 0 : index
    %25 = vector.load %arg5[%c0_7, %c0_8] : memref<1x128xf32, #tpu.memory_space<vmem>>, vector<1x128xf32>
    %cst_9 = arith.constant dense<0.000000e+00> : vector<512x128xf32>
    %26 = tpu.matmul %23, %24, %cst_9 {dimension_numbers = #tpu.dot_dimension_numbers<[1], [0], [0], [1], [0, 0, 1, 1], [], []>} : vector<512x128xf32>, vector<128x128xf32>, vector<512x128xf32> -> vector<512x128xf32>
    %27 = vector.broadcast %25 : vector<1x128xf32> to vector<512x128xf32>
    %28 = arith.addf %26, %27 : vector<512x128xf32>
    %cst_10 = arith.constant 0.000000e+00 : f32
    %29 = vector.broadcast %cst_10 : f32 to vector<512x128xf32>
    %30 = arith.maximumf %28, %29 : vector<512x128xf32>
    %c0_11 = arith.constant 0 : index
    %c0_12 = arith.constant 0 : index
    %31 = vector.load %arg6[%c0_11, %c0_12] : memref<128x128xf32, #tpu.memory_space<vmem>>, vector<128x128xf32>
    %c0_13 = arith.constant 0 : index
    %c0_14 = arith.constant 0 : index
    %32 = vector.load %arg7[%c0_13, %c0_14] : memref<1x128xf32, #tpu.memory_space<vmem>>, vector<1x128xf32>
    %cst_15 = arith.constant dense<0.000000e+00> : vector<512x128xf32>
    %33 = tpu.matmul %30, %31, %cst_15 {dimension_numbers = #tpu.dot_dimension_numbers<[1], [0], [0], [1], [0, 0, 1, 1], [], []>} : vector<512x128xf32>, vector<128x128xf32>, vector<512x128xf32> -> vector<512x128xf32>
    %34 = vector.broadcast %32 : vector<1x128xf32> to vector<512x128xf32>
    %35 = arith.addf %33, %34 : vector<512x128xf32>
    %cst_16 = arith.constant 0.000000e+00 : f32
    %36 = vector.broadcast %cst_16 : f32 to vector<512x128xf32>
    %37 = arith.maximumf %35, %36 : vector<512x128xf32>
    %c0_17 = arith.constant 0 : index
    %c0_18 = arith.constant 0 : index
    %38 = vector.load %arg8[%c0_17, %c0_18] : memref<128x128xf32, #tpu.memory_space<vmem>>, vector<128x128xf32>
    %c0_19 = arith.constant 0 : index
    %c0_20 = arith.constant 0 : index
    %39 = vector.load %arg9[%c0_19, %c0_20] : memref<1x128xf32, #tpu.memory_space<vmem>>, vector<1x128xf32>
    %cst_21 = arith.constant dense<0.000000e+00> : vector<512x128xf32>
    %40 = tpu.matmul %37, %38, %cst_21 {dimension_numbers = #tpu.dot_dimension_numbers<[1], [0], [0], [1], [0, 0, 1, 1], [], []>} : vector<512x128xf32>, vector<128x128xf32>, vector<512x128xf32> -> vector<512x128xf32>
    %41 = vector.broadcast %39 : vector<1x128xf32> to vector<512x128xf32>
    %42 = arith.addf %40, %41 : vector<512x128xf32>
    %cst_22 = arith.constant 0.000000e+00 : f32
    %43 = vector.broadcast %cst_22 : f32 to vector<512x128xf32>
    %44 = arith.maximumf %42, %43 : vector<512x128xf32>
    %c0_23 = arith.constant 0 : index
    %c0_24 = arith.constant 0 : index
    %45 = vector.load %arg10[%c0_23, %c0_24] : memref<128x128xf32, #tpu.memory_space<vmem>>, vector<128x128xf32>
    %c0_25 = arith.constant 0 : index
    %c0_26 = arith.constant 0 : index
    %46 = vector.load %arg11[%c0_25, %c0_26] : memref<1x128xf32, #tpu.memory_space<vmem>>, vector<1x128xf32>
    %cst_27 = arith.constant dense<0.000000e+00> : vector<512x128xf32>
    %47 = tpu.matmul %44, %45, %cst_27 {dimension_numbers = #tpu.dot_dimension_numbers<[1], [0], [0], [1], [0, 0, 1, 1], [], []>} : vector<512x128xf32>, vector<128x128xf32>, vector<512x128xf32> -> vector<512x128xf32>
    %48 = vector.broadcast %46 : vector<1x128xf32> to vector<512x128xf32>
    %49 = arith.addf %47, %48 : vector<512x128xf32>
    %cst_28 = arith.constant 0.000000e+00 : f32
    %50 = vector.broadcast %cst_28 : f32 to vector<512x128xf32>
    %51 = arith.maximumf %49, %50 : vector<512x128xf32>
    %c0_29 = arith.constant 0 : index
    %c0_30 = arith.constant 0 : index
    %52 = vector.load %arg12[%c0_29, %c0_30] : memref<3x128xf32, #tpu.memory_space<vmem>>, vector<3x128xf32>
    %c0_31 = arith.constant 0 : index
    %c0_32 = arith.constant 0 : index
    %53 = vector.load %arg13[%c0_31, %c0_32] : memref<128x128xf32, #tpu.memory_space<vmem>>, vector<128x128xf32>
    %c0_33 = arith.constant 0 : index
    %c0_34 = arith.constant 0 : index
    %54 = vector.load %arg14[%c0_33, %c0_34] : memref<1x128xf32, #tpu.memory_space<vmem>>, vector<1x128xf32>
    %cst_35 = arith.constant dense<0.000000e+00> : vector<512x128xf32>
    %55 = tpu.matmul %51, %53, %cst_35 {dimension_numbers = #tpu.dot_dimension_numbers<[1], [0], [0], [1], [0, 0, 1, 1], [], []>} : vector<512x128xf32>, vector<128x128xf32>, vector<512x128xf32> -> vector<512x128xf32>
    %56 = vector.extract_strided_slice %0 {offsets = [0, 0], sizes = [512, 1], strides = [1, 1]} : vector<512x3xf32> to vector<512x1xf32>
    %57 = vector.extract_strided_slice %52 {offsets = [0, 0], sizes = [1, 128], strides = [1, 1]} : vector<3x128xf32> to vector<1x128xf32>
    %58 = vector.broadcast %56 : vector<512x1xf32> to vector<512x128xf32>
    %59 = vector.broadcast %57 : vector<1x128xf32> to vector<512x128xf32>
    %60 = arith.mulf %58, %59 : vector<512x128xf32>
    %61 = vector.extract_strided_slice %0 {offsets = [0, 1], sizes = [512, 1], strides = [1, 1]} : vector<512x3xf32> to vector<512x1xf32>
    %62 = vector.extract_strided_slice %52 {offsets = [1, 0], sizes = [1, 128], strides = [1, 1]} : vector<3x128xf32> to vector<1x128xf32>
    %63 = vector.broadcast %61 : vector<512x1xf32> to vector<512x128xf32>
    %64 = vector.broadcast %62 : vector<1x128xf32> to vector<512x128xf32>
    %65 = arith.mulf %63, %64 : vector<512x128xf32>
    %66 = arith.addf %60, %65 : vector<512x128xf32>
    %67 = vector.extract_strided_slice %0 {offsets = [0, 2], sizes = [512, 1], strides = [1, 1]} : vector<512x3xf32> to vector<512x1xf32>
    %68 = vector.extract_strided_slice %52 {offsets = [2, 0], sizes = [1, 128], strides = [1, 1]} : vector<3x128xf32> to vector<1x128xf32>
    %69 = vector.broadcast %67 : vector<512x1xf32> to vector<512x128xf32>
    %70 = vector.broadcast %68 : vector<1x128xf32> to vector<512x128xf32>
    %71 = arith.mulf %69, %70 : vector<512x128xf32>
    %72 = arith.addf %66, %71 : vector<512x128xf32>
    %73 = arith.addf %55, %72 : vector<512x128xf32>
    %74 = vector.broadcast %54 : vector<1x128xf32> to vector<512x128xf32>
    %75 = arith.addf %73, %74 : vector<512x128xf32>
    %cst_36 = arith.constant 0.000000e+00 : f32
    %76 = vector.broadcast %cst_36 : f32 to vector<512x128xf32>
    %77 = arith.maximumf %75, %76 : vector<512x128xf32>
    %c0_37 = arith.constant 0 : index
    %c0_38 = arith.constant 0 : index
    %78 = vector.load %arg15[%c0_37, %c0_38] : memref<128x128xf32, #tpu.memory_space<vmem>>, vector<128x128xf32>
    %c0_39 = arith.constant 0 : index
    %c0_40 = arith.constant 0 : index
    %79 = vector.load %arg16[%c0_39, %c0_40] : memref<1x128xf32, #tpu.memory_space<vmem>>, vector<1x128xf32>
    %cst_41 = arith.constant dense<0.000000e+00> : vector<512x128xf32>
    %80 = tpu.matmul %77, %78, %cst_41 {dimension_numbers = #tpu.dot_dimension_numbers<[1], [0], [0], [1], [0, 0, 1, 1], [], []>} : vector<512x128xf32>, vector<128x128xf32>, vector<512x128xf32> -> vector<512x128xf32>
    %81 = vector.broadcast %79 : vector<1x128xf32> to vector<512x128xf32>
    %82 = arith.addf %80, %81 : vector<512x128xf32>
    %cst_42 = arith.constant 0.000000e+00 : f32
    %83 = vector.broadcast %cst_42 : f32 to vector<512x128xf32>
    %84 = arith.maximumf %82, %83 : vector<512x128xf32>
    %c0_43 = arith.constant 0 : index
    %c0_44 = arith.constant 0 : index
    %85 = vector.load %arg17[%c0_43, %c0_44] : memref<128x128xf32, #tpu.memory_space<vmem>>, vector<128x128xf32>
    %c0_45 = arith.constant 0 : index
    %c0_46 = arith.constant 0 : index
    %86 = vector.load %arg18[%c0_45, %c0_46] : memref<1x128xf32, #tpu.memory_space<vmem>>, vector<1x128xf32>
    %cst_47 = arith.constant dense<0.000000e+00> : vector<512x128xf32>
    %87 = tpu.matmul %84, %85, %cst_47 {dimension_numbers = #tpu.dot_dimension_numbers<[1], [0], [0], [1], [0, 0, 1, 1], [], []>} : vector<512x128xf32>, vector<128x128xf32>, vector<512x128xf32> -> vector<512x128xf32>
    %88 = vector.broadcast %86 : vector<1x128xf32> to vector<512x128xf32>
    %89 = arith.addf %87, %88 : vector<512x128xf32>
    %cst_48 = arith.constant 0.000000e+00 : f32
    %90 = vector.broadcast %cst_48 : f32 to vector<512x128xf32>
    %91 = arith.maximumf %89, %90 : vector<512x128xf32>
    %c0_49 = arith.constant 0 : index
    %c0_50 = arith.constant 0 : index
    %92 = vector.load %arg19[%c0_49, %c0_50] : memref<128x3xf32, #tpu.memory_space<vmem>>, vector<128x3xf32>
    %c0_51 = arith.constant 0 : index
    %c0_52 = arith.constant 0 : index
    %93 = vector.load %arg20[%c0_51, %c0_52] : memref<1x3xf32, #tpu.memory_space<vmem>>, vector<1x3xf32>
    %cst_53 = arith.constant dense<0.000000e+00> : vector<512x3xf32>
    %94 = tpu.matmul %91, %92, %cst_53 {dimension_numbers = #tpu.dot_dimension_numbers<[1], [0], [0], [1], [0, 0, 1, 1], [], []>} : vector<512x128xf32>, vector<128x3xf32>, vector<512x3xf32> -> vector<512x3xf32>
    %95 = vector.broadcast %93 : vector<1x3xf32> to vector<512x3xf32>
    %96 = arith.addf %94, %95 : vector<512x3xf32>
    %cst_54 = arith.constant 1.000000e+00 : f32
    %97 = vector.broadcast %cst_54 : f32 to vector<512x3xf32>
    %98 = arith.mulf %96, %97 : vector<512x3xf32>
    %c0_55 = arith.constant 0 : index
    %c0_56 = arith.constant 0 : index
    %99 = vector.load %arg21[%c0_55, %c0_56] : memref<512x3xf32, #tpu.memory_space<vmem>>, vector<512x3xf32>
    tpu.vector_store %arg21[%c0_55, %c0_56], %98 {strides = array<i32>} : memref<512x3xf32, #tpu.memory_space<vmem>>, vector<512x3xf32>,
    return
  }
  func.func @transform_0(%arg0: i32) -> (i32, i32) {
    %c0_i32 = arith.constant 0 : i32
    %c0_i32_0 = arith.constant 0 : i32
    return %arg0, %c0_i32 : i32, i32
  }
  func.func @transform_1(%arg0: i32) -> (i32, i32) {
    %c0_i32 = arith.constant 0 : i32
    %c0_i32_0 = arith.constant 0 : i32
    %c0_i32_1 = arith.constant 0 : i32
    return %c0_i32, %c0_i32_0 : i32, i32
  }
  func.func @transform_2(%arg0: i32) -> (i32, i32) {
    %c0_i32 = arith.constant 0 : i32
    %c0_i32_0 = arith.constant 0 : i32
    %c0_i32_1 = arith.constant 0 : i32
    return %c0_i32, %c0_i32_0 : i32, i32
  }
  func.func @transform_3(%arg0: i32) -> (i32, i32) {
    %c0_i32 = arith.constant 0 : i32
    %c0_i32_0 = arith.constant 0 : i32
    %c0_i32_1 = arith.constant 0 : i32
    return %c0_i32, %c0_i32_0 : i32, i32
  }
  func.func @transform_4(%arg0: i32) -> (i32, i32) {
    %c0_i32 = arith.constant 0 : i32
    %c0_i32_0 = arith.constant 0 : i32
    %c0_i32_1 = arith.constant 0 : i32
    return %c0_i32, %c0_i32_0 : i32, i32
  }
  func.func @transform_5(%arg0: i32) -> (i32, i32) {
    %c0_i32 = arith.constant 0 : i32
    %c0_i32_0 = arith.constant 0 : i32
    %c0_i32_1 = arith.constant 0 : i32
    return %c0_i32, %c0_i32_0 : i32, i32
  }
  func.func @transform_6(%arg0: i32) -> (i32, i32) {
    %c0_i32 = arith.constant 0 : i32
    %c0_i32_0 = arith.constant 0 : i32
    %c0_i32_1 = arith.constant 0 : i32
    return %c0_i32, %c0_i32_0 : i32, i32
  }
  func.func @transform_7(%arg0: i32) -> (i32, i32) {
    %c0_i32 = arith.constant 0 : i32
    %c0_i32_0 = arith.constant 0 : i32
    %c0_i32_1 = arith.constant 0 : i32
    return %c0_i32, %c0_i32_0 : i32, i32
  }
  func.func @transform_8(%arg0: i32) -> (i32, i32) {
    %c0_i32 = arith.constant 0 : i32
    %c0_i32_0 = arith.constant 0 : i32
    %c0_i32_1 = arith.constant 0 : i32
    return %c0_i32, %c0_i32_0 : i32, i32
  }
  func.func @transform_9(%arg0: i32) -> (i32, i32) {
    %c0_i32 = arith.constant 0 : i32
    %c0_i32_0 = arith.constant 0 : i32
    %c0_i32_1 = arith.constant 0 : i32
    return %c0_i32, %c0_i32_0 : i32, i32
  }
  func.func @transform_10(%arg0: i32) -> (i32, i32) {
    %c0_i32 = arith.constant 0 : i32
    %c0_i32_0 = arith.constant 0 : i32
    %c0_i32_1 = arith.constant 0 : i32
    return %c0_i32, %c0_i32_0 : i32, i32
  }
  func.func @transform_11(%arg0: i32) -> (i32, i32) {
    %c0_i32 = arith.constant 0 : i32
    %c0_i32_0 = arith.constant 0 : i32
    %c0_i32_1 = arith.constant 0 : i32
    return %c0_i32, %c0_i32_0 : i32, i32
  }
  func.func @transform_12(%arg0: i32) -> (i32, i32) {
    %c0_i32 = arith.constant 0 : i32
    %c0_i32_0 = arith.constant 0 : i32
    %c0_i32_1 = arith.constant 0 : i32
    return %c0_i32, %c0_i32_0 : i32, i32
  }
  func.func @transform_13(%arg0: i32) -> (i32, i32) {
    %c0_i32 = arith.constant 0 : i32
    %c0_i32_0 = arith.constant 0 : i32
    %c0_i32_1 = arith.constant 0 : i32
    return %c0_i32, %c0_i32_0 : i32, i32
  }
  func.func @transform_14(%arg0: i32) -> (i32, i32) {
    %c0_i32 = arith.constant 0 : i32
    %c0_i32_0 = arith.constant 0 : i32
    %c0_i32_1 = arith.constant 0 : i32
    return %c0_i32, %c0_i32_0 : i32, i32
  }
  func.func @transform_15(%arg0: i32) -> (i32, i32) {
    %c0_i32 = arith.constant 0 : i32
    %c0_i32_0 = arith.constant 0 : i32
    %c0_i32_1 = arith.constant 0 : i32
    return %c0_i32, %c0_i32_0 : i32, i32
  }
  func.func @transform_16(%arg0: i32) -> (i32, i32) {
    %c0_i32 = arith.constant 0 : i32
    %c0_i32_0 = arith.constant 0 : i32
    %c0_i32_1 = arith.constant 0 : i32
    return %c0_i32, %c0_i32_0 : i32, i32
  }
  func.func @transform_17(%arg0: i32) -> (i32, i32) {
    %c0_i32 = arith.constant 0 : i32
    %c0_i32_0 = arith.constant 0 : i32
    %c0_i32_1 = arith.constant 0 : i32
    return %c0_i32, %c0_i32_0 : i32, i32
  }
  func.func @transform_18(%arg0: i32) -> (i32, i32) {
    %c0_i32 = arith.constant 0 : i32
    %c0_i32_0 = arith.constant 0 : i32
    %c0_i32_1 = arith.constant 0 : i32
    return %c0_i32, %c0_i32_0 : i32, i32
  }
  func.func @transform_19(%arg0: i32) -> (i32, i32) {
    %c0_i32 = arith.constant 0 : i32
    %c0_i32_0 = arith.constant 0 : i32
    %c0_i32_1 = arith.constant 0 : i32
    return %c0_i32, %c0_i32_0 : i32, i32
  }
  func.func @transform_20(%arg0: i32) -> (i32, i32) {
    %c0_i32 = arith.constant 0 : i32
    %c0_i32_0 = arith.constant 0 : i32
    return %arg0, %c0_i32 : i32, i32
  }
}

</mosaic_0001>

<llo_original>
// kernel: tpu_custom_call.1
$region0: #{tpu_custom_call.1}
  #allocation0 [shape = 'u32[]', space=smem, size = 0x4, offset = 0x4, fixed_abs, tag = 'smem constant byte address 0x4 - core index']
  #allocation1 [shape = 'u32[144,128]{1,0:T(1,128)}', space=vmem, size = 0x12000, scoped, tag = 'internal scratch']
  %s0 = inlined_call_operand.vmem [shape: f32[2048,3], index: 0, kind: input, shape index: {}]
  %s1 = inlined_call_operand.vmem [shape: f32[3,128], index: 1, kind: input, shape index: {}]
  %s2 = inlined_call_operand.vmem [shape: f32[1,128], index: 2, kind: input, shape index: {}]
  %s3 = inlined_call_operand.vmem [shape: f32[128,128], index: 3, kind: input, shape index: {}]
  %s4 = inlined_call_operand.vmem [shape: f32[1,128], index: 4, kind: input, shape index: {}]
  %s5 = inlined_call_operand.vmem [shape: f32[128,128], index: 5, kind: input, shape index: {}]
  %s6 = inlined_call_operand.vmem [shape: f32[1,128], index: 6, kind: input, shape index: {}]
  %s7 = inlined_call_operand.vmem [shape: f32[128,128], index: 7, kind: input, shape index: {}]
  %s8 = inlined_call_operand.vmem [shape: f32[1,128], index: 8, kind: input, shape index: {}]
  %s9 = inlined_call_operand.vmem [shape: f32[128,128], index: 9, kind: input, shape index: {}]
  %s10 = inlined_call_operand.vmem [shape: f32[1,128], index: 10, kind: input, shape index: {}]
  %s11 = inlined_call_operand.vmem [shape: f32[3,128], index: 11, kind: input, shape index: {}]
  %s12 = inlined_call_operand.vmem [shape: f32[128,128], index: 12, kind: input, shape index: {}]
  %s13 = inlined_call_operand.vmem [shape: f32[1,128], index: 13, kind: input, shape index: {}]
  %s14 = inlined_call_operand.vmem [shape: f32[128,128], index: 14, kind: input, shape index: {}]
  %s15 = inlined_call_operand.vmem [shape: f32[1,128], index: 15, kind: input, shape index: {}]
  %s16 = inlined_call_operand.vmem [shape: f32[128,128], index: 16, kind: input, shape index: {}]
  %s17 = inlined_call_operand.vmem [shape: f32[1,128], index: 17, kind: input, shape index: {}]
  %s18 = inlined_call_operand.vmem [shape: f32[128,3], index: 18, kind: input, shape index: {}]
  %s19 = inlined_call_operand.vmem [shape: f32[1,3], index: 19, kind: input, shape index: {}]
  %s20 = inlined_call_operand.vmem [shape: f32[2048,3], index: 20, kind: output, shape index: {}]
  %s21 = sld [smem:[#allocation0]]
  $region113: #{tpu_custom_call.1} parent=0
    _
  %s23 = ssub.s32 1, %s21
  %s24 = scalar_select 0, %s23, %s21
  loop: start=0, step=1, limit=6
  $region2: #{tpu_custom_call.1} parent=0 // loop_pre_header
    _
  $region3: #{tpu_custom_call.1} parent=0 // loop_header
    %s26 = sphi 0, %s30
    %p27 = scmp.ge.s32.totalorder %s26, 6
    %s36 = sphi 0, %s38
    %s39 = sphi 0, %s36
    %s40 = sphi 0, %s39
    %s56 = sphi 0, %s40
    %s60 = sphi 0, %s60
    %s62 = sphi 0, %s60
    %s63 = sphi 0, %s62
    %s77 = sphi 0, %s63
    %s81 = sphi 0, %s81
    %s83 = sphi 0, %s81
    %s84 = sphi 0, %s83
    %s98 = sphi 0, %s84
    %s102 = sphi 0, %s102
    %s104 = sphi 0, %s102
    %s105 = sphi 0, %s104
    %s119 = sphi 0, %s105
    %s123 = sphi 0, %s123
    %s125 = sphi 0, %s123
    %s126 = sphi 0, %s125
    %s140 = sphi 0, %s126
    %s144 = sphi 0, %s144
    %s146 = sphi 0, %s144
    %s147 = sphi 0, %s146
    %s161 = sphi 0, %s147
    %s165 = sphi 0, %s165
    %s167 = sphi 0, %s165
    %s168 = sphi 0, %s167
    %s182 = sphi 0, %s168
    %s186 = sphi 0, %s186
    %s188 = sphi 0, %s186
    %s189 = sphi 0, %s188
    %s203 = sphi 0, %s189
    %s207 = sphi 0, %s207
    %s209 = sphi 0, %s207
    %s210 = sphi 0, %s209
    %s224 = sphi 0, %s210
    %s228 = sphi 0, %s228
    %s230 = sphi 0, %s228
    %s231 = sphi 0, %s230
    %s245 = sphi 0, %s231
    %s249 = sphi 0, %s249
    %s251 = sphi 0, %s249
    %s252 = sphi 0, %s251
    %s266 = sphi 0, %s252
    %s270 = sphi 0, %s270
    %s272 = sphi 0, %s270
    %s273 = sphi 0, %s272
    %s287 = sphi 0, %s273
    %s291 = sphi 0, %s291
    %s293 = sphi 0, %s291
    %s294 = sphi 0, %s293
    %s308 = sphi 0, %s294
    %s312 = sphi 0, %s312
    %s314 = sphi 0, %s312
    %s315 = sphi 0, %s314
    %s329 = sphi 0, %s315
    %s333 = sphi 0, %s333
    %s335 = sphi 0, %s333
    %s336 = sphi 0, %s335
    %s350 = sphi 0, %s336
    %s354 = sphi 0, %s354
    %s356 = sphi 0, %s354
    %s357 = sphi 0, %s356
    %s371 = sphi 0, %s357
    %s375 = sphi 0, %s375
    %s377 = sphi 0, %s375
    %s378 = sphi 0, %s377
    %s392 = sphi 0, %s378
    %s396 = sphi 0, %s396
    %s398 = sphi 0, %s396
    %s399 = sphi 0, %s398
    %s413 = sphi 0, %s399
    %s417 = sphi 0, %s417
    %s419 = sphi 0, %s417
    %s420 = sphi 0, %s419
    %s434 = sphi 0, %s420
    %s438 = sphi 0, %s438
    %s440 = sphi 0, %s438
    %s441 = sphi 0, %s440
    %s455 = sphi 0, %s441
    %s461 = sphi 0, %s463
    %s464 = sphi 0, %s461
    %s465 = sphi 0, %s464
    %s481 = sphi 0, %s465
  $region4: #{tpu_custom_call.1} parent=0 // loop_header_branch
    %29 = sbr.rel (%p27) target = $region8
  $region5: #{tpu_custom_call.1} parent=0 // loop_body
    %s31 = ssub.s32 %s26, 1
    %s32 = ssub.s32 %s26, 2
    %s33 = sadd.s32 %s26, 1
    %s34 = ssub.s32 %s26, %s33
    %p35 = scmp.eq.s32.totalorder %s34, 0
    %s37 = sadd.s32 %s36, 1
    %s38 = scalar_select %p35, %s36, %s37
    %p41 = pneg %p35
    %p42 = scmp.eq.s32.totalorder %s26, 3
    %p43 = por %p41, %p42
    %p44 = scmp.ne.s32.totalorder %s36, %s39
    %p45 = scmp.eq.s32.totalorder %s26, 0
    %p46 = por %p44, %p45
    %p47 = scmp.ne.s32.totalorder %s36, %s39
    %p48 = scmp.eq.s32.totalorder %s31, 3
    %p49 = por %p47, %p48
    %p50 = scmp.ne.s32.totalorder %s39, %s40
    %p51 = scmp.eq.s32.totalorder %s31, 0
    %p52 = por %p50, %p51
    %p53 = scmp.ne.s32.totalorder %s39, %s40
    %p54 = scmp.eq.s32.totalorder %s32, 3
    %p55 = por %p53, %p54
    %p57 = scmp.ne.s32.totalorder %s40, %s56
    %p58 = scmp.eq.s32.totalorder %s32, 0
    %p59 = por %p57, %p58
    %s61 = sadd.s32 %s60, 1
    %p64 = scmp.eq.s32.totalorder %s26, 3
    %p65 = scmp.ne.s32.totalorder %s60, %s62
    %p66 = scmp.eq.s32.totalorder %s26, 0
    %p67 = por %p65, %p66
    %p68 = scmp.ne.s32.totalorder %s60, %s62
    %p69 = scmp.eq.s32.totalorder %s31, 3
    %p70 = por %p68, %p69
    %p71 = scmp.ne.s32.totalorder %s62, %s63
    %p72 = scmp.eq.s32.totalorder %s31, 0
    %p73 = por %p71, %p72
    %p74 = scmp.ne.s32.totalorder %s62, %s63
    %p75 = scmp.eq.s32.totalorder %s32, 3
    %p76 = por %p74, %p75
    %p78 = scmp.ne.s32.totalorder %s63, %s77
    %p79 = scmp.eq.s32.totalorder %s32, 0
    %p80 = por %p78, %p79
    %s82 = sadd.s32 %s81, 1
    %p85 = scmp.eq.s32.totalorder %s26, 3
    %p86 = scmp.ne.s32.totalorder %s81, %s83
    %p87 = scmp.eq.s32.totalorder %s26, 0
    %p88 = por %p86, %p87
    %p89 = scmp.ne.s32.totalorder %s81, %s83
    %p90 = scmp.eq.s32.totalorder %s31, 3
    %p91 = por %p89, %p90
    %p92 = scmp.ne.s32.totalorder %s83, %s84
    %p93 = scmp.eq.s32.totalorder %s31, 0
    %p94 = por %p92, %p93
    %p95 = scmp.ne.s32.totalorder %s83, %s84
    %p96 = scmp.eq.s32.totalorder %s32, 3
    %p97 = por %p95, %p96
    %p99 = scmp.ne.s32.totalorder %s84, %s98
    %p100 = scmp.eq.s32.totalorder %s32, 0
    %p101 = por %p99, %p100
    %s103 = sadd.s32 %s102, 1
    %p106 = scmp.eq.s32.totalorder %s26, 3
    %p107 = scmp.ne.s32.totalorder %s102, %s104
    %p108 = scmp.eq.s32.totalorder %s26, 0
    %p109 = por %p107, %p108
    %p110 = scmp.ne.s32.totalorder %s102, %s104
    %p111 = scmp.eq.s32.totalorder %s31, 3
    %p112 = por %p110, %p111
    %p113 = scmp.ne.s32.totalorder %s104, %s105
    %p114 = scmp.eq.s32.totalorder %s31, 0
    %p115 = por %p113, %p114
    %p116 = scmp.ne.s32.totalorder %s104, %s105
    %p117 = scmp.eq.s32.totalorder %s32, 3
    %p118 = por %p116, %p117
    %p120 = scmp.ne.s32.totalorder %s105, %s119
    %p121 = scmp.eq.s32.totalorder %s32, 0
    %p122 = por %p120, %p121
    %s124 = sadd.s32 %s123, 1
    %p127 = scmp.eq.s32.totalorder %s26, 3
    %p128 = scmp.ne.s32.totalorder %s123, %s125
    %p129 = scmp.eq.s32.totalorder %s26, 0
    %p130 = por %p128, %p129
    %p131 = scmp.ne.s32.totalorder %s123, %s125
    %p132 = scmp.eq.s32.totalorder %s31, 3
    %p133 = por %p131, %p132
    %p134 = scmp.ne.s32.totalorder %s125, %s126
    %p135 = scmp.eq.s32.totalorder %s31, 0
    %p136 = por %p134, %p135
    %p137 = scmp.ne.s32.totalorder %s125, %s126
    %p138 = scmp.eq.s32.totalorder %s32, 3
    %p139 = por %p137, %p138
    %p141 = scmp.ne.s32.totalorder %s126, %s140
    %p142 = scmp.eq.s32.totalorder %s32, 0
    %p143 = por %p141, %p142
    %s145 = sadd.s32 %s144, 1
    %p148 = scmp.eq.s32.totalorder %s26, 3
    %p149 = scmp.ne.s32.totalorder %s144, %s146
    %p150 = scmp.eq.s32.totalorder %s26, 0
    %p151 = por %p149, %p150
    %p152 = scmp.ne.s32.totalorder %s144, %s146
    %p153 = scmp.eq.s32.totalorder %s31, 3
    %p154 = por %p152, %p153
    %p155 = scmp.ne.s32.totalorder %s146, %s147
    %p156 = scmp.eq.s32.totalorder %s31, 0
    %p157 = por %p155, %p156
    %p158 = scmp.ne.s32.totalorder %s146, %s147
    %p159 = scmp.eq.s32.totalorder %s32, 3
    %p160 = por %p158, %p159
    %p162 = scmp.ne.s32.totalorder %s147, %s161
    %p163 = scmp.eq.s32.totalorder %s32, 0
    %p164 = por %p162, %p163
    %s166 = sadd.s32 %s165, 1
    %p169 = scmp.eq.s32.totalorder %s26, 3
    %p170 = scmp.ne.s32.totalorder %s165, %s167
    %p171 = scmp.eq.s32.totalorder %s26, 0
    %p172 = por %p170, %p171
    %p173 = scmp.ne.s32.totalorder %s165, %s167
    %p174 = scmp.eq.s32.totalorder %s31, 3
    %p175 = por %p173, %p174
    %p176 = scmp.ne.s32.totalorder %s167, %s168
    %p177 = scmp.eq.s32.totalorder %s31, 0
    %p178 = por %p176, %p177
    %p179 = scmp.ne.s32.totalorder %s167, %s168
    %p180 = scmp.eq.s32.totalorder %s32, 3
    %p181 = por %p179, %p180
    %p183 = scmp.ne.s32.totalorder %s168, %s182
    %p184 = scmp.eq.s32.totalorder %s32, 0
    %p185 = por %p183, %p184
    %s187 = sadd.s32 %s186, 1
    %p190 = scmp.eq.s32.totalorder %s26, 3
    %p191 = scmp.ne.s32.totalorder %s186, %s188
    %p192 = scmp.eq.s32.totalorder %s26, 0
    %p193 = por %p191, %p192
    %p194 = scmp.ne.s32.totalorder %s186, %s188
    %p195 = scmp.eq.s32.totalorder %s31, 3
    %p196 = por %p194, %p195
    %p197 = scmp.ne.s32.totalorder %s188, %s189
    %p198 = scmp.eq.s32.totalorder %s31, 0
    %p199 = por %p197, %p198
    %p200 = scmp.ne.s32.totalorder %s188, %s189
    %p201 = scmp.eq.s32.totalorder %s32, 3
    %p202 = por %p200, %p201
    %p204 = scmp.ne.s32.totalorder %s189, %s203
    %p205 = scmp.eq.s32.totalorder %s32, 0
    %p206 = por %p204, %p205
    %s208 = sadd.s32 %s207, 1
    %p211 = scmp.eq.s32.totalorder %s26, 3
    %p212 = scmp.ne.s32.totalorder %s207, %s209
    %p213 = scmp.eq.s32.totalorder %s26, 0
    %p214 = por %p212, %p213
    %p215 = scmp.ne.s32.totalorder %s207, %s209
    %p216 = scmp.eq.s32.totalorder %s31, 3
    %p217 = por %p215, %p216
    %p218 = scmp.ne.s32.totalorder %s209, %s210
    %p219 = scmp.eq.s32.totalorder %s31, 0
    %p220 = por %p218, %p219
    %p221 = scmp.ne.s32.totalorder %s209, %s210
    %p222 = scmp.eq.s32.totalorder %s32, 3
    %p223 = por %p221, %p222
    %p225 = scmp.ne.s32.totalorder %s210, %s224
    %p226 = scmp.eq.s32.totalorder %s32, 0
    %p227 = por %p225, %p226
    %s229 = sadd.s32 %s228, 1
    %p232 = scmp.eq.s32.totalorder %s26, 3
    %p233 = scmp.ne.s32.totalorder %s228, %s230
    %p234 = scmp.eq.s32.totalorder %s26, 0
    %p235 = por %p233, %p234
    %p236 = scmp.ne.s32.totalorder %s228, %s230
    %p237 = scmp.eq.s32.totalorder %s31, 3
    %p238 = por %p236, %p237
    %p239 = scmp.ne.s32.totalorder %s230, %s231
    %p240 = scmp.eq.s32.totalorder %s31, 0
    %p241 = por %p239, %p240
    %p242 = scmp.ne.s32.totalorder %s230, %s231
    %p243 = scmp.eq.s32.totalorder %s32, 3
    %p244 = por %p242, %p243
    %p246 = scmp.ne.s32.totalorder %s231, %s245
    %p247 = scmp.eq.s32.totalorder %s32, 0
    %p248 = por %p246, %p247
    %s250 = sadd.s32 %s249, 1
    %p253 = scmp.eq.s32.totalorder %s26, 3
    %p254 = scmp.ne.s32.totalorder %s249, %s251
    %p255 = scmp.eq.s32.totalorder %s26, 0
    %p256 = por %p254, %p255
    %p257 = scmp.ne.s32.totalorder %s249, %s251
    %p258 = scmp.eq.s32.totalorder %s31, 3
    %p259 = por %p257, %p258
    %p260 = scmp.ne.s32.totalorder %s251, %s252
    %p261 = scmp.eq.s32.totalorder %s31, 0
    %p262 = por %p260, %p261
    %p263 = scmp.ne.s32.totalorder %s251, %s252
    %p264 = scmp.eq.s32.totalorder %s32, 3
    %p265 = por %p263, %p264
    %p267 = scmp.ne.s32.totalorder %s252, %s266
    %p268 = scmp.eq.s32.totalorder %s32, 0
    %p269 = por %p267, %p268
    %s271 = sadd.s32 %s270, 1
    %p274 = scmp.eq.s32.totalorder %s26, 3
    %p275 = scmp.ne.s32.totalorder %s270, %s272
    %p276 = scmp.eq.s32.totalorder %s26, 0
    %p277 = por %p275, %p276
    %p278 = scmp.ne.s32.totalorder %s270, %s272
    %p279 = scmp.eq.s32.totalorder %s31, 3
    %p280 = por %p278, %p279
    %p281 = scmp.ne.s32.totalorder %s272, %s273
    %p282 = scmp.eq.s32.totalorder %s31, 0
    %p283 = por %p281, %p282
    %p284 = scmp.ne.s32.totalorder %s272, %s273
    %p285 = scmp.eq.s32.totalorder %s32, 3
    %p286 = por %p284, %p285
    %p288 = scmp.ne.s32.totalorder %s273, %s287
    %p289 = scmp.eq.s32.totalorder %s32, 0
    %p290 = por %p288, %p289
    %s292 = sadd.s32 %s291, 1
    %p295 = scmp.eq.s32.totalorder %s26, 3
    %p296 = scmp.ne.s32.totalorder %s291, %s293
    %p297 = scmp.eq.s32.totalorder %s26, 0
    %p298 = por %p296, %p297
    %p299 = scmp.ne.s32.totalorder %s291, %s293
    %p300 = scmp.eq.s32.totalorder %s31, 3
    %p301 = por %p299, %p300
    %p302 = scmp.ne.s32.totalorder %s293, %s294
    %p303 = scmp.eq.s32.totalorder %s31, 0
    %p304 = por %p302, %p303
    %p305 = scmp.ne.s32.totalorder %s293, %s294
    %p306 = scmp.eq.s32.totalorder %s32, 3
    %p307 = por %p305, %p306
    %p309 = scmp.ne.s32.totalorder %s294, %s308
    %p310 = scmp.eq.s32.totalorder %s32, 0
    %p311 = por %p309, %p310
    %s313 = sadd.s32 %s312, 1
    %p316 = scmp.eq.s32.totalorder %s26, 3
    %p317 = scmp.ne.s32.totalorder %s312, %s314
    %p318 = scmp.eq.s32.totalorder %s26, 0
    %p319 = por %p317, %p318
    %p320 = scmp.ne.s32.totalorder %s312, %s314
    %p321 = scmp.eq.s32.totalorder %s31, 3
    %p322 = por %p320, %p321
    %p323 = scmp.ne.s32.totalorder %s314, %s315
    %p324 = scmp.eq.s32.totalorder %s31, 0
    %p325 = por %p323, %p324
    %p326 = scmp.ne.s32.totalorder %s314, %s315
    %p327 = scmp.eq.s32.totalorder %s32, 3
    %p328 = por %p326, %p327
    %p330 = scmp.ne.s32.totalorder %s315, %s329
    %p331 = scmp.eq.s32.totalorder %s32, 0
    %p332 = por %p330, %p331
    %s334 = sadd.s32 %s333, 1
    %p337 = scmp.eq.s32.totalorder %s26, 3
    %p338 = scmp.ne.s32.totalorder %s333, %s335
    %p339 = scmp.eq.s32.totalorder %s26, 0
    %p340 = por %p338, %p339
    %p341 = scmp.ne.s32.totalorder %s333, %s335
    %p342 = scmp.eq.s32.totalorder %s31, 3
    %p343 = por %p341, %p342
    %p344 = scmp.ne.s32.totalorder %s335, %s336
    %p345 = scmp.eq.s32.totalorder %s31, 0
    %p346 = por %p344, %p345
    %p347 = scmp.ne.s32.totalorder %s335, %s336
    %p348 = scmp.eq.s32.totalorder %s32, 3
    %p349 = por %p347, %p348
    %p351 = scmp.ne.s32.totalorder %s336, %s350
    %p352 = scmp.eq.s32.totalorder %s32, 0
    %p353 = por %p351, %p352
    %s355 = sadd.s32 %s354, 1
    %p358 = scmp.eq.s32.totalorder %s26, 3
    %p359 = scmp.ne.s32.totalorder %s354, %s356
    %p360 = scmp.eq.s32.totalorder %s26, 0
    %p361 = por %p359, %p360
    %p362 = scmp.ne.s32.totalorder %s354, %s356
    %p363 = scmp.eq.s32.totalorder %s31, 3
    %p364 = por %p362, %p363
    %p365 = scmp.ne.s32.totalorder %s356, %s357
    %p366 = scmp.eq.s32.totalorder %s31, 0
    %p367 = por %p365, %p366
    %p368 = scmp.ne.s32.totalorder %s356, %s357
    %p369 = scmp.eq.s32.totalorder %s32, 3
    %p370 = por %p368, %p369
    %p372 = scmp.ne.s32.totalorder %s357, %s371
    %p373 = scmp.eq.s32.totalorder %s32, 0
    %p374 = por %p372, %p373
    %s376 = sadd.s32 %s375, 1
    %p379 = scmp.eq.s32.totalorder %s26, 3
    %p380 = scmp.ne.s32.totalorder %s375, %s377
    %p381 = scmp.eq.s32.totalorder %s26, 0
    %p382 = por %p380, %p381
    %p383 = scmp.ne.s32.totalorder %s375, %s377
    %p384 = scmp.eq.s32.totalorder %s31, 3
    %p385 = por %p383, %p384
    %p386 = scmp.ne.s32.totalorder %s377, %s378
    %p387 = scmp.eq.s32.totalorder %s31, 0
    %p388 = por %p386, %p387
    %p389 = scmp.ne.s32.totalorder %s377, %s378
    %p390 = scmp.eq.s32.totalorder %s32, 3
    %p391 = por %p389, %p390
    %p393 = scmp.ne.s32.totalorder %s378, %s392
    %p394 = scmp.eq.s32.totalorder %s32, 0
    %p395 = por %p393, %p394
    %s397 = sadd.s32 %s396, 1
    %p400 = scmp.eq.s32.totalorder %s26, 3
    %p401 = scmp.ne.s32.totalorder %s396, %s398
    %p402 = scmp.eq.s32.totalorder %s26, 0
    %p403 = por %p401, %p402
    %p404 = scmp.ne.s32.totalorder %s396, %s398
    %p405 = scmp.eq.s32.totalorder %s31, 3
    %p406 = por %p404, %p405
    %p407 = scmp.ne.s32.totalorder %s398, %s399
    %p408 = scmp.eq.s32.totalorder %s31, 0
    %p409 = por %p407, %p408
    %p410 = scmp.ne.s32.totalorder %s398, %s399
    %p411 = scmp.eq.s32.totalorder %s32, 3
    %p412 = por %p410, %p411
    %p414 = scmp.ne.s32.totalorder %s399, %s413
    %p415 = scmp.eq.s32.totalorder %s32, 0
    %p416 = por %p414, %p415
    %s418 = sadd.s32 %s417, 1
    %p421 = scmp.eq.s32.totalorder %s26, 3
    %p422 = scmp.ne.s32.totalorder %s417, %s419
    %p423 = scmp.eq.s32.totalorder %s26, 0
    %p424 = por %p422, %p423
    %p425 = scmp.ne.s32.totalorder %s417, %s419
    %p426 = scmp.eq.s32.totalorder %s31, 3
    %p427 = por %p425, %p426
    %p428 = scmp.ne.s32.totalorder %s419, %s420
    %p429 = scmp.eq.s32.totalorder %s31, 0
    %p430 = por %p428, %p429
    %p431 = scmp.ne.s32.totalorder %s419, %s420
    %p432 = scmp.eq.s32.totalorder %s32, 3
    %p433 = por %p431, %p432
    %p435 = scmp.ne.s32.totalorder %s420, %s434
    %p436 = scmp.eq.s32.totalorder %s32, 0
    %p437 = por %p435, %p436
    %s439 = sadd.s32 %s438, 1
    %p442 = scmp.eq.s32.totalorder %s26, 3
    %p443 = scmp.ne.s32.totalorder %s438, %s440
    %p444 = scmp.eq.s32.totalorder %s26, 0
    %p445 = por %p443, %p444
    %p446 = scmp.ne.s32.totalorder %s438, %s440
    %p447 = scmp.eq.s32.totalorder %s31, 3
    %p448 = por %p446, %p447
    %p449 = scmp.ne.s32.totalorder %s440, %s441
    %p450 = scmp.eq.s32.totalorder %s31, 0
    %p451 = por %p449, %p450
    %p452 = scmp.ne.s32.totalorder %s440, %s441
    %p453 = scmp.eq.s32.totalorder %s32, 3
    %p454 = por %p452, %p453
    %p456 = scmp.ne.s32.totalorder %s441, %s455
    %p457 = scmp.eq.s32.totalorder %s32, 0
    %p458 = por %p456, %p457
    %s459 = ssub.s32 %s26, %s33
    %p460 = scmp.eq.s32.totalorder %s459, 0
    %s462 = sadd.s32 %s461, 1
    %s463 = scalar_select %p460, %s461, %s462
    %p466 = pneg %p460
    %p467 = scmp.eq.s32.totalorder %s26, 3
    %p468 = por %p466, %p467
    %p469 = scmp.ne.s32.totalorder %s461, %s464
    %p470 = scmp.eq.s32.totalorder %s26, 0
    %p471 = por %p469, %p470
    %p472 = scmp.ne.s32.totalorder %s461, %s464
    %p473 = scmp.eq.s32.totalorder %s31, 3
    %p474 = por %p472, %p473
    %p475 = scmp.ne.s32.totalorder %s464, %s465
    %p476 = scmp.eq.s32.totalorder %s31, 0
    %p477 = por %p475, %p476
    %p478 = scmp.ne.s32.totalorder %s464, %s465
    %p479 = scmp.eq.s32.totalorder %s32, 3
    %p480 = por %p478, %p479
    %p482 = scmp.ne.s32.totalorder %s465, %s481
    %p483 = scmp.eq.s32.totalorder %s32, 0
    %p484 = por %p482, %p483
    %p485 = scmp.le.s32.totalorder 1, %s26
    %p486 = scmp.lt.s32.totalorder %s26, 5
    %p487 = pnand %p485, %p486
    %p488 = pneg %p487
    // Predicated region
    $region9: #{tpu_custom_call.1} parent=5 // pred_check
      _
    $region10: #{tpu_custom_call.1} parent=5 // pred_check_branch
      %490 = sbr.rel (%p487) target = $region12
    $region11: #{tpu_custom_call.1} parent=5 // pred_region
      %s491 = ssub.s32 %s26, 1
      // Predicated region
      $region13: #{tpu_custom_call.1} parent=11 // pred_check
        %p492 = pneg %p73
      $region14: #{tpu_custom_call.1} parent=11 // pred_check_branch
        %494 = sbr.rel (%p492) target = $region16
      $region15: #{tpu_custom_call.1} parent=11 // pred_region
        _
      $region16: #{tpu_custom_call.1} parent=11 // pred_fallthru
        _
      // Predicated region
      $region17: #{tpu_custom_call.1} parent=11 // pred_check
        %p495 = pneg %p94
      $region18: #{tpu_custom_call.1} parent=11 // pred_check_branch
        %497 = sbr.rel (%p495) target = $region20
      $region19: #{tpu_custom_call.1} parent=11 // pred_region
        _
      $region20: #{tpu_custom_call.1} parent=11 // pred_fallthru
        _
      // Predicated region
      $region21: #{tpu_custom_call.1} parent=11 // pred_check
        %p498 = pneg %p115
      $region22: #{tpu_custom_call.1} parent=11 // pred_check_branch
        %500 = sbr.rel (%p498) target = $region24
      $region23: #{tpu_custom_call.1} parent=11 // pred_region
        _
      $region24: #{tpu_custom_call.1} parent=11 // pred_fallthru
        _
      // Predicated region
      $region25: #{tpu_custom_call.1} parent=11 // pred_check
        %p501 = pneg %p136
      $region26: #{tpu_custom_call.1} parent=11 // pred_check_branch
        %503 = sbr.rel (%p501) target = $region28
      $region27: #{tpu_custom_call.1} parent=11 // pred_region
        _
      $region28: #{tpu_custom_call.1} parent=11 // pred_fallthru
        _
      // Predicated region
      $region29: #{tpu_custom_call.1} parent=11 // pred_check
        %p504 = pneg %p157
      $region30: #{tpu_custom_call.1} parent=11 // pred_check_branch
        %506 = sbr.rel (%p504) target = $region32
      $region31: #{tpu_custom_call.1} parent=11 // pred_region
        _
      $region32: #{tpu_custom_call.1} parent=11 // pred_fallthru
        _
      // Predicated region
      $region33: #{tpu_custom_call.1} parent=11 // pred_check
        %p507 = pneg %p178
      $region34: #{tpu_custom_call.1} parent=11 // pred_check_branch
        %509 = sbr.rel (%p507) target = $region36
      $region35: #{tpu_custom_call.1} parent=11 // pred_region
        _
      $region36: #{tpu_custom_call.1} parent=11 // pred_fallthru
        _
      // Predicated region
      $region37: #{tpu_custom_call.1} parent=11 // pred_check
        %p510 = pneg %p199
      $region38: #{tpu_custom_call.1} parent=11 // pred_check_branch
        %512 = sbr.rel (%p510) target = $region40
      $region39: #{tpu_custom_call.1} parent=11 // pred_region
        _
      $region40: #{tpu_custom_call.1} parent=11 // pred_fallthru
        _
      // Predicated region
      $region41: #{tpu_custom_call.1} parent=11 // pred_check
        %p513 = pneg %p220
      $region42: #{tpu_custom_call.1} parent=11 // pred_check_branch
        %515 = sbr.rel (%p513) target = $region44
      $region43: #{tpu_custom_call.1} parent=11 // pred_region
        _
      $region44: #{tpu_custom_call.1} parent=11 // pred_fallthru
        _
      // Predicated region
      $region45: #{tpu_custom_call.1} parent=11 // pred_check
        %p516 = pneg %p241
      $region46: #{tpu_custom_call.1} parent=11 // pred_check_branch
        %518 = sbr.rel (%p516) target = $region48
      $region47: #{tpu_custom_call.1} parent=11 // pred_region
        _
      $region48: #{tpu_custom_call.1} parent=11 // pred_fallthru
        _
      // Predicated region
      $region49: #{tpu_custom_call.1} parent=11 // pred_check
        %p519 = pneg %p262
      $region50: #{tpu_custom_call.1} parent=11 // pred_check_branch
        %521 = sbr.rel (%p519) target = $region52
      $region51: #{tpu_custom_call.1} parent=11 // pred_region
        _
      $region52: #{tpu_custom_call.1} parent=11 // pred_fallthru
        _
      // Predicated region
      $region53: #{tpu_custom_call.1} parent=11 // pred_check
        %p522 = pneg %p283
      $region54: #{tpu_custom_call.1} parent=11 // pred_check_branch
        %524 = sbr.rel (%p522) target = $region56
      $region55: #{tpu_custom_call.1} parent=11 // pred_region
        _
      $region56: #{tpu_custom_call.1} parent=11 // pred_fallthru
        _
      // Predicated region
      $region57: #{tpu_custom_call.1} parent=11 // pred_check
        %p525 = pneg %p304
      $region58: #{tpu_custom_call.1} parent=11 // pred_check_branch
        %527 = sbr.rel (%p525) target = $region60
      $region59: #{tpu_custom_call.1} parent=11 // pred_region
        _
      $region60: #{tpu_custom_call.1} parent=11 // pred_fallthru
        _
      // Predicated region
      $region61: #{tpu_custom_call.1} parent=11 // pred_check
        %p528 = pneg %p325
      $region62: #{tpu_custom_call.1} parent=11 // pred_check_branch
        %530 = sbr.rel (%p528) target = $region64
      $region63: #{tpu_custom_call.1} parent=11 // pred_region
        _
      $region64: #{tpu_custom_call.1} parent=11 // pred_fallthru
        _
      // Predicated region
      $region65: #{tpu_custom_call.1} parent=11 // pred_check
        %p531 = pneg %p346
      $region66: #{tpu_custom_call.1} parent=11 // pred_check_branch
        %533 = sbr.rel (%p531) target = $region68
      $region67: #{tpu_custom_call.1} parent=11 // pred_region
        _
      $region68: #{tpu_custom_call.1} parent=11 // pred_fallthru
        _
      // Predicated region
      $region69: #{tpu_custom_call.1} parent=11 // pred_check
        %p534 = pneg %p367
      $region70: #{tpu_custom_call.1} parent=11 // pred_check_branch
        %536 = sbr.rel (%p534) target = $region72
      $region71: #{tpu_custom_call.1} parent=11 // pred_region
        _
      $region72: #{tpu_custom_call.1} parent=11 // pred_fallthru
        _
      // Predicated region
      $region73: #{tpu_custom_call.1} parent=11 // pred_check
        %p537 = pneg %p388
      $region74: #{tpu_custom_call.1} parent=11 // pred_check_branch
        %539 = sbr.rel (%p537) target = $region76
      $region75: #{tpu_custom_call.1} parent=11 // pred_region
        _
      $region76: #{tpu_custom_call.1} parent=11 // pred_fallthru
        _
      // Predicated region
      $region77: #{tpu_custom_call.1} parent=11 // pred_check
        %p540 = pneg %p409
      $region78: #{tpu_custom_call.1} parent=11 // pred_check_branch
        %542 = sbr.rel (%p540) target = $region80
      $region79: #{tpu_custom_call.1} parent=11 // pred_region
        _
      $region80: #{tpu_custom_call.1} parent=11 // pred_fallthru
        _
      // Predicated region
      $region81: #{tpu_custom_call.1} parent=11 // pred_check
        %p543 = pneg %p430
      $region82: #{tpu_custom_call.1} parent=11 // pred_check_branch
        %545 = sbr.rel (%p543) target = $region84
      $region83: #{tpu_custom_call.1} parent=11 // pred_region
        _
      $region84: #{tpu_custom_call.1} parent=11 // pred_fallthru
        _
      // Predicated region
      $region85: #{tpu_custom_call.1} parent=11 // pred_check
        %p546 = pneg %p451
      $region86: #{tpu_custom_call.1} parent=11 // pred_check_branch
        %548 = sbr.rel (%p546) target = $region88
      $region87: #{tpu_custom_call.1} parent=11 // pred_region
        _
      $region88: #{tpu_custom_call.1} parent=11 // pred_fallthru
        _
    $region12: #{tpu_custom_call.1} parent=5 // pred_fallthru
      _
    %p549 = scmp.lt.s32.totalorder %s26, 4
    // Predicated region
    $region89: #{tpu_custom_call.1} parent=5 // pred_check
      %p550 = pneg %p549
    $region90: #{tpu_custom_call.1} parent=5 // pred_check_branch
      %552 = sbr.rel (%p550) target = $region92
    $region91: #{tpu_custom_call.1} parent=5 // pred_region
      // Predicated region
      $region93: #{tpu_custom_call.1} parent=91 // pred_check
        %p553 = pneg %p46
      $region94: #{tpu_custom_call.1} parent=91 // pred_check_branch
        %555 = sbr.rel (%p553) target = $region96
      $region95: #{tpu_custom_call.1} parent=91 // pred_region
        %s556 = smul.u32 64, %s26
        %p557 = scmp.lt.s32.totalorder %s556, 255
        %s558 = scalar_select %p557, %s556, 255
        %s559 = smul.addr %s558, 8
        %s560 = scalar_lea.vmem %s0, %s559
        %s561 = smul.u32 64, %s26
      $region96: #{tpu_custom_call.1} parent=91 // pred_fallthru
        _
    $region92: #{tpu_custom_call.1} parent=5 // pred_fallthru
      _
    %p562 = scmp.le.s32.totalorder 1, %s26
    %p563 = scmp.lt.s32.totalorder %s26, 5
    %p564 = pnand %p562, %p563
    %p565 = pneg %p564
    // Predicated region
    $region97: #{tpu_custom_call.1} parent=5 // pred_check
      _
    $region98: #{tpu_custom_call.1} parent=5 // pred_check_branch
      %567 = sbr.rel (%p564) target = $region100
    $region99: #{tpu_custom_call.1} parent=5 // pred_region
      %s568 = ssub.s32 %s26, 1
      %s569 = smul.u32 64, %s31
      %p570 = scmp.lt.s32.totalorder %s569, 255
      %s571 = scalar_select %p570, %s569, 255
      %s572 = smul.addr %s571, 8
      %s573 = scalar_lea.vmem %s0, %s572
      %p574 = pneg %p52
      %p575 = pneg %p49
      %p576 = pneg %p73
      %p577 = pneg %p70
      %p578 = pneg %p94
      %p579 = pneg %p91
      %p580 = pneg %p115
      %p581 = pneg %p112
      %p582 = pneg %p136
      %p583 = pneg %p133
      %p584 = pneg %p157
      %p585 = pneg %p154
      %p586 = pneg %p178
      %p587 = pneg %p175
      %p588 = pneg %p199
      %p589 = pneg %p196
      %p590 = pneg %p220
      %p591 = pneg %p217
      %p592 = pneg %p241
      %p593 = pneg %p238
      %p594 = pneg %p262
      %p595 = pneg %p259
      %p596 = pneg %p283
      %p597 = pneg %p280
      %p598 = pneg %p304
      %p599 = pneg %p301
      %p600 = pneg %p325
      %p601 = pneg %p322
      %p602 = pneg %p346
      %p603 = pneg %p343
      %p604 = pneg %p367
      %p605 = pneg %p364
      %p606 = pneg %p388
      %p607 = pneg %p385
      %p608 = pneg %p409
      %p609 = pneg %p406
      %p610 = pneg %p430
      %p611 = pneg %p427
      %p612 = pneg %p451
      %p613 = pneg %p448
      %p614 = pneg %p477
      %p615 = pneg %p474
      %s616 = smul.u32 64, %s31
      %p617 = scmp.lt.s32.totalorder %s616, 255
      %s618 = scalar_select %p617, %s616, 255
      %s619 = smul.addr %s618, 8
      %s620 = scalar_lea.vmem %s20, %s619
      %s621 = smul.u32 64, %s31
      %p622 = scmp.lt.s32.totalorder %s621, 255
      %s623 = scalar_select %p622, %s621, 255
      %s624 = smul.addr %s623, 8
      %s625 = scalar_lea.vmem %s0, %s624
      %s626 = smul.u32 64, %s31
      %s627 = smul.u32 64, %s31
      %p628 = scmp.lt.s32.totalorder %s627, 255
      %s629 = scalar_select %p628, %s627, 255
      %s630 = smul.addr %s629, 8
      %s631 = scalar_lea.vmem %s20, %s630
      %s632 = smul.u32 64, %s31
      %v633 = vld [vmem:[%s625] sm:$0xff]
      %v634 = vld [vmem:[%s625 + $0x8] sm:$0xff]
      %v635 = vld [vmem:[%s625 + $0x10] sm:$0xff]
      %v636 = vld [vmem:[%s625 + $0x18] sm:$0xff]
      %v637 = vld [vmem:[%s625 + $0x20] sm:$0xff]
      %v638 = vld [vmem:[%s625 + $0x28] sm:$0xff]
      %v639 = vld [vmem:[%s625 + $0x30] sm:$0xff]
      %v640 = vld [vmem:[%s625 + $0x38] sm:$0xff]
      %v641 = vld [vmem:[%s625 + $0x40] sm:$0xff]
      %v642 = vld [vmem:[%s625 + $0x48] sm:$0xff]
      %v643 = vld [vmem:[%s625 + $0x50] sm:$0xff]
      %v644 = vld [vmem:[%s625 + $0x58] sm:$0xff]
      %v645 = vld [vmem:[%s625 + $0x60] sm:$0xff]
      %v646 = vld [vmem:[%s625 + $0x68] sm:$0xff]
      %v647 = vld [vmem:[%s625 + $0x70] sm:$0xff]
      %v648 = vld [vmem:[%s625 + $0x78] sm:$0xff]
      %v649 = vld [vmem:[%s625 + $0x80] sm:$0xff]
      %v650 = vld [vmem:[%s625 + $0x88] sm:$0xff]
      %v651 = vld [vmem:[%s625 + $0x90] sm:$0xff]
      %v652 = vld [vmem:[%s625 + $0x98] sm:$0xff]
      %v653 = vld [vmem:[%s625 + $0xa0] sm:$0xff]
      %v654 = vld [vmem:[%s625 + $0xa8] sm:$0xff]
      %v655 = vld [vmem:[%s625 + $0xb0] sm:$0xff]
      %v656 = vld [vmem:[%s625 + $0xb8] sm:$0xff]
      %v657 = vld [vmem:[%s625 + $0xc0] sm:$0xff]
      %v658 = vld [vmem:[%s625 + $0xc8] sm:$0xff]
      %v659 = vld [vmem:[%s625 + $0xd0] sm:$0xff]
      %v660 = vld [vmem:[%s625 + $0xd8] sm:$0xff]
      %v661 = vld [vmem:[%s625 + $0xe0] sm:$0xff]
      %v662 = vld [vmem:[%s625 + $0xe8] sm:$0xff]
      %v663 = vld [vmem:[%s625 + $0xf0] sm:$0xff]
      %v664 = vld [vmem:[%s625 + $0xf8] sm:$0xff]
      %v665 = vld [vmem:[%s625 + $0x100] sm:$0xff]
      %v666 = vld [vmem:[%s625 + $0x108] sm:$0xff]
      %v667 = vld [vmem:[%s625 + $0x110] sm:$0xff]
      %v668 = vld [vmem:[%s625 + $0x118] sm:$0xff]
      %v669 = vld [vmem:[%s625 + $0x120] sm:$0xff]
      %v670 = vld [vmem:[%s625 + $0x128] sm:$0xff]
      %v671 = vld [vmem:[%s625 + $0x130] sm:$0xff]
      %v672 = vld [vmem:[%s625 + $0x138] sm:$0xff]
      %v673 = vld [vmem:[%s625 + $0x140] sm:$0xff]
      %v674 = vld [vmem:[%s625 + $0x148] sm:$0xff]
      %v675 = vld [vmem:[%s625 + $0x150] sm:$0xff]
      %v676 = vld [vmem:[%s625 + $0x158] sm:$0xff]
      %v677 = vld [vmem:[%s625 + $0x160] sm:$0xff]
      %v678 = vld [vmem:[%s625 + $0x168] sm:$0xff]
      %v679 = vld [vmem:[%s625 + $0x170] sm:$0xff]
      %v680 = vld [vmem:[%s625 + $0x178] sm:$0xff]
      %v681 = vld [vmem:[%s625 + $0x180] sm:$0xff]
      %v682 = vld [vmem:[%s625 + $0x188] sm:$0xff]
      %v683 = vld [vmem:[%s625 + $0x190] sm:$0xff]
      %v684 = vld [vmem:[%s625 + $0x198] sm:$0xff]
      %v685 = vld [vmem:[%s625 + $0x1a0] sm:$0xff]
      %v686 = vld [vmem:[%s625 + $0x1a8] sm:$0xff]
      %v687 = vld [vmem:[%s625 + $0x1b0] sm:$0xff]
      %v688 = vld [vmem:[%s625 + $0x1b8] sm:$0xff]
      %v689 = vld [vmem:[%s625 + $0x1c0] sm:$0xff]
      %v690 = vld [vmem:[%s625 + $0x1c8] sm:$0xff]
      %v691 = vld [vmem:[%s625 + $0x1d0] sm:$0xff]
      %v692 = vld [vmem:[%s625 + $0x1d8] sm:$0xff]
      %v693 = vld [vmem:[%s625 + $0x1e0] sm:$0xff]
      %v694 = vld [vmem:[%s625 + $0x1e8] sm:$0xff]
      %v695 = vld [vmem:[%s625 + $0x1f0] sm:$0xff]
      %v696 = vld [vmem:[%s625 + $0x1f8] sm:$0xff]
      %v697 = vld [vmem:[%s1] sm:$0x7]
      %v698 = vld [vmem:[%s2] sm:$0x1]
      %700 = vset.pattern.permute.xlu0 0
      %701 = vperm.xlu0 %700, %v633
      %v702 = vpop.permute.xlu0 %701
      %705 = vset.pattern.permute.xlu0 0
      %706 = vperm.xlu0 %705, %v634
      %v707 = vpop.permute.xlu0 %706
      %710 = vset.pattern.permute.xlu0 0
      %711 = vperm.xlu0 %710, %v635
      %v712 = vpop.permute.xlu0 %711
      %715 = vset.pattern.permute.xlu0 0
      %716 = vperm.xlu0 %715, %v636
      %v717 = vpop.permute.xlu0 %716
      %720 = vset.pattern.permute.xlu0 0
      %721 = vperm.xlu0 %720, %v637
      %v722 = vpop.permute.xlu0 %721
      %725 = vset.pattern.permute.xlu0 0
      %726 = vperm.xlu0 %725, %v638
      %v727 = vpop.permute.xlu0 %726
      %730 = vset.pattern.permute.xlu0 0
      %731 = vperm.xlu0 %730, %v639
      %v732 = vpop.permute.xlu0 %731
      %735 = vset.pattern.permute.xlu0 0
      %736 = vperm.xlu0 %735, %v640
      %v737 = vpop.permute.xlu0 %736
      %740 = vset.pattern.permute.xlu0 0
      %741 = vperm.xlu0 %740, %v641
      %v742 = vpop.permute.xlu0 %741
      %745 = vset.pattern.permute.xlu0 0
      %746 = vperm.xlu0 %745, %v642
      %v747 = vpop.permute.xlu0 %746
      %750 = vset.pattern.permute.xlu0 0
      %751 = vperm.xlu0 %750, %v643
      %v752 = vpop.permute.xlu0 %751
      %755 = vset.pattern.permute.xlu0 0
      %756 = vperm.xlu0 %755, %v644
      %v757 = vpop.permute.xlu0 %756
      %760 = vset.pattern.permute.xlu0 0
      %761 = vperm.xlu0 %760, %v645
      %v762 = vpop.permute.xlu0 %761
      %765 = vset.pattern.permute.xlu0 0
      %766 = vperm.xlu0 %765, %v646
      %v767 = vpop.permute.xlu0 %766
      %770 = vset.pattern.permute.xlu0 0
      %771 = vperm.xlu0 %770, %v647
      %v772 = vpop.permute.xlu0 %771
      %775 = vset.pattern.permute.xlu0 0
      %776 = vperm.xlu0 %775, %v648
      %v777 = vpop.permute.xlu0 %776
      %780 = vset.pattern.permute.xlu0 0
      %781 = vperm.xlu0 %780, %v649
      %v782 = vpop.permute.xlu0 %781
      %785 = vset.pattern.permute.xlu0 0
      %786 = vperm.xlu0 %785, %v650
      %v787 = vpop.permute.xlu0 %786
      %790 = vset.pattern.permute.xlu0 0
      %791 = vperm.xlu0 %790, %v651
      %v792 = vpop.permute.xlu0 %791
      %795 = vset.pattern.permute.xlu0 0
      %796 = vperm.xlu0 %795, %v652
      %v797 = vpop.permute.xlu0 %796
      %800 = vset.pattern.permute.xlu0 0
      %801 = vperm.xlu0 %800, %v653
      %v802 = vpop.permute.xlu0 %801
      %805 = vset.pattern.permute.xlu0 0
      %806 = vperm.xlu0 %805, %v654
      %v807 = vpop.permute.xlu0 %806
      %810 = vset.pattern.permute.xlu0 0
      %811 = vperm.xlu0 %810, %v655
      %v812 = vpop.permute.xlu0 %811
      %815 = vset.pattern.permute.xlu0 0
      %816 = vperm.xlu0 %815, %v656
      %v817 = vpop.permute.xlu0 %816
      %820 = vset.pattern.permute.xlu0 0
      %821 = vperm.xlu0 %820, %v657
      %v822 = vpop.permute.xlu0 %821
      %825 = vset.pattern.permute.xlu0 0
      %826 = vperm.xlu0 %825, %v658
      %v827 = vpop.permute.xlu0 %826
      %830 = vset.pattern.permute.xlu0 0
      %831 = vperm.xlu0 %830, %v659
      %v832 = vpop.permute.xlu0 %831
      %835 = vset.pattern.permute.xlu0 0
      %836 = vperm.xlu0 %835, %v660
      %v837 = vpop.permute.xlu0 %836
      %840 = vset.pattern.permute.xlu0 0
      %841 = vperm.xlu0 %840, %v661
      %v842 = vpop.permute.xlu0 %841
      %845 = vset.pattern.permute.xlu0 0
      %846 = vperm.xlu0 %845, %v662
      %v847 = vpop.permute.xlu0 %846
      %850 = vset.pattern.permute.xlu0 0
      %851 = vperm.xlu0 %850, %v663
      %v852 = vpop.permute.xlu0 %851
      %855 = vset.pattern.permute.xlu0 0
      %856 = vperm.xlu0 %855, %v664
      %v857 = vpop.permute.xlu0 %856
      %860 = vset.pattern.permute.xlu0 0
      %861 = vperm.xlu0 %860, %v665
      %v862 = vpop.permute.xlu0 %861
      %865 = vset.pattern.permute.xlu0 0
      %866 = vperm.xlu0 %865, %v666
      %v867 = vpop.permute.xlu0 %866
      %870 = vset.pattern.permute.xlu0 0
      %871 = vperm.xlu0 %870, %v667
      %v872 = vpop.permute.xlu0 %871
      %875 = vset.pattern.permute.xlu0 0
      %876 = vperm.xlu0 %875, %v668
      %v877 = vpop.permute.xlu0 %876
      %880 = vset.pattern.permute.xlu0 0
      %881 = vperm.xlu0 %880, %v669
      %v882 = vpop.permute.xlu0 %881
      %885 = vset.pattern.permute.xlu0 0
      %886 = vperm.xlu0 %885, %v670
      %v887 = vpop.permute.xlu0 %886
      %890 = vset.pattern.permute.xlu0 0
      %891 = vperm.xlu0 %890, %v671
      %v892 = vpop.permute.xlu0 %891
      %895 = vset.pattern.permute.xlu0 0
      %896 = vperm.xlu0 %895, %v672
      %v897 = vpop.permute.xlu0 %896
      %900 = vset.pattern.permute.xlu0 0
      %901 = vperm.xlu0 %900, %v673
      %v902 = vpop.permute.xlu0 %901
      %905 = vset.pattern.permute.xlu0 0
      %906 = vperm.xlu0 %905, %v674
      %v907 = vpop.permute.xlu0 %906
      %910 = vset.pattern.permute.xlu0 0
      %911 = vperm.xlu0 %910, %v675
      %v912 = vpop.permute.xlu0 %911
      %915 = vset.pattern.permute.xlu0 0
      %916 = vperm.xlu0 %915, %v676
      %v917 = vpop.permute.xlu0 %916
      %920 = vset.pattern.permute.xlu0 0
      %921 = vperm.xlu0 %920, %v677
      %v922 = vpop.permute.xlu0 %921
      %925 = vset.pattern.permute.xlu0 0
      %926 = vperm.xlu0 %925, %v678
      %v927 = vpop.permute.xlu0 %926
      %930 = vset.pattern.permute.xlu0 0
      %931 = vperm.xlu0 %930, %v679
      %v932 = vpop.permute.xlu0 %931
      %935 = vset.pattern.permute.xlu0 0
      %936 = vperm.xlu0 %935, %v680
      %v937 = vpop.permute.xlu0 %936
      %940 = vset.pattern.permute.xlu0 0
      %941 = vperm.xlu0 %940, %v681
      %v942 = vpop.permute.xlu0 %941
      %945 = vset.pattern.permute.xlu0 0
      %946 = vperm.xlu0 %945, %v682
      %v947 = vpop.permute.xlu0 %946
      %950 = vset.pattern.permute.xlu0 0
      %951 = vperm.xlu0 %950, %v683
      %v952 = vpop.permute.xlu0 %951
      %955 = vset.pattern.permute.xlu0 0
      %956 = vperm.xlu0 %955, %v684
      %v957 = vpop.permute.xlu0 %956
      %960 = vset.pattern.permute.xlu0 0
      %961 = vperm.xlu0 %960, %v685
      %v962 = vpop.permute.xlu0 %961
      %965 = vset.pattern.permute.xlu0 0
      %966 = vperm.xlu0 %965, %v686
      %v967 = vpop.permute.xlu0 %966
      %970 = vset.pattern.permute.xlu0 0
      %971 = vperm.xlu0 %970, %v687
      %v972 = vpop.permute.xlu0 %971
      %975 = vset.pattern.permute.xlu0 0
      %976 = vperm.xlu0 %975, %v688
      %v977 = vpop.permute.xlu0 %976
      %980 = vset.pattern.permute.xlu0 0
      %981 = vperm.xlu0 %980, %v689
      %v982 = vpop.permute.xlu0 %981
      %985 = vset.pattern.permute.xlu0 0
      %986 = vperm.xlu0 %985, %v690
      %v987 = vpop.permute.xlu0 %986
      %990 = vset.pattern.permute.xlu0 0
      %991 = vperm.xlu0 %990, %v691
      %v992 = vpop.permute.xlu0 %991
      %995 = vset.pattern.permute.xlu0 0
      %996 = vperm.xlu0 %995, %v692
      %v997 = vpop.permute.xlu0 %996
      %1000 = vset.pattern.permute.xlu0 0
      %1001 = vperm.xlu0 %1000, %v693
      %v1002 = vpop.permute.xlu0 %1001
      %1005 = vset.pattern.permute.xlu0 0
      %1006 = vperm.xlu0 %1005, %v694
      %v1007 = vpop.permute.xlu0 %1006
      %1010 = vset.pattern.permute.xlu0 0
      %1011 = vperm.xlu0 %1010, %v695
      %v1012 = vpop.permute.xlu0 %1011
      %1015 = vset.pattern.permute.xlu0 0
      %1016 = vperm.xlu0 %1015, %v696
      %v1017 = vpop.permute.xlu0 %1016
      %v1019 = vlaneseq
      %v1020 = vshrl.u32 %v1019, 7
      %v1021 = vsub.s32 0, %v1020
      %v1022 = vrot.slane %v697, %v1021
      %v1023 = vmul.f32 %v702, %v1022
      %v1024 = vmul.f32 %v707, %v1022
      %v1025 = vmul.f32 %v712, %v1022
      %v1026 = vmul.f32 %v717, %v1022
      %v1027 = vmul.f32 %v722, %v1022
      %v1028 = vmul.f32 %v727, %v1022
      %v1029 = vmul.f32 %v732, %v1022
      %v1030 = vmul.f32 %v737, %v1022
      %v1031 = vmul.f32 %v742, %v1022
      %v1032 = vmul.f32 %v747, %v1022
      %v1033 = vmul.f32 %v752, %v1022
      %v1034 = vmul.f32 %v757, %v1022
      %v1035 = vmul.f32 %v762, %v1022
      %v1036 = vmul.f32 %v767, %v1022
      %v1037 = vmul.f32 %v772, %v1022
      %v1038 = vmul.f32 %v777, %v1022
      %v1039 = vmul.f32 %v782, %v1022
      %v1040 = vmul.f32 %v787, %v1022
      %v1041 = vmul.f32 %v792, %v1022
      %v1042 = vmul.f32 %v797, %v1022
      %v1043 = vmul.f32 %v802, %v1022
      %v1044 = vmul.f32 %v807, %v1022
      %v1045 = vmul.f32 %v812, %v1022
      %v1046 = vmul.f32 %v817, %v1022
      %v1047 = vmul.f32 %v822, %v1022
      %v1048 = vmul.f32 %v827, %v1022
      %v1049 = vmul.f32 %v832, %v1022
      %v1050 = vmul.f32 %v837, %v1022
      %v1051 = vmul.f32 %v842, %v1022
      %v1052 = vmul.f32 %v847, %v1022
      %v1053 = vmul.f32 %v852, %v1022
      %v1054 = vmul.f32 %v857, %v1022
      %v1055 = vmul.f32 %v862, %v1022
      %v1056 = vmul.f32 %v867, %v1022
      %v1057 = vmul.f32 %v872, %v1022
      %v1058 = vmul.f32 %v877, %v1022
      %v1059 = vmul.f32 %v882, %v1022
      %v1060 = vmul.f32 %v887, %v1022
      %v1061 = vmul.f32 %v892, %v1022
      %v1062 = vmul.f32 %v897, %v1022
      %v1063 = vmul.f32 %v902, %v1022
      %v1064 = vmul.f32 %v907, %v1022
      %v1065 = vmul.f32 %v912, %v1022
      %v1066 = vmul.f32 %v917, %v1022
      %v1067 = vmul.f32 %v922, %v1022
      %v1068 = vmul.f32 %v927, %v1022
      %v1069 = vmul.f32 %v932, %v1022
      %v1070 = vmul.f32 %v937, %v1022
      %v1071 = vmul.f32 %v942, %v1022
      %v1072 = vmul.f32 %v947, %v1022
      %v1073 = vmul.f32 %v952, %v1022
      %v1074 = vmul.f32 %v957, %v1022
      %v1075 = vmul.f32 %v962, %v1022
      %v1076 = vmul.f32 %v967, %v1022
      %v1077 = vmul.f32 %v972, %v1022
      %v1078 = vmul.f32 %v977, %v1022
      %v1079 = vmul.f32 %v982, %v1022
      %v1080 = vmul.f32 %v987, %v1022
      %v1081 = vmul.f32 %v992, %v1022
      %v1082 = vmul.f32 %v997, %v1022
      %v1083 = vmul.f32 %v1002, %v1022
      %v1084 = vmul.f32 %v1007, %v1022
      %v1085 = vmul.f32 %v1012, %v1022
      %v1086 = vmul.f32 %v1017, %v1022
      %1087 = vset.pattern.permute.xlu0 1
      %1088 = vperm.xlu0 %1087, %v633
      %v1089 = vpop.permute.xlu0 %1088
      %1091 = vset.pattern.permute.xlu0 1
      %1092 = vperm.xlu0 %1091, %v634
      %v1093 = vpop.permute.xlu0 %1092
      %1095 = vset.pattern.permute.xlu0 1
      %1096 = vperm.xlu0 %1095, %v635
      %v1097 = vpop.permute.xlu0 %1096
      %1099 = vset.pattern.permute.xlu0 1
      %1100 = vperm.xlu0 %1099, %v636
      %v1101 = vpop.permute.xlu0 %1100
      %1103 = vset.pattern.permute.xlu0 1
      %1104 = vperm.xlu0 %1103, %v637
      %v1105 = vpop.permute.xlu0 %1104
      %1107 = vset.pattern.permute.xlu0 1
      %1108 = vperm.xlu0 %1107, %v638
      %v1109 = vpop.permute.xlu0 %1108
      %1111 = vset.pattern.permute.xlu0 1
      %1112 = vperm.xlu0 %1111, %v639
      %v1113 = vpop.permute.xlu0 %1112
      %1115 = vset.pattern.permute.xlu0 1
      %1116 = vperm.xlu0 %1115, %v640
      %v1117 = vpop.permute.xlu0 %1116
      %1119 = vset.pattern.permute.xlu0 1
      %1120 = vperm.xlu0 %1119, %v641
      %v1121 = vpop.permute.xlu0 %1120
      %1123 = vset.pattern.permute.xlu0 1
      %1124 = vperm.xlu0 %1123, %v642
      %v1125 = vpop.permute.xlu0 %1124
      %1127 = vset.pattern.permute.xlu0 1
      %1128 = vperm.xlu0 %1127, %v643
      %v1129 = vpop.permute.xlu0 %1128
      %1131 = vset.pattern.permute.xlu0 1
      %1132 = vperm.xlu0 %1131, %v644
      %v1133 = vpop.permute.xlu0 %1132
      %1135 = vset.pattern.permute.xlu0 1
      %1136 = vperm.xlu0 %1135, %v645
      %v1137 = vpop.permute.xlu0 %1136
      %1139 = vset.pattern.permute.xlu0 1
      %1140 = vperm.xlu0 %1139, %v646
      %v1141 = vpop.permute.xlu0 %1140
      %1143 = vset.pattern.permute.xlu0 1
      %1144 = vperm.xlu0 %1143, %v647
      %v1145 = vpop.permute.xlu0 %1144
      %1147 = vset.pattern.permute.xlu0 1
      %1148 = vperm.xlu0 %1147, %v648
      %v1149 = vpop.permute.xlu0 %1148
      %1151 = vset.pattern.permute.xlu0 1
      %1152 = vperm.xlu0 %1151, %v649
      %v1153 = vpop.permute.xlu0 %1152
      %1155 = vset.pattern.permute.xlu0 1
      %1156 = vperm.xlu0 %1155, %v650
      %v1157 = vpop.permute.xlu0 %1156
      %1159 = vset.pattern.permute.xlu0 1
      %1160 = vperm.xlu0 %1159, %v651
      %v1161 = vpop.permute.xlu0 %1160
      %1163 = vset.pattern.permute.xlu0 1
      %1164 = vperm.xlu0 %1163, %v652
      %v1165 = vpop.permute.xlu0 %1164
      %1167 = vset.pattern.permute.xlu0 1
      %1168 = vperm.xlu0 %1167, %v653
      %v1169 = vpop.permute.xlu0 %1168
      %1171 = vset.pattern.permute.xlu0 1
      %1172 = vperm.xlu0 %1171, %v654
      %v1173 = vpop.permute.xlu0 %1172
      %1175 = vset.pattern.permute.xlu0 1
      %1176 = vperm.xlu0 %1175, %v655
      %v1177 = vpop.permute.xlu0 %1176
      %1179 = vset.pattern.permute.xlu0 1
      %1180 = vperm.xlu0 %1179, %v656
      %v1181 = vpop.permute.xlu0 %1180
      %1183 = vset.pattern.permute.xlu0 1
      %1184 = vperm.xlu0 %1183, %v657
      %v1185 = vpop.permute.xlu0 %1184
      %1187 = vset.pattern.permute.xlu0 1
      %1188 = vperm.xlu0 %1187, %v658
      %v1189 = vpop.permute.xlu0 %1188
      %1191 = vset.pattern.permute.xlu0 1
      %1192 = vperm.xlu0 %1191, %v659
      %v1193 = vpop.permute.xlu0 %1192
      %1195 = vset.pattern.permute.xlu0 1
      %1196 = vperm.xlu0 %1195, %v660
      %v1197 = vpop.permute.xlu0 %1196
      %1199 = vset.pattern.permute.xlu0 1
      %1200 = vperm.xlu0 %1199, %v661
      %v1201 = vpop.permute.xlu0 %1200
      %1203 = vset.pattern.permute.xlu0 1
      %1204 = vperm.xlu0 %1203, %v662
      %v1205 = vpop.permute.xlu0 %1204
      %1207 = vset.pattern.permute.xlu0 1
      %1208 = vperm.xlu0 %1207, %v663
      %v1209 = vpop.permute.xlu0 %1208
      %1211 = vset.pattern.permute.xlu0 1
      %1212 = vperm.xlu0 %1211, %v664
      %v1213 = vpop.permute.xlu0 %1212
      %1215 = vset.pattern.permute.xlu0 1
      %1216 = vperm.xlu0 %1215, %v665
      %v1217 = vpop.permute.xlu0 %1216
      %1219 = vset.pattern.permute.xlu0 1
      %1220 = vperm.xlu0 %1219, %v666
      %v1221 = vpop.permute.xlu0 %1220
      %1223 = vset.pattern.permute.xlu0 1
      %1224 = vperm.xlu0 %1223, %v667
      %v1225 = vpop.permute.xlu0 %1224
      %1227 = vset.pattern.permute.xlu0 1
      %1228 = vperm.xlu0 %1227, %v668
      %v1229 = vpop.permute.xlu0 %1228
      %1231 = vset.pattern.permute.xlu0 1
      %1232 = vperm.xlu0 %1231, %v669
      %v1233 = vpop.permute.xlu0 %1232
      %1235 = vset.pattern.permute.xlu0 1
      %1236 = vperm.xlu0 %1235, %v670
      %v1237 = vpop.permute.xlu0 %1236
      %1239 = vset.pattern.permute.xlu0 1
      %1240 = vperm.xlu0 %1239, %v671
      %v1241 = vpop.permute.xlu0 %1240
      %1243 = vset.pattern.permute.xlu0 1
      %1244 = vperm.xlu0 %1243, %v672
      %v1245 = vpop.permute.xlu0 %1244
      %1247 = vset.pattern.permute.xlu0 1
      %1248 = vperm.xlu0 %1247, %v673
      %v1249 = vpop.permute.xlu0 %1248
      %1251 = vset.pattern.permute.xlu0 1
      %1252 = vperm.xlu0 %1251, %v674
      %v1253 = vpop.permute.xlu0 %1252
      %1255 = vset.pattern.permute.xlu0 1
      %1256 = vperm.xlu0 %1255, %v675
      %v1257 = vpop.permute.xlu0 %1256
      %1259 = vset.pattern.permute.xlu0 1
      %1260 = vperm.xlu0 %1259, %v676
      %v1261 = vpop.permute.xlu0 %1260
      %1263 = vset.pattern.permute.xlu0 1
      %1264 = vperm.xlu0 %1263, %v677
      %v1265 = vpop.permute.xlu0 %1264
      %1267 = vset.pattern.permute.xlu0 1
      %1268 = vperm.xlu0 %1267, %v678
      %v1269 = vpop.permute.xlu0 %1268
      %1271 = vset.pattern.permute.xlu0 1
      %1272 = vperm.xlu0 %1271, %v679
      %v1273 = vpop.permute.xlu0 %1272
      %1275 = vset.pattern.permute.xlu0 1
      %1276 = vperm.xlu0 %1275, %v680
      %v1277 = vpop.permute.xlu0 %1276
      %1279 = vset.pattern.permute.xlu0 1
      %1280 = vperm.xlu0 %1279, %v681
      %v1281 = vpop.permute.xlu0 %1280
      %1283 = vset.pattern.permute.xlu0 1
      %1284 = vperm.xlu0 %1283, %v682
      %v1285 = vpop.permute.xlu0 %1284
      %1287 = vset.pattern.permute.xlu0 1
      %1288 = vperm.xlu0 %1287, %v683
      %v1289 = vpop.permute.xlu0 %1288
      %1291 = vset.pattern.permute.xlu0 1
      %1292 = vperm.xlu0 %1291, %v684
      %v1293 = vpop.permute.xlu0 %1292
      %1295 = vset.pattern.permute.xlu0 1
      %1296 = vperm.xlu0 %1295, %v685
      %v1297 = vpop.permute.xlu0 %1296
      %1299 = vset.pattern.permute.xlu0 1
      %1300 = vperm.xlu0 %1299, %v686
      %v1301 = vpop.permute.xlu0 %1300
      %1303 = vset.pattern.permute.xlu0 1
      %1304 = vperm.xlu0 %1303, %v687
      %v1305 = vpop.permute.xlu0 %1304
      %1307 = vset.pattern.permute.xlu0 1
      %1308 = vperm.xlu0 %1307, %v688
      %v1309 = vpop.permute.xlu0 %1308
      %1311 = vset.pattern.permute.xlu0 1
      %1312 = vperm.xlu0 %1311, %v689
      %v1313 = vpop.permute.xlu0 %1312
      %1315 = vset.pattern.permute.xlu0 1
      %1316 = vperm.xlu0 %1315, %v690
      %v1317 = vpop.permute.xlu0 %1316
      %1319 = vset.pattern.permute.xlu0 1
      %1320 = vperm.xlu0 %1319, %v691
      %v1321 = vpop.permute.xlu0 %1320
      %1323 = vset.pattern.permute.xlu0 1
      %1324 = vperm.xlu0 %1323, %v692
      %v1325 = vpop.permute.xlu0 %1324
      %1327 = vset.pattern.permute.xlu0 1
      %1328 = vperm.xlu0 %1327, %v693
      %v1329 = vpop.permute.xlu0 %1328
      %1331 = vset.pattern.permute.xlu0 1
      %1332 = vperm.xlu0 %1331, %v694
      %v1333 = vpop.permute.xlu0 %1332
      %1335 = vset.pattern.permute.xlu0 1
      %1336 = vperm.xlu0 %1335, %v695
      %v1337 = vpop.permute.xlu0 %1336
      %1339 = vset.pattern.permute.xlu0 1
      %1340 = vperm.xlu0 %1339, %v696
      %v1341 = vpop.permute.xlu0 %1340
      %v1343 = vlaneseq
      %v1344 = vshrl.u32 %v1343, 7
      %v1345 = vsub.s32 1, %v1344
      %v1346 = vrot.slane %v697, %v1345
      %v1347 = vmul.f32 %v1089, %v1346
      %v1348 = vmul.f32 %v1093, %v1346
      %v1349 = vmul.f32 %v1097, %v1346
      %v1350 = vmul.f32 %v1101, %v1346
      %v1351 = vmul.f32 %v1105, %v1346
      %v1352 = vmul.f32 %v1109, %v1346
      %v1353 = vmul.f32 %v1113, %v1346
      %v1354 = vmul.f32 %v1117, %v1346
      %v1355 = vmul.f32 %v1121, %v1346
      %v1356 = vmul.f32 %v1125, %v1346
      %v1357 = vmul.f32 %v1129, %v1346
      %v1358 = vmul.f32 %v1133, %v1346
      %v1359 = vmul.f32 %v1137, %v1346
      %v1360 = vmul.f32 %v1141, %v1346
      %v1361 = vmul.f32 %v1145, %v1346
      %v1362 = vmul.f32 %v1149, %v1346
      %v1363 = vmul.f32 %v1153, %v1346
      %v1364 = vmul.f32 %v1157, %v1346
      %v1365 = vmul.f32 %v1161, %v1346
      %v1366 = vmul.f32 %v1165, %v1346
      %v1367 = vmul.f32 %v1169, %v1346
      %v1368 = vmul.f32 %v1173, %v1346
      %v1369 = vmul.f32 %v1177, %v1346
      %v1370 = vmul.f32 %v1181, %v1346
      %v1371 = vmul.f32 %v1185, %v1346
      %v1372 = vmul.f32 %v1189, %v1346
      %v1373 = vmul.f32 %v1193, %v1346
      %v1374 = vmul.f32 %v1197, %v1346
      %v1375 = vmul.f32 %v1201, %v1346
      %v1376 = vmul.f32 %v1205, %v1346
      %v1377 = vmul.f32 %v1209, %v1346
      %v1378 = vmul.f32 %v1213, %v1346
      %v1379 = vmul.f32 %v1217, %v1346
      %v1380 = vmul.f32 %v1221, %v1346
      %v1381 = vmul.f32 %v1225, %v1346
      %v1382 = vmul.f32 %v1229, %v1346
      %v1383 = vmul.f32 %v1233, %v1346
      %v1384 = vmul.f32 %v1237, %v1346
      %v1385 = vmul.f32 %v1241, %v1346
      %v1386 = vmul.f32 %v1245, %v1346
      %v1387 = vmul.f32 %v1249, %v1346
      %v1388 = vmul.f32 %v1253, %v1346
      %v1389 = vmul.f32 %v1257, %v1346
      %v1390 = vmul.f32 %v1261, %v1346
      %v1391 = vmul.f32 %v1265, %v1346
      %v1392 = vmul.f32 %v1269, %v1346
      %v1393 = vmul.f32 %v1273, %v1346
      %v1394 = vmul.f32 %v1277, %v1346
      %v1395 = vmul.f32 %v1281, %v1346
      %v1396 = vmul.f32 %v1285, %v1346
      %v1397 = vmul.f32 %v1289, %v1346
      %v1398 = vmul.f32 %v1293, %v1346
      %v1399 = vmul.f32 %v1297, %v1346
      %v1400 = vmul.f32 %v1301, %v1346
      %v1401 = vmul.f32 %v1305, %v1346
      %v1402 = vmul.f32 %v1309, %v1346
      %v1403 = vmul.f32 %v1313, %v1346
      %v1404 = vmul.f32 %v1317, %v1346
      %v1405 = vmul.f32 %v1321, %v1346
      %v1406 = vmul.f32 %v1325, %v1346
      %v1407 = vmul.f32 %v1329, %v1346
      %v1408 = vmul.f32 %v1333, %v1346
      %v1409 = vmul.f32 %v1337, %v1346
      %v1410 = vmul.f32 %v1341, %v1346
      %v1411 = vadd.f32 %v1023, %v1347
      %v1412 = vadd.f32 %v1024, %v1348
      %v1413 = vadd.f32 %v1025, %v1349
      %v1414 = vadd.f32 %v1026, %v1350
      %v1415 = vadd.f32 %v1027, %v1351
      %v1416 = vadd.f32 %v1028, %v1352
      %v1417 = vadd.f32 %v1029, %v1353
      %v1418 = vadd.f32 %v1030, %v1354
      %v1419 = vadd.f32 %v1031, %v1355
      %v1420 = vadd.f32 %v1032, %v1356
      %v1421 = vadd.f32 %v1033, %v1357
      %v1422 = vadd.f32 %v1034, %v1358
      %v1423 = vadd.f32 %v1035, %v1359
      %v1424 = vadd.f32 %v1036, %v1360
      %v1425 = vadd.f32 %v1037, %v1361
      %v1426 = vadd.f32 %v1038, %v1362
      %v1427 = vadd.f32 %v1039, %v1363
      %v1428 = vadd.f32 %v1040, %v1364
      %v1429 = vadd.f32 %v1041, %v1365
      %v1430 = vadd.f32 %v1042, %v1366
      %v1431 = vadd.f32 %v1043, %v1367
      %v1432 = vadd.f32 %v1044, %v1368
      %v1433 = vadd.f32 %v1045, %v1369
      %v1434 = vadd.f32 %v1046, %v1370
      %v1435 = vadd.f32 %v1047, %v1371
      %v1436 = vadd.f32 %v1048, %v1372
      %v1437 = vadd.f32 %v1049, %v1373
      %v1438 = vadd.f32 %v1050, %v1374
      %v1439 = vadd.f32 %v1051, %v1375
      %v1440 = vadd.f32 %v1052, %v1376
      %v1441 = vadd.f32 %v1053, %v1377
      %v1442 = vadd.f32 %v1054, %v1378
      %v1443 = vadd.f32 %v1055, %v1379
      %v1444 = vadd.f32 %v1056, %v1380
      %v1445 = vadd.f32 %v1057, %v1381
      %v1446 = vadd.f32 %v1058, %v1382
      %v1447 = vadd.f32 %v1059, %v1383
      %v1448 = vadd.f32 %v1060, %v1384
      %v1449 = vadd.f32 %v1061, %v1385
      %v1450 = vadd.f32 %v1062, %v1386
      %v1451 = vadd.f32 %v1063, %v1387
      %v1452 = vadd.f32 %v1064, %v1388
      %v1453 = vadd.f32 %v1065, %v1389
      %v1454 = vadd.f32 %v1066, %v1390
      %v1455 = vadd.f32 %v1067, %v1391
      %v1456 = vadd.f32 %v1068, %v1392
      %v1457 = vadd.f32 %v1069, %v1393
      %v1458 = vadd.f32 %v1070, %v1394
      %v1459 = vadd.f32 %v1071, %v1395
      %v1460 = vadd.f32 %v1072, %v1396
      %v1461 = vadd.f32 %v1073, %v1397
      %v1462 = vadd.f32 %v1074, %v1398
      %v1463 = vadd.f32 %v1075, %v1399
      %v1464 = vadd.f32 %v1076, %v1400
      %v1465 = vadd.f32 %v1077, %v1401
      %v1466 = vadd.f32 %v1078, %v1402
      %v1467 = vadd.f32 %v1079, %v1403
      %v1468 = vadd.f32 %v1080, %v1404
      %v1469 = vadd.f32 %v1081, %v1405
      %v1470 = vadd.f32 %v1082, %v1406
      %v1471 = vadd.f32 %v1083, %v1407
      %v1472 = vadd.f32 %v1084, %v1408
      %v1473 = vadd.f32 %v1085, %v1409
      %v1474 = vadd.f32 %v1086, %v1410
      %1475 = vset.pattern.permute.xlu0 2
      %1476 = vperm.xlu0 %1475, %v633
      %v1477 = vpop.permute.xlu0 %1476
      %1479 = vset.pattern.permute.xlu0 2
      %1480 = vperm.xlu0 %1479, %v634
      %v1481 = vpop.permute.xlu0 %1480
      %1483 = vset.pattern.permute.xlu0 2
      %1484 = vperm.xlu0 %1483, %v635
      %v1485 = vpop.permute.xlu0 %1484
      %1487 = vset.pattern.permute.xlu0 2
      %1488 = vperm.xlu0 %1487, %v636
      %v1489 = vpop.permute.xlu0 %1488
      %1491 = vset.pattern.permute.xlu0 2
      %1492 = vperm.xlu0 %1491, %v637
      %v1493 = vpop.permute.xlu0 %1492
      %1495 = vset.pattern.permute.xlu0 2
      %1496 = vperm.xlu0 %1495, %v638
      %v1497 = vpop.permute.xlu0 %1496
      %1499 = vset.pattern.permute.xlu0 2
      %1500 = vperm.xlu0 %1499, %v639
      %v1501 = vpop.permute.xlu0 %1500
      %1503 = vset.pattern.permute.xlu0 2
      %1504 = vperm.xlu0 %1503, %v640
      %v1505 = vpop.permute.xlu0 %1504
      %1507 = vset.pattern.permute.xlu0 2
      %1508 = vperm.xlu0 %1507, %v641
      %v1509 = vpop.permute.xlu0 %1508
      %1511 = vset.pattern.permute.xlu0 2
      %1512 = vperm.xlu0 %1511, %v642
      %v1513 = vpop.permute.xlu0 %1512
      %1515 = vset.pattern.permute.xlu0 2
      %1516 = vperm.xlu0 %1515, %v643
      %v1517 = vpop.permute.xlu0 %1516
      %1519 = vset.pattern.permute.xlu0 2
      %1520 = vperm.xlu0 %1519, %v644
      %v1521 = vpop.permute.xlu0 %1520
      %1523 = vset.pattern.permute.xlu0 2
      %1524 = vperm.xlu0 %1523, %v645
      %v1525 = vpop.permute.xlu0 %1524
      %1527 = vset.pattern.permute.xlu0 2
      %1528 = vperm.xlu0 %1527, %v646
      %v1529 = vpop.permute.xlu0 %1528
      %1531 = vset.pattern.permute.xlu0 2
      %1532 = vperm.xlu0 %1531, %v647
      %v1533 = vpop.permute.xlu0 %1532
      %1535 = vset.pattern.permute.xlu0 2
      %1536 = vperm.xlu0 %1535, %v648
      %v1537 = vpop.permute.xlu0 %1536
      %1539 = vset.pattern.permute.xlu0 2
      %1540 = vperm.xlu0 %1539, %v649
      %v1541 = vpop.permute.xlu0 %1540
      %1543 = vset.pattern.permute.xlu0 2
      %1544 = vperm.xlu0 %1543, %v650
      %v1545 = vpop.permute.xlu0 %1544
      %1547 = vset.pattern.permute.xlu0 2
      %1548 = vperm.xlu0 %1547, %v651
      %v1549 = vpop.permute.xlu0 %1548
      %1551 = vset.pattern.permute.xlu0 2
      %1552 = vperm.xlu0 %1551, %v652
      %v1553 = vpop.permute.xlu0 %1552
      %1555 = vset.pattern.permute.xlu0 2
      %1556 = vperm.xlu0 %1555, %v653
      %v1557 = vpop.permute.xlu0 %1556
      %1559 = vset.pattern.permute.xlu0 2
      %1560 = vperm.xlu0 %1559, %v654
      %v1561 = vpop.permute.xlu0 %1560
      %1563 = vset.pattern.permute.xlu0 2
      %1564 = vperm.xlu0 %1563, %v655
      %v1565 = vpop.permute.xlu0 %1564
      %1567 = vset.pattern.permute.xlu0 2
      %1568 = vperm.xlu0 %1567, %v656
      %v1569 = vpop.permute.xlu0 %1568
      %1571 = vset.pattern.permute.xlu0 2
      %1572 = vperm.xlu0 %1571, %v657
      %v1573 = vpop.permute.xlu0 %1572
      %1575 = vset.pattern.permute.xlu0 2
      %1576 = vperm.xlu0 %1575, %v658
      %v1577 = vpop.permute.xlu0 %1576
      %1579 = vset.pattern.permute.xlu0 2
      %1580 = vperm.xlu0 %1579, %v659
      %v1581 = vpop.permute.xlu0 %1580
      %1583 = vset.pattern.permute.xlu0 2
      %1584 = vperm.xlu0 %1583, %v660
      %v1585 = vpop.permute.xlu0 %1584
      %1587 = vset.pattern.permute.xlu0 2
      %1588 = vperm.xlu0 %1587, %v661
      %v1589 = vpop.permute.xlu0 %1588
      %1591 = vset.pattern.permute.xlu0 2
      %1592 = vperm.xlu0 %1591, %v662
      %v1593 = vpop.permute.xlu0 %1592
      %1595 = vset.pattern.permute.xlu0 2
      %1596 = vperm.xlu0 %1595, %v663
      %v1597 = vpop.permute.xlu0 %1596
      %1599 = vset.pattern.permute.xlu0 2
      %1600 = vperm.xlu0 %1599, %v664
      %v1601 = vpop.permute.xlu0 %1600
      %1603 = vset.pattern.permute.xlu0 2
      %1604 = vperm.xlu0 %1603, %v665
      %v1605 = vpop.permute.xlu0 %1604
      %1607 = vset.pattern.permute.xlu0 2
      %1608 = vperm.xlu0 %1607, %v666
      %v1609 = vpop.permute.xlu0 %1608
      %1611 = vset.pattern.permute.xlu0 2
      %1612 = vperm.xlu0 %1611, %v667
      %v1613 = vpop.permute.xlu0 %1612
      %1615 = vset.pattern.permute.xlu0 2
      %1616 = vperm.xlu0 %1615, %v668
      %v1617 = vpop.permute.xlu0 %1616
      %1619 = vset.pattern.permute.xlu0 2
      %1620 = vperm.xlu0 %1619, %v669
      %v1621 = vpop.permute.xlu0 %1620
      %1623 = vset.pattern.permute.xlu0 2
      %1624 = vperm.xlu0 %1623, %v670
      %v1625 = vpop.permute.xlu0 %1624
      %1627 = vset.pattern.permute.xlu0 2
      %1628 = vperm.xlu0 %1627, %v671
      %v1629 = vpop.permute.xlu0 %1628
      %1631 = vset.pattern.permute.xlu0 2
      %1632 = vperm.xlu0 %1631, %v672
      %v1633 = vpop.permute.xlu0 %1632
      %1635 = vset.pattern.permute.xlu0 2
      %1636 = vperm.xlu0 %1635, %v673
      %v1637 = vpop.permute.xlu0 %1636
      %1639 = vset.pattern.permute.xlu0 2
      %1640 = vperm.xlu0 %1639, %v674
      %v1641 = vpop.permute.xlu0 %1640
      %1643 = vset.pattern.permute.xlu0 2
      %1644 = vperm.xlu0 %1643, %v675
      %v1645 = vpop.permute.xlu0 %1644
      %1647 = vset.pattern.permute.xlu0 2
      %1648 = vperm.xlu0 %1647, %v676
      %v1649 = vpop.permute.xlu0 %1648
      %1651 = vset.pattern.permute.xlu0 2
      %1652 = vperm.xlu0 %1651, %v677
      %v1653 = vpop.permute.xlu0 %1652
      %1655 = vset.pattern.permute.xlu0 2
      %1656 = vperm.xlu0 %1655, %v678
      %v1657 = vpop.permute.xlu0 %1656
      %1659 = vset.pattern.permute.xlu0 2
      %1660 = vperm.xlu0 %1659, %v679
      %v1661 = vpop.permute.xlu0 %1660
      %1663 = vset.pattern.permute.xlu0 2
      %1664 = vperm.xlu0 %1663, %v680
      %v1665 = vpop.permute.xlu0 %1664
      %1667 = vset.pattern.permute.xlu0 2
      %1668 = vperm.xlu0 %1667, %v681
      %v1669 = vpop.permute.xlu0 %1668
      %1671 = vset.pattern.permute.xlu0 2
      %1672 = vperm.xlu0 %1671, %v682
      %v1673 = vpop.permute.xlu0 %1672
      %1675 = vset.pattern.permute.xlu0 2
      %1676 = vperm.xlu0 %1675, %v683
      %v1677 = vpop.permute.xlu0 %1676
      %1679 = vset.pattern.permute.xlu0 2
      %1680 = vperm.xlu0 %1679, %v684
      %v1681 = vpop.permute.xlu0 %1680
      %1683 = vset.pattern.permute.xlu0 2
      %1684 = vperm.xlu0 %1683, %v685
      %v1685 = vpop.permute.xlu0 %1684
      %1687 = vset.pattern.permute.xlu0 2
      %1688 = vperm.xlu0 %1687, %v686
      %v1689 = vpop.permute.xlu0 %1688
      %1691 = vset.pattern.permute.xlu0 2
      %1692 = vperm.xlu0 %1691, %v687
      %v1693 = vpop.permute.xlu0 %1692
      %1695 = vset.pattern.permute.xlu0 2
      %1696 = vperm.xlu0 %1695, %v688
      %v1697 = vpop.permute.xlu0 %1696
      %1699 = vset.pattern.permute.xlu0 2
      %1700 = vperm.xlu0 %1699, %v689
      %v1701 = vpop.permute.xlu0 %1700
      %1703 = vset.pattern.permute.xlu0 2
      %1704 = vperm.xlu0 %1703, %v690
      %v1705 = vpop.permute.xlu0 %1704
      %1707 = vset.pattern.permute.xlu0 2
      %1708 = vperm.xlu0 %1707, %v691
      %v1709 = vpop.permute.xlu0 %1708
      %1711 = vset.pattern.permute.xlu0 2
      %1712 = vperm.xlu0 %1711, %v692
      %v1713 = vpop.permute.xlu0 %1712
      %1715 = vset.pattern.permute.xlu0 2
      %1716 = vperm.xlu0 %1715, %v693
      %v1717 = vpop.permute.xlu0 %1716
      %1719 = vset.pattern.permute.xlu0 2
      %1720 = vperm.xlu0 %1719, %v694
      %v1721 = vpop.permute.xlu0 %1720
      %1723 = vset.pattern.permute.xlu0 2
      %1724 = vperm.xlu0 %1723, %v695
      %v1725 = vpop.permute.xlu0 %1724
      %1727 = vset.pattern.permute.xlu0 2
      %1728 = vperm.xlu0 %1727, %v696
      %v1729 = vpop.permute.xlu0 %1728
      %v1731 = vlaneseq
      %v1732 = vshrl.u32 %v1731, 7
      %v1733 = vsub.s32 2, %v1732
      %v1734 = vrot.slane %v697, %v1733
      %v1735 = vmul.f32 %v1477, %v1734
      %v1736 = vmul.f32 %v1481, %v1734
      %v1737 = vmul.f32 %v1485, %v1734
      %v1738 = vmul.f32 %v1489, %v1734
      %v1739 = vmul.f32 %v1493, %v1734
      %v1740 = vmul.f32 %v1497, %v1734
      %v1741 = vmul.f32 %v1501, %v1734
      %v1742 = vmul.f32 %v1505, %v1734
      %v1743 = vmul.f32 %v1509, %v1734
      %v1744 = vmul.f32 %v1513, %v1734
      %v1745 = vmul.f32 %v1517, %v1734
      %v1746 = vmul.f32 %v1521, %v1734
      %v1747 = vmul.f32 %v1525, %v1734
      %v1748 = vmul.f32 %v1529, %v1734
      %v1749 = vmul.f32 %v1533, %v1734
      %v1750 = vmul.f32 %v1537, %v1734
      %v1751 = vmul.f32 %v1541, %v1734
      %v1752 = vmul.f32 %v1545, %v1734
      %v1753 = vmul.f32 %v1549, %v1734
      %v1754 = vmul.f32 %v1553, %v1734
      %v1755 = vmul.f32 %v1557, %v1734
      %v1756 = vmul.f32 %v1561, %v1734
      %v1757 = vmul.f32 %v1565, %v1734
      %v1758 = vmul.f32 %v1569, %v1734
      %v1759 = vmul.f32 %v1573, %v1734
      %v1760 = vmul.f32 %v1577, %v1734
      %v1761 = vmul.f32 %v1581, %v1734
      %v1762 = vmul.f32 %v1585, %v1734
      %v1763 = vmul.f32 %v1589, %v1734
      %v1764 = vmul.f32 %v1593, %v1734
      %v1765 = vmul.f32 %v1597, %v1734
      %v1766 = vmul.f32 %v1601, %v1734
      %v1767 = vmul.f32 %v1605, %v1734
      %v1768 = vmul.f32 %v1609, %v1734
      %v1769 = vmul.f32 %v1613, %v1734
      %v1770 = vmul.f32 %v1617, %v1734
      %v1771 = vmul.f32 %v1621, %v1734
      %v1772 = vmul.f32 %v1625, %v1734
      %v1773 = vmul.f32 %v1629, %v1734
      %v1774 = vmul.f32 %v1633, %v1734
      %v1775 = vmul.f32 %v1637, %v1734
      %v1776 = vmul.f32 %v1641, %v1734
      %v1777 = vmul.f32 %v1645, %v1734
      %v1778 = vmul.f32 %v1649, %v1734
      %v1779 = vmul.f32 %v1653, %v1734
      %v1780 = vmul.f32 %v1657, %v1734
      %v1781 = vmul.f32 %v1661, %v1734
      %v1782 = vmul.f32 %v1665, %v1734
      %v1783 = vmul.f32 %v1669, %v1734
      %v1784 = vmul.f32 %v1673, %v1734
      %v1785 = vmul.f32 %v1677, %v1734
      %v1786 = vmul.f32 %v1681, %v1734
      %v1787 = vmul.f32 %v1685, %v1734
      %v1788 = vmul.f32 %v1689, %v1734
      %v1789 = vmul.f32 %v1693, %v1734
      %v1790 = vmul.f32 %v1697, %v1734
      %v1791 = vmul.f32 %v1701, %v1734
      %v1792 = vmul.f32 %v1705, %v1734
      %v1793 = vmul.f32 %v1709, %v1734
      %v1794 = vmul.f32 %v1713, %v1734
      %v1795 = vmul.f32 %v1717, %v1734
      %v1796 = vmul.f32 %v1721, %v1734
      %v1797 = vmul.f32 %v1725, %v1734
      %v1798 = vmul.f32 %v1729, %v1734
      %v1799 = vadd.f32 %v1411, %v1735
      %v1800 = vadd.f32 %v1412, %v1736
      %v1801 = vadd.f32 %v1413, %v1737
      %v1802 = vadd.f32 %v1414, %v1738
      %v1803 = vadd.f32 %v1415, %v1739
      %v1804 = vadd.f32 %v1416, %v1740
      %v1805 = vadd.f32 %v1417, %v1741
      %v1806 = vadd.f32 %v1418, %v1742
      %v1807 = vadd.f32 %v1419, %v1743
      %v1808 = vadd.f32 %v1420, %v1744
      %v1809 = vadd.f32 %v1421, %v1745
      %v1810 = vadd.f32 %v1422, %v1746
      %v1811 = vadd.f32 %v1423, %v1747
      %v1812 = vadd.f32 %v1424, %v1748
      %v1813 = vadd.f32 %v1425, %v1749
      %v1814 = vadd.f32 %v1426, %v1750
      %v1815 = vadd.f32 %v1427, %v1751
      %v1816 = vadd.f32 %v1428, %v1752
      %v1817 = vadd.f32 %v1429, %v1753
      %v1818 = vadd.f32 %v1430, %v1754
      %v1819 = vadd.f32 %v1431, %v1755
      %v1820 = vadd.f32 %v1432, %v1756
      %v1821 = vadd.f32 %v1433, %v1757
      %v1822 = vadd.f32 %v1434, %v1758
      %v1823 = vadd.f32 %v1435, %v1759
      %v1824 = vadd.f32 %v1436, %v1760
      %v1825 = vadd.f32 %v1437, %v1761
      %v1826 = vadd.f32 %v1438, %v1762
      %v1827 = vadd.f32 %v1439, %v1763
      %v1828 = vadd.f32 %v1440, %v1764
      %v1829 = vadd.f32 %v1441, %v1765
      %v1830 = vadd.f32 %v1442, %v1766
      %v1831 = vadd.f32 %v1443, %v1767
      %v1832 = vadd.f32 %v1444, %v1768
      %v1833 = vadd.f32 %v1445, %v1769
      %v1834 = vadd.f32 %v1446, %v1770
      %v1835 = vadd.f32 %v1447, %v1771
      %v1836 = vadd.f32 %v1448, %v1772
      %v1837 = vadd.f32 %v1449, %v1773
      %v1838 = vadd.f32 %v1450, %v1774
      %v1839 = vadd.f32 %v1451, %v1775
      %v1840 = vadd.f32 %v1452, %v1776
      %v1841 = vadd.f32 %v1453, %v1777
      %v1842 = vadd.f32 %v1454, %v1778
      %v1843 = vadd.f32 %v1455, %v1779
      %v1844 = vadd.f32 %v1456, %v1780
      %v1845 = vadd.f32 %v1457, %v1781
      %v1846 = vadd.f32 %v1458, %v1782
      %v1847 = vadd.f32 %v1459, %v1783
      %v1848 = vadd.f32 %v1460, %v1784
      %v1849 = vadd.f32 %v1461, %v1785
      %v1850 = vadd.f32 %v1462, %v1786
      %v1851 = vadd.f32 %v1463, %v1787
      %v1852 = vadd.f32 %v1464, %v1788
      %v1853 = vadd.f32 %v1465, %v1789
      %v1854 = vadd.f32 %v1466, %v1790
      %v1855 = vadd.f32 %v1467, %v1791
      %v1856 = vadd.f32 %v1468, %v1792
      %v1857 = vadd.f32 %v1469, %v1793
      %v1858 = vadd.f32 %v1470, %v1794
      %v1859 = vadd.f32 %v1471, %v1795
      %v1860 = vadd.f32 %v1472, %v1796
      %v1861 = vadd.f32 %v1473, %v1797
      %v1862 = vadd.f32 %v1474, %v1798
      %v1864 = vlaneseq
      %v1865 = vshrl.u32 %v1864, 7
      %v1866 = vsub.s32 0, %v1865
      %v1867 = vrot.slane %v698, %v1866
      %v1869 = vadd.f32 %v1799, %v1867
      %v1870 = vadd.f32 %v1800, %v1867
      %v1871 = vadd.f32 %v1801, %v1867
      %v1872 = vadd.f32 %v1802, %v1867
      %v1873 = vadd.f32 %v1803, %v1867
      %v1874 = vadd.f32 %v1804, %v1867
      %v1875 = vadd.f32 %v1805, %v1867
      %v1876 = vadd.f32 %v1806, %v1867
      %v1877 = vadd.f32 %v1807, %v1867
      %v1878 = vadd.f32 %v1808, %v1867
      %v1879 = vadd.f32 %v1809, %v1867
      %v1880 = vadd.f32 %v1810, %v1867
      %v1881 = vadd.f32 %v1811, %v1867
      %v1882 = vadd.f32 %v1812, %v1867
      %v1883 = vadd.f32 %v1813, %v1867
      %v1884 = vadd.f32 %v1814, %v1867
      %v1885 = vadd.f32 %v1815, %v1867
      %v1886 = vadd.f32 %v1816, %v1867
      %v1887 = vadd.f32 %v1817, %v1867
      %v1888 = vadd.f32 %v1818, %v1867
      %v1889 = vadd.f32 %v1819, %v1867
      %v1890 = vadd.f32 %v1820, %v1867
      %v1891 = vadd.f32 %v1821, %v1867
      %v1892 = vadd.f32 %v1822, %v1867
      %v1893 = vadd.f32 %v1823, %v1867
      %v1894 = vadd.f32 %v1824, %v1867
      %v1895 = vadd.f32 %v1825, %v1867
      %v1896 = vadd.f32 %v1826, %v1867
      %v1897 = vadd.f32 %v1827, %v1867
      %v1898 = vadd.f32 %v1828, %v1867
      %v1899 = vadd.f32 %v1829, %v1867
      %v1900 = vadd.f32 %v1830, %v1867
      %v1901 = vadd.f32 %v1831, %v1867
      %v1902 = vadd.f32 %v1832, %v1867
      %v1903 = vadd.f32 %v1833, %v1867
      %v1904 = vadd.f32 %v1834, %v1867
      %v1905 = vadd.f32 %v1835, %v1867
      %v1906 = vadd.f32 %v1836, %v1867
      %v1907 = vadd.f32 %v1837, %v1867
      %v1908 = vadd.f32 %v1838, %v1867
      %v1909 = vadd.f32 %v1839, %v1867
      %v1910 = vadd.f32 %v1840, %v1867
      %v1911 = vadd.f32 %v1841, %v1867
      %v1912 = vadd.f32 %v1842, %v1867
      %v1913 = vadd.f32 %v1843, %v1867
      %v1914 = vadd.f32 %v1844, %v1867
      %v1915 = vadd.f32 %v1845, %v1867
      %v1916 = vadd.f32 %v1846, %v1867
      %v1917 = vadd.f32 %v1847, %v1867
      %v1918 = vadd.f32 %v1848, %v1867
      %v1919 = vadd.f32 %v1849, %v1867
      %v1920 = vadd.f32 %v1850, %v1867
      %v1921 = vadd.f32 %v1851, %v1867
      %v1922 = vadd.f32 %v1852, %v1867
      %v1923 = vadd.f32 %v1853, %v1867
      %v1924 = vadd.f32 %v1854, %v1867
      %v1925 = vadd.f32 %v1855, %v1867
      %v1926 = vadd.f32 %v1856, %v1867
      %v1927 = vadd.f32 %v1857, %v1867
      %v1928 = vadd.f32 %v1858, %v1867
      %v1929 = vadd.f32 %v1859, %v1867
      %v1930 = vadd.f32 %v1860, %v1867
      %v1931 = vadd.f32 %v1861, %v1867
      %v1932 = vadd.f32 %v1862, %v1867
      %v1933 = vmax.f32 %v1869, 0.0
      %v1934 = vmax.f32 %v1870, 0.0
      %v1935 = vmax.f32 %v1871, 0.0
      %v1936 = vmax.f32 %v1872, 0.0
      %v1937 = vmax.f32 %v1873, 0.0
      %v1938 = vmax.f32 %v1874, 0.0
      %v1939 = vmax.f32 %v1875, 0.0
      %v1940 = vmax.f32 %v1876, 0.0
      %v1941 = vmax.f32 %v1877, 0.0
      %v1942 = vmax.f32 %v1878, 0.0
      %v1943 = vmax.f32 %v1879, 0.0
      %v1944 = vmax.f32 %v1880, 0.0
      %v1945 = vmax.f32 %v1881, 0.0
      %v1946 = vmax.f32 %v1882, 0.0
      %v1947 = vmax.f32 %v1883, 0.0
      %v1948 = vmax.f32 %v1884, 0.0
      %v1949 = vmax.f32 %v1885, 0.0
      %v1950 = vmax.f32 %v1886, 0.0
      %v1951 = vmax.f32 %v1887, 0.0
      %v1952 = vmax.f32 %v1888, 0.0
      %v1953 = vmax.f32 %v1889, 0.0
      %v1954 = vmax.f32 %v1890, 0.0
      %v1955 = vmax.f32 %v1891, 0.0
      %v1956 = vmax.f32 %v1892, 0.0
      %v1957 = vmax.f32 %v1893, 0.0
      %v1958 = vmax.f32 %v1894, 0.0
      %v1959 = vmax.f32 %v1895, 0.0
      %v1960 = vmax.f32 %v1896, 0.0
      %v1961 = vmax.f32 %v1897, 0.0
      %v1962 = vmax.f32 %v1898, 0.0
      %v1963 = vmax.f32 %v1899, 0.0
      %v1964 = vmax.f32 %v1900, 0.0
      %v1965 = vmax.f32 %v1901, 0.0
      %v1966 = vmax.f32 %v1902, 0.0
      %v1967 = vmax.f32 %v1903, 0.0
      %v1968 = vmax.f32 %v1904, 0.0
      %v1969 = vmax.f32 %v1905, 0.0
      %v1970 = vmax.f32 %v1906, 0.0
      %v1971 = vmax.f32 %v1907, 0.0
      %v1972 = vmax.f32 %v1908, 0.0
      %v1973 = vmax.f32 %v1909, 0.0
      %v1974 = vmax.f32 %v1910, 0.0
      %v1975 = vmax.f32 %v1911, 0.0
      %v1976 = vmax.f32 %v1912, 0.0
      %v1977 = vmax.f32 %v1913, 0.0
      %v1978 = vmax.f32 %v1914, 0.0
      %v1979 = vmax.f32 %v1915, 0.0
      %v1980 = vmax.f32 %v1916, 0.0
      %v1981 = vmax.f32 %v1917, 0.0
      %v1982 = vmax.f32 %v1918, 0.0
      %v1983 = vmax.f32 %v1919, 0.0
      %v1984 = vmax.f32 %v1920, 0.0
      %v1985 = vmax.f32 %v1921, 0.0
      %v1986 = vmax.f32 %v1922, 0.0
      %v1987 = vmax.f32 %v1923, 0.0
      %v1988 = vmax.f32 %v1924, 0.0
      %v1989 = vmax.f32 %v1925, 0.0
      %v1990 = vmax.f32 %v1926, 0.0
      %v1991 = vmax.f32 %v1927, 0.0
      %v1992 = vmax.f32 %v1928, 0.0
      %v1993 = vmax.f32 %v1929, 0.0
      %v1994 = vmax.f32 %v1930, 0.0
      %v1995 = vmax.f32 %v1931, 0.0
      %v1996 = vmax.f32 %v1932, 0.0
      %v1997 = vld [vmem:[%s3] sm:$0xff]
      %v1998 = vld [vmem:[%s3 + $0x8] sm:$0xff]
      %v1999 = vld [vmem:[%s3 + $0x10] sm:$0xff]
      %v2000 = vld [vmem:[%s3 + $0x18] sm:$0xff]
      %v2001 = vld [vmem:[%s3 + $0x20] sm:$0xff]
      %v2002 = vld [vmem:[%s3 + $0x28] sm:$0xff]
      %v2003 = vld [vmem:[%s3 + $0x30] sm:$0xff]
      %v2004 = vld [vmem:[%s3 + $0x38] sm:$0xff]
      %v2005 = vld [vmem:[%s3 + $0x40] sm:$0xff]
      %v2006 = vld [vmem:[%s3 + $0x48] sm:$0xff]
      %v2007 = vld [vmem:[%s3 + $0x50] sm:$0xff]
      %v2008 = vld [vmem:[%s3 + $0x58] sm:$0xff]
      %v2009 = vld [vmem:[%s3 + $0x60] sm:$0xff]
      %v2010 = vld [vmem:[%s3 + $0x68] sm:$0xff]
      %v2011 = vld [vmem:[%s3 + $0x70] sm:$0xff]
      %v2012 = vld [vmem:[%s3 + $0x78] sm:$0xff]
      %v2013 = vld [vmem:[%s4] sm:$0x1]
      %v2015 = vlaneseq
      %v2016 = vshrl.u32 %v2015, 7
      %v2017 = vsub.s32 0, %v2016
      %v2018 = vrot.slane %v2013, %v2017
      %2020 = vmatprep.subr.mxu0 0.0
      %2021 = vmatpush1.msra.mxu0 %v1997
      %2022 = vmatprep.subr.mxu0 0.0
      %2023 = vmatpush1.msra.mxu0 %v1998
      %2024 = vmatprep.subr.mxu0 0.0
      %2025 = vmatpush1.msra.mxu0 %v1999
      %2026 = vmatprep.subr.mxu0 0.0
      %2027 = vmatpush1.msra.mxu0 %v2000
      %2028 = vmatprep.subr.mxu0 0.0
      %2029 = vmatpush1.msra.mxu0 %v2001
      %2030 = vmatprep.subr.mxu0 0.0
      %2031 = vmatpush1.msra.mxu0 %v2002
      %2032 = vmatprep.subr.mxu0 0.0
      %2033 = vmatpush1.msra.mxu0 %v2003
      %2034 = vmatprep.subr.mxu0 0.0
      %2035 = vmatpush1.msra.mxu0 %v2004
      %2036 = vmatprep.subr.mxu0 0.0
      %2037 = vmatpush1.msra.mxu0 %v2005
      %2038 = vmatprep.subr.mxu0 0.0
      %2039 = vmatpush1.msra.mxu0 %v2006
      %2040 = vmatprep.subr.mxu0 0.0
      %2041 = vmatpush1.msra.mxu0 %v2007
      %2042 = vmatprep.subr.mxu0 0.0
      %2043 = vmatpush1.msra.mxu0 %v2008
      %2044 = vmatprep.subr.mxu0 0.0
      %2045 = vmatpush1.msra.mxu0 %v2009
      %2046 = vmatprep.subr.mxu0 0.0
      %2047 = vmatpush1.msra.mxu0 %v2010
      %2048 = vmatprep.subr.mxu0 0.0
      %2049 = vmatpush1.msra.mxu0 %v2011
      %2050 = vmatprep.subr.mxu0 0.0
      %2051 = vmatpush1.msra.mxu0 %v2012
      %2052 = vmatprep.subr.mxu0 0.0
      %2053 = vmatpush1.msra.mxu0 0.0
      %2054 = vmatprep.subr.mxu0 0.0
      %2055 = vmatpush1.msra.mxu0 0.0
      %2056 = vmatprep.subr.mxu0 0.0
      %2057 = vmatpush1.msra.mxu0 0.0
      %2058 = vmatprep.subr.mxu0 0.0
      %2059 = vmatpush1.msra.mxu0 0.0
      %2060 = vmatprep.subr.mxu0 0.0
      %2061 = vmatpush1.msra.mxu0 0.0
      %2062 = vmatprep.subr.mxu0 0.0
      %2063 = vmatpush1.msra.mxu0 0.0
      %2064 = vmatprep.subr.mxu0 0.0
      %2065 = vmatpush1.msra.mxu0 0.0
      %2066 = vmatprep.subr.mxu0 0.0
      %2067 = vmatpush1.msra.mxu0 0.0
      %2068 = vmatprep.subr.mxu0 0.0
      %2069 = vmatpush1.msra.mxu0 0.0
      %2070 = vmatprep.subr.mxu0 0.0
      %2071 = vmatpush1.msra.mxu0 0.0
      %2072 = vmatprep.subr.mxu0 0.0
      %2073 = vmatpush1.msra.mxu0 0.0
      %2074 = vmatprep.subr.mxu0 0.0
      %2075 = vmatpush1.msra.mxu0 0.0
      %2076 = vmatprep.subr.mxu0 0.0
      %2077 = vmatpush1.msra.mxu0 0.0
      %2078 = vmatprep.subr.mxu0 0.0
      %2079 = vmatpush1.msra.mxu0 0.0
      %2080 = vmatprep.subr.mxu0 0.0
      %2081 = vmatpush1.msra.mxu0 0.0
      %2082 = vmatprep.subr.mxu0 0.0
      %2083 = vmatpush1.msra.mxu0 0.0
      %2084 = vmatprep.mubr.f32.mxu0 0.0
      %2085 = vmatmul.mubr.f32.gmra.mrb[0].mxu0 %v1933
      %v2086 = vpop.f32.mrb[0].mxu0
      %v2087 = vadd.f32 %v2018, %v2086
      %v2088 = vpop.f32.mrb[0].mxu0
      %2089 = vmatprep.mubr.f32.mxu0 0.0
      %2090 = vmatmul.mubr.f32.gmra.mrb[0].mxu0 %v1934
      %v2091 = vpop.f32.mrb[0].mxu0
      %v2092 = vadd.f32 %v2018, %v2091
      %v2093 = vpop.f32.mrb[0].mxu0
      %2094 = vmatprep.mubr.f32.mxu0 0.0
      %2095 = vmatmul.mubr.f32.gmra.mrb[0].mxu0 %v1935
      %v2096 = vpop.f32.mrb[0].mxu0
      %v2097 = vadd.f32 %v2018, %v2096
      %v2098 = vpop.f32.mrb[0].mxu0
      %2099 = vmatprep.mubr.f32.mxu0 0.0
      %2100 = vmatmul.mubr.f32.gmra.mrb[0].mxu0 %v1936
      %v2101 = vpop.f32.mrb[0].mxu0
      %v2102 = vadd.f32 %v2018, %v2101
      %v2103 = vpop.f32.mrb[0].mxu0
      %2104 = vmatprep.mubr.f32.mxu0 0.0
      %2105 = vmatmul.mubr.f32.gmra.mrb[0].mxu0 %v1937
      %v2106 = vpop.f32.mrb[0].mxu0
      %v2107 = vadd.f32 %v2018, %v2106
      %v2108 = vpop.f32.mrb[0].mxu0
      %2109 = vmatprep.mubr.f32.mxu0 0.0
      %2110 = vmatmul.mubr.f32.gmra.mrb[0].mxu0 %v1938
      %v2111 = vpop.f32.mrb[0].mxu0
      %v2112 = vadd.f32 %v2018, %v2111
      %v2113 = vpop.f32.mrb[0].mxu0
      %2114 = vmatprep.mubr.f32.mxu0 0.0
      %2115 = vmatmul.mubr.f32.gmra.mrb[0].mxu0 %v1939
      %v2116 = vpop.f32.mrb[0].mxu0
      %v2117 = vadd.f32 %v2018, %v2116
      %v2118 = vpop.f32.mrb[0].mxu0
      %2119 = vmatprep.mubr.f32.mxu0 0.0
      %2120 = vmatmul.mubr.f32.gmra.mrb[0].mxu0 %v1940
      %v2121 = vpop.f32.mrb[0].mxu0
      %v2122 = vadd.f32 %v2018, %v2121
      %v2123 = vpop.f32.mrb[0].mxu0
      %2124 = vmatprep.mubr.f32.mxu0 0.0
      %2125 = vmatmul.mubr.f32.gmra.mrb[0].mxu0 %v1941
      %v2126 = vpop.f32.mrb[0].mxu0
      %v2127 = vadd.f32 %v2018, %v2126
      %v2128 = vpop.f32.mrb[0].mxu0
      %2129 = vmatprep.mubr.f32.mxu0 0.0
      %2130 = vmatmul.mubr.f32.gmra.mrb[0].mxu0 %v1942
      %v2131 = vpop.f32.mrb[0].mxu0
      %v2132 = vadd.f32 %v2018, %v2131
      %v2133 = vpop.f32.mrb[0].mxu0
      %2134 = vmatprep.mubr.f32.mxu0 0.0
      %2135 = vmatmul.mubr.f32.gmra.mrb[0].mxu0 %v1943
      %v2136 = vpop.f32.mrb[0].mxu0
      %v2137 = vadd.f32 %v2018, %v2136
      %v2138 = vpop.f32.mrb[0].mxu0
      %2139 = vmatprep.mubr.f32.mxu0 0.0
      %2140 = vmatmul.mubr.f32.gmra.mrb[0].mxu0 %v1944
      %v2141 = vpop.f32.mrb[0].mxu0
      %v2142 = vadd.f32 %v2018, %v2141
      %v2143 = vpop.f32.mrb[0].mxu0
      %2144 = vmatprep.mubr.f32.mxu0 0.0
      %2145 = vmatmul.mubr.f32.gmra.mrb[0].mxu0 %v1945
      %v2146 = vpop.f32.mrb[0].mxu0
      %v2147 = vadd.f32 %v2018, %v2146
      %v2148 = vpop.f32.mrb[0].mxu0
      %2149 = vmatprep.mubr.f32.mxu0 0.0
      %2150 = vmatmul.mubr.f32.gmra.mrb[0].mxu0 %v1946
      %v2151 = vpop.f32.mrb[0].mxu0
      %v2152 = vadd.f32 %v2018, %v2151
      %v2153 = vpop.f32.mrb[0].mxu0
      %2154 = vmatprep.mubr.f32.mxu0 0.0
      %2155 = vmatmul.mubr.f32.gmra.mrb[0].mxu0 %v1947
      %v2156 = vpop.f32.mrb[0].mxu0
      %v2157 = vadd.f32 %v2018, %v2156
      %v2158 = vpop.f32.mrb[0].mxu0
      %2159 = vmatprep.mubr.f32.mxu0 0.0
      %2160 = vmatmul.mubr.f32.gmra.mrb[0].mxu0 %v1948
      %v2161 = vpop.f32.mrb[0].mxu0
      %v2162 = vadd.f32 %v2018, %v2161
      %v2163 = vpop.f32.mrb[0].mxu0
      %2164 = vmatprep.mubr.f32.mxu0 0.0
      %2165 = vmatmul.mubr.f32.gmra.mrb[0].mxu0 %v1949
      %v2166 = vpop.f32.mrb[0].mxu0
      %v2167 = vadd.f32 %v2018, %v2166
      %v2168 = vpop.f32.mrb[0].mxu0
      %2169 = vmatprep.mubr.f32.mxu0 0.0
      %2170 = vmatmul.mubr.f32.gmra.mrb[0].mxu0 %v1950
      %v2171 = vpop.f32.mrb[0].mxu0
      %v2172 = vadd.f32 %v2018, %v2171
      %v2173 = vpop.f32.mrb[0].mxu0
      %2174 = vmatprep.mubr.f32.mxu0 0.0
      %2175 = vmatmul.mubr.f32.gmra.mrb[0].mxu0 %v1951
      %v2176 = vpop.f32.mrb[0].mxu0
      %v2177 = vadd.f32 %v2018, %v2176
      %v2178 = vpop.f32.mrb[0].mxu0
      %2179 = vmatprep.mubr.f32.mxu0 0.0
      %2180 = vmatmul.mubr.f32.gmra.mrb[0].mxu0 %v1952
      %v2181 = vpop.f32.mrb[0].mxu0
      %v2182 = vadd.f32 %v2018, %v2181
      %v2183 = vpop.f32.mrb[0].mxu0
      %2184 = vmatprep.mubr.f32.mxu0 0.0
      %2185 = vmatmul.mubr.f32.gmra.mrb[0].mxu0 %v1953
      %v2186 = vpop.f32.mrb[0].mxu0
      %v2187 = vadd.f32 %v2018, %v2186
      %v2188 = vpop.f32.mrb[0].mxu0
      %2189 = vmatprep.mubr.f32.mxu0 0.0
      %2190 = vmatmul.mubr.f32.gmra.mrb[0].mxu0 %v1954
      %v2191 = vpop.f32.mrb[0].mxu0
      %v2192 = vadd.f32 %v2018, %v2191
      %v2193 = vpop.f32.mrb[0].mxu0
      %2194 = vmatprep.mubr.f32.mxu0 0.0
      %2195 = vmatmul.mubr.f32.gmra.mrb[0].mxu0 %v1955
      %v2196 = vpop.f32.mrb[0].mxu0
      %v2197 = vadd.f32 %v2018, %v2196
      %v2198 = vpop.f32.mrb[0].mxu0
      %2199 = vmatprep.mubr.f32.mxu0 0.0
      %2200 = vmatmul.mubr.f32.gmra.mrb[0].mxu0 %v1956
      %v2201 = vpop.f32.mrb[0].mxu0
      %v2202 = vadd.f32 %v2018, %v2201
      %v2203 = vpop.f32.mrb[0].mxu0
      %2204 = vmatprep.mubr.f32.mxu0 0.0
      %2205 = vmatmul.mubr.f32.gmra.mrb[0].mxu0 %v1957
      %v2206 = vpop.f32.mrb[0].mxu0
      %v2207 = vadd.f32 %v2018, %v2206
      %v2208 = vpop.f32.mrb[0].mxu0
      %2209 = vmatprep.mubr.f32.mxu0 0.0
      %2210 = vmatmul.mubr.f32.gmra.mrb[0].mxu0 %v1958
      %v2211 = vpop.f32.mrb[0].mxu0
      %v2212 = vadd.f32 %v2018, %v2211
      %v2213 = vpop.f32.mrb[0].mxu0
      %2214 = vmatprep.mubr.f32.mxu0 0.0
      %2215 = vmatmul.mubr.f32.gmra.mrb[0].mxu0 %v1959
      %v2216 = vpop.f32.mrb[0].mxu0
      %v2217 = vadd.f32 %v2018, %v2216
      %v2218 = vpop.f32.mrb[0].mxu0
      %2219 = vmatprep.mubr.f32.mxu0 0.0
      %2220 = vmatmul.mubr.f32.gmra.mrb[0].mxu0 %v1960
      %v2221 = vpop.f32.mrb[0].mxu0
      %v2222 = vadd.f32 %v2018, %v2221
      %v2223 = vpop.f32.mrb[0].mxu0
      %2224 = vmatprep.mubr.f32.mxu0 0.0
      %2225 = vmatmul.mubr.f32.gmra.mrb[0].mxu0 %v1961
      %v2226 = vpop.f32.mrb[0].mxu0
      %v2227 = vadd.f32 %v2018, %v2226
      %v2228 = vpop.f32.mrb[0].mxu0
      %2229 = vmatprep.mubr.f32.mxu0 0.0
      %2230 = vmatmul.mubr.f32.gmra.mrb[0].mxu0 %v1962
      %v2231 = vpop.f32.mrb[0].mxu0
      %v2232 = vadd.f32 %v2018, %v2231
      %v2233 = vpop.f32.mrb[0].mxu0
      %2234 = vmatprep.mubr.f32.mxu0 0.0
      %2235 = vmatmul.mubr.f32.gmra.mrb[0].mxu0 %v1963
      %v2236 = vpop.f32.mrb[0].mxu0
      %v2237 = vadd.f32 %v2018, %v2236
      %v2238 = vpop.f32.mrb[0].mxu0
      %2239 = vmatprep.mubr.f32.mxu0 0.0
      %2240 = vmatmul.mubr.f32.gmra.mrb[0].mxu0 %v1964
      %v2241 = vpop.f32.mrb[0].mxu0
      %v2242 = vadd.f32 %v2018, %v2241
      %v2243 = vpop.f32.mrb[0].mxu0
      %2244 = vmatprep.mubr.f32.mxu0 0.0
      %2245 = vmatmul.mubr.f32.gmra.mrb[0].mxu0 %v1965
      %v2246 = vpop.f32.mrb[0].mxu0
      %v2247 = vadd.f32 %v2018, %v2246
      %v2248 = vpop.f32.mrb[0].mxu0
      %2249 = vmatprep.mubr.f32.mxu0 0.0
      %2250 = vmatmul.mubr.f32.gmra.mrb[0].mxu0 %v1966
      %v2251 = vpop.f32.mrb[0].mxu0
      %v2252 = vadd.f32 %v2018, %v2251
      %v2253 = vpop.f32.mrb[0].mxu0
      %2254 = vmatprep.mubr.f32.mxu0 0.0
      %2255 = vmatmul.mubr.f32.gmra.mrb[0].mxu0 %v1967
      %v2256 = vpop.f32.mrb[0].mxu0
      %v2257 = vadd.f32 %v2018, %v2256
      %v2258 = vpop.f32.mrb[0].mxu0
      %2259 = vmatprep.mubr.f32.mxu0 0.0
      %2260 = vmatmul.mubr.f32.gmra.mrb[0].mxu0 %v1968
      %v2261 = vpop.f32.mrb[0].mxu0
      %v2262 = vadd.f32 %v2018, %v2261
      %v2263 = vpop.f32.mrb[0].mxu0
      %2264 = vmatprep.mubr.f32.mxu0 0.0
      %2265 = vmatmul.mubr.f32.gmra.mrb[0].mxu0 %v1969
      %v2266 = vpop.f32.mrb[0].mxu0
      %v2267 = vadd.f32 %v2018, %v2266
      %v2268 = vpop.f32.mrb[0].mxu0
      %2269 = vmatprep.mubr.f32.mxu0 0.0
      %2270 = vmatmul.mubr.f32.gmra.mrb[0].mxu0 %v1970
      %v2271 = vpop.f32.mrb[0].mxu0
      %v2272 = vadd.f32 %v2018, %v2271
      %v2273 = vpop.f32.mrb[0].mxu0
      %2274 = vmatprep.mubr.f32.mxu0 0.0
      %2275 = vmatmul.mubr.f32.gmra.mrb[0].mxu0 %v1971
      %v2276 = vpop.f32.mrb[0].mxu0
      %v2277 = vadd.f32 %v2018, %v2276
      %v2278 = vpop.f32.mrb[0].mxu0
      %2279 = vmatprep.mubr.f32.mxu0 0.0
      %2280 = vmatmul.mubr.f32.gmra.mrb[0].mxu0 %v1972
      %v2281 = vpop.f32.mrb[0].mxu0
      %v2282 = vadd.f32 %v2018, %v2281
      %v2283 = vpop.f32.mrb[0].mxu0
      %2284 = vmatprep.mubr.f32.mxu0 0.0
      %2285 = vmatmul.mubr.f32.gmra.mrb[0].mxu0 %v1973
      %v2286 = vpop.f32.mrb[0].mxu0
      %v2287 = vadd.f32 %v2018, %v2286
      %v2288 = vpop.f32.mrb[0].mxu0
      %2289 = vmatprep.mubr.f32.mxu0 0.0
      %2290 = vmatmul.mubr.f32.gmra.mrb[0].mxu0 %v1974
      %v2291 = vpop.f32.mrb[0].mxu0
      %v2292 = vadd.f32 %v2018, %v2291
      %v2293 = vpop.f32.mrb[0].mxu0
      %2294 = vmatprep.mubr.f32.mxu0 0.0
      %2295 = vmatmul.mubr.f32.gmra.mrb[0].mxu0 %v1975
      %v2296 = vpop.f32.mrb[0].mxu0
      %v2297 = vadd.f32 %v2018, %v2296
      %v2298 = vpop.f32.mrb[0].mxu0
      %2299 = vmatprep.mubr.f32.mxu0 0.0
      %2300 = vmatmul.mubr.f32.gmra.mrb[0].mxu0 %v1976
      %v2301 = vpop.f32.mrb[0].mxu0
      %v2302 = vadd.f32 %v2018, %v2301
      %v2303 = vpop.f32.mrb[0].mxu0
      %2304 = vmatprep.mubr.f32.mxu0 0.0
      %2305 = vmatmul.mubr.f32.gmra.mrb[0].mxu0 %v1977
      %v2306 = vpop.f32.mrb[0].mxu0
      %v2307 = vadd.f32 %v2018, %v2306
      %v2308 = vpop.f32.mrb[0].mxu0
      %2309 = vmatprep.mubr.f32.mxu0 0.0
      %2310 = vmatmul.mubr.f32.gmra.mrb[0].mxu0 %v1978
      %v2311 = vpop.f32.mrb[0].mxu0
      %v2312 = vadd.f32 %v2018, %v2311
      %v2313 = vpop.f32.mrb[0].mxu0
      %2314 = vmatprep.mubr.f32.mxu0 0.0
      %2315 = vmatmul.mubr.f32.gmra.mrb[0].mxu0 %v1979
      %v2316 = vpop.f32.mrb[0].mxu0
      %v2317 = vadd.f32 %v2018, %v2316
      %v2318 = vpop.f32.mrb[0].mxu0
      %2319 = vmatprep.mubr.f32.mxu0 0.0
      %2320 = vmatmul.mubr.f32.gmra.mrb[0].mxu0 %v1980
      %v2321 = vpop.f32.mrb[0].mxu0
      %v2322 = vadd.f32 %v2018, %v2321
      %v2323 = vpop.f32.mrb[0].mxu0
      %2324 = vmatprep.mubr.f32.mxu0 0.0
      %2325 = vmatmul.mubr.f32.gmra.mrb[0].mxu0 %v1981
      %v2326 = vpop.f32.mrb[0].mxu0
      %v2327 = vadd.f32 %v2018, %v2326
      %v2328 = vpop.f32.mrb[0].mxu0
      %2329 = vmatprep.mubr.f32.mxu0 0.0
      %2330 = vmatmul.mubr.f32.gmra.mrb[0].mxu0 %v1982
      %v2331 = vpop.f32.mrb[0].mxu0
      %v2332 = vadd.f32 %v2018, %v2331
      %v2333 = vpop.f32.mrb[0].mxu0
      %2334 = vmatprep.mubr.f32.mxu0 0.0
      %2335 = vmatmul.mubr.f32.gmra.mrb[0].mxu0 %v1983
      %v2336 = vpop.f32.mrb[0].mxu0
      %v2337 = vadd.f32 %v2018, %v2336
      %v2338 = vpop.f32.mrb[0].mxu0
      %2339 = vmatprep.mubr.f32.mxu0 0.0
      %2340 = vmatmul.mubr.f32.gmra.mrb[0].mxu0 %v1984
      %v2341 = vpop.f32.mrb[0].mxu0
      %v2342 = vadd.f32 %v2018, %v2341
      %v2343 = vpop.f32.mrb[0].mxu0
      %2344 = vmatprep.mubr.f32.mxu0 0.0
      %2345 = vmatmul.mubr.f32.gmra.mrb[0].mxu0 %v1985
      %v2346 = vpop.f32.mrb[0].mxu0
      %v2347 = vadd.f32 %v2018, %v2346
      %v2348 = vpop.f32.mrb[0].mxu0
      %2349 = vmatprep.mubr.f32.mxu0 0.0
      %2350 = vmatmul.mubr.f32.gmra.mrb[0].mxu0 %v1986
      %v2351 = vpop.f32.mrb[0].mxu0
      %v2352 = vadd.f32 %v2018, %v2351
      %v2353 = vpop.f32.mrb[0].mxu0
      %2354 = vmatprep.mubr.f32.mxu0 0.0
      %2355 = vmatmul.mubr.f32.gmra.mrb[0].mxu0 %v1987
      %v2356 = vpop.f32.mrb[0].mxu0
      %v2357 = vadd.f32 %v2018, %v2356
      %v2358 = vpop.f32.mrb[0].mxu0
      %2359 = vmatprep.mubr.f32.mxu0 0.0
      %2360 = vmatmul.mubr.f32.gmra.mrb[0].mxu0 %v1988
      %v2361 = vpop.f32.mrb[0].mxu0
      %v2362 = vadd.f32 %v2018, %v2361
      %v2363 = vpop.f32.mrb[0].mxu0
      %2364 = vmatprep.mubr.f32.mxu0 0.0
      %2365 = vmatmul.mubr.f32.gmra.mrb[0].mxu0 %v1989
      %v2366 = vpop.f32.mrb[0].mxu0
      %v2367 = vadd.f32 %v2018, %v2366
      %v2368 = vpop.f32.mrb[0].mxu0
      %2369 = vmatprep.mubr.f32.mxu0 0.0
      %2370 = vmatmul.mubr.f32.gmra.mrb[0].mxu0 %v1990
      %v2371 = vpop.f32.mrb[0].mxu0
      %v2372 = vadd.f32 %v2018, %v2371
      %v2373 = vpop.f32.mrb[0].mxu0
      %2374 = vmatprep.mubr.f32.mxu0 0.0
      %2375 = vmatmul.mubr.f32.gmra.mrb[0].mxu0 %v1991
      %v2376 = vpop.f32.mrb[0].mxu0
      %v2377 = vadd.f32 %v2018, %v2376
      %v2378 = vpop.f32.mrb[0].mxu0
      %2379 = vmatprep.mubr.f32.mxu0 0.0
      %2380 = vmatmul.mubr.f32.gmra.mrb[0].mxu0 %v1992
      %v2381 = vpop.f32.mrb[0].mxu0
      %v2382 = vadd.f32 %v2018, %v2381
      %v2383 = vpop.f32.mrb[0].mxu0
      %2384 = vmatprep.mubr.f32.mxu0 0.0
      %2385 = vmatmul.mubr.f32.gmra.mrb[0].mxu0 %v1993
      %v2386 = vpop.f32.mrb[0].mxu0
      %v2387 = vadd.f32 %v2018, %v2386
      %v2388 = vpop.f32.mrb[0].mxu0
      %2389 = vmatprep.mubr.f32.mxu0 0.0
      %2390 = vmatmul.mubr.f32.gmra.mrb[0].mxu0 %v1994
      %v2391 = vpop.f32.mrb[0].mxu0
      %v2392 = vadd.f32 %v2018, %v2391
      %v2393 = vpop.f32.mrb[0].mxu0
      %2394 = vmatprep.mubr.f32.mxu0 0.0
      %2395 = vmatmul.mubr.f32.gmra.mrb[0].mxu0 %v1995
      %v2396 = vpop.f32.mrb[0].mxu0
      %v2397 = vadd.f32 %v2018, %v2396
      %v2398 = vpop.f32.mrb[0].mxu0
      %2399 = vmatprep.mubr.f32.mxu0 0.0
      %2400 = vmatmul.mubr.f32.gmra.mrb[0].mxu0 %v1996
      %v2401 = vpop.f32.mrb[0].mxu0
      %v2402 = vadd.f32 %v2018, %v2401
      %v2403 = vpop.f32.mrb[0].mxu0
      %2404 = vdwg.mxu0
      %v2405 = vmax.f32 %v2087, 0.0
      %v2406 = vmax.f32 %v2092, 0.0
      %v2407 = vmax.f32 %v2097, 0.0
      %v2408 = vmax.f32 %v2102, 0.0
      %v2409 = vmax.f32 %v2107, 0.0
      %v2410 = vmax.f32 %v2112, 0.0
      %v2411 = vmax.f32 %v2117, 0.0
      %v2412 = vmax.f32 %v2122, 0.0
      %v2413 = vmax.f32 %v2127, 0.0
      %v2414 = vmax.f32 %v2132, 0.0
      %v2415 = vmax.f32 %v2137, 0.0
      %v2416 = vmax.f32 %v2142, 0.0
      %v2417 = vmax.f32 %v2147, 0.0
      %v2418 = vmax.f32 %v2152, 0.0
      %v2419 = vmax.f32 %v2157, 0.0
      %v2420 = vmax.f32 %v2162, 0.0
      %v2421 = vmax.f32 %v2167, 0.0
      %v2422 = vmax.f32 %v2172, 0.0
      %v2423 = vmax.f32 %v2177, 0.0
      %v2424 = vmax.f32 %v2182, 0.0
      %v2425 = vmax.f32 %v2187, 0.0
      %v2426 = vmax.f32 %v2192, 0.0
      %v2427 = vmax.f32 %v2197, 0.0
      %v2428 = vmax.f32 %v2202, 0.0
      %v2429 = vmax.f32 %v2207, 0.0
      %v2430 = vmax.f32 %v2212, 0.0
      %v2431 = vmax.f32 %v2217, 0.0
      %v2432 = vmax.f32 %v2222, 0.0
      %v2433 = vmax.f32 %v2227, 0.0
      %v2434 = vmax.f32 %v2232, 0.0
      %v2435 = vmax.f32 %v2237, 0.0
      %v2436 = vmax.f32 %v2242, 0.0
      %v2437 = vmax.f32 %v2247, 0.0
      %v2438 = vmax.f32 %v2252, 0.0
      %v2439 = vmax.f32 %v2257, 0.0
      %v2440 = vmax.f32 %v2262, 0.0
      %v2441 = vmax.f32 %v2267, 0.0
      %v2442 = vmax.f32 %v2272, 0.0
      %v2443 = vmax.f32 %v2277, 0.0
      %v2444 = vmax.f32 %v2282, 0.0
      %v2445 = vmax.f32 %v2287, 0.0
      %v2446 = vmax.f32 %v2292, 0.0
      %v2447 = vmax.f32 %v2297, 0.0
      %v2448 = vmax.f32 %v2302, 0.0
      %v2449 = vmax.f32 %v2307, 0.0
      %v2450 = vmax.f32 %v2312, 0.0
      %v2451 = vmax.f32 %v2317, 0.0
      %v2452 = vmax.f32 %v2322, 0.0
      %v2453 = vmax.f32 %v2327, 0.0
      %v2454 = vmax.f32 %v2332, 0.0
      %v2455 = vmax.f32 %v2337, 0.0
      %v2456 = vmax.f32 %v2342, 0.0
      %v2457 = vmax.f32 %v2347, 0.0
      %v2458 = vmax.f32 %v2352, 0.0
      %v2459 = vmax.f32 %v2357, 0.0
      %v2460 = vmax.f32 %v2362, 0.0
      %v2461 = vmax.f32 %v2367, 0.0
      %v2462 = vmax.f32 %v2372, 0.0
      %v2463 = vmax.f32 %v2377, 0.0
      %v2464 = vmax.f32 %v2382, 0.0
      %v2465 = vmax.f32 %v2387, 0.0
      %v2466 = vmax.f32 %v2392, 0.0
      %v2467 = vmax.f32 %v2397, 0.0
      %v2468 = vmax.f32 %v2402, 0.0
      %v2469 = vld [vmem:[%s5] sm:$0xff]
      %v2470 = vld [vmem:[%s5 + $0x8] sm:$0xff]
      %v2471 = vld [vmem:[%s5 + $0x10] sm:$0xff]
      %v2472 = vld [vmem:[%s5 + $0x18] sm:$0xff]
      %v2473 = vld [vmem:[%s5 + $0x20] sm:$0xff]
      %v2474 = vld [vmem:[%s5 + $0x28] sm:$0xff]
      %v2475 = vld [vmem:[%s5 + $0x30] sm:$0xff]
      %v2476 = vld [vmem:[%s5 + $0x38] sm:$0xff]
      %v2477 = vld [vmem:[%s5 + $0x40] sm:$0xff]
      %v2478 = vld [vmem:[%s5 + $0x48] sm:$0xff]
      %v2479 = vld [vmem:[%s5 + $0x50] sm:$0xff]
      %v2480 = vld [vmem:[%s5 + $0x58] sm:$0xff]
      %v2481 = vld [vmem:[%s5 + $0x60] sm:$0xff]
      %v2482 = vld [vmem:[%s5 + $0x68] sm:$0xff]
      %v2483 = vld [vmem:[%s5 + $0x70] sm:$0xff]
      %v2484 = vld [vmem:[%s5 + $0x78] sm:$0xff]
      %v2485 = vld [vmem:[%s6] sm:$0x1]
      %v2487 = vlaneseq
      %v2488 = vshrl.u32 %v2487, 7
      %v2489 = vsub.s32 0, %v2488
      %v2490 = vrot.slane %v2485, %v2489
      %2492 = vmatprep.subr.mxu0 0.0
      %2493 = vmatpush1.msra.mxu0 %v2469
      %2494 = vmatprep.subr.mxu0 0.0
      %2495 = vmatpush1.msra.mxu0 %v2470
      %2496 = vmatprep.subr.mxu0 0.0
      %2497 = vmatpush1.msra.mxu0 %v2471
      %2498 = vmatprep.subr.mxu0 0.0
      %2499 = vmatpush1.msra.mxu0 %v2472
      %2500 = vmatprep.subr.mxu0 0.0
      %2501 = vmatpush1.msra.mxu0 %v2473
      %2502 = vmatprep.subr.mxu0 0.0
      %2503 = vmatpush1.msra.mxu0 %v2474
      %2504 = vmatprep.subr.mxu0 0.0
      %2505 = vmatpush1.msra.mxu0 %v2475
      %2506 = vmatprep.subr.mxu0 0.0
      %2507 = vmatpush1.msra.mxu0 %v2476
      %2508 = vmatprep.subr.mxu0 0.0
      %2509 = vmatpush1.msra.mxu0 %v2477
      %2510 = vmatprep.subr.mxu0 0.0
      %2511 = vmatpush1.msra.mxu0 %v2478
      %2512 = vmatprep.subr.mxu0 0.0
      %2513 = vmatpush1.msra.mxu0 %v2479
      %2514 = vmatprep.subr.mxu0 0.0
      %2515 = vmatpush1.msra.mxu0 %v2480
      %2516 = vmatprep.subr.mxu0 0.0
      %2517 = vmatpush1.msra.mxu0 %v2481
      %2518 = vmatprep.subr.mxu0 0.0
      %2519 = vmatpush1.msra.mxu0 %v2482
      %2520 = vmatprep.subr.mxu0 0.0
      %2521 = vmatpush1.msra.mxu0 %v2483
      %2522 = vmatprep.subr.mxu0 0.0
      %2523 = vmatpush1.msra.mxu0 %v2484
      %2524 = vmatprep.subr.mxu0 0.0
      %2525 = vmatpush1.msra.mxu0 0.0
      %2526 = vmatprep.subr.mxu0 0.0
      %2527 = vmatpush1.msra.mxu0 0.0
      %2528 = vmatprep.subr.mxu0 0.0
      %2529 = vmatpush1.msra.mxu0 0.0
      %2530 = vmatprep.subr.mxu0 0.0
      %2531 = vmatpush1.msra.mxu0 0.0
      %2532 = vmatprep.subr.mxu0 0.0
      %2533 = vmatpush1.msra.mxu0 0.0
      %2534 = vmatprep.subr.mxu0 0.0
      %2535 = vmatpush1.msra.mxu0 0.0
      %2536 = vmatprep.subr.mxu0 0.0
      %2537 = vmatpush1.msra.mxu0 0.0
      %2538 = vmatprep.subr.mxu0 0.0
      %2539 = vmatpush1.msra.mxu0 0.0
      %2540 = vmatprep.subr.mxu0 0.0
      %2541 = vmatpush1.msra.mxu0 0.0
      %2542 = vmatprep.subr.mxu0 0.0
      %2543 = vmatpush1.msra.mxu0 0.0
      %2544 = vmatprep.subr.mxu0 0.0
      %2545 = vmatpush1.msra.mxu0 0.0
      %2546 = vmatprep.subr.mxu0 0.0
      %2547 = vmatpush1.msra.mxu0 0.0
      %2548 = vmatprep.subr.mxu0 0.0
      %2549 = vmatpush1.msra.mxu0 0.0
      %2550 = vmatprep.subr.mxu0 0.0
      %2551 = vmatpush1.msra.mxu0 0.0
      %2552 = vmatprep.subr.mxu0 0.0
      %2553 = vmatpush1.msra.mxu0 0.0
      %2554 = vmatprep.subr.mxu0 0.0
      %2555 = vmatpush1.msra.mxu0 0.0
      %2556 = vmatprep.mubr.f32.mxu0 0.0
      %2557 = vmatmul.mubr.f32.gmra.mrb[0].mxu0 %v2405
      %v2558 = vpop.f32.mrb[0].mxu0
      %v2559 = vadd.f32 %v2490, %v2558
      %v2560 = vpop.f32.mrb[0].mxu0
      %2561 = vmatprep.mubr.f32.mxu0 0.0
      %2562 = vmatmul.mubr.f32.gmra.mrb[0].mxu0 %v2406
      %v2563 = vpop.f32.mrb[0].mxu0
      %v2564 = vadd.f32 %v2490, %v2563
      %v2565 = vpop.f32.mrb[0].mxu0
      %2566 = vmatprep.mubr.f32.mxu0 0.0
      %2567 = vmatmul.mubr.f32.gmra.mrb[0].mxu0 %v2407
      %v2568 = vpop.f32.mrb[0].mxu0
      %v2569 = vadd.f32 %v2490, %v2568
      %v2570 = vpop.f32.mrb[0].mxu0
      %2571 = vmatprep.mubr.f32.mxu0 0.0
      %2572 = vmatmul.mubr.f32.gmra.mrb[0].mxu0 %v2408
      %v2573 = vpop.f32.mrb[0].mxu0
      %v2574 = vadd.f32 %v2490, %v2573
      %v2575 = vpop.f32.mrb[0].mxu0
      %2576 = vmatprep.mubr.f32.mxu0 0.0
      %2577 = vmatmul.mubr.f32.gmra.mrb[0].mxu0 %v2409
      %v2578 = vpop.f32.mrb[0].mxu0
      %v2579 = vadd.f32 %v2490, %v2578
      %v2580 = vpop.f32.mrb[0].mxu0
      %2581 = vmatprep.mubr.f32.mxu0 0.0
      %2582 = vmatmul.mubr.f32.gmra.mrb[0].mxu0 %v2410
      %v2583 = vpop.f32.mrb[0].mxu0
      %v2584 = vadd.f32 %v2490, %v2583
      %v2585 = vpop.f32.mrb[0].mxu0
      %2586 = vmatprep.mubr.f32.mxu0 0.0
      %2587 = vmatmul.mubr.f32.gmra.mrb[0].mxu0 %v2411
      %v2588 = vpop.f32.mrb[0].mxu0
      %v2589 = vadd.f32 %v2490, %v2588
      %v2590 = vpop.f32.mrb[0].mxu0
      %2591 = vmatprep.mubr.f32.mxu0 0.0
      %2592 = vmatmul.mubr.f32.gmra.mrb[0].mxu0 %v2412
      %v2593 = vpop.f32.mrb[0].mxu0
      %v2594 = vadd.f32 %v2490, %v2593
      %v2595 = vpop.f32.mrb[0].mxu0
      %2596 = vmatprep.mubr.f32.mxu0 0.0
      %2597 = vmatmul.mubr.f32.gmra.mrb[0].mxu0 %v2413
      %v2598 = vpop.f32.mrb[0].mxu0
      %v2599 = vadd.f32 %v2490, %v2598
      %v2600 = vpop.f32.mrb[0].mxu0
      %2601 = vmatprep.mubr.f32.mxu0 0.0
      %2602 = vmatmul.mubr.f32.gmra.mrb[0].mxu0 %v2414
      %v2603 = vpop.f32.mrb[0].mxu0
      %v2604 = vadd.f32 %v2490, %v2603
      %v2605 = vpop.f32.mrb[0].mxu0
      %2606 = vmatprep.mubr.f32.mxu0 0.0
      %2607 = vmatmul.mubr.f32.gmra.mrb[0].mxu0 %v2415
      %v2608 = vpop.f32.mrb[0].mxu0
      %v2609 = vadd.f32 %v2490, %v2608
      %v2610 = vpop.f32.mrb[0].mxu0
      %2611 = vmatprep.mubr.f32.mxu0 0.0
      %2612 = vmatmul.mubr.f32.gmra.mrb[0].mxu0 %v2416
      %v2613 = vpop.f32.mrb[0].mxu0
      %v2614 = vadd.f32 %v2490, %v2613
      %v2615 = vpop.f32.mrb[0].mxu0
      %2616 = vmatprep.mubr.f32.mxu0 0.0
      %2617 = vmatmul.mubr.f32.gmra.mrb[0].mxu0 %v2417
      %v2618 = vpop.f32.mrb[0].mxu0
      %v2619 = vadd.f32 %v2490, %v2618
      %v2620 = vpop.f32.mrb[0].mxu0
      %2621 = vmatprep.mubr.f32.mxu0 0.0
      %2622 = vmatmul.mubr.f32.gmra.mrb[0].mxu0 %v2418
      %v2623 = vpop.f32.mrb[0].mxu0
      %v2624 = vadd.f32 %v2490, %v2623
      %v2625 = vpop.f32.mrb[0].mxu0
      %2626 = vmatprep.mubr.f32.mxu0 0.0
      %2627 = vmatmul.mubr.f32.gmra.mrb[0].mxu0 %v2419
      %v2628 = vpop.f32.mrb[0].mxu0
      %v2629 = vadd.f32 %v2490, %v2628
      %v2630 = vpop.f32.mrb[0].mxu0
      %2631 = vmatprep.mubr.f32.mxu0 0.0
      %2632 = vmatmul.mubr.f32.gmra.mrb[0].mxu0 %v2420
      %v2633 = vpop.f32.mrb[0].mxu0
      %v2634 = vadd.f32 %v2490, %v2633
      %v2635 = vpop.f32.mrb[0].mxu0
      %2636 = vmatprep.mubr.f32.mxu0 0.0
      %2637 = vmatmul.mubr.f32.gmra.mrb[0].mxu0 %v2421
      %v2638 = vpop.f32.mrb[0].mxu0
      %v2639 = vadd.f32 %v2490, %v2638
      %v2640 = vpop.f32.mrb[0].mxu0
      %2641 = vmatprep.mubr.f32.mxu0 0.0
      %2642 = vmatmul.mubr.f32.gmra.mrb[0].mxu0 %v2422
      %v2643 = vpop.f32.mrb[0].mxu0
      %v2644 = vadd.f32 %v2490, %v2643
      %v2645 = vpop.f32.mrb[0].mxu0
      %2646 = vmatprep.mubr.f32.mxu0 0.0
      %2647 = vmatmul.mubr.f32.gmra.mrb[0].mxu0 %v2423
      %v2648 = vpop.f32.mrb[0].mxu0
      %v2649 = vadd.f32 %v2490, %v2648
      %v2650 = vpop.f32.mrb[0].mxu0
      %2651 = vmatprep.mubr.f32.mxu0 0.0
      %2652 = vmatmul.mubr.f32.gmra.mrb[0].mxu0 %v2424
      %v2653 = vpop.f32.mrb[0].mxu0
      %v2654 = vadd.f32 %v2490, %v2653
      %v2655 = vpop.f32.mrb[0].mxu0
      %2656 = vmatprep.mubr.f32.mxu0 0.0
      %2657 = vmatmul.mubr.f32.gmra.mrb[0].mxu0 %v2425
      %v2658 = vpop.f32.mrb[0].mxu0
      %v2659 = vadd.f32 %v2490, %v2658
      %v2660 = vpop.f32.mrb[0].mxu0
      %2661 = vmatprep.mubr.f32.mxu0 0.0
      %2662 = vmatmul.mubr.f32.gmra.mrb[0].mxu0 %v2426
      %v2663 = vpop.f32.mrb[0].mxu0
      %v2664 = vadd.f32 %v2490, %v2663
      %v2665 = vpop.f32.mrb[0].mxu0
      %2666 = vmatprep.mubr.f32.mxu0 0.0
      %2667 = vmatmul.mubr.f32.gmra.mrb[0].mxu0 %v2427
      %v2668 = vpop.f32.mrb[0].mxu0
      %v2669 = vadd.f32 %v2490, %v2668
      %v2670 = vpop.f32.mrb[0].mxu0
      %2671 = vmatprep.mubr.f32.mxu0 0.0
      %2672 = vmatmul.mubr.f32.gmra.mrb[0].mxu0 %v2428
      %v2673 = vpop.f32.mrb[0].mxu0
      %v2674 = vadd.f32 %v2490, %v2673
      %v2675 = vpop.f32.mrb[0].mxu0
      %2676 = vmatprep.mubr.f32.mxu0 0.0
      %2677 = vmatmul.mubr.f32.gmra.mrb[0].mxu0 %v2429
      %v2678 = vpop.f32.mrb[0].mxu0
      %v2679 = vadd.f32 %v2490, %v2678
      %v2680 = vpop.f32.mrb[0].mxu0
      %2681 = vmatprep.mubr.f32.mxu0 0.0
      %2682 = vmatmul.mubr.f32.gmra.mrb[0].mxu0 %v2430
      %v2683 = vpop.f32.mrb[0].mxu0
      %v2684 = vadd.f32 %v2490, %v2683
      %v2685 = vpop.f32.mrb[0].mxu0
      %2686 = vmatprep.mubr.f32.mxu0 0.0
      %2687 = vmatmul.mubr.f32.gmra.mrb[0].mxu0 %v2431
      %v2688 = vpop.f32.mrb[0].mxu0
      %v2689 = vadd.f32 %v2490, %v2688
      %v2690 = vpop.f32.mrb[0].mxu0
      %2691 = vmatprep.mubr.f32.mxu0 0.0
      %2692 = vmatmul.mubr.f32.gmra.mrb[0].mxu0 %v2432
      %v2693 = vpop.f32.mrb[0].mxu0
      %v2694 = vadd.f32 %v2490, %v2693
      %v2695 = vpop.f32.mrb[0].mxu0
      %2696 = vmatprep.mubr.f32.mxu0 0.0
      %2697 = vmatmul.mubr.f32.gmra.mrb[0].mxu0 %v2433
      %v2698 = vpop.f32.mrb[0].mxu0
      %v2699 = vadd.f32 %v2490, %v2698
      %v2700 = vpop.f32.mrb[0].mxu0
      %2701 = vmatprep.mubr.f32.mxu0 0.0
      %2702 = vmatmul.mubr.f32.gmra.mrb[0].mxu0 %v2434
      %v2703 = vpop.f32.mrb[0].mxu0
      %v2704 = vadd.f32 %v2490, %v2703
      %v2705 = vpop.f32.mrb[0].mxu0
      %2706 = vmatprep.mubr.f32.mxu0 0.0
      %2707 = vmatmul.mubr.f32.gmra.mrb[0].mxu0 %v2435
      %v2708 = vpop.f32.mrb[0].mxu0
      %v2709 = vadd.f32 %v2490, %v2708
      %v2710 = vpop.f32.mrb[0].mxu0
      %2711 = vmatprep.mubr.f32.mxu0 0.0
      %2712 = vmatmul.mubr.f32.gmra.mrb[0].mxu0 %v2436
      %v2713 = vpop.f32.mrb[0].mxu0
      %v2714 = vadd.f32 %v2490, %v2713
      %v2715 = vpop.f32.mrb[0].mxu0
      %2716 = vmatprep.mubr.f32.mxu0 0.0
      %2717 = vmatmul.mubr.f32.gmra.mrb[0].mxu0 %v2437
      %v2718 = vpop.f32.mrb[0].mxu0
      %v2719 = vadd.f32 %v2490, %v2718
      %v2720 = vpop.f32.mrb[0].mxu0
      %2721 = vmatprep.mubr.f32.mxu0 0.0
      %2722 = vmatmul.mubr.f32.gmra.mrb[0].mxu0 %v2438
      %v2723 = vpop.f32.mrb[0].mxu0
      %v2724 = vadd.f32 %v2490, %v2723
      %v2725 = vpop.f32.mrb[0].mxu0
      %2726 = vmatprep.mubr.f32.mxu0 0.0
      %2727 = vmatmul.mubr.f32.gmra.mrb[0].mxu0 %v2439
      %v2728 = vpop.f32.mrb[0].mxu0
      %v2729 = vadd.f32 %v2490, %v2728
      %v2730 = vpop.f32.mrb[0].mxu0
      %2731 = vmatprep.mubr.f32.mxu0 0.0
      %2732 = vmatmul.mubr.f32.gmra.mrb[0].mxu0 %v2440
      %v2733 = vpop.f32.mrb[0].mxu0
      %v2734 = vadd.f32 %v2490, %v2733
      %v2735 = vpop.f32.mrb[0].mxu0
      %2736 = vmatprep.mubr.f32.mxu0 0.0
      %2737 = vmatmul.mubr.f32.gmra.mrb[0].mxu0 %v2441
      %v2738 = vpop.f32.mrb[0].mxu0
      %v2739 = vadd.f32 %v2490, %v2738
      %v2740 = vpop.f32.mrb[0].mxu0
      %2741 = vmatprep.mubr.f32.mxu0 0.0
      %2742 = vmatmul.mubr.f32.gmra.mrb[0].mxu0 %v2442
      %v2743 = vpop.f32.mrb[0].mxu0
      %v2744 = vadd.f32 %v2490, %v2743
      %v2745 = vpop.f32.mrb[0].mxu0
      %2746 = vmatprep.mubr.f32.mxu0 0.0
      %2747 = vmatmul.mubr.f32.gmra.mrb[0].mxu0 %v2443
      %v2748 = vpop.f32.mrb[0].mxu0
      %v2749 = vadd.f32 %v2490, %v2748
      %v2750 = vpop.f32.mrb[0].mxu0
      %2751 = vmatprep.mubr.f32.mxu0 0.0
      %2752 = vmatmul.mubr.f32.gmra.mrb[0].mxu0 %v2444
      %v2753 = vpop.f32.mrb[0].mxu0
      %v2754 = vadd.f32 %v2490, %v2753
      %v2755 = vpop.f32.mrb[0].mxu0
      %2756 = vmatprep.mubr.f32.mxu0 0.0
      %2757 = vmatmul.mubr.f32.gmra.mrb[0].mxu0 %v2445
      %v2758 = vpop.f32.mrb[0].mxu0
      %v2759 = vadd.f32 %v2490, %v2758
      %v2760 = vpop.f32.mrb[0].mxu0
      %2761 = vmatprep.mubr.f32.mxu0 0.0
      %2762 = vmatmul.mubr.f32.gmra.mrb[0].mxu0 %v2446
      %v2763 = vpop.f32.mrb[0].mxu0
      %v2764 = vadd.f32 %v2490, %v2763
      %v2765 = vpop.f32.mrb[0].mxu0
      %2766 = vmatprep.mubr.f32.mxu0 0.0
      %2767 = vmatmul.mubr.f32.gmra.mrb[0].mxu0 %v2447
      %v2768 = vpop.f32.mrb[0].mxu0
      %v2769 = vadd.f32 %v2490, %v2768
      %v2770 = vpop.f32.mrb[0].mxu0
      %2771 = vmatprep.mubr.f32.mxu0 0.0
      %2772 = vmatmul.mubr.f32.gmra.mrb[0].mxu0 %v2448
      %v2773 = vpop.f32.mrb[0].mxu0
      %v2774 = vadd.f32 %v2490, %v2773
      %v2775 = vpop.f32.mrb[0].mxu0
      %2776 = vmatprep.mubr.f32.mxu0 0.0
      %2777 = vmatmul.mubr.f32.gmra.mrb[0].mxu0 %v2449
      %v2778 = vpop.f32.mrb[0].mxu0
      %v2779 = vadd.f32 %v2490, %v2778
      %v2780 = vpop.f32.mrb[0].mxu0
      %2781 = vmatprep.mubr.f32.mxu0 0.0
      %2782 = vmatmul.mubr.f32.gmra.mrb[0].mxu0 %v2450
      %v2783 = vpop.f32.mrb[0].mxu0
      %v2784 = vadd.f32 %v2490, %v2783
      %v2785 = vpop.f32.mrb[0].mxu0
      %2786 = vmatprep.mubr.f32.mxu0 0.0
      %2787 = vmatmul.mubr.f32.gmra.mrb[0].mxu0 %v2451
      %v2788 = vpop.f32.mrb[0].mxu0
      %v2789 = vadd.f32 %v2490, %v2788
      %v2790 = vpop.f32.mrb[0].mxu0
      %2791 = vmatprep.mubr.f32.mxu0 0.0
      %2792 = vmatmul.mubr.f32.gmra.mrb[0].mxu0 %v2452
      %v2793 = vpop.f32.mrb[0].mxu0
      %v2794 = vadd.f32 %v2490, %v2793
      %v2795 = vpop.f32.mrb[0].mxu0
      %2796 = vmatprep.mubr.f32.mxu0 0.0
      %2797 = vmatmul.mubr.f32.gmra.mrb[0].mxu0 %v2453
      %v2798 = vpop.f32.mrb[0].mxu0
      %v2799 = vadd.f32 %v2490, %v2798
      %v2800 = vpop.f32.mrb[0].mxu0
      %2801 = vmatprep.mubr.f32.mxu0 0.0
      %2802 = vmatmul.mubr.f32.gmra.mrb[0].mxu0 %v2454
      %v2803 = vpop.f32.mrb[0].mxu0
      %v2804 = vadd.f32 %v2490, %v2803
      %v2805 = vpop.f32.mrb[0].mxu0
      %2806 = vmatprep.mubr.f32.mxu0 0.0
      %2807 = vmatmul.mubr.f32.gmra.mrb[0].mxu0 %v2455
      %v2808 = vpop.f32.mrb[0].mxu0
      %v2809 = vadd.f32 %v2490, %v2808
      %v2810 = vpop.f32.mrb[0].mxu0
      %2811 = vmatprep.mubr.f32.mxu0 0.0
      %2812 = vmatmul.mubr.f32.gmra.mrb[0].mxu0 %v2456
      %v2813 = vpop.f32.mrb[0].mxu0
      %v2814 = vadd.f32 %v2490, %v2813
      %v2815 = vpop.f32.mrb[0].mxu0
      %2816 = vmatprep.mubr.f32.mxu0 0.0
      %2817 = vmatmul.mubr.f32.gmra.mrb[0].mxu0 %v2457
      %v2818 = vpop.f32.mrb[0].mxu0
      %v2819 = vadd.f32 %v2490, %v2818
      %v2820 = vpop.f32.mrb[0].mxu0
      %2821 = vmatprep.mubr.f32.mxu0 0.0
      %2822 = vmatmul.mubr.f32.gmra.mrb[0].mxu0 %v2458
      %v2823 = vpop.f32.mrb[0].mxu0
      %v2824 = vadd.f32 %v2490, %v2823
      %v2825 = vpop.f32.mrb[0].mxu0
      %2826 = vmatprep.mubr.f32.mxu0 0.0
      %2827 = vmatmul.mubr.f32.gmra.mrb[0].mxu0 %v2459
      %v2828 = vpop.f32.mrb[0].mxu0
      %v2829 = vadd.f32 %v2490, %v2828
      %v2830 = vpop.f32.mrb[0].mxu0
      %2831 = vmatprep.mubr.f32.mxu0 0.0
      %2832 = vmatmul.mubr.f32.gmra.mrb[0].mxu0 %v2460
      %v2833 = vpop.f32.mrb[0].mxu0
      %v2834 = vadd.f32 %v2490, %v2833
      %v2835 = vpop.f32.mrb[0].mxu0
      %2836 = vmatprep.mubr.f32.mxu0 0.0
      %2837 = vmatmul.mubr.f32.gmra.mrb[0].mxu0 %v2461
      %v2838 = vpop.f32.mrb[0].mxu0
      %v2839 = vadd.f32 %v2490, %v2838
      %v2840 = vpop.f32.mrb[0].mxu0
      %2841 = vmatprep.mubr.f32.mxu0 0.0
      %2842 = vmatmul.mubr.f32.gmra.mrb[0].mxu0 %v2462
      %v2843 = vpop.f32.mrb[0].mxu0
      %v2844 = vadd.f32 %v2490, %v2843
      %v2845 = vpop.f32.mrb[0].mxu0
      %2846 = vmatprep.mubr.f32.mxu0 0.0
      %2847 = vmatmul.mubr.f32.gmra.mrb[0].mxu0 %v2463
      %v2848 = vpop.f32.mrb[0].mxu0
      %v2849 = vadd.f32 %v2490, %v2848
      %v2850 = vpop.f32.mrb[0].mxu0
      %2851 = vmatprep.mubr.f32.mxu0 0.0
      %2852 = vmatmul.mubr.f32.gmra.mrb[0].mxu0 %v2464
      %v2853 = vpop.f32.mrb[0].mxu0
      %v2854 = vadd.f32 %v2490, %v2853
      %v2855 = vpop.f32.mrb[0].mxu0
      %2856 = vmatprep.mubr.f32.mxu0 0.0
      %2857 = vmatmul.mubr.f32.gmra.mrb[0].mxu0 %v2465
      %v2858 = vpop.f32.mrb[0].mxu0
      %v2859 = vadd.f32 %v2490, %v2858
      %v2860 = vpop.f32.mrb[0].mxu0
      %2861 = vmatprep.mubr.f32.mxu0 0.0
      %2862 = vmatmul.mubr.f32.gmra.mrb[0].mxu0 %v2466
      %v2863 = vpop.f32.mrb[0].mxu0
      %v2864 = vadd.f32 %v2490, %v2863
      %v2865 = vpop.f32.mrb[0].mxu0
      %2866 = vmatprep.mubr.f32.mxu0 0.0
      %2867 = vmatmul.mubr.f32.gmra.mrb[0].mxu0 %v2467
      %v2868 = vpop.f32.mrb[0].mxu0
      %v2869 = vadd.f32 %v2490, %v2868
      %v2870 = vpop.f32.mrb[0].mxu0
      %2871 = vmatprep.mubr.f32.mxu0 0.0
      %2872 = vmatmul.mubr.f32.gmra.mrb[0].mxu0 %v2468
      %v2873 = vpop.f32.mrb[0].mxu0
      %v2874 = vadd.f32 %v2490, %v2873
      %v2875 = vpop.f32.mrb[0].mxu0
      %2876 = vdwg.mxu0
      %v2877 = vmax.f32 %v2559, 0.0
      %v2878 = vmax.f32 %v2564, 0.0
      %v2879 = vmax.f32 %v2569, 0.0
      %v2880 = vmax.f32 %v2574, 0.0
      %v2881 = vmax.f32 %v2579, 0.0
      %v2882 = vmax.f32 %v2584, 0.0
      %v2883 = vmax.f32 %v2589, 0.0
      %v2884 = vmax.f32 %v2594, 0.0
      %v2885 = vmax.f32 %v2599, 0.0
      %v2886 = vmax.f32 %v2604, 0.0
      %v2887 = vmax.f32 %v2609, 0.0
      %v2888 = vmax.f32 %v2614, 0.0
      %v2889 = vmax.f32 %v2619, 0.0
      %v2890 = vmax.f32 %v2624, 0.0
      %v2891 = vmax.f32 %v2629, 0.0
      %v2892 = vmax.f32 %v2634, 0.0
      %v2893 = vmax.f32 %v2639, 0.0
      %v2894 = vmax.f32 %v2644, 0.0
      %v2895 = vmax.f32 %v2649, 0.0
      %v2896 = vmax.f32 %v2654, 0.0
      %v2897 = vmax.f32 %v2659, 0.0
      %v2898 = vmax.f32 %v2664, 0.0
      %v2899 = vmax.f32 %v2669, 0.0
      %v2900 = vmax.f32 %v2674, 0.0
      %v2901 = vmax.f32 %v2679, 0.0
      %v2902 = vmax.f32 %v2684, 0.0
      %v2903 = vmax.f32 %v2689, 0.0
      %v2904 = vmax.f32 %v2694, 0.0
      %v2905 = vmax.f32 %v2699, 0.0
      %v2906 = vmax.f32 %v2704, 0.0
      %v2907 = vmax.f32 %v2709, 0.0
      %v2908 = vmax.f32 %v2714, 0.0
      %v2909 = vmax.f32 %v2719, 0.0
      %v2910 = vmax.f32 %v2724, 0.0
      %v2911 = vmax.f32 %v2729, 0.0
      %v2912 = vmax.f32 %v2734, 0.0
      %v2913 = vmax.f32 %v2739, 0.0
      %v2914 = vmax.f32 %v2744, 0.0
      %v2915 = vmax.f32 %v2749, 0.0
      %v2916 = vmax.f32 %v2754, 0.0
      %v2917 = vmax.f32 %v2759, 0.0
      %v2918 = vmax.f32 %v2764, 0.0
      %v2919 = vmax.f32 %v2769, 0.0
      %v2920 = vmax.f32 %v2774, 0.0
      %v2921 = vmax.f32 %v2779, 0.0
      %v2922 = vmax.f32 %v2784, 0.0
      %v2923 = vmax.f32 %v2789, 0.0
      %v2924 = vmax.f32 %v2794, 0.0
      %v2925 = vmax.f32 %v2799, 0.0
      %v2926 = vmax.f32 %v2804, 0.0
      %v2927 = vmax.f32 %v2809, 0.0
      %v2928 = vmax.f32 %v2814, 0.0
      %v2929 = vmax.f32 %v2819, 0.0
      %v2930 = vmax.f32 %v2824, 0.0
      %v2931 = vmax.f32 %v2829, 0.0
      %v2932 = vmax.f32 %v2834, 0.0
      %v2933 = vmax.f32 %v2839, 0.0
      %v2934 = vmax.f32 %v2844, 0.0
      %v2935 = vmax.f32 %v2849, 0.0
      %v2936 = vmax.f32 %v2854, 0.0
      %v2937 = vmax.f32 %v2859, 0.0
      %v2938 = vmax.f32 %v2864, 0.0
      %v2939 = vmax.f32 %v2869, 0.0
      %v2940 = vmax.f32 %v2874, 0.0
      %v2941 = vld [vmem:[%s7] sm:$0xff]
      %v2942 = vld [vmem:[%s7 + $0x8] sm:$0xff]
      %v2943 = vld [vmem:[%s7 + $0x10] sm:$0xff]
      %v2944 = vld [vmem:[%s7 + $0x18] sm:$0xff]
      %v2945 = vld [vmem:[%s7 + $0x20] sm:$0xff]
      %v2946 = vld [vmem:[%s7 + $0x28] sm:$0xff]
      %v2947 = vld [vmem:[%s7 + $0x30] sm:$0xff]
      %v2948 = vld [vmem:[%s7 + $0x38] sm:$0xff]
      %v2949 = vld [vmem:[%s7 + $0x40] sm:$0xff]
      %v2950 = vld [vmem:[%s7 + $0x48] sm:$0xff]
      %v2951 = vld [vmem:[%s7 + $0x50] sm:$0xff]
      %v2952 = vld [vmem:[%s7 + $0x58] sm:$0xff]
      %v2953 = vld [vmem:[%s7 + $0x60] sm:$0xff]
      %v2954 = vld [vmem:[%s7 + $0x68] sm:$0xff]
      %v2955 = vld [vmem:[%s7 + $0x70] sm:$0xff]
      %v2956 = vld [vmem:[%s7 + $0x78] sm:$0xff]
      %v2957 = vld [vmem:[%s8] sm:$0x1]
      %v2959 = vlaneseq
      %v2960 = vshrl.u32 %v2959, 7
      %v2961 = vsub.s32 0, %v2960
      %v2962 = vrot.slane %v2957, %v2961
      %2964 = vmatprep.subr.mxu0 0.0
      %2965 = vmatpush1.msra.mxu0 %v2941
      %2966 = vmatprep.subr.mxu0 0.0
      %2967 = vmatpush1.msra.mxu0 %v2942
      %2968 = vmatprep.subr.mxu0 0.0
      %2969 = vmatpush1.msra.mxu0 %v2943
      %2970 = vmatprep.subr.mxu0 0.0
      %2971 = vmatpush1.msra.mxu0 %v2944
      %2972 = vmatprep.subr.mxu0 0.0
      %2973 = vmatpush1.msra.mxu0 %v2945
      %2974 = vmatprep.subr.mxu0 0.0
      %2975 = vmatpush1.msra.mxu0 %v2946
      %2976 = vmatprep.subr.mxu0 0.0
      %2977 = vmatpush1.msra.mxu0 %v2947
      %2978 = vmatprep.subr.mxu0 0.0
      %2979 = vmatpush1.msra.mxu0 %v2948
      %2980 = vmatprep.subr.mxu0 0.0
      %2981 = vmatpush1.msra.mxu0 %v2949
      %2982 = vmatprep.subr.mxu0 0.0
      %2983 = vmatpush1.msra.mxu0 %v2950
      %2984 = vmatprep.subr.mxu0 0.0
      %2985 = vmatpush1.msra.mxu0 %v2951
      %2986 = vmatprep.subr.mxu0 0.0
      %2987 = vmatpush1.msra.mxu0 %v2952
      %2988 = vmatprep.subr.mxu0 0.0
      %2989 = vmatpush1.msra.mxu0 %v2953
      %2990 = vmatprep.subr.mxu0 0.0
      %2991 = vmatpush1.msra.mxu0 %v2954
      %2992 = vmatprep.subr.mxu0 0.0
      %2993 = vmatpush1.msra.mxu0 %v2955
      %2994 = vmatprep.subr.mxu0 0.0
      %2995 = vmatpush1.msra.mxu0 %v2956
      %2996 = vmatprep.subr.mxu0 0.0
      %2997 = vmatpush1.msra.mxu0 0.0
      %2998 = vmatprep.subr.mxu0 0.0
      %2999 = vmatpush1.msra.mxu0 0.0
      %3000 = vmatprep.subr.mxu0 0.0
      %3001 = vmatpush1.msra.mxu0 0.0
      %3002 = vmatprep.subr.mxu0 0.0
      %3003 = vmatpush1.msra.mxu0 0.0
      %3004 = vmatprep.subr.mxu0 0.0
      %3005 = vmatpush1.msra.mxu0 0.0
      %3006 = vmatprep.subr.mxu0 0.0
      %3007 = vmatpush1.msra.mxu0 0.0
      %3008 = vmatprep.subr.mxu0 0.0
      %3009 = vmatpush1.msra.mxu0 0.0
      %3010 = vmatprep.subr.mxu0 0.0
      %3011 = vmatpush1.msra.mxu0 0.0
      %3012 = vmatprep.subr.mxu0 0.0
      %3013 = vmatpush1.msra.mxu0 0.0
      %3014 = vmatprep.subr.mxu0 0.0
      %3015 = vmatpush1.msra.mxu0 0.0
      %3016 = vmatprep.subr.mxu0 0.0
      %3017 = vmatpush1.msra.mxu0 0.0
      %3018 = vmatprep.subr.mxu0 0.0
      %3019 = vmatpush1.msra.mxu0 0.0
      %3020 = vmatprep.subr.mxu0 0.0
      %3021 = vmatpush1.msra.mxu0 0.0
      %3022 = vmatprep.subr.mxu0 0.0
      %3023 = vmatpush1.msra.mxu0 0.0
      %3024 = vmatprep.subr.mxu0 0.0
      %3025 = vmatpush1.msra.mxu0 0.0
      %3026 = vmatprep.subr.mxu0 0.0
      %3027 = vmatpush1.msra.mxu0 0.0
      %3028 = vmatprep.mubr.f32.mxu0 0.0
      %3029 = vmatmul.mubr.f32.gmra.mrb[0].mxu0 %v2877
      %v3030 = vpop.f32.mrb[0].mxu0
      %v3031 = vadd.f32 %v2962, %v3030
      %v3032 = vpop.f32.mrb[0].mxu0
      %3033 = vmatprep.mubr.f32.mxu0 0.0
      %3034 = vmatmul.mubr.f32.gmra.mrb[0].mxu0 %v2878
      %v3035 = vpop.f32.mrb[0].mxu0
      %v3036 = vadd.f32 %v2962, %v3035
      %v3037 = vpop.f32.mrb[0].mxu0
      %3038 = vmatprep.mubr.f32.mxu0 0.0
      %3039 = vmatmul.mubr.f32.gmra.mrb[0].mxu0 %v2879
      %v3040 = vpop.f32.mrb[0].mxu0
      %v3041 = vadd.f32 %v2962, %v3040
      %v3042 = vpop.f32.mrb[0].mxu0
      %3043 = vmatprep.mubr.f32.mxu0 0.0
      %3044 = vmatmul.mubr.f32.gmra.mrb[0].mxu0 %v2880
      %v3045 = vpop.f32.mrb[0].mxu0
      %v3046 = vadd.f32 %v2962, %v3045
      %v3047 = vpop.f32.mrb[0].mxu0
      %3048 = vmatprep.mubr.f32.mxu0 0.0
      %3049 = vmatmul.mubr.f32.gmra.mrb[0].mxu0 %v2881
      %v3050 = vpop.f32.mrb[0].mxu0
      %v3051 = vadd.f32 %v2962, %v3050
      %v3052 = vpop.f32.mrb[0].mxu0
      %3053 = vmatprep.mubr.f32.mxu0 0.0
      %3054 = vmatmul.mubr.f32.gmra.mrb[0].mxu0 %v2882
      %v3055 = vpop.f32.mrb[0].mxu0
      %v3056 = vadd.f32 %v2962, %v3055
      %v3057 = vpop.f32.mrb[0].mxu0
      %3058 = vmatprep.mubr.f32.mxu0 0.0
      %3059 = vmatmul.mubr.f32.gmra.mrb[0].mxu0 %v2883
      %v3060 = vpop.f32.mrb[0].mxu0
      %v3061 = vadd.f32 %v2962, %v3060
      %v3062 = vpop.f32.mrb[0].mxu0
      %3063 = vmatprep.mubr.f32.mxu0 0.0
      %3064 = vmatmul.mubr.f32.gmra.mrb[0].mxu0 %v2884
      %v3065 = vpop.f32.mrb[0].mxu0
      %v3066 = vadd.f32 %v2962, %v3065
      %v3067 = vpop.f32.mrb[0].mxu0
      %3068 = vmatprep.mubr.f32.mxu0 0.0
      %3069 = vmatmul.mubr.f32.gmra.mrb[0].mxu0 %v2885
      %v3070 = vpop.f32.mrb[0].mxu0
      %v3071 = vadd.f32 %v2962, %v3070
      %v3072 = vpop.f32.mrb[0].mxu0
      %3073 = vmatprep.mubr.f32.mxu0 0.0
      %3074 = vmatmul.mubr.f32.gmra.mrb[0].mxu0 %v2886
      %v3075 = vpop.f32.mrb[0].mxu0
      %v3076 = vadd.f32 %v2962, %v3075
      %v3077 = vpop.f32.mrb[0].mxu0
      %3078 = vmatprep.mubr.f32.mxu0 0.0
      %3079 = vmatmul.mubr.f32.gmra.mrb[0].mxu0 %v2887
      %v3080 = vpop.f32.mrb[0].mxu0
      %v3081 = vadd.f32 %v2962, %v3080
      %v3082 = vpop.f32.mrb[0].mxu0
      %3083 = vmatprep.mubr.f32.mxu0 0.0
      %3084 = vmatmul.mubr.f32.gmra.mrb[0].mxu0 %v2888
      %v3085 = vpop.f32.mrb[0].mxu0
      %v3086 = vadd.f32 %v2962, %v3085
      %v3087 = vpop.f32.mrb[0].mxu0
      %3088 = vmatprep.mubr.f32.mxu0 0.0
      %3089 = vmatmul.mubr.f32.gmra.mrb[0].mxu0 %v2889
      %v3090 = vpop.f32.mrb[0].mxu0
      %v3091 = vadd.f32 %v2962, %v3090
      %v3092 = vpop.f32.mrb[0].mxu0
      %3093 = vmatprep.mubr.f32.mxu0 0.0
      %3094 = vmatmul.mubr.f32.gmra.mrb[0].mxu0 %v2890
      %v3095 = vpop.f32.mrb[0].mxu0
      %v3096 = vadd.f32 %v2962, %v3095
      %v3097 = vpop.f32.mrb[0].mxu0
      %3098 = vmatprep.mubr.f32.mxu0 0.0
      %3099 = vmatmul.mubr.f32.gmra.mrb[0].mxu0 %v2891
      %v3100 = vpop.f32.mrb[0].mxu0
      %v3101 = vadd.f32 %v2962, %v3100
      %v3102 = vpop.f32.mrb[0].mxu0
      %3103 = vmatprep.mubr.f32.mxu0 0.0
      %3104 = vmatmul.mubr.f32.gmra.mrb[0].mxu0 %v2892
      %v3105 = vpop.f32.mrb[0].mxu0
      %v3106 = vadd.f32 %v2962, %v3105
      %v3107 = vpop.f32.mrb[0].mxu0
      %3108 = vmatprep.mubr.f32.mxu0 0.0
      %3109 = vmatmul.mubr.f32.gmra.mrb[0].mxu0 %v2893
      %v3110 = vpop.f32.mrb[0].mxu0
      %v3111 = vadd.f32 %v2962, %v3110
      %v3112 = vpop.f32.mrb[0].mxu0
      %3113 = vmatprep.mubr.f32.mxu0 0.0
      %3114 = vmatmul.mubr.f32.gmra.mrb[0].mxu0 %v2894
      %v3115 = vpop.f32.mrb[0].mxu0
      %v3116 = vadd.f32 %v2962, %v3115
      %v3117 = vpop.f32.mrb[0].mxu0
      %3118 = vmatprep.mubr.f32.mxu0 0.0
      %3119 = vmatmul.mubr.f32.gmra.mrb[0].mxu0 %v2895
      %v3120 = vpop.f32.mrb[0].mxu0
      %v3121 = vadd.f32 %v2962, %v3120
      %v3122 = vpop.f32.mrb[0].mxu0
      %3123 = vmatprep.mubr.f32.mxu0 0.0
      %3124 = vmatmul.mubr.f32.gmra.mrb[0].mxu0 %v2896
      %v3125 = vpop.f32.mrb[0].mxu0
      %v3126 = vadd.f32 %v2962, %v3125
      %v3127 = vpop.f32.mrb[0].mxu0
      %3128 = vmatprep.mubr.f32.mxu0 0.0
      %3129 = vmatmul.mubr.f32.gmra.mrb[0].mxu0 %v2897
      %v3130 = vpop.f32.mrb[0].mxu0
      %v3131 = vadd.f32 %v2962, %v3130
      %v3132 = vpop.f32.mrb[0].mxu0
      %3133 = vmatprep.mubr.f32.mxu0 0.0
      %3134 = vmatmul.mubr.f32.gmra.mrb[0].mxu0 %v2898
      %v3135 = vpop.f32.mrb[0].mxu0
      %v3136 = vadd.f32 %v2962, %v3135
      %v3137 = vpop.f32.mrb[0].mxu0
      %3138 = vmatprep.mubr.f32.mxu0 0.0
      %3139 = vmatmul.mubr.f32.gmra.mrb[0].mxu0 %v2899
      %v3140 = vpop.f32.mrb[0].mxu0
      %v3141 = vadd.f32 %v2962, %v3140
      %v3142 = vpop.f32.mrb[0].mxu0
      %3143 = vmatprep.mubr.f32.mxu0 0.0
      %3144 = vmatmul.mubr.f32.gmra.mrb[0].mxu0 %v2900
      %v3145 = vpop.f32.mrb[0].mxu0
      %v3146 = vadd.f32 %v2962, %v3145
      %v3147 = vpop.f32.mrb[0].mxu0
      %3148 = vmatprep.mubr.f32.mxu0 0.0
      %3149 = vmatmul.mubr.f32.gmra.mrb[0].mxu0 %v2901
      %v3150 = vpop.f32.mrb[0].mxu0
      %v3151 = vadd.f32 %v2962, %v3150
      %v3152 = vpop.f32.mrb[0].mxu0
      %3153 = vmatprep.mubr.f32.mxu0 0.0
      %3154 = vmatmul.mubr.f32.gmra.mrb[0].mxu0 %v2902
      %v3155 = vpop.f32.mrb[0].mxu0
      %v3156 = vadd.f32 %v2962, %v3155
      %v3157 = vpop.f32.mrb[0].mxu0
      %3158 = vmatprep.mubr.f32.mxu0 0.0
      %3159 = vmatmul.mubr.f32.gmra.mrb[0].mxu0 %v2903
      %v3160 = vpop.f32.mrb[0].mxu0
      %v3161 = vadd.f32 %v2962, %v3160
      %v3162 = vpop.f32.mrb[0].mxu0
      %3163 = vmatprep.mubr.f32.mxu0 0.0
      %3164 = vmatmul.mubr.f32.gmra.mrb[0].mxu0 %v2904
      %v3165 = vpop.f32.mrb[0].mxu0
      %v3166 = vadd.f32 %v2962, %v3165
      %v3167 = vpop.f32.mrb[0].mxu0
      %3168 = vmatprep.mubr.f32.mxu0 0.0
      %3169 = vmatmul.mubr.f32.gmra.mrb[0].mxu0 %v2905
      %v3170 = vpop.f32.mrb[0].mxu0
      %v3171 = vadd.f32 %v2962, %v3170
      %v3172 = vpop.f32.mrb[0].mxu0
      %3173 = vmatprep.mubr.f32.mxu0 0.0
      %3174 = vmatmul.mubr.f32.gmra.mrb[0].mxu0 %v2906
      %v3175 = vpop.f32.mrb[0].mxu0
      %v3176 = vadd.f32 %v2962, %v3175
      %v3177 = vpop.f32.mrb[0].mxu0
      %3178 = vmatprep.mubr.f32.mxu0 0.0
      %3179 = vmatmul.mubr.f32.gmra.mrb[0].mxu0 %v2907
      %v3180 = vpop.f32.mrb[0].mxu0
      %v3181 = vadd.f32 %v2962, %v3180
      %v3182 = vpop.f32.mrb[0].mxu0
      %3183 = vmatprep.mubr.f32.mxu0 0.0
      %3184 = vmatmul.mubr.f32.gmra.mrb[0].mxu0 %v2908
      %v3185 = vpop.f32.mrb[0].mxu0
      %v3186 = vadd.f32 %v2962, %v3185
      %v3187 = vpop.f32.mrb[0].mxu0
      %3188 = vmatprep.mubr.f32.mxu0 0.0
      %3189 = vmatmul.mubr.f32.gmra.mrb[0].mxu0 %v2909
      %v3190 = vpop.f32.mrb[0].mxu0
      %v3191 = vadd.f32 %v2962, %v3190
      %v3192 = vpop.f32.mrb[0].mxu0
      %3193 = vmatprep.mubr.f32.mxu0 0.0
      %3194 = vmatmul.mubr.f32.gmra.mrb[0].mxu0 %v2910
      %v3195 = vpop.f32.mrb[0].mxu0
      %v3196 = vadd.f32 %v2962, %v3195
      %v3197 = vpop.f32.mrb[0].mxu0
      %3198 = vmatprep.mubr.f32.mxu0 0.0
      %3199 = vmatmul.mubr.f32.gmra.mrb[0].mxu0 %v2911
      %v3200 = vpop.f32.mrb[0].mxu0
      %v3201 = vadd.f32 %v2962, %v3200
      %v3202 = vpop.f32.mrb[0].mxu0
      %3203 = vmatprep.mubr.f32.mxu0 0.0
      %3204 = vmatmul.mubr.f32.gmra.mrb[0].mxu0 %v2912
      %v3205 = vpop.f32.mrb[0].mxu0
      %v3206 = vadd.f32 %v2962, %v3205
      %v3207 = vpop.f32.mrb[0].mxu0
      %3208 = vmatprep.mubr.f32.mxu0 0.0
      %3209 = vmatmul.mubr.f32.gmra.mrb[0].mxu0 %v2913
      %v3210 = vpop.f32.mrb[0].mxu0
      %v3211 = vadd.f32 %v2962, %v3210
      %v3212 = vpop.f32.mrb[0].mxu0
      %3213 = vmatprep.mubr.f32.mxu0 0.0
      %3214 = vmatmul.mubr.f32.gmra.mrb[0].mxu0 %v2914
      %v3215 = vpop.f32.mrb[0].mxu0
      %v3216 = vadd.f32 %v2962, %v3215
      %v3217 = vpop.f32.mrb[0].mxu0
      %3218 = vmatprep.mubr.f32.mxu0 0.0
      %3219 = vmatmul.mubr.f32.gmra.mrb[0].mxu0 %v2915
      %v3220 = vpop.f32.mrb[0].mxu0
      %v3221 = vadd.f32 %v2962, %v3220
      %v3222 = vpop.f32.mrb[0].mxu0
      %3223 = vmatprep.mubr.f32.mxu0 0.0
      %3224 = vmatmul.mubr.f32.gmra.mrb[0].mxu0 %v2916
      %v3225 = vpop.f32.mrb[0].mxu0
      %v3226 = vadd.f32 %v2962, %v3225
      %v3227 = vpop.f32.mrb[0].mxu0
      %3228 = vmatprep.mubr.f32.mxu0 0.0
      %3229 = vmatmul.mubr.f32.gmra.mrb[0].mxu0 %v2917
      %v3230 = vpop.f32.mrb[0].mxu0
      %v3231 = vadd.f32 %v2962, %v3230
      %v3232 = vpop.f32.mrb[0].mxu0
      %3233 = vmatprep.mubr.f32.mxu0 0.0
      %3234 = vmatmul.mubr.f32.gmra.mrb[0].mxu0 %v2918
      %v3235 = vpop.f32.mrb[0].mxu0
      %v3236 = vadd.f32 %v2962, %v3235
      %v3237 = vpop.f32.mrb[0].mxu0
      %3238 = vmatprep.mubr.f32.mxu0 0.0
      %3239 = vmatmul.mubr.f32.gmra.mrb[0].mxu0 %v2919
      %v3240 = vpop.f32.mrb[0].mxu0
      %v3241 = vadd.f32 %v2962, %v3240
      %v3242 = vpop.f32.mrb[0].mxu0
      %3243 = vmatprep.mubr.f32.mxu0 0.0
      %3244 = vmatmul.mubr.f32.gmra.mrb[0].mxu0 %v2920
      %v3245 = vpop.f32.mrb[0].mxu0
      %v3246 = vadd.f32 %v2962, %v3245
      %v3247 = vpop.f32.mrb[0].mxu0
      %3248 = vmatprep.mubr.f32.mxu0 0.0
      %3249 = vmatmul.mubr.f32.gmra.mrb[0].mxu0 %v2921
      %v3250 = vpop.f32.mrb[0].mxu0
      %v3251 = vadd.f32 %v2962, %v3250
      %v3252 = vpop.f32.mrb[0].mxu0
      %3253 = vmatprep.mubr.f32.mxu0 0.0
      %3254 = vmatmul.mubr.f32.gmra.mrb[0].mxu0 %v2922
      %v3255 = vpop.f32.mrb[0].mxu0
      %v3256 = vadd.f32 %v2962, %v3255
      %v3257 = vpop.f32.mrb[0].mxu0
      %3258 = vmatprep.mubr.f32.mxu0 0.0
      %3259 = vmatmul.mubr.f32.gmra.mrb[0].mxu0 %v2923
      %v3260 = vpop.f32.mrb[0].mxu0
      %v3261 = vadd.f32 %v2962, %v3260
      %v3262 = vpop.f32.mrb[0].mxu0
      %3263 = vmatprep.mubr.f32.mxu0 0.0
      %3264 = vmatmul.mubr.f32.gmra.mrb[0].mxu0 %v2924
      %v3265 = vpop.f32.mrb[0].mxu0
      %v3266 = vadd.f32 %v2962, %v3265
      %v3267 = vpop.f32.mrb[0].mxu0
      %3268 = vmatprep.mubr.f32.mxu0 0.0
      %3269 = vmatmul.mubr.f32.gmra.mrb[0].mxu0 %v2925
      %v3270 = vpop.f32.mrb[0].mxu0
      %v3271 = vadd.f32 %v2962, %v3270
      %v3272 = vpop.f32.mrb[0].mxu0
      %3273 = vmatprep.mubr.f32.mxu0 0.0
      %3274 = vmatmul.mubr.f32.gmra.mrb[0].mxu0 %v2926
      %v3275 = vpop.f32.mrb[0].mxu0
      %v3276 = vadd.f32 %v2962, %v3275
      %v3277 = vpop.f32.mrb[0].mxu0
      %3278 = vmatprep.mubr.f32.mxu0 0.0
      %3279 = vmatmul.mubr.f32.gmra.mrb[0].mxu0 %v2927
      %v3280 = vpop.f32.mrb[0].mxu0
      %v3281 = vadd.f32 %v2962, %v3280
      %v3282 = vpop.f32.mrb[0].mxu0
      %3283 = vmatprep.mubr.f32.mxu0 0.0
      %3284 = vmatmul.mubr.f32.gmra.mrb[0].mxu0 %v2928
      %v3285 = vpop.f32.mrb[0].mxu0
      %v3286 = vadd.f32 %v2962, %v3285
      %v3287 = vpop.f32.mrb[0].mxu0
      %3288 = vmatprep.mubr.f32.mxu0 0.0
      %3289 = vmatmul.mubr.f32.gmra.mrb[0].mxu0 %v2929
      %v3290 = vpop.f32.mrb[0].mxu0
      %v3291 = vadd.f32 %v2962, %v3290
      %v3292 = vpop.f32.mrb[0].mxu0
      %3293 = vmatprep.mubr.f32.mxu0 0.0
      %3294 = vmatmul.mubr.f32.gmra.mrb[0].mxu0 %v2930
      %v3295 = vpop.f32.mrb[0].mxu0
      %v3296 = vadd.f32 %v2962, %v3295
      %v3297 = vpop.f32.mrb[0].mxu0
      %3298 = vmatprep.mubr.f32.mxu0 0.0
      %3299 = vmatmul.mubr.f32.gmra.mrb[0].mxu0 %v2931
      %v3300 = vpop.f32.mrb[0].mxu0
      %v3301 = vadd.f32 %v2962, %v3300
      %v3302 = vpop.f32.mrb[0].mxu0
      %3303 = vmatprep.mubr.f32.mxu0 0.0
      %3304 = vmatmul.mubr.f32.gmra.mrb[0].mxu0 %v2932
      %v3305 = vpop.f32.mrb[0].mxu0
      %v3306 = vadd.f32 %v2962, %v3305
      %v3307 = vpop.f32.mrb[0].mxu0
      %3308 = vmatprep.mubr.f32.mxu0 0.0
      %3309 = vmatmul.mubr.f32.gmra.mrb[0].mxu0 %v2933
      %v3310 = vpop.f32.mrb[0].mxu0
      %v3311 = vadd.f32 %v2962, %v3310
      %v3312 = vpop.f32.mrb[0].mxu0
      %3313 = vmatprep.mubr.f32.mxu0 0.0
      %3314 = vmatmul.mubr.f32.gmra.mrb[0].mxu0 %v2934
      %v3315 = vpop.f32.mrb[0].mxu0
      %v3316 = vadd.f32 %v2962, %v3315
      %v3317 = vpop.f32.mrb[0].mxu0
      %3318 = vmatprep.mubr.f32.mxu0 0.0
      %3319 = vmatmul.mubr.f32.gmra.mrb[0].mxu0 %v2935
      %v3320 = vpop.f32.mrb[0].mxu0
      %v3321 = vadd.f32 %v2962, %v3320
      %v3322 = vpop.f32.mrb[0].mxu0
      %3323 = vmatprep.mubr.f32.mxu0 0.0
      %3324 = vmatmul.mubr.f32.gmra.mrb[0].mxu0 %v2936
      %v3325 = vpop.f32.mrb[0].mxu0
      %v3326 = vadd.f32 %v2962, %v3325
      %v3327 = vpop.f32.mrb[0].mxu0
      %3328 = vmatprep.mubr.f32.mxu0 0.0
      %3329 = vmatmul.mubr.f32.gmra.mrb[0].mxu0 %v2937
      %v3330 = vpop.f32.mrb[0].mxu0
      %v3331 = vadd.f32 %v2962, %v3330
      %v3332 = vpop.f32.mrb[0].mxu0
      %3333 = vmatprep.mubr.f32.mxu0 0.0
      %3334 = vmatmul.mubr.f32.gmra.mrb[0].mxu0 %v2938
      %v3335 = vpop.f32.mrb[0].mxu0
      %v3336 = vadd.f32 %v2962, %v3335
      %v3337 = vpop.f32.mrb[0].mxu0
      %3338 = vmatprep.mubr.f32.mxu0 0.0
      %3339 = vmatmul.mubr.f32.gmra.mrb[0].mxu0 %v2939
      %v3340 = vpop.f32.mrb[0].mxu0
      %v3341 = vadd.f32 %v2962, %v3340
      %v3342 = vpop.f32.mrb[0].mxu0
      %3343 = vmatprep.mubr.f32.mxu0 0.0
      %3344 = vmatmul.mubr.f32.gmra.mrb[0].mxu0 %v2940
      %v3345 = vpop.f32.mrb[0].mxu0
      %v3346 = vadd.f32 %v2962, %v3345
      %v3347 = vpop.f32.mrb[0].mxu0
      %3348 = vdwg.mxu0
      %v3349 = vmax.f32 %v3031, 0.0
      %v3350 = vmax.f32 %v3036, 0.0
      %v3351 = vmax.f32 %v3041, 0.0
      %v3352 = vmax.f32 %v3046, 0.0
      %v3353 = vmax.f32 %v3051, 0.0
      %v3354 = vmax.f32 %v3056, 0.0
      %v3355 = vmax.f32 %v3061, 0.0
      %v3356 = vmax.f32 %v3066, 0.0
      %v3357 = vmax.f32 %v3071, 0.0
      %v3358 = vmax.f32 %v3076, 0.0
      %v3359 = vmax.f32 %v3081, 0.0
      %v3360 = vmax.f32 %v3086, 0.0
      %v3361 = vmax.f32 %v3091, 0.0
      %v3362 = vmax.f32 %v3096, 0.0
      %v3363 = vmax.f32 %v3101, 0.0
      %v3364 = vmax.f32 %v3106, 0.0
      %v3365 = vmax.f32 %v3111, 0.0
      %v3366 = vmax.f32 %v3116, 0.0
      %v3367 = vmax.f32 %v3121, 0.0
      %v3368 = vmax.f32 %v3126, 0.0
      %v3369 = vmax.f32 %v3131, 0.0
      %v3370 = vmax.f32 %v3136, 0.0
      %v3371 = vmax.f32 %v3141, 0.0
      %v3372 = vmax.f32 %v3146, 0.0
      %v3373 = vmax.f32 %v3151, 0.0
      %v3374 = vmax.f32 %v3156, 0.0
      %v3375 = vmax.f32 %v3161, 0.0
      %v3376 = vmax.f32 %v3166, 0.0
      %v3377 = vmax.f32 %v3171, 0.0
      %v3378 = vmax.f32 %v3176, 0.0
      %v3379 = vmax.f32 %v3181, 0.0
      %v3380 = vmax.f32 %v3186, 0.0
      %v3381 = vmax.f32 %v3191, 0.0
      %v3382 = vmax.f32 %v3196, 0.0
      %v3383 = vmax.f32 %v3201, 0.0
      %v3384 = vmax.f32 %v3206, 0.0
      %v3385 = vmax.f32 %v3211, 0.0
      %v3386 = vmax.f32 %v3216, 0.0
      %v3387 = vmax.f32 %v3221, 0.0
      %v3388 = vmax.f32 %v3226, 0.0
      %v3389 = vmax.f32 %v3231, 0.0
      %v3390 = vmax.f32 %v3236, 0.0
      %v3391 = vmax.f32 %v3241, 0.0
      %v3392 = vmax.f32 %v3246, 0.0
      %v3393 = vmax.f32 %v3251, 0.0
      %v3394 = vmax.f32 %v3256, 0.0
      %v3395 = vmax.f32 %v3261, 0.0
      %v3396 = vmax.f32 %v3266, 0.0
      %v3397 = vmax.f32 %v3271, 0.0
      %v3398 = vmax.f32 %v3276, 0.0
      %v3399 = vmax.f32 %v3281, 0.0
      %v3400 = vmax.f32 %v3286, 0.0
      %v3401 = vmax.f32 %v3291, 0.0
      %v3402 = vmax.f32 %v3296, 0.0
      %v3403 = vmax.f32 %v3301, 0.0
      %v3404 = vmax.f32 %v3306, 0.0
      %v3405 = vmax.f32 %v3311, 0.0
      %v3406 = vmax.f32 %v3316, 0.0
      %v3407 = vmax.f32 %v3321, 0.0
      %v3408 = vmax.f32 %v3326, 0.0
      %v3409 = vmax.f32 %v3331, 0.0
      %v3410 = vmax.f32 %v3336, 0.0
      %v3411 = vmax.f32 %v3341, 0.0
      %v3412 = vmax.f32 %v3346, 0.0
      %v3413 = vld [vmem:[%s9] sm:$0xff]
      %v3414 = vld [vmem:[%s9 + $0x8] sm:$0xff]
      %v3415 = vld [vmem:[%s9 + $0x10] sm:$0xff]
      %v3416 = vld [vmem:[%s9 + $0x18] sm:$0xff]
      %v3417 = vld [vmem:[%s9 + $0x20] sm:$0xff]
      %v3418 = vld [vmem:[%s9 + $0x28] sm:$0xff]
      %v3419 = vld [vmem:[%s9 + $0x30] sm:$0xff]
      %v3420 = vld [vmem:[%s9 + $0x38] sm:$0xff]
      %v3421 = vld [vmem:[%s9 + $0x40] sm:$0xff]
      %v3422 = vld [vmem:[%s9 + $0x48] sm:$0xff]
      %v3423 = vld [vmem:[%s9 + $0x50] sm:$0xff]
      %v3424 = vld [vmem:[%s9 + $0x58] sm:$0xff]
      %v3425 = vld [vmem:[%s9 + $0x60] sm:$0xff]
      %v3426 = vld [vmem:[%s9 + $0x68] sm:$0xff]
      %v3427 = vld [vmem:[%s9 + $0x70] sm:$0xff]
      %v3428 = vld [vmem:[%s9 + $0x78] sm:$0xff]
      %v3429 = vld [vmem:[%s10] sm:$0x1]
      %v3431 = vlaneseq
      %v3432 = vshrl.u32 %v3431, 7
      %v3433 = vsub.s32 0, %v3432
      %v3434 = vrot.slane %v3429, %v3433
      %3436 = vmatprep.subr.mxu0 0.0
      %3437 = vmatpush1.msra.mxu0 %v3413
      %3438 = vmatprep.subr.mxu0 0.0
      %3439 = vmatpush1.msra.mxu0 %v3414
      %3440 = vmatprep.subr.mxu0 0.0
      %3441 = vmatpush1.msra.mxu0 %v3415
      %3442 = vmatprep.subr.mxu0 0.0
      %3443 = vmatpush1.msra.mxu0 %v3416
      %3444 = vmatprep.subr.mxu0 0.0
      %3445 = vmatpush1.msra.mxu0 %v3417
      %3446 = vmatprep.subr.mxu0 0.0
      %3447 = vmatpush1.msra.mxu0 %v3418
      %3448 = vmatprep.subr.mxu0 0.0
      %3449 = vmatpush1.msra.mxu0 %v3419
      %3450 = vmatprep.subr.mxu0 0.0
      %3451 = vmatpush1.msra.mxu0 %v3420
      %3452 = vmatprep.subr.mxu0 0.0
      %3453 = vmatpush1.msra.mxu0 %v3421
      %3454 = vmatprep.subr.mxu0 0.0
      %3455 = vmatpush1.msra.mxu0 %v3422
      %3456 = vmatprep.subr.mxu0 0.0
      %3457 = vmatpush1.msra.mxu0 %v3423
      %3458 = vmatprep.subr.mxu0 0.0
      %3459 = vmatpush1.msra.mxu0 %v3424
      %3460 = vmatprep.subr.mxu0 0.0
      %3461 = vmatpush1.msra.mxu0 %v3425
      %3462 = vmatprep.subr.mxu0 0.0
      %3463 = vmatpush1.msra.mxu0 %v3426
      %3464 = vmatprep.subr.mxu0 0.0
      %3465 = vmatpush1.msra.mxu0 %v3427
      %3466 = vmatprep.subr.mxu0 0.0
      %3467 = vmatpush1.msra.mxu0 %v3428
      %3468 = vmatprep.subr.mxu0 0.0
      %3469 = vmatpush1.msra.mxu0 0.0
      %3470 = vmatprep.subr.mxu0 0.0
      %3471 = vmatpush1.msra.mxu0 0.0
      %3472 = vmatprep.subr.mxu0 0.0
      %3473 = vmatpush1.msra.mxu0 0.0
      %3474 = vmatprep.subr.mxu0 0.0
      %3475 = vmatpush1.msra.mxu0 0.0
      %3476 = vmatprep.subr.mxu0 0.0
      %3477 = vmatpush1.msra.mxu0 0.0
      %3478 = vmatprep.subr.mxu0 0.0
      %3479 = vmatpush1.msra.mxu0 0.0
      %3480 = vmatprep.subr.mxu0 0.0
      %3481 = vmatpush1.msra.mxu0 0.0
      %3482 = vmatprep.subr.mxu0 0.0
      %3483 = vmatpush1.msra.mxu0 0.0
      %3484 = vmatprep.subr.mxu0 0.0
      %3485 = vmatpush1.msra.mxu0 0.0
      %3486 = vmatprep.subr.mxu0 0.0
      %3487 = vmatpush1.msra.mxu0 0.0
      %3488 = vmatprep.subr.mxu0 0.0
      %3489 = vmatpush1.msra.mxu0 0.0
      %3490 = vmatprep.subr.mxu0 0.0
      %3491 = vmatpush1.msra.mxu0 0.0
      %3492 = vmatprep.subr.mxu0 0.0
      %3493 = vmatpush1.msra.mxu0 0.0
      %3494 = vmatprep.subr.mxu0 0.0
      %3495 = vmatpush1.msra.mxu0 0.0
      %3496 = vmatprep.subr.mxu0 0.0
      %3497 = vmatpush1.msra.mxu0 0.0
      %3498 = vmatprep.subr.mxu0 0.0
      %3499 = vmatpush1.msra.mxu0 0.0
      %3500 = vmatprep.mubr.f32.mxu0 0.0
      %3501 = vmatmul.mubr.f32.gmra.mrb[0].mxu0 %v3349
      %v3502 = vpop.f32.mrb[0].mxu0
      %v3503 = vadd.f32 %v3434, %v3502
      %v3504 = vpop.f32.mrb[0].mxu0
      %3505 = vmatprep.mubr.f32.mxu0 0.0
      %3506 = vmatmul.mubr.f32.gmra.mrb[0].mxu0 %v3350
      %v3507 = vpop.f32.mrb[0].mxu0
      %v3508 = vadd.f32 %v3434, %v3507
      %v3509 = vpop.f32.mrb[0].mxu0
      %3510 = vmatprep.mubr.f32.mxu0 0.0
      %3511 = vmatmul.mubr.f32.gmra.mrb[0].mxu0 %v3351
      %v3512 = vpop.f32.mrb[0].mxu0
      %v3513 = vadd.f32 %v3434, %v3512
      %v3514 = vpop.f32.mrb[0].mxu0
      %3515 = vmatprep.mubr.f32.mxu0 0.0
      %3516 = vmatmul.mubr.f32.gmra.mrb[0].mxu0 %v3352
      %v3517 = vpop.f32.mrb[0].mxu0
      %v3518 = vadd.f32 %v3434, %v3517
      %v3519 = vpop.f32.mrb[0].mxu0
      %3520 = vmatprep.mubr.f32.mxu0 0.0
      %3521 = vmatmul.mubr.f32.gmra.mrb[0].mxu0 %v3353
      %v3522 = vpop.f32.mrb[0].mxu0
      %v3523 = vadd.f32 %v3434, %v3522
      %v3524 = vpop.f32.mrb[0].mxu0
      %3525 = vmatprep.mubr.f32.mxu0 0.0
      %3526 = vmatmul.mubr.f32.gmra.mrb[0].mxu0 %v3354
      %v3527 = vpop.f32.mrb[0].mxu0
      %v3528 = vadd.f32 %v3434, %v3527
      %v3529 = vpop.f32.mrb[0].mxu0
      %3530 = vmatprep.mubr.f32.mxu0 0.0
      %3531 = vmatmul.mubr.f32.gmra.mrb[0].mxu0 %v3355
      %v3532 = vpop.f32.mrb[0].mxu0
      %v3533 = vadd.f32 %v3434, %v3532
      %v3534 = vpop.f32.mrb[0].mxu0
      %3535 = vmatprep.mubr.f32.mxu0 0.0
      %3536 = vmatmul.mubr.f32.gmra.mrb[0].mxu0 %v3356
      %v3537 = vpop.f32.mrb[0].mxu0
      %v3538 = vadd.f32 %v3434, %v3537
      %v3539 = vpop.f32.mrb[0].mxu0
      %3540 = vmatprep.mubr.f32.mxu0 0.0
      %3541 = vmatmul.mubr.f32.gmra.mrb[0].mxu0 %v3357
      %v3542 = vpop.f32.mrb[0].mxu0
      %v3543 = vadd.f32 %v3434, %v3542
      %v3544 = vpop.f32.mrb[0].mxu0
      %3545 = vmatprep.mubr.f32.mxu0 0.0
      %3546 = vmatmul.mubr.f32.gmra.mrb[0].mxu0 %v3358
      %v3547 = vpop.f32.mrb[0].mxu0
      %v3548 = vadd.f32 %v3434, %v3547
      %v3549 = vpop.f32.mrb[0].mxu0
      %3550 = vmatprep.mubr.f32.mxu0 0.0
      %3551 = vmatmul.mubr.f32.gmra.mrb[0].mxu0 %v3359
      %v3552 = vpop.f32.mrb[0].mxu0
      %v3553 = vadd.f32 %v3434, %v3552
      %v3554 = vpop.f32.mrb[0].mxu0
      %3555 = vmatprep.mubr.f32.mxu0 0.0
      %3556 = vmatmul.mubr.f32.gmra.mrb[0].mxu0 %v3360
      %v3557 = vpop.f32.mrb[0].mxu0
      %v3558 = vadd.f32 %v3434, %v3557
      %v3559 = vpop.f32.mrb[0].mxu0
      %3560 = vmatprep.mubr.f32.mxu0 0.0
      %3561 = vmatmul.mubr.f32.gmra.mrb[0].mxu0 %v3361
      %v3562 = vpop.f32.mrb[0].mxu0
      %v3563 = vadd.f32 %v3434, %v3562
      %v3564 = vpop.f32.mrb[0].mxu0
      %3565 = vmatprep.mubr.f32.mxu0 0.0
      %3566 = vmatmul.mubr.f32.gmra.mrb[0].mxu0 %v3362
      %v3567 = vpop.f32.mrb[0].mxu0
      %v3568 = vadd.f32 %v3434, %v3567
      %v3569 = vpop.f32.mrb[0].mxu0
      %3570 = vmatprep.mubr.f32.mxu0 0.0
      %3571 = vmatmul.mubr.f32.gmra.mrb[0].mxu0 %v3363
      %v3572 = vpop.f32.mrb[0].mxu0
      %v3573 = vadd.f32 %v3434, %v3572
      %v3574 = vpop.f32.mrb[0].mxu0
      %3575 = vmatprep.mubr.f32.mxu0 0.0
      %3576 = vmatmul.mubr.f32.gmra.mrb[0].mxu0 %v3364
      %v3577 = vpop.f32.mrb[0].mxu0
      %v3578 = vadd.f32 %v3434, %v3577
      %v3579 = vpop.f32.mrb[0].mxu0
      %3580 = vmatprep.mubr.f32.mxu0 0.0
      %3581 = vmatmul.mubr.f32.gmra.mrb[0].mxu0 %v3365
      %v3582 = vpop.f32.mrb[0].mxu0
      %v3583 = vadd.f32 %v3434, %v3582
      %v3584 = vpop.f32.mrb[0].mxu0
      %3585 = vmatprep.mubr.f32.mxu0 0.0
      %3586 = vmatmul.mubr.f32.gmra.mrb[0].mxu0 %v3366
      %v3587 = vpop.f32.mrb[0].mxu0
      %v3588 = vadd.f32 %v3434, %v3587
      %v3589 = vpop.f32.mrb[0].mxu0
      %3590 = vmatprep.mubr.f32.mxu0 0.0
      %3591 = vmatmul.mubr.f32.gmra.mrb[0].mxu0 %v3367
      %v3592 = vpop.f32.mrb[0].mxu0
      %v3593 = vadd.f32 %v3434, %v3592
      %v3594 = vpop.f32.mrb[0].mxu0
      %3595 = vmatprep.mubr.f32.mxu0 0.0
      %3596 = vmatmul.mubr.f32.gmra.mrb[0].mxu0 %v3368
      %v3597 = vpop.f32.mrb[0].mxu0
      %v3598 = vadd.f32 %v3434, %v3597
      %v3599 = vpop.f32.mrb[0].mxu0
      %3600 = vmatprep.mubr.f32.mxu0 0.0
      %3601 = vmatmul.mubr.f32.gmra.mrb[0].mxu0 %v3369
      %v3602 = vpop.f32.mrb[0].mxu0
      %v3603 = vadd.f32 %v3434, %v3602
      %v3604 = vpop.f32.mrb[0].mxu0
      %3605 = vmatprep.mubr.f32.mxu0 0.0
      %3606 = vmatmul.mubr.f32.gmra.mrb[0].mxu0 %v3370
      %v3607 = vpop.f32.mrb[0].mxu0
      %v3608 = vadd.f32 %v3434, %v3607
      %v3609 = vpop.f32.mrb[0].mxu0
      %3610 = vmatprep.mubr.f32.mxu0 0.0
      %3611 = vmatmul.mubr.f32.gmra.mrb[0].mxu0 %v3371
      %v3612 = vpop.f32.mrb[0].mxu0
      %v3613 = vadd.f32 %v3434, %v3612
      %v3614 = vpop.f32.mrb[0].mxu0
      %3615 = vmatprep.mubr.f32.mxu0 0.0
      %3616 = vmatmul.mubr.f32.gmra.mrb[0].mxu0 %v3372
      %v3617 = vpop.f32.mrb[0].mxu0
      %v3618 = vadd.f32 %v3434, %v3617
      %v3619 = vpop.f32.mrb[0].mxu0
      %3620 = vmatprep.mubr.f32.mxu0 0.0
      %3621 = vmatmul.mubr.f32.gmra.mrb[0].mxu0 %v3373
      %v3622 = vpop.f32.mrb[0].mxu0
      %v3623 = vadd.f32 %v3434, %v3622
      %v3624 = vpop.f32.mrb[0].mxu0
      %3625 = vmatprep.mubr.f32.mxu0 0.0
      %3626 = vmatmul.mubr.f32.gmra.mrb[0].mxu0 %v3374
      %v3627 = vpop.f32.mrb[0].mxu0
      %v3628 = vadd.f32 %v3434, %v3627
      %v3629 = vpop.f32.mrb[0].mxu0
      %3630 = vmatprep.mubr.f32.mxu0 0.0
      %3631 = vmatmul.mubr.f32.gmra.mrb[0].mxu0 %v3375
      %v3632 = vpop.f32.mrb[0].mxu0
      %v3633 = vadd.f32 %v3434, %v3632
      %v3634 = vpop.f32.mrb[0].mxu0
      %3635 = vmatprep.mubr.f32.mxu0 0.0
      %3636 = vmatmul.mubr.f32.gmra.mrb[0].mxu0 %v3376
      %v3637 = vpop.f32.mrb[0].mxu0
      %v3638 = vadd.f32 %v3434, %v3637
      %v3639 = vpop.f32.mrb[0].mxu0
      %3640 = vmatprep.mubr.f32.mxu0 0.0
      %3641 = vmatmul.mubr.f32.gmra.mrb[0].mxu0 %v3377
      %v3642 = vpop.f32.mrb[0].mxu0
      %v3643 = vadd.f32 %v3434, %v3642
      %v3644 = vpop.f32.mrb[0].mxu0
      %3645 = vmatprep.mubr.f32.mxu0 0.0
      %3646 = vmatmul.mubr.f32.gmra.mrb[0].mxu0 %v3378
      %v3647 = vpop.f32.mrb[0].mxu0
      %v3648 = vadd.f32 %v3434, %v3647
      %v3649 = vpop.f32.mrb[0].mxu0
      %3650 = vmatprep.mubr.f32.mxu0 0.0
      %3651 = vmatmul.mubr.f32.gmra.mrb[0].mxu0 %v3379
      %v3652 = vpop.f32.mrb[0].mxu0
      %v3653 = vadd.f32 %v3434, %v3652
      %v3654 = vpop.f32.mrb[0].mxu0
      %3655 = vmatprep.mubr.f32.mxu0 0.0
      %3656 = vmatmul.mubr.f32.gmra.mrb[0].mxu0 %v3380
      %v3657 = vpop.f32.mrb[0].mxu0
      %v3658 = vadd.f32 %v3434, %v3657
      %v3659 = vpop.f32.mrb[0].mxu0
      %3660 = vmatprep.mubr.f32.mxu0 0.0
      %3661 = vmatmul.mubr.f32.gmra.mrb[0].mxu0 %v3381
      %v3662 = vpop.f32.mrb[0].mxu0
      %v3663 = vadd.f32 %v3434, %v3662
      %v3664 = vpop.f32.mrb[0].mxu0
      %3665 = vmatprep.mubr.f32.mxu0 0.0
      %3666 = vmatmul.mubr.f32.gmra.mrb[0].mxu0 %v3382
      %v3667 = vpop.f32.mrb[0].mxu0
      %v3668 = vadd.f32 %v3434, %v3667
      %v3669 = vpop.f32.mrb[0].mxu0
      %3670 = vmatprep.mubr.f32.mxu0 0.0
      %3671 = vmatmul.mubr.f32.gmra.mrb[0].mxu0 %v3383
      %v3672 = vpop.f32.mrb[0].mxu0
      %v3673 = vadd.f32 %v3434, %v3672
      %v3674 = vpop.f32.mrb[0].mxu0
      %3675 = vmatprep.mubr.f32.mxu0 0.0
      %3676 = vmatmul.mubr.f32.gmra.mrb[0].mxu0 %v3384
      %v3677 = vpop.f32.mrb[0].mxu0
      %v3678 = vadd.f32 %v3434, %v3677
      %v3679 = vpop.f32.mrb[0].mxu0
      %3680 = vmatprep.mubr.f32.mxu0 0.0
      %3681 = vmatmul.mubr.f32.gmra.mrb[0].mxu0 %v3385
      %v3682 = vpop.f32.mrb[0].mxu0
      %v3683 = vadd.f32 %v3434, %v3682
      %v3684 = vpop.f32.mrb[0].mxu0
      %3685 = vmatprep.mubr.f32.mxu0 0.0
      %3686 = vmatmul.mubr.f32.gmra.mrb[0].mxu0 %v3386
      %v3687 = vpop.f32.mrb[0].mxu0
      %v3688 = vadd.f32 %v3434, %v3687
      %v3689 = vpop.f32.mrb[0].mxu0
      %3690 = vmatprep.mubr.f32.mxu0 0.0
      %3691 = vmatmul.mubr.f32.gmra.mrb[0].mxu0 %v3387
      %v3692 = vpop.f32.mrb[0].mxu0
      %v3693 = vadd.f32 %v3434, %v3692
      %v3694 = vpop.f32.mrb[0].mxu0
      %3695 = vmatprep.mubr.f32.mxu0 0.0
      %3696 = vmatmul.mubr.f32.gmra.mrb[0].mxu0 %v3388
      %v3697 = vpop.f32.mrb[0].mxu0
      %v3698 = vadd.f32 %v3434, %v3697
      %v3699 = vpop.f32.mrb[0].mxu0
      %3700 = vmatprep.mubr.f32.mxu0 0.0
      %3701 = vmatmul.mubr.f32.gmra.mrb[0].mxu0 %v3389
      %v3702 = vpop.f32.mrb[0].mxu0
      %v3703 = vadd.f32 %v3434, %v3702
      %v3704 = vpop.f32.mrb[0].mxu0
      %3705 = vmatprep.mubr.f32.mxu0 0.0
      %3706 = vmatmul.mubr.f32.gmra.mrb[0].mxu0 %v3390
      %v3707 = vpop.f32.mrb[0].mxu0
      %v3708 = vadd.f32 %v3434, %v3707
      %v3709 = vpop.f32.mrb[0].mxu0
      %3710 = vmatprep.mubr.f32.mxu0 0.0
      %3711 = vmatmul.mubr.f32.gmra.mrb[0].mxu0 %v3391
      %v3712 = vpop.f32.mrb[0].mxu0
      %v3713 = vadd.f32 %v3434, %v3712
      %v3714 = vpop.f32.mrb[0].mxu0
      %3715 = vmatprep.mubr.f32.mxu0 0.0
      %3716 = vmatmul.mubr.f32.gmra.mrb[0].mxu0 %v3392
      %v3717 = vpop.f32.mrb[0].mxu0
      %v3718 = vadd.f32 %v3434, %v3717
      %v3719 = vpop.f32.mrb[0].mxu0
      %3720 = vmatprep.mubr.f32.mxu0 0.0
      %3721 = vmatmul.mubr.f32.gmra.mrb[0].mxu0 %v3393
      %v3722 = vpop.f32.mrb[0].mxu0
      %v3723 = vadd.f32 %v3434, %v3722
      %v3724 = vpop.f32.mrb[0].mxu0
      %3725 = vmatprep.mubr.f32.mxu0 0.0
      %3726 = vmatmul.mubr.f32.gmra.mrb[0].mxu0 %v3394
      %v3727 = vpop.f32.mrb[0].mxu0
      %v3728 = vadd.f32 %v3434, %v3727
      %v3729 = vpop.f32.mrb[0].mxu0
      %3730 = vmatprep.mubr.f32.mxu0 0.0
      %3731 = vmatmul.mubr.f32.gmra.mrb[0].mxu0 %v3395
      %v3732 = vpop.f32.mrb[0].mxu0
      %v3733 = vadd.f32 %v3434, %v3732
      %v3734 = vpop.f32.mrb[0].mxu0
      %3735 = vmatprep.mubr.f32.mxu0 0.0
      %3736 = vmatmul.mubr.f32.gmra.mrb[0].mxu0 %v3396
      %v3737 = vpop.f32.mrb[0].mxu0
      %v3738 = vadd.f32 %v3434, %v3737
      %v3739 = vpop.f32.mrb[0].mxu0
      %3740 = vmatprep.mubr.f32.mxu0 0.0
      %3741 = vmatmul.mubr.f32.gmra.mrb[0].mxu0 %v3397
      %v3742 = vpop.f32.mrb[0].mxu0
      %v3743 = vadd.f32 %v3434, %v3742
      %v3744 = vpop.f32.mrb[0].mxu0
      %3745 = vmatprep.mubr.f32.mxu0 0.0
      %3746 = vmatmul.mubr.f32.gmra.mrb[0].mxu0 %v3398
      %v3747 = vpop.f32.mrb[0].mxu0
      %v3748 = vadd.f32 %v3434, %v3747
      %v3749 = vpop.f32.mrb[0].mxu0
      %3750 = vmatprep.mubr.f32.mxu0 0.0
      %3751 = vmatmul.mubr.f32.gmra.mrb[0].mxu0 %v3399
      %v3752 = vpop.f32.mrb[0].mxu0
      %v3753 = vadd.f32 %v3434, %v3752
      %v3754 = vpop.f32.mrb[0].mxu0
      %3755 = vmatprep.mubr.f32.mxu0 0.0
      %3756 = vmatmul.mubr.f32.gmra.mrb[0].mxu0 %v3400
      %v3757 = vpop.f32.mrb[0].mxu0
      %v3758 = vadd.f32 %v3434, %v3757
      %v3759 = vpop.f32.mrb[0].mxu0
      %3760 = vmatprep.mubr.f32.mxu0 0.0
      %3761 = vmatmul.mubr.f32.gmra.mrb[0].mxu0 %v3401
      %v3762 = vpop.f32.mrb[0].mxu0
      %v3763 = vadd.f32 %v3434, %v3762
      %v3764 = vpop.f32.mrb[0].mxu0
      %3765 = vmatprep.mubr.f32.mxu0 0.0
      %3766 = vmatmul.mubr.f32.gmra.mrb[0].mxu0 %v3402
      %v3767 = vpop.f32.mrb[0].mxu0
      %v3768 = vadd.f32 %v3434, %v3767
      %v3769 = vpop.f32.mrb[0].mxu0
      %3770 = vmatprep.mubr.f32.mxu0 0.0
      %3771 = vmatmul.mubr.f32.gmra.mrb[0].mxu0 %v3403
      %v3772 = vpop.f32.mrb[0].mxu0
      %v3773 = vadd.f32 %v3434, %v3772
      %v3774 = vpop.f32.mrb[0].mxu0
      %3775 = vmatprep.mubr.f32.mxu0 0.0
      %3776 = vmatmul.mubr.f32.gmra.mrb[0].mxu0 %v3404
      %v3777 = vpop.f32.mrb[0].mxu0
      %v3778 = vadd.f32 %v3434, %v3777
      %v3779 = vpop.f32.mrb[0].mxu0
      %3780 = vmatprep.mubr.f32.mxu0 0.0
      %3781 = vmatmul.mubr.f32.gmra.mrb[0].mxu0 %v3405
      %v3782 = vpop.f32.mrb[0].mxu0
      %v3783 = vadd.f32 %v3434, %v3782
      %v3784 = vpop.f32.mrb[0].mxu0
      %3785 = vmatprep.mubr.f32.mxu0 0.0
      %3786 = vmatmul.mubr.f32.gmra.mrb[0].mxu0 %v3406
      %v3787 = vpop.f32.mrb[0].mxu0
      %v3788 = vadd.f32 %v3434, %v3787
      %v3789 = vpop.f32.mrb[0].mxu0
      %3790 = vmatprep.mubr.f32.mxu0 0.0
      %3791 = vmatmul.mubr.f32.gmra.mrb[0].mxu0 %v3407
      %v3792 = vpop.f32.mrb[0].mxu0
      %v3793 = vadd.f32 %v3434, %v3792
      %v3794 = vpop.f32.mrb[0].mxu0
      %3795 = vmatprep.mubr.f32.mxu0 0.0
      %3796 = vmatmul.mubr.f32.gmra.mrb[0].mxu0 %v3408
      %v3797 = vpop.f32.mrb[0].mxu0
      %v3798 = vadd.f32 %v3434, %v3797
      %v3799 = vpop.f32.mrb[0].mxu0
      %3800 = vmatprep.mubr.f32.mxu0 0.0
      %3801 = vmatmul.mubr.f32.gmra.mrb[0].mxu0 %v3409
      %v3802 = vpop.f32.mrb[0].mxu0
      %v3803 = vadd.f32 %v3434, %v3802
      %v3804 = vpop.f32.mrb[0].mxu0
      %3805 = vmatprep.mubr.f32.mxu0 0.0
      %3806 = vmatmul.mubr.f32.gmra.mrb[0].mxu0 %v3410
      %v3807 = vpop.f32.mrb[0].mxu0
      %v3808 = vadd.f32 %v3434, %v3807
      %v3809 = vpop.f32.mrb[0].mxu0
      %3810 = vmatprep.mubr.f32.mxu0 0.0
      %3811 = vmatmul.mubr.f32.gmra.mrb[0].mxu0 %v3411
      %v3812 = vpop.f32.mrb[0].mxu0
      %v3813 = vadd.f32 %v3434, %v3812
      %v3814 = vpop.f32.mrb[0].mxu0
      %3815 = vmatprep.mubr.f32.mxu0 0.0
      %3816 = vmatmul.mubr.f32.gmra.mrb[0].mxu0 %v3412
      %v3817 = vpop.f32.mrb[0].mxu0
      %v3818 = vadd.f32 %v3434, %v3817
      %v3819 = vpop.f32.mrb[0].mxu0
      %3820 = vdwg.mxu0
      %v3821 = vmax.f32 %v3503, 0.0
      %v3822 = vmax.f32 %v3508, 0.0
      %v3823 = vmax.f32 %v3513, 0.0
      %v3824 = vmax.f32 %v3518, 0.0
      %v3825 = vmax.f32 %v3523, 0.0
      %v3826 = vmax.f32 %v3528, 0.0
      %v3827 = vmax.f32 %v3533, 0.0
      %v3828 = vmax.f32 %v3538, 0.0
      %v3829 = vmax.f32 %v3543, 0.0
      %v3830 = vmax.f32 %v3548, 0.0
      %v3831 = vmax.f32 %v3553, 0.0
      %v3832 = vmax.f32 %v3558, 0.0
      %v3833 = vmax.f32 %v3563, 0.0
      %v3834 = vmax.f32 %v3568, 0.0
      %v3835 = vmax.f32 %v3573, 0.0
      %v3836 = vmax.f32 %v3578, 0.0
      %v3837 = vmax.f32 %v3583, 0.0
      %v3838 = vmax.f32 %v3588, 0.0
      %v3839 = vmax.f32 %v3593, 0.0
      %v3840 = vmax.f32 %v3598, 0.0
      %v3841 = vmax.f32 %v3603, 0.0
      %v3842 = vmax.f32 %v3608, 0.0
      %v3843 = vmax.f32 %v3613, 0.0
      %v3844 = vmax.f32 %v3618, 0.0
      %v3845 = vmax.f32 %v3623, 0.0
      %v3846 = vmax.f32 %v3628, 0.0
      %v3847 = vmax.f32 %v3633, 0.0
      %v3848 = vmax.f32 %v3638, 0.0
      %v3849 = vmax.f32 %v3643, 0.0
      %v3850 = vmax.f32 %v3648, 0.0
      %v3851 = vmax.f32 %v3653, 0.0
      %v3852 = vmax.f32 %v3658, 0.0
      %v3853 = vmax.f32 %v3663, 0.0
      %v3854 = vmax.f32 %v3668, 0.0
      %v3855 = vmax.f32 %v3673, 0.0
      %v3856 = vmax.f32 %v3678, 0.0
      %v3857 = vmax.f32 %v3683, 0.0
      %v3858 = vmax.f32 %v3688, 0.0
      %v3859 = vmax.f32 %v3693, 0.0
      %v3860 = vmax.f32 %v3698, 0.0
      %v3861 = vmax.f32 %v3703, 0.0
      %v3862 = vmax.f32 %v3708, 0.0
      %v3863 = vmax.f32 %v3713, 0.0
      %v3864 = vmax.f32 %v3718, 0.0
      %v3865 = vmax.f32 %v3723, 0.0
      %v3866 = vmax.f32 %v3728, 0.0
      %v3867 = vmax.f32 %v3733, 0.0
      %v3868 = vmax.f32 %v3738, 0.0
      %v3869 = vmax.f32 %v3743, 0.0
      %v3870 = vmax.f32 %v3748, 0.0
      %v3871 = vmax.f32 %v3753, 0.0
      %v3872 = vmax.f32 %v3758, 0.0
      %v3873 = vmax.f32 %v3763, 0.0
      %v3874 = vmax.f32 %v3768, 0.0
      %v3875 = vmax.f32 %v3773, 0.0
      %v3876 = vmax.f32 %v3778, 0.0
      %v3877 = vmax.f32 %v3783, 0.0
      %v3878 = vmax.f32 %v3788, 0.0
      %v3879 = vmax.f32 %v3793, 0.0
      %v3880 = vmax.f32 %v3798, 0.0
      %v3881 = vmax.f32 %v3803, 0.0
      %v3882 = vmax.f32 %v3808, 0.0
      %v3883 = vmax.f32 %v3813, 0.0
      %v3884 = vmax.f32 %v3818, 0.0
      %v3885 = vld [vmem:[%s11] sm:$0x7]
      %v3886 = vld [vmem:[%s12] sm:$0xff]
      %v3887 = vld [vmem:[%s12 + $0x8] sm:$0xff]
      %v3888 = vld [vmem:[%s12 + $0x10] sm:$0xff]
      %v3889 = vld [vmem:[%s12 + $0x18] sm:$0xff]
      %v3890 = vld [vmem:[%s12 + $0x20] sm:$0xff]
      %v3891 = vld [vmem:[%s12 + $0x28] sm:$0xff]
      %v3892 = vld [vmem:[%s12 + $0x30] sm:$0xff]
      %v3893 = vld [vmem:[%s12 + $0x38] sm:$0xff]
      %v3894 = vld [vmem:[%s12 + $0x40] sm:$0xff]
      %v3895 = vld [vmem:[%s12 + $0x48] sm:$0xff]
      %v3896 = vld [vmem:[%s12 + $0x50] sm:$0xff]
      %v3897 = vld [vmem:[%s12 + $0x58] sm:$0xff]
      %v3898 = vld [vmem:[%s12 + $0x60] sm:$0xff]
      %v3899 = vld [vmem:[%s12 + $0x68] sm:$0xff]
      %v3900 = vld [vmem:[%s12 + $0x70] sm:$0xff]
      %v3901 = vld [vmem:[%s12 + $0x78] sm:$0xff]
      %v3902 = vld [vmem:[%s13] sm:$0x1]
      %v3903 = vlaneseq
      %v3904 = vshrl.u32 %v3903, 7
      %v3905 = vsub.s32 0, %v3904
      %v3906 = vrot.slane %v3885, %v3905
      %v3907 = vmul.f32 %v702, %v3906
      %v3908 = vmul.f32 %v707, %v3906
      %v3909 = vmul.f32 %v712, %v3906
      %v3910 = vmul.f32 %v717, %v3906
      %v3911 = vmul.f32 %v722, %v3906
      %v3912 = vmul.f32 %v727, %v3906
      %v3913 = vmul.f32 %v732, %v3906
      %v3914 = vmul.f32 %v737, %v3906
      %v3915 = vmul.f32 %v742, %v3906
      %v3916 = vmul.f32 %v747, %v3906
      %v3917 = vmul.f32 %v752, %v3906
      %v3918 = vmul.f32 %v757, %v3906
      %v3919 = vmul.f32 %v762, %v3906
      %v3920 = vmul.f32 %v767, %v3906
      %v3921 = vmul.f32 %v772, %v3906
      %v3922 = vmul.f32 %v777, %v3906
      %v3923 = vmul.f32 %v782, %v3906
      %v3924 = vmul.f32 %v787, %v3906
      %v3925 = vmul.f32 %v792, %v3906
      %v3926 = vmul.f32 %v797, %v3906
      %v3927 = vmul.f32 %v802, %v3906
      %v3928 = vmul.f32 %v807, %v3906
      %v3929 = vmul.f32 %v812, %v3906
      %v3930 = vmul.f32 %v817, %v3906
      %v3931 = vmul.f32 %v822, %v3906
      %v3932 = vmul.f32 %v827, %v3906
      %v3933 = vmul.f32 %v832, %v3906
      %v3934 = vmul.f32 %v837, %v3906
      %v3935 = vmul.f32 %v842, %v3906
      %v3936 = vmul.f32 %v847, %v3906
      %v3937 = vmul.f32 %v852, %v3906
      %v3938 = vmul.f32 %v857, %v3906
      %v3939 = vmul.f32 %v862, %v3906
      %v3940 = vmul.f32 %v867, %v3906
      %v3941 = vmul.f32 %v872, %v3906
      %v3942 = vmul.f32 %v877, %v3906
      %v3943 = vmul.f32 %v882, %v3906
      %v3944 = vmul.f32 %v887, %v3906
      %v3945 = vmul.f32 %v892, %v3906
      %v3946 = vmul.f32 %v897, %v3906
      %v3947 = vmul.f32 %v902, %v3906
      %v3948 = vmul.f32 %v907, %v3906
      %v3949 = vmul.f32 %v912, %v3906
      %v3950 = vmul.f32 %v917, %v3906
      %v3951 = vmul.f32 %v922, %v3906
      %v3952 = vmul.f32 %v927, %v3906
      %v3953 = vmul.f32 %v932, %v3906
      %v3954 = vmul.f32 %v937, %v3906
      %v3955 = vmul.f32 %v942, %v3906
      %v3956 = vmul.f32 %v947, %v3906
      %v3957 = vmul.f32 %v952, %v3906
      %v3958 = vmul.f32 %v957, %v3906
      %v3959 = vmul.f32 %v962, %v3906
      %v3960 = vmul.f32 %v967, %v3906
      %v3961 = vmul.f32 %v972, %v3906
      %v3962 = vmul.f32 %v977, %v3906
      %v3963 = vmul.f32 %v982, %v3906
      %v3964 = vmul.f32 %v987, %v3906
      %v3965 = vmul.f32 %v992, %v3906
      %v3966 = vmul.f32 %v997, %v3906
      %v3967 = vmul.f32 %v1002, %v3906
      %v3968 = vmul.f32 %v1007, %v3906
      %v3969 = vmul.f32 %v1012, %v3906
      %v3970 = vmul.f32 %v1017, %v3906
      %v3971 = vlaneseq
      %v3972 = vshrl.u32 %v3971, 7
      %v3973 = vsub.s32 1, %v3972
      %v3974 = vrot.slane %v3885, %v3973
      %v3975 = vmul.f32 %v1089, %v3974
      %v3976 = vmul.f32 %v1093, %v3974
      %v3977 = vmul.f32 %v1097, %v3974
      %v3978 = vmul.f32 %v1101, %v3974
      %v3979 = vmul.f32 %v1105, %v3974
      %v3980 = vmul.f32 %v1109, %v3974
      %v3981 = vmul.f32 %v1113, %v3974
      %v3982 = vmul.f32 %v1117, %v3974
      %v3983 = vmul.f32 %v1121, %v3974
      %v3984 = vmul.f32 %v1125, %v3974
      %v3985 = vmul.f32 %v1129, %v3974
      %v3986 = vmul.f32 %v1133, %v3974
      %v3987 = vmul.f32 %v1137, %v3974
      %v3988 = vmul.f32 %v1141, %v3974
      %v3989 = vmul.f32 %v1145, %v3974
      %v3990 = vmul.f32 %v1149, %v3974
      %v3991 = vmul.f32 %v1153, %v3974
      %v3992 = vmul.f32 %v1157, %v3974
      %v3993 = vmul.f32 %v1161, %v3974
      %v3994 = vmul.f32 %v1165, %v3974
      %v3995 = vmul.f32 %v1169, %v3974
      %v3996 = vmul.f32 %v1173, %v3974
      %v3997 = vmul.f32 %v1177, %v3974
      %v3998 = vmul.f32 %v1181, %v3974
      %v3999 = vmul.f32 %v1185, %v3974
      %v4000 = vmul.f32 %v1189, %v3974
      %v4001 = vmul.f32 %v1193, %v3974
      %v4002 = vmul.f32 %v1197, %v3974
      %v4003 = vmul.f32 %v1201, %v3974
      %v4004 = vmul.f32 %v1205, %v3974
      %v4005 = vmul.f32 %v1209, %v3974
      %v4006 = vmul.f32 %v1213, %v3974
      %v4007 = vmul.f32 %v1217, %v3974
      %v4008 = vmul.f32 %v1221, %v3974
      %v4009 = vmul.f32 %v1225, %v3974
      %v4010 = vmul.f32 %v1229, %v3974
      %v4011 = vmul.f32 %v1233, %v3974
      %v4012 = vmul.f32 %v1237, %v3974
      %v4013 = vmul.f32 %v1241, %v3974
      %v4014 = vmul.f32 %v1245, %v3974
      %v4015 = vmul.f32 %v1249, %v3974
      %v4016 = vmul.f32 %v1253, %v3974
      %v4017 = vmul.f32 %v1257, %v3974
      %v4018 = vmul.f32 %v1261, %v3974
      %v4019 = vmul.f32 %v1265, %v3974
      %v4020 = vmul.f32 %v1269, %v3974
      %v4021 = vmul.f32 %v1273, %v3974
      %v4022 = vmul.f32 %v1277, %v3974
      %v4023 = vmul.f32 %v1281, %v3974
      %v4024 = vmul.f32 %v1285, %v3974
      %v4025 = vmul.f32 %v1289, %v3974
      %v4026 = vmul.f32 %v1293, %v3974
      %v4027 = vmul.f32 %v1297, %v3974
      %v4028 = vmul.f32 %v1301, %v3974
      %v4029 = vmul.f32 %v1305, %v3974
      %v4030 = vmul.f32 %v1309, %v3974
      %v4031 = vmul.f32 %v1313, %v3974
      %v4032 = vmul.f32 %v1317, %v3974
      %v4033 = vmul.f32 %v1321, %v3974
      %v4034 = vmul.f32 %v1325, %v3974
      %v4035 = vmul.f32 %v1329, %v3974
      %v4036 = vmul.f32 %v1333, %v3974
      %v4037 = vmul.f32 %v1337, %v3974
      %v4038 = vmul.f32 %v1341, %v3974
      %v4039 = vadd.f32 %v3907, %v3975
      %v4040 = vadd.f32 %v3908, %v3976
      %v4041 = vadd.f32 %v3909, %v3977
      %v4042 = vadd.f32 %v3910, %v3978
      %v4043 = vadd.f32 %v3911, %v3979
      %v4044 = vadd.f32 %v3912, %v3980
      %v4045 = vadd.f32 %v3913, %v3981
      %v4046 = vadd.f32 %v3914, %v3982
      %v4047 = vadd.f32 %v3915, %v3983
      %v4048 = vadd.f32 %v3916, %v3984
      %v4049 = vadd.f32 %v3917, %v3985
      %v4050 = vadd.f32 %v3918, %v3986
      %v4051 = vadd.f32 %v3919, %v3987
      %v4052 = vadd.f32 %v3920, %v3988
      %v4053 = vadd.f32 %v3921, %v3989
      %v4054 = vadd.f32 %v3922, %v3990
      %v4055 = vadd.f32 %v3923, %v3991
      %v4056 = vadd.f32 %v3924, %v3992
      %v4057 = vadd.f32 %v3925, %v3993
      %v4058 = vadd.f32 %v3926, %v3994
      %v4059 = vadd.f32 %v3927, %v3995
      %v4060 = vadd.f32 %v3928, %v3996
      %v4061 = vadd.f32 %v3929, %v3997
      %v4062 = vadd.f32 %v3930, %v3998
      %v4063 = vadd.f32 %v3931, %v3999
      %v4064 = vadd.f32 %v3932, %v4000
      %v4065 = vadd.f32 %v3933, %v4001
      %v4066 = vadd.f32 %v3934, %v4002
      %v4067 = vadd.f32 %v3935, %v4003
      %v4068 = vadd.f32 %v3936, %v4004
      %v4069 = vadd.f32 %v3937, %v4005
      %v4070 = vadd.f32 %v3938, %v4006
      %v4071 = vadd.f32 %v3939, %v4007
      %v4072 = vadd.f32 %v3940, %v4008
      %v4073 = vadd.f32 %v3941, %v4009
      %v4074 = vadd.f32 %v3942, %v4010
      %v4075 = vadd.f32 %v3943, %v4011
      %v4076 = vadd.f32 %v3944, %v4012
      %v4077 = vadd.f32 %v3945, %v4013
      %v4078 = vadd.f32 %v3946, %v4014
      %v4079 = vadd.f32 %v3947, %v4015
      %v4080 = vadd.f32 %v3948, %v4016
      %v4081 = vadd.f32 %v3949, %v4017
      %v4082 = vadd.f32 %v3950, %v4018
      %v4083 = vadd.f32 %v3951, %v4019
      %v4084 = vadd.f32 %v3952, %v4020
      %v4085 = vadd.f32 %v3953, %v4021
      %v4086 = vadd.f32 %v3954, %v4022
      %v4087 = vadd.f32 %v3955, %v4023
      %v4088 = vadd.f32 %v3956, %v4024
      %v4089 = vadd.f32 %v3957, %v4025
      %v4090 = vadd.f32 %v3958, %v4026
      %v4091 = vadd.f32 %v3959, %v4027
      %v4092 = vadd.f32 %v3960, %v4028
      %v4093 = vadd.f32 %v3961, %v4029
      %v4094 = vadd.f32 %v3962, %v4030
      %v4095 = vadd.f32 %v3963, %v4031
      %v4096 = vadd.f32 %v3964, %v4032
      %v4097 = vadd.f32 %v3965, %v4033
      %v4098 = vadd.f32 %v3966, %v4034
      %v4099 = vadd.f32 %v3967, %v4035
      %v4100 = vadd.f32 %v3968, %v4036
      %v4101 = vadd.f32 %v3969, %v4037
      %v4102 = vadd.f32 %v3970, %v4038
      %v4103 = vlaneseq
      %v4104 = vshrl.u32 %v4103, 7
      %v4105 = vsub.s32 2, %v4104
      %v4106 = vrot.slane %v3885, %v4105
      %v4107 = vmul.f32 %v1477, %v4106
      %v4108 = vmul.f32 %v1481, %v4106
      %v4109 = vmul.f32 %v1485, %v4106
      %v4110 = vmul.f32 %v1489, %v4106
      %v4111 = vmul.f32 %v1493, %v4106
      %v4112 = vmul.f32 %v1497, %v4106
      %v4113 = vmul.f32 %v1501, %v4106
      %v4114 = vmul.f32 %v1505, %v4106
      %v4115 = vmul.f32 %v1509, %v4106
      %v4116 = vmul.f32 %v1513, %v4106
      %v4117 = vmul.f32 %v1517, %v4106
      %v4118 = vmul.f32 %v1521, %v4106
      %v4119 = vmul.f32 %v1525, %v4106
      %v4120 = vmul.f32 %v1529, %v4106
      %v4121 = vmul.f32 %v1533, %v4106
      %v4122 = vmul.f32 %v1537, %v4106
      %v4123 = vmul.f32 %v1541, %v4106
      %v4124 = vmul.f32 %v1545, %v4106
      %v4125 = vmul.f32 %v1549, %v4106
      %v4126 = vmul.f32 %v1553, %v4106
      %v4127 = vmul.f32 %v1557, %v4106
      %v4128 = vmul.f32 %v1561, %v4106
      %v4129 = vmul.f32 %v1565, %v4106
      %v4130 = vmul.f32 %v1569, %v4106
      %v4131 = vmul.f32 %v1573, %v4106
      %v4132 = vmul.f32 %v1577, %v4106
      %v4133 = vmul.f32 %v1581, %v4106
      %v4134 = vmul.f32 %v1585, %v4106
      %v4135 = vmul.f32 %v1589, %v4106
      %v4136 = vmul.f32 %v1593, %v4106
      %v4137 = vmul.f32 %v1597, %v4106
      %v4138 = vmul.f32 %v1601, %v4106
      %v4139 = vmul.f32 %v1605, %v4106
      %v4140 = vmul.f32 %v1609, %v4106
      %v4141 = vmul.f32 %v1613, %v4106
      %v4142 = vmul.f32 %v1617, %v4106
      %v4143 = vmul.f32 %v1621, %v4106
      %v4144 = vmul.f32 %v1625, %v4106
      %v4145 = vmul.f32 %v1629, %v4106
      %v4146 = vmul.f32 %v1633, %v4106
      %v4147 = vmul.f32 %v1637, %v4106
      %v4148 = vmul.f32 %v1641, %v4106
      %v4149 = vmul.f32 %v1645, %v4106
      %v4150 = vmul.f32 %v1649, %v4106
      %v4151 = vmul.f32 %v1653, %v4106
      %v4152 = vmul.f32 %v1657, %v4106
      %v4153 = vmul.f32 %v1661, %v4106
      %v4154 = vmul.f32 %v1665, %v4106
      %v4155 = vmul.f32 %v1669, %v4106
      %v4156 = vmul.f32 %v1673, %v4106
      %v4157 = vmul.f32 %v1677, %v4106
      %v4158 = vmul.f32 %v1681, %v4106
      %v4159 = vmul.f32 %v1685, %v4106
      %v4160 = vmul.f32 %v1689, %v4106
      %v4161 = vmul.f32 %v1693, %v4106
      %v4162 = vmul.f32 %v1697, %v4106
      %v4163 = vmul.f32 %v1701, %v4106
      %v4164 = vmul.f32 %v1705, %v4106
      %v4165 = vmul.f32 %v1709, %v4106
      %v4166 = vmul.f32 %v1713, %v4106
      %v4167 = vmul.f32 %v1717, %v4106
      %v4168 = vmul.f32 %v1721, %v4106
      %v4169 = vmul.f32 %v1725, %v4106
      %v4170 = vmul.f32 %v1729, %v4106
      %v4171 = vadd.f32 %v4039, %v4107
      %v4172 = vadd.f32 %v4040, %v4108
      %v4173 = vadd.f32 %v4041, %v4109
      %v4174 = vadd.f32 %v4042, %v4110
      %v4175 = vadd.f32 %v4043, %v4111
      %v4176 = vadd.f32 %v4044, %v4112
      %v4177 = vadd.f32 %v4045, %v4113
      %v4178 = vadd.f32 %v4046, %v4114
      %v4179 = vadd.f32 %v4047, %v4115
      %v4180 = vadd.f32 %v4048, %v4116
      %v4181 = vadd.f32 %v4049, %v4117
      %v4182 = vadd.f32 %v4050, %v4118
      %v4183 = vadd.f32 %v4051, %v4119
      %v4184 = vadd.f32 %v4052, %v4120
      %v4185 = vadd.f32 %v4053, %v4121
      %v4186 = vadd.f32 %v4054, %v4122
      %v4187 = vadd.f32 %v4055, %v4123
      %v4188 = vadd.f32 %v4056, %v4124
      %v4189 = vadd.f32 %v4057, %v4125
      %v4190 = vadd.f32 %v4058, %v4126
      %v4191 = vadd.f32 %v4059, %v4127
      %v4192 = vadd.f32 %v4060, %v4128
      %v4193 = vadd.f32 %v4061, %v4129
      %v4194 = vadd.f32 %v4062, %v4130
      %v4195 = vadd.f32 %v4063, %v4131
      %v4196 = vadd.f32 %v4064, %v4132
      %v4197 = vadd.f32 %v4065, %v4133
      %v4198 = vadd.f32 %v4066, %v4134
      %v4199 = vadd.f32 %v4067, %v4135
      %v4200 = vadd.f32 %v4068, %v4136
      %v4201 = vadd.f32 %v4069, %v4137
      %v4202 = vadd.f32 %v4070, %v4138
      %v4203 = vadd.f32 %v4071, %v4139
      %v4204 = vadd.f32 %v4072, %v4140
      %v4205 = vadd.f32 %v4073, %v4141
      %v4206 = vadd.f32 %v4074, %v4142
      %v4207 = vadd.f32 %v4075, %v4143
      %v4208 = vadd.f32 %v4076, %v4144
      %v4209 = vadd.f32 %v4077, %v4145
      %v4210 = vadd.f32 %v4078, %v4146
      %v4211 = vadd.f32 %v4079, %v4147
      %v4212 = vadd.f32 %v4080, %v4148
      %v4213 = vadd.f32 %v4081, %v4149
      %v4214 = vadd.f32 %v4082, %v4150
      %v4215 = vadd.f32 %v4083, %v4151
      %v4216 = vadd.f32 %v4084, %v4152
      %v4217 = vadd.f32 %v4085, %v4153
      %v4218 = vadd.f32 %v4086, %v4154
      %v4219 = vadd.f32 %v4087, %v4155
      %v4220 = vadd.f32 %v4088, %v4156
      %v4221 = vadd.f32 %v4089, %v4157
      %v4222 = vadd.f32 %v4090, %v4158
      %v4223 = vadd.f32 %v4091, %v4159
      %v4224 = vadd.f32 %v4092, %v4160
      %v4225 = vadd.f32 %v4093, %v4161
      %v4226 = vadd.f32 %v4094, %v4162
      %v4227 = vadd.f32 %v4095, %v4163
      %v4228 = vadd.f32 %v4096, %v4164
      %v4229 = vadd.f32 %v4097, %v4165
      %v4230 = vadd.f32 %v4098, %v4166
      %v4231 = vadd.f32 %v4099, %v4167
      %v4232 = vadd.f32 %v4100, %v4168
      %v4233 = vadd.f32 %v4101, %v4169
      %v4234 = vadd.f32 %v4102, %v4170
      %4235 = vmatprep.subr.mxu0 0.0
      %4236 = vmatpush1.msra.mxu0 %v3886
      %4237 = vmatprep.subr.mxu0 0.0
      %4238 = vmatpush1.msra.mxu0 %v3887
      %4239 = vmatprep.subr.mxu0 0.0
      %4240 = vmatpush1.msra.mxu0 %v3888
      %4241 = vmatprep.subr.mxu0 0.0
      %4242 = vmatpush1.msra.mxu0 %v3889
      %4243 = vmatprep.subr.mxu0 0.0
      %4244 = vmatpush1.msra.mxu0 %v3890
      %4245 = vmatprep.subr.mxu0 0.0
      %4246 = vmatpush1.msra.mxu0 %v3891
      %4247 = vmatprep.subr.mxu0 0.0
      %4248 = vmatpush1.msra.mxu0 %v3892
      %4249 = vmatprep.subr.mxu0 0.0
      %4250 = vmatpush1.msra.mxu0 %v3893
      %4251 = vmatprep.subr.mxu0 0.0
      %4252 = vmatpush1.msra.mxu0 %v3894
      %4253 = vmatprep.subr.mxu0 0.0
      %4254 = vmatpush1.msra.mxu0 %v3895
      %4255 = vmatprep.subr.mxu0 0.0
      %4256 = vmatpush1.msra.mxu0 %v3896
      %4257 = vmatprep.subr.mxu0 0.0
      %4258 = vmatpush1.msra.mxu0 %v3897
      %4259 = vmatprep.subr.mxu0 0.0
      %4260 = vmatpush1.msra.mxu0 %v3898
      %4261 = vmatprep.subr.mxu0 0.0
      %4262 = vmatpush1.msra.mxu0 %v3899
      %4263 = vmatprep.subr.mxu0 0.0
      %4264 = vmatpush1.msra.mxu0 %v3900
      %4265 = vmatprep.subr.mxu0 0.0
      %4266 = vmatpush1.msra.mxu0 %v3901
      %4267 = vmatprep.subr.mxu0 0.0
      %4268 = vmatpush1.msra.mxu0 0.0
      %4269 = vmatprep.subr.mxu0 0.0
      %4270 = vmatpush1.msra.mxu0 0.0
      %4271 = vmatprep.subr.mxu0 0.0
      %4272 = vmatpush1.msra.mxu0 0.0
      %4273 = vmatprep.subr.mxu0 0.0
      %4274 = vmatpush1.msra.mxu0 0.0
      %4275 = vmatprep.subr.mxu0 0.0
      %4276 = vmatpush1.msra.mxu0 0.0
      %4277 = vmatprep.subr.mxu0 0.0
      %4278 = vmatpush1.msra.mxu0 0.0
      %4279 = vmatprep.subr.mxu0 0.0
      %4280 = vmatpush1.msra.mxu0 0.0
      %4281 = vmatprep.subr.mxu0 0.0
      %4282 = vmatpush1.msra.mxu0 0.0
      %4283 = vmatprep.subr.mxu0 0.0
      %4284 = vmatpush1.msra.mxu0 0.0
      %4285 = vmatprep.subr.mxu0 0.0
      %4286 = vmatpush1.msra.mxu0 0.0
      %4287 = vmatprep.subr.mxu0 0.0
      %4288 = vmatpush1.msra.mxu0 0.0
      %4289 = vmatprep.subr.mxu0 0.0
      %4290 = vmatpush1.msra.mxu0 0.0
      %4291 = vmatprep.subr.mxu0 0.0
      %4292 = vmatpush1.msra.mxu0 0.0
      %4293 = vmatprep.subr.mxu0 0.0
      %4294 = vmatpush1.msra.mxu0 0.0
      %4295 = vmatprep.subr.mxu0 0.0
      %4296 = vmatpush1.msra.mxu0 0.0
      %4297 = vmatprep.subr.mxu0 0.0
      %4298 = vmatpush1.msra.mxu0 0.0
      %4299 = vmatprep.mubr.f32.mxu0 0.0
      %4300 = vmatmul.mubr.f32.gmra.mrb[0].mxu0 %v3821
      %v4301 = vpop.f32.mrb[0].mxu0
      %v4302 = vadd.f32 %v4171, %v4301
      %v4303 = vpop.f32.mrb[0].mxu0
      %4304 = vmatprep.mubr.f32.mxu0 0.0
      %4305 = vmatmul.mubr.f32.gmra.mrb[0].mxu0 %v3822
      %v4306 = vpop.f32.mrb[0].mxu0
      %v4307 = vadd.f32 %v4172, %v4306
      %v4308 = vpop.f32.mrb[0].mxu0
      %4309 = vmatprep.mubr.f32.mxu0 0.0
      %4310 = vmatmul.mubr.f32.gmra.mrb[0].mxu0 %v3823
      %v4311 = vpop.f32.mrb[0].mxu0
      %v4312 = vadd.f32 %v4173, %v4311
      %v4313 = vpop.f32.mrb[0].mxu0
      %4314 = vmatprep.mubr.f32.mxu0 0.0
      %4315 = vmatmul.mubr.f32.gmra.mrb[0].mxu0 %v3824
      %v4316 = vpop.f32.mrb[0].mxu0
      %v4317 = vadd.f32 %v4174, %v4316
      %v4318 = vpop.f32.mrb[0].mxu0
      %4319 = vmatprep.mubr.f32.mxu0 0.0
      %4320 = vmatmul.mubr.f32.gmra.mrb[0].mxu0 %v3825
      %v4321 = vpop.f32.mrb[0].mxu0
      %v4322 = vadd.f32 %v4175, %v4321
      %v4323 = vpop.f32.mrb[0].mxu0
      %4324 = vmatprep.mubr.f32.mxu0 0.0
      %4325 = vmatmul.mubr.f32.gmra.mrb[0].mxu0 %v3826
      %v4326 = vpop.f32.mrb[0].mxu0
      %v4327 = vadd.f32 %v4176, %v4326
      %v4328 = vpop.f32.mrb[0].mxu0
      %4329 = vmatprep.mubr.f32.mxu0 0.0
      %4330 = vmatmul.mubr.f32.gmra.mrb[0].mxu0 %v3827
      %v4331 = vpop.f32.mrb[0].mxu0
      %v4332 = vadd.f32 %v4177, %v4331
      %v4333 = vpop.f32.mrb[0].mxu0
      %4334 = vmatprep.mubr.f32.mxu0 0.0
      %4335 = vmatmul.mubr.f32.gmra.mrb[0].mxu0 %v3828
      %v4336 = vpop.f32.mrb[0].mxu0
      %v4337 = vadd.f32 %v4178, %v4336
      %v4338 = vpop.f32.mrb[0].mxu0
      %4339 = vmatprep.mubr.f32.mxu0 0.0
      %4340 = vmatmul.mubr.f32.gmra.mrb[0].mxu0 %v3829
      %v4341 = vpop.f32.mrb[0].mxu0
      %v4342 = vadd.f32 %v4179, %v4341
      %v4343 = vpop.f32.mrb[0].mxu0
      %4344 = vmatprep.mubr.f32.mxu0 0.0
      %4345 = vmatmul.mubr.f32.gmra.mrb[0].mxu0 %v3830
      %v4346 = vpop.f32.mrb[0].mxu0
      %v4347 = vadd.f32 %v4180, %v4346
      %v4348 = vpop.f32.mrb[0].mxu0
      %4349 = vmatprep.mubr.f32.mxu0 0.0
      %4350 = vmatmul.mubr.f32.gmra.mrb[0].mxu0 %v3831
      %v4351 = vpop.f32.mrb[0].mxu0
      %v4352 = vadd.f32 %v4181, %v4351
      %v4353 = vpop.f32.mrb[0].mxu0
      %4354 = vmatprep.mubr.f32.mxu0 0.0
      %4355 = vmatmul.mubr.f32.gmra.mrb[0].mxu0 %v3832
      %v4356 = vpop.f32.mrb[0].mxu0
      %v4357 = vadd.f32 %v4182, %v4356
      %v4358 = vpop.f32.mrb[0].mxu0
      %4359 = vmatprep.mubr.f32.mxu0 0.0
      %4360 = vmatmul.mubr.f32.gmra.mrb[0].mxu0 %v3833
      %v4361 = vpop.f32.mrb[0].mxu0
      %v4362 = vadd.f32 %v4183, %v4361
      %v4363 = vpop.f32.mrb[0].mxu0
      %4364 = vmatprep.mubr.f32.mxu0 0.0
      %4365 = vmatmul.mubr.f32.gmra.mrb[0].mxu0 %v3834
      %v4366 = vpop.f32.mrb[0].mxu0
      %v4367 = vadd.f32 %v4184, %v4366
      %v4368 = vpop.f32.mrb[0].mxu0
      %4369 = vmatprep.mubr.f32.mxu0 0.0
      %4370 = vmatmul.mubr.f32.gmra.mrb[0].mxu0 %v3835
      %v4371 = vpop.f32.mrb[0].mxu0
      %v4372 = vadd.f32 %v4185, %v4371
      %v4373 = vpop.f32.mrb[0].mxu0
      %4374 = vmatprep.mubr.f32.mxu0 0.0
      %4375 = vmatmul.mubr.f32.gmra.mrb[0].mxu0 %v3836
      %v4376 = vpop.f32.mrb[0].mxu0
      %v4377 = vadd.f32 %v4186, %v4376
      %v4378 = vpop.f32.mrb[0].mxu0
      %4379 = vmatprep.mubr.f32.mxu0 0.0
      %4380 = vmatmul.mubr.f32.gmra.mrb[0].mxu0 %v3837
      %v4381 = vpop.f32.mrb[0].mxu0
      %v4382 = vadd.f32 %v4187, %v4381
      %v4383 = vpop.f32.mrb[0].mxu0
      %4384 = vmatprep.mubr.f32.mxu0 0.0
      %4385 = vmatmul.mubr.f32.gmra.mrb[0].mxu0 %v3838
      %v4386 = vpop.f32.mrb[0].mxu0
      %v4387 = vadd.f32 %v4188, %v4386
      %v4388 = vpop.f32.mrb[0].mxu0
      %4389 = vmatprep.mubr.f32.mxu0 0.0
      %4390 = vmatmul.mubr.f32.gmra.mrb[0].mxu0 %v3839
      %v4391 = vpop.f32.mrb[0].mxu0
      %v4392 = vadd.f32 %v4189, %v4391
      %v4393 = vpop.f32.mrb[0].mxu0
      %4394 = vmatprep.mubr.f32.mxu0 0.0
      %4395 = vmatmul.mubr.f32.gmra.mrb[0].mxu0 %v3840
      %v4396 = vpop.f32.mrb[0].mxu0
      %v4397 = vadd.f32 %v4190, %v4396
      %v4398 = vpop.f32.mrb[0].mxu0
      %4399 = vmatprep.mubr.f32.mxu0 0.0
      %4400 = vmatmul.mubr.f32.gmra.mrb[0].mxu0 %v3841
      %v4401 = vpop.f32.mrb[0].mxu0
      %v4402 = vadd.f32 %v4191, %v4401
      %v4403 = vpop.f32.mrb[0].mxu0
      %4404 = vmatprep.mubr.f32.mxu0 0.0
      %4405 = vmatmul.mubr.f32.gmra.mrb[0].mxu0 %v3842
      %v4406 = vpop.f32.mrb[0].mxu0
      %v4407 = vadd.f32 %v4192, %v4406
      %v4408 = vpop.f32.mrb[0].mxu0
      %4409 = vmatprep.mubr.f32.mxu0 0.0
      %4410 = vmatmul.mubr.f32.gmra.mrb[0].mxu0 %v3843
      %v4411 = vpop.f32.mrb[0].mxu0
      %v4412 = vadd.f32 %v4193, %v4411
      %v4413 = vpop.f32.mrb[0].mxu0
      %4414 = vmatprep.mubr.f32.mxu0 0.0
      %4415 = vmatmul.mubr.f32.gmra.mrb[0].mxu0 %v3844
      %v4416 = vpop.f32.mrb[0].mxu0
      %v4417 = vadd.f32 %v4194, %v4416
      %v4418 = vpop.f32.mrb[0].mxu0
      %4419 = vmatprep.mubr.f32.mxu0 0.0
      %4420 = vmatmul.mubr.f32.gmra.mrb[0].mxu0 %v3845
      %v4421 = vpop.f32.mrb[0].mxu0
      %v4422 = vadd.f32 %v4195, %v4421
      %v4423 = vpop.f32.mrb[0].mxu0
      %4424 = vmatprep.mubr.f32.mxu0 0.0
      %4425 = vmatmul.mubr.f32.gmra.mrb[0].mxu0 %v3846
      %v4426 = vpop.f32.mrb[0].mxu0
      %v4427 = vadd.f32 %v4196, %v4426
      %v4428 = vpop.f32.mrb[0].mxu0
      %4429 = vmatprep.mubr.f32.mxu0 0.0
      %4430 = vmatmul.mubr.f32.gmra.mrb[0].mxu0 %v3847
      %v4431 = vpop.f32.mrb[0].mxu0
      %v4432 = vadd.f32 %v4197, %v4431
      %v4433 = vpop.f32.mrb[0].mxu0
      %4434 = vmatprep.mubr.f32.mxu0 0.0
      %4435 = vmatmul.mubr.f32.gmra.mrb[0].mxu0 %v3848
      %v4436 = vpop.f32.mrb[0].mxu0
      %v4437 = vadd.f32 %v4198, %v4436
      %v4438 = vpop.f32.mrb[0].mxu0
      %4439 = vmatprep.mubr.f32.mxu0 0.0
      %4440 = vmatmul.mubr.f32.gmra.mrb[0].mxu0 %v3849
      %v4441 = vpop.f32.mrb[0].mxu0
      %v4442 = vadd.f32 %v4199, %v4441
      %v4443 = vpop.f32.mrb[0].mxu0
      %4444 = vmatprep.mubr.f32.mxu0 0.0
      %4445 = vmatmul.mubr.f32.gmra.mrb[0].mxu0 %v3850
      %v4446 = vpop.f32.mrb[0].mxu0
      %v4447 = vadd.f32 %v4200, %v4446
      %v4448 = vpop.f32.mrb[0].mxu0
      %4449 = vmatprep.mubr.f32.mxu0 0.0
      %4450 = vmatmul.mubr.f32.gmra.mrb[0].mxu0 %v3851
      %v4451 = vpop.f32.mrb[0].mxu0
      %v4452 = vadd.f32 %v4201, %v4451
      %v4453 = vpop.f32.mrb[0].mxu0
      %4454 = vmatprep.mubr.f32.mxu0 0.0
      %4455 = vmatmul.mubr.f32.gmra.mrb[0].mxu0 %v3852
      %v4456 = vpop.f32.mrb[0].mxu0
      %v4457 = vadd.f32 %v4202, %v4456
      %v4458 = vpop.f32.mrb[0].mxu0
      %4459 = vmatprep.mubr.f32.mxu0 0.0
      %4460 = vmatmul.mubr.f32.gmra.mrb[0].mxu0 %v3853
      %v4461 = vpop.f32.mrb[0].mxu0
      %v4462 = vadd.f32 %v4203, %v4461
      %v4463 = vpop.f32.mrb[0].mxu0
      %4464 = vmatprep.mubr.f32.mxu0 0.0
      %4465 = vmatmul.mubr.f32.gmra.mrb[0].mxu0 %v3854
      %v4466 = vpop.f32.mrb[0].mxu0
      %v4467 = vadd.f32 %v4204, %v4466
      %v4468 = vpop.f32.mrb[0].mxu0
      %4469 = vmatprep.mubr.f32.mxu0 0.0
      %4470 = vmatmul.mubr.f32.gmra.mrb[0].mxu0 %v3855
      %v4471 = vpop.f32.mrb[0].mxu0
      %v4472 = vadd.f32 %v4205, %v4471
      %v4473 = vpop.f32.mrb[0].mxu0
      %4474 = vmatprep.mubr.f32.mxu0 0.0
      %4475 = vmatmul.mubr.f32.gmra.mrb[0].mxu0 %v3856
      %v4476 = vpop.f32.mrb[0].mxu0
      %v4477 = vadd.f32 %v4206, %v4476
      %v4478 = vpop.f32.mrb[0].mxu0
      %4479 = vmatprep.mubr.f32.mxu0 0.0
      %4480 = vmatmul.mubr.f32.gmra.mrb[0].mxu0 %v3857
      %v4481 = vpop.f32.mrb[0].mxu0
      %v4482 = vadd.f32 %v4207, %v4481
      %v4483 = vpop.f32.mrb[0].mxu0
      %4484 = vmatprep.mubr.f32.mxu0 0.0
      %4485 = vmatmul.mubr.f32.gmra.mrb[0].mxu0 %v3858
      %v4486 = vpop.f32.mrb[0].mxu0
      %v4487 = vadd.f32 %v4208, %v4486
      %v4488 = vpop.f32.mrb[0].mxu0
      %4489 = vmatprep.mubr.f32.mxu0 0.0
      %4490 = vmatmul.mubr.f32.gmra.mrb[0].mxu0 %v3859
      %v4491 = vpop.f32.mrb[0].mxu0
      %v4492 = vadd.f32 %v4209, %v4491
      %v4493 = vpop.f32.mrb[0].mxu0
      %4494 = vmatprep.mubr.f32.mxu0 0.0
      %4495 = vmatmul.mubr.f32.gmra.mrb[0].mxu0 %v3860
      %v4496 = vpop.f32.mrb[0].mxu0
      %v4497 = vadd.f32 %v4210, %v4496
      %v4498 = vpop.f32.mrb[0].mxu0
      %4499 = vmatprep.mubr.f32.mxu0 0.0
      %4500 = vmatmul.mubr.f32.gmra.mrb[0].mxu0 %v3861
      %v4501 = vpop.f32.mrb[0].mxu0
      %v4502 = vadd.f32 %v4211, %v4501
      %v4503 = vpop.f32.mrb[0].mxu0
      %4504 = vmatprep.mubr.f32.mxu0 0.0
      %4505 = vmatmul.mubr.f32.gmra.mrb[0].mxu0 %v3862
      %v4506 = vpop.f32.mrb[0].mxu0
      %v4507 = vadd.f32 %v4212, %v4506
      %v4508 = vpop.f32.mrb[0].mxu0
      %4509 = vmatprep.mubr.f32.mxu0 0.0
      %4510 = vmatmul.mubr.f32.gmra.mrb[0].mxu0 %v3863
      %v4511 = vpop.f32.mrb[0].mxu0
      %v4512 = vadd.f32 %v4213, %v4511
      %v4513 = vpop.f32.mrb[0].mxu0
      %4514 = vmatprep.mubr.f32.mxu0 0.0
      %4515 = vmatmul.mubr.f32.gmra.mrb[0].mxu0 %v3864
      %v4516 = vpop.f32.mrb[0].mxu0
      %v4517 = vadd.f32 %v4214, %v4516
      %v4518 = vpop.f32.mrb[0].mxu0
      %4519 = vmatprep.mubr.f32.mxu0 0.0
      %4520 = vmatmul.mubr.f32.gmra.mrb[0].mxu0 %v3865
      %v4521 = vpop.f32.mrb[0].mxu0
      %v4522 = vadd.f32 %v4215, %v4521
      %v4523 = vpop.f32.mrb[0].mxu0
      %4524 = vmatprep.mubr.f32.mxu0 0.0
      %4525 = vmatmul.mubr.f32.gmra.mrb[0].mxu0 %v3866
      %v4526 = vpop.f32.mrb[0].mxu0
      %v4527 = vadd.f32 %v4216, %v4526
      %v4528 = vpop.f32.mrb[0].mxu0
      %4529 = vmatprep.mubr.f32.mxu0 0.0
      %4530 = vmatmul.mubr.f32.gmra.mrb[0].mxu0 %v3867
      %v4531 = vpop.f32.mrb[0].mxu0
      %v4532 = vadd.f32 %v4217, %v4531
      %v4533 = vpop.f32.mrb[0].mxu0
      %4534 = vmatprep.mubr.f32.mxu0 0.0
      %4535 = vmatmul.mubr.f32.gmra.mrb[0].mxu0 %v3868
      %v4536 = vpop.f32.mrb[0].mxu0
      %v4537 = vadd.f32 %v4218, %v4536
      %v4538 = vpop.f32.mrb[0].mxu0
      %4539 = vmatprep.mubr.f32.mxu0 0.0
      %4540 = vmatmul.mubr.f32.gmra.mrb[0].mxu0 %v3869
      %v4541 = vpop.f32.mrb[0].mxu0
      %v4542 = vadd.f32 %v4219, %v4541
      %v4543 = vpop.f32.mrb[0].mxu0
      %4544 = vmatprep.mubr.f32.mxu0 0.0
      %4545 = vmatmul.mubr.f32.gmra.mrb[0].mxu0 %v3870
      %v4546 = vpop.f32.mrb[0].mxu0
      %v4547 = vadd.f32 %v4220, %v4546
      %v4548 = vpop.f32.mrb[0].mxu0
      %4549 = vmatprep.mubr.f32.mxu0 0.0
      %4550 = vmatmul.mubr.f32.gmra.mrb[0].mxu0 %v3871
      %v4551 = vpop.f32.mrb[0].mxu0
      %v4552 = vadd.f32 %v4221, %v4551
      %v4553 = vpop.f32.mrb[0].mxu0
      %4554 = vmatprep.mubr.f32.mxu0 0.0
      %4555 = vmatmul.mubr.f32.gmra.mrb[0].mxu0 %v3872
      %v4556 = vpop.f32.mrb[0].mxu0
      %v4557 = vadd.f32 %v4222, %v4556
      %v4558 = vpop.f32.mrb[0].mxu0
      %4559 = vmatprep.mubr.f32.mxu0 0.0
      %4560 = vmatmul.mubr.f32.gmra.mrb[0].mxu0 %v3873
      %v4561 = vpop.f32.mrb[0].mxu0
      %v4562 = vadd.f32 %v4223, %v4561
      %v4563 = vpop.f32.mrb[0].mxu0
      %4564 = vmatprep.mubr.f32.mxu0 0.0
      %4565 = vmatmul.mubr.f32.gmra.mrb[0].mxu0 %v3874
      %v4566 = vpop.f32.mrb[0].mxu0
      %v4567 = vadd.f32 %v4224, %v4566
      %v4568 = vpop.f32.mrb[0].mxu0
      %4569 = vmatprep.mubr.f32.mxu0 0.0
      %4570 = vmatmul.mubr.f32.gmra.mrb[0].mxu0 %v3875
      %v4571 = vpop.f32.mrb[0].mxu0
      %v4572 = vadd.f32 %v4225, %v4571
      %v4573 = vpop.f32.mrb[0].mxu0
      %4574 = vmatprep.mubr.f32.mxu0 0.0
      %4575 = vmatmul.mubr.f32.gmra.mrb[0].mxu0 %v3876
      %v4576 = vpop.f32.mrb[0].mxu0
      %v4577 = vadd.f32 %v4226, %v4576
      %v4578 = vpop.f32.mrb[0].mxu0
      %4579 = vmatprep.mubr.f32.mxu0 0.0
      %4580 = vmatmul.mubr.f32.gmra.mrb[0].mxu0 %v3877
      %v4581 = vpop.f32.mrb[0].mxu0
      %v4582 = vadd.f32 %v4227, %v4581
      %v4583 = vpop.f32.mrb[0].mxu0
      %4584 = vmatprep.mubr.f32.mxu0 0.0
      %4585 = vmatmul.mubr.f32.gmra.mrb[0].mxu0 %v3878
      %v4586 = vpop.f32.mrb[0].mxu0
      %v4587 = vadd.f32 %v4228, %v4586
      %v4588 = vpop.f32.mrb[0].mxu0
      %4589 = vmatprep.mubr.f32.mxu0 0.0
      %4590 = vmatmul.mubr.f32.gmra.mrb[0].mxu0 %v3879
      %v4591 = vpop.f32.mrb[0].mxu0
      %v4592 = vadd.f32 %v4229, %v4591
      %v4593 = vpop.f32.mrb[0].mxu0
      %4594 = vmatprep.mubr.f32.mxu0 0.0
      %4595 = vmatmul.mubr.f32.gmra.mrb[0].mxu0 %v3880
      %v4596 = vpop.f32.mrb[0].mxu0
      %v4597 = vadd.f32 %v4230, %v4596
      %v4598 = vpop.f32.mrb[0].mxu0
      %4599 = vmatprep.mubr.f32.mxu0 0.0
      %4600 = vmatmul.mubr.f32.gmra.mrb[0].mxu0 %v3881
      %v4601 = vpop.f32.mrb[0].mxu0
      %v4602 = vadd.f32 %v4231, %v4601
      %v4603 = vpop.f32.mrb[0].mxu0
      %4604 = vmatprep.mubr.f32.mxu0 0.0
      %4605 = vmatmul.mubr.f32.gmra.mrb[0].mxu0 %v3882
      %v4606 = vpop.f32.mrb[0].mxu0
      %v4607 = vadd.f32 %v4232, %v4606
      %v4608 = vpop.f32.mrb[0].mxu0
      %4609 = vmatprep.mubr.f32.mxu0 0.0
      %4610 = vmatmul.mubr.f32.gmra.mrb[0].mxu0 %v3883
      %v4611 = vpop.f32.mrb[0].mxu0
      %v4612 = vadd.f32 %v4233, %v4611
      %v4613 = vpop.f32.mrb[0].mxu0
      %4614 = vmatprep.mubr.f32.mxu0 0.0
      %4615 = vmatmul.mubr.f32.gmra.mrb[0].mxu0 %v3884
      %v4616 = vpop.f32.mrb[0].mxu0
      %v4617 = vadd.f32 %v4234, %v4616
      %v4618 = vpop.f32.mrb[0].mxu0
      %4619 = vdwg.mxu0
      %v4621 = vlaneseq
      %v4622 = vshrl.u32 %v4621, 7
      %v4623 = vsub.s32 0, %v4622
      %v4624 = vrot.slane %v3902, %v4623
      %v4626 = vadd.f32 %v4302, %v4624
      %v4627 = vadd.f32 %v4307, %v4624
      %v4628 = vadd.f32 %v4312, %v4624
      %v4629 = vadd.f32 %v4317, %v4624
      %v4630 = vadd.f32 %v4322, %v4624
      %v4631 = vadd.f32 %v4327, %v4624
      %v4632 = vadd.f32 %v4332, %v4624
      %v4633 = vadd.f32 %v4337, %v4624
      %v4634 = vadd.f32 %v4342, %v4624
      %v4635 = vadd.f32 %v4347, %v4624
      %v4636 = vadd.f32 %v4352, %v4624
      %v4637 = vadd.f32 %v4357, %v4624
      %v4638 = vadd.f32 %v4362, %v4624
      %v4639 = vadd.f32 %v4367, %v4624
      %v4640 = vadd.f32 %v4372, %v4624
      %v4641 = vadd.f32 %v4377, %v4624
      %v4642 = vadd.f32 %v4382, %v4624
      %v4643 = vadd.f32 %v4387, %v4624
      %v4644 = vadd.f32 %v4392, %v4624
      %v4645 = vadd.f32 %v4397, %v4624
      %v4646 = vadd.f32 %v4402, %v4624
      %v4647 = vadd.f32 %v4407, %v4624
      %v4648 = vadd.f32 %v4412, %v4624
      %v4649 = vadd.f32 %v4417, %v4624
      %v4650 = vadd.f32 %v4422, %v4624
      %v4651 = vadd.f32 %v4427, %v4624
      %v4652 = vadd.f32 %v4432, %v4624
      %v4653 = vadd.f32 %v4437, %v4624
      %v4654 = vadd.f32 %v4442, %v4624
      %v4655 = vadd.f32 %v4447, %v4624
      %v4656 = vadd.f32 %v4452, %v4624
      %v4657 = vadd.f32 %v4457, %v4624
      %v4658 = vadd.f32 %v4462, %v4624
      %v4659 = vadd.f32 %v4467, %v4624
      %v4660 = vadd.f32 %v4472, %v4624
      %v4661 = vadd.f32 %v4477, %v4624
      %v4662 = vadd.f32 %v4482, %v4624
      %v4663 = vadd.f32 %v4487, %v4624
      %v4664 = vadd.f32 %v4492, %v4624
      %v4665 = vadd.f32 %v4497, %v4624
      %v4666 = vadd.f32 %v4502, %v4624
      %v4667 = vadd.f32 %v4507, %v4624
      %v4668 = vadd.f32 %v4512, %v4624
      %v4669 = vadd.f32 %v4517, %v4624
      %v4670 = vadd.f32 %v4522, %v4624
      %v4671 = vadd.f32 %v4527, %v4624
      %v4672 = vadd.f32 %v4532, %v4624
      %v4673 = vadd.f32 %v4537, %v4624
      %v4674 = vadd.f32 %v4542, %v4624
      %v4675 = vadd.f32 %v4547, %v4624
      %v4676 = vadd.f32 %v4552, %v4624
      %v4677 = vadd.f32 %v4557, %v4624
      %v4678 = vadd.f32 %v4562, %v4624
      %v4679 = vadd.f32 %v4567, %v4624
      %v4680 = vadd.f32 %v4572, %v4624
      %v4681 = vadd.f32 %v4577, %v4624
      %v4682 = vadd.f32 %v4582, %v4624
      %v4683 = vadd.f32 %v4587, %v4624
      %v4684 = vadd.f32 %v4592, %v4624
      %v4685 = vadd.f32 %v4597, %v4624
      %v4686 = vadd.f32 %v4602, %v4624
      %v4687 = vadd.f32 %v4607, %v4624
      %v4688 = vadd.f32 %v4612, %v4624
      %v4689 = vadd.f32 %v4617, %v4624
      %v4690 = vmax.f32 %v4626, 0.0
      %v4691 = vmax.f32 %v4627, 0.0
      %v4692 = vmax.f32 %v4628, 0.0
      %v4693 = vmax.f32 %v4629, 0.0
      %v4694 = vmax.f32 %v4630, 0.0
      %v4695 = vmax.f32 %v4631, 0.0
      %v4696 = vmax.f32 %v4632, 0.0
      %v4697 = vmax.f32 %v4633, 0.0
      %v4698 = vmax.f32 %v4634, 0.0
      %v4699 = vmax.f32 %v4635, 0.0
      %v4700 = vmax.f32 %v4636, 0.0
      %v4701 = vmax.f32 %v4637, 0.0
      %v4702 = vmax.f32 %v4638, 0.0
      %v4703 = vmax.f32 %v4639, 0.0
      %v4704 = vmax.f32 %v4640, 0.0
      %v4705 = vmax.f32 %v4641, 0.0
      %v4706 = vmax.f32 %v4642, 0.0
      %v4707 = vmax.f32 %v4643, 0.0
      %v4708 = vmax.f32 %v4644, 0.0
      %v4709 = vmax.f32 %v4645, 0.0
      %v4710 = vmax.f32 %v4646, 0.0
      %v4711 = vmax.f32 %v4647, 0.0
      %v4712 = vmax.f32 %v4648, 0.0
      %v4713 = vmax.f32 %v4649, 0.0
      %v4714 = vmax.f32 %v4650, 0.0
      %v4715 = vmax.f32 %v4651, 0.0
      %v4716 = vmax.f32 %v4652, 0.0
      %v4717 = vmax.f32 %v4653, 0.0
      %v4718 = vmax.f32 %v4654, 0.0
      %v4719 = vmax.f32 %v4655, 0.0
      %v4720 = vmax.f32 %v4656, 0.0
      %v4721 = vmax.f32 %v4657, 0.0
      %v4722 = vmax.f32 %v4658, 0.0
      %v4723 = vmax.f32 %v4659, 0.0
      %v4724 = vmax.f32 %v4660, 0.0
      %v4725 = vmax.f32 %v4661, 0.0
      %v4726 = vmax.f32 %v4662, 0.0
      %v4727 = vmax.f32 %v4663, 0.0
      %v4728 = vmax.f32 %v4664, 0.0
      %v4729 = vmax.f32 %v4665, 0.0
      %v4730 = vmax.f32 %v4666, 0.0
      %v4731 = vmax.f32 %v4667, 0.0
      %v4732 = vmax.f32 %v4668, 0.0
      %v4733 = vmax.f32 %v4669, 0.0
      %v4734 = vmax.f32 %v4670, 0.0
      %v4735 = vmax.f32 %v4671, 0.0
      %v4736 = vmax.f32 %v4672, 0.0
      %v4737 = vmax.f32 %v4673, 0.0
      %v4738 = vmax.f32 %v4674, 0.0
      %v4739 = vmax.f32 %v4675, 0.0
      %v4740 = vmax.f32 %v4676, 0.0
      %v4741 = vmax.f32 %v4677, 0.0
      %v4742 = vmax.f32 %v4678, 0.0
      %v4743 = vmax.f32 %v4679, 0.0
      %v4744 = vmax.f32 %v4680, 0.0
      %v4745 = vmax.f32 %v4681, 0.0
      %v4746 = vmax.f32 %v4682, 0.0
      %v4747 = vmax.f32 %v4683, 0.0
      %v4748 = vmax.f32 %v4684, 0.0
      %v4749 = vmax.f32 %v4685, 0.0
      %v4750 = vmax.f32 %v4686, 0.0
      %v4751 = vmax.f32 %v4687, 0.0
      %v4752 = vmax.f32 %v4688, 0.0
      %v4753 = vmax.f32 %v4689, 0.0
      %v4754 = vld [vmem:[%s14] sm:$0xff]
      %v4755 = vld [vmem:[%s14 + $0x8] sm:$0xff]
      %v4756 = vld [vmem:[%s14 + $0x10] sm:$0xff]
      %v4757 = vld [vmem:[%s14 + $0x18] sm:$0xff]
      %v4758 = vld [vmem:[%s14 + $0x20] sm:$0xff]
      %v4759 = vld [vmem:[%s14 + $0x28] sm:$0xff]
      %v4760 = vld [vmem:[%s14 + $0x30] sm:$0xff]
      %v4761 = vld [vmem:[%s14 + $0x38] sm:$0xff]
      %v4762 = vld [vmem:[%s14 + $0x40] sm:$0xff]
      %v4763 = vld [vmem:[%s14 + $0x48] sm:$0xff]
      %v4764 = vld [vmem:[%s14 + $0x50] sm:$0xff]
      %v4765 = vld [vmem:[%s14 + $0x58] sm:$0xff]
      %v4766 = vld [vmem:[%s14 + $0x60] sm:$0xff]
      %v4767 = vld [vmem:[%s14 + $0x68] sm:$0xff]
      %v4768 = vld [vmem:[%s14 + $0x70] sm:$0xff]
      %v4769 = vld [vmem:[%s14 + $0x78] sm:$0xff]
      %v4770 = vld [vmem:[%s15] sm:$0x1]
      %v4772 = vlaneseq
      %v4773 = vshrl.u32 %v4772, 7
      %v4774 = vsub.s32 0, %v4773
      %v4775 = vrot.slane %v4770, %v4774
      %4777 = vmatprep.subr.mxu0 0.0
      %4778 = vmatpush1.msra.mxu0 %v4754
      %4779 = vmatprep.subr.mxu0 0.0
      %4780 = vmatpush1.msra.mxu0 %v4755
      %4781 = vmatprep.subr.mxu0 0.0
      %4782 = vmatpush1.msra.mxu0 %v4756
      %4783 = vmatprep.subr.mxu0 0.0
      %4784 = vmatpush1.msra.mxu0 %v4757
      %4785 = vmatprep.subr.mxu0 0.0
      %4786 = vmatpush1.msra.mxu0 %v4758
      %4787 = vmatprep.subr.mxu0 0.0
      %4788 = vmatpush1.msra.mxu0 %v4759
      %4789 = vmatprep.subr.mxu0 0.0
      %4790 = vmatpush1.msra.mxu0 %v4760
      %4791 = vmatprep.subr.mxu0 0.0
      %4792 = vmatpush1.msra.mxu0 %v4761
      %4793 = vmatprep.subr.mxu0 0.0
      %4794 = vmatpush1.msra.mxu0 %v4762
      %4795 = vmatprep.subr.mxu0 0.0
      %4796 = vmatpush1.msra.mxu0 %v4763
      %4797 = vmatprep.subr.mxu0 0.0
      %4798 = vmatpush1.msra.mxu0 %v4764
      %4799 = vmatprep.subr.mxu0 0.0
      %4800 = vmatpush1.msra.mxu0 %v4765
      %4801 = vmatprep.subr.mxu0 0.0
      %4802 = vmatpush1.msra.mxu0 %v4766
      %4803 = vmatprep.subr.mxu0 0.0
      %4804 = vmatpush1.msra.mxu0 %v4767
      %4805 = vmatprep.subr.mxu0 0.0
      %4806 = vmatpush1.msra.mxu0 %v4768
      %4807 = vmatprep.subr.mxu0 0.0
      %4808 = vmatpush1.msra.mxu0 %v4769
      %4809 = vmatprep.subr.mxu0 0.0
      %4810 = vmatpush1.msra.mxu0 0.0
      %4811 = vmatprep.subr.mxu0 0.0
      %4812 = vmatpush1.msra.mxu0 0.0
      %4813 = vmatprep.subr.mxu0 0.0
      %4814 = vmatpush1.msra.mxu0 0.0
      %4815 = vmatprep.subr.mxu0 0.0
      %4816 = vmatpush1.msra.mxu0 0.0
      %4817 = vmatprep.subr.mxu0 0.0
      %4818 = vmatpush1.msra.mxu0 0.0
      %4819 = vmatprep.subr.mxu0 0.0
      %4820 = vmatpush1.msra.mxu0 0.0
      %4821 = vmatprep.subr.mxu0 0.0
      %4822 = vmatpush1.msra.mxu0 0.0
      %4823 = vmatprep.subr.mxu0 0.0
      %4824 = vmatpush1.msra.mxu0 0.0
      %4825 = vmatprep.subr.mxu0 0.0
      %4826 = vmatpush1.msra.mxu0 0.0
      %4827 = vmatprep.subr.mxu0 0.0
      %4828 = vmatpush1.msra.mxu0 0.0
      %4829 = vmatprep.subr.mxu0 0.0
      %4830 = vmatpush1.msra.mxu0 0.0
      %4831 = vmatprep.subr.mxu0 0.0
      %4832 = vmatpush1.msra.mxu0 0.0
      %4833 = vmatprep.subr.mxu0 0.0
      %4834 = vmatpush1.msra.mxu0 0.0
      %4835 = vmatprep.subr.mxu0 0.0
      %4836 = vmatpush1.msra.mxu0 0.0
      %4837 = vmatprep.subr.mxu0 0.0
      %4838 = vmatpush1.msra.mxu0 0.0
      %4839 = vmatprep.subr.mxu0 0.0
      %4840 = vmatpush1.msra.mxu0 0.0
      %4841 = vmatprep.mubr.f32.mxu0 0.0
      %4842 = vmatmul.mubr.f32.gmra.mrb[0].mxu0 %v4690
      %v4843 = vpop.f32.mrb[0].mxu0
      %v4844 = vadd.f32 %v4775, %v4843
      %v4845 = vpop.f32.mrb[0].mxu0
      %4846 = vmatprep.mubr.f32.mxu0 0.0
      %4847 = vmatmul.mubr.f32.gmra.mrb[0].mxu0 %v4691
      %v4848 = vpop.f32.mrb[0].mxu0
      %v4849 = vadd.f32 %v4775, %v4848
      %v4850 = vpop.f32.mrb[0].mxu0
      %4851 = vmatprep.mubr.f32.mxu0 0.0
      %4852 = vmatmul.mubr.f32.gmra.mrb[0].mxu0 %v4692
      %v4853 = vpop.f32.mrb[0].mxu0
      %v4854 = vadd.f32 %v4775, %v4853
      %v4855 = vpop.f32.mrb[0].mxu0
      %4856 = vmatprep.mubr.f32.mxu0 0.0
      %4857 = vmatmul.mubr.f32.gmra.mrb[0].mxu0 %v4693
      %v4858 = vpop.f32.mrb[0].mxu0
      %v4859 = vadd.f32 %v4775, %v4858
      %v4860 = vpop.f32.mrb[0].mxu0
      %4861 = vmatprep.mubr.f32.mxu0 0.0
      %4862 = vmatmul.mubr.f32.gmra.mrb[0].mxu0 %v4694
      %v4863 = vpop.f32.mrb[0].mxu0
      %v4864 = vadd.f32 %v4775, %v4863
      %v4865 = vpop.f32.mrb[0].mxu0
      %4866 = vmatprep.mubr.f32.mxu0 0.0
      %4867 = vmatmul.mubr.f32.gmra.mrb[0].mxu0 %v4695
      %v4868 = vpop.f32.mrb[0].mxu0
      %v4869 = vadd.f32 %v4775, %v4868
      %v4870 = vpop.f32.mrb[0].mxu0
      %4871 = vmatprep.mubr.f32.mxu0 0.0
      %4872 = vmatmul.mubr.f32.gmra.mrb[0].mxu0 %v4696
      %v4873 = vpop.f32.mrb[0].mxu0
      %v4874 = vadd.f32 %v4775, %v4873
      %v4875 = vpop.f32.mrb[0].mxu0
      %4876 = vmatprep.mubr.f32.mxu0 0.0
      %4877 = vmatmul.mubr.f32.gmra.mrb[0].mxu0 %v4697
      %v4878 = vpop.f32.mrb[0].mxu0
      %v4879 = vadd.f32 %v4775, %v4878
      %v4880 = vpop.f32.mrb[0].mxu0
      %4881 = vmatprep.mubr.f32.mxu0 0.0
      %4882 = vmatmul.mubr.f32.gmra.mrb[0].mxu0 %v4698
      %v4883 = vpop.f32.mrb[0].mxu0
      %v4884 = vadd.f32 %v4775, %v4883
      %v4885 = vpop.f32.mrb[0].mxu0
      %4886 = vmatprep.mubr.f32.mxu0 0.0
      %4887 = vmatmul.mubr.f32.gmra.mrb[0].mxu0 %v4699
      %v4888 = vpop.f32.mrb[0].mxu0
      %v4889 = vadd.f32 %v4775, %v4888
      %v4890 = vpop.f32.mrb[0].mxu0
      %4891 = vmatprep.mubr.f32.mxu0 0.0
      %4892 = vmatmul.mubr.f32.gmra.mrb[0].mxu0 %v4700
      %v4893 = vpop.f32.mrb[0].mxu0
      %v4894 = vadd.f32 %v4775, %v4893
      %v4895 = vpop.f32.mrb[0].mxu0
      %4896 = vmatprep.mubr.f32.mxu0 0.0
      %4897 = vmatmul.mubr.f32.gmra.mrb[0].mxu0 %v4701
      %v4898 = vpop.f32.mrb[0].mxu0
      %v4899 = vadd.f32 %v4775, %v4898
      %v4900 = vpop.f32.mrb[0].mxu0
      %4901 = vmatprep.mubr.f32.mxu0 0.0
      %4902 = vmatmul.mubr.f32.gmra.mrb[0].mxu0 %v4702
      %v4903 = vpop.f32.mrb[0].mxu0
      %v4904 = vadd.f32 %v4775, %v4903
      %v4905 = vpop.f32.mrb[0].mxu0
      %4906 = vmatprep.mubr.f32.mxu0 0.0
      %4907 = vmatmul.mubr.f32.gmra.mrb[0].mxu0 %v4703
      %v4908 = vpop.f32.mrb[0].mxu0
      %v4909 = vadd.f32 %v4775, %v4908
      %v4910 = vpop.f32.mrb[0].mxu0
      %4911 = vmatprep.mubr.f32.mxu0 0.0
      %4912 = vmatmul.mubr.f32.gmra.mrb[0].mxu0 %v4704
      %v4913 = vpop.f32.mrb[0].mxu0
      %v4914 = vadd.f32 %v4775, %v4913
      %v4915 = vpop.f32.mrb[0].mxu0
      %4916 = vmatprep.mubr.f32.mxu0 0.0
      %4917 = vmatmul.mubr.f32.gmra.mrb[0].mxu0 %v4705
      %v4918 = vpop.f32.mrb[0].mxu0
      %v4919 = vadd.f32 %v4775, %v4918
      %v4920 = vpop.f32.mrb[0].mxu0
      %4921 = vmatprep.mubr.f32.mxu0 0.0
      %4922 = vmatmul.mubr.f32.gmra.mrb[0].mxu0 %v4706
      %v4923 = vpop.f32.mrb[0].mxu0
      %v4924 = vadd.f32 %v4775, %v4923
      %v4925 = vpop.f32.mrb[0].mxu0
      %4926 = vmatprep.mubr.f32.mxu0 0.0
      %4927 = vmatmul.mubr.f32.gmra.mrb[0].mxu0 %v4707
      %v4928 = vpop.f32.mrb[0].mxu0
      %v4929 = vadd.f32 %v4775, %v4928
      %v4930 = vpop.f32.mrb[0].mxu0
      %4931 = vmatprep.mubr.f32.mxu0 0.0
      %4932 = vmatmul.mubr.f32.gmra.mrb[0].mxu0 %v4708
      %v4933 = vpop.f32.mrb[0].mxu0
      %v4934 = vadd.f32 %v4775, %v4933
      %v4935 = vpop.f32.mrb[0].mxu0
      %4936 = vmatprep.mubr.f32.mxu0 0.0
      %4937 = vmatmul.mubr.f32.gmra.mrb[0].mxu0 %v4709
      %v4938 = vpop.f32.mrb[0].mxu0
      %v4939 = vadd.f32 %v4775, %v4938
      %v4940 = vpop.f32.mrb[0].mxu0
      %4941 = vmatprep.mubr.f32.mxu0 0.0
      %4942 = vmatmul.mubr.f32.gmra.mrb[0].mxu0 %v4710
      %v4943 = vpop.f32.mrb[0].mxu0
      %v4944 = vadd.f32 %v4775, %v4943
      %v4945 = vpop.f32.mrb[0].mxu0
      %4946 = vmatprep.mubr.f32.mxu0 0.0
      %4947 = vmatmul.mubr.f32.gmra.mrb[0].mxu0 %v4711
      %v4948 = vpop.f32.mrb[0].mxu0
      %v4949 = vadd.f32 %v4775, %v4948
      %v4950 = vpop.f32.mrb[0].mxu0
      %4951 = vmatprep.mubr.f32.mxu0 0.0
      %4952 = vmatmul.mubr.f32.gmra.mrb[0].mxu0 %v4712
      %v4953 = vpop.f32.mrb[0].mxu0
      %v4954 = vadd.f32 %v4775, %v4953
      %v4955 = vpop.f32.mrb[0].mxu0
      %4956 = vmatprep.mubr.f32.mxu0 0.0
      %4957 = vmatmul.mubr.f32.gmra.mrb[0].mxu0 %v4713
      %v4958 = vpop.f32.mrb[0].mxu0
      %v4959 = vadd.f32 %v4775, %v4958
      %v4960 = vpop.f32.mrb[0].mxu0
      %4961 = vmatprep.mubr.f32.mxu0 0.0
      %4962 = vmatmul.mubr.f32.gmra.mrb[0].mxu0 %v4714
      %v4963 = vpop.f32.mrb[0].mxu0
      %v4964 = vadd.f32 %v4775, %v4963
      %v4965 = vpop.f32.mrb[0].mxu0
      %4966 = vmatprep.mubr.f32.mxu0 0.0
      %4967 = vmatmul.mubr.f32.gmra.mrb[0].mxu0 %v4715
      %v4968 = vpop.f32.mrb[0].mxu0
      %v4969 = vadd.f32 %v4775, %v4968
      %v4970 = vpop.f32.mrb[0].mxu0
      %4971 = vmatprep.mubr.f32.mxu0 0.0
      %4972 = vmatmul.mubr.f32.gmra.mrb[0].mxu0 %v4716
      %v4973 = vpop.f32.mrb[0].mxu0
      %v4974 = vadd.f32 %v4775, %v4973
      %v4975 = vpop.f32.mrb[0].mxu0
      %4976 = vmatprep.mubr.f32.mxu0 0.0
      %4977 = vmatmul.mubr.f32.gmra.mrb[0].mxu0 %v4717
      %v4978 = vpop.f32.mrb[0].mxu0
      %v4979 = vadd.f32 %v4775, %v4978
      %v4980 = vpop.f32.mrb[0].mxu0
      %4981 = vmatprep.mubr.f32.mxu0 0.0
      %4982 = vmatmul.mubr.f32.gmra.mrb[0].mxu0 %v4718
      %v4983 = vpop.f32.mrb[0].mxu0
      %v4984 = vadd.f32 %v4775, %v4983
      %v4985 = vpop.f32.mrb[0].mxu0
      %4986 = vmatprep.mubr.f32.mxu0 0.0
      %4987 = vmatmul.mubr.f32.gmra.mrb[0].mxu0 %v4719
      %v4988 = vpop.f32.mrb[0].mxu0
      %v4989 = vadd.f32 %v4775, %v4988
      %v4990 = vpop.f32.mrb[0].mxu0
      %4991 = vmatprep.mubr.f32.mxu0 0.0
      %4992 = vmatmul.mubr.f32.gmra.mrb[0].mxu0 %v4720
      %v4993 = vpop.f32.mrb[0].mxu0
      %v4994 = vadd.f32 %v4775, %v4993
      %v4995 = vpop.f32.mrb[0].mxu0
      %4996 = vmatprep.mubr.f32.mxu0 0.0
      %4997 = vmatmul.mubr.f32.gmra.mrb[0].mxu0 %v4721
      %v4998 = vpop.f32.mrb[0].mxu0
      %v4999 = vadd.f32 %v4775, %v4998
      %v5000 = vpop.f32.mrb[0].mxu0
      %5001 = vmatprep.mubr.f32.mxu0 0.0
      %5002 = vmatmul.mubr.f32.gmra.mrb[0].mxu0 %v4722
      %v5003 = vpop.f32.mrb[0].mxu0
      %v5004 = vadd.f32 %v4775, %v5003
      %v5005 = vpop.f32.mrb[0].mxu0
      %5006 = vmatprep.mubr.f32.mxu0 0.0
      %5007 = vmatmul.mubr.f32.gmra.mrb[0].mxu0 %v4723
      %v5008 = vpop.f32.mrb[0].mxu0
      %v5009 = vadd.f32 %v4775, %v5008
      %v5010 = vpop.f32.mrb[0].mxu0
      %5011 = vmatprep.mubr.f32.mxu0 0.0
      %5012 = vmatmul.mubr.f32.gmra.mrb[0].mxu0 %v4724
      %v5013 = vpop.f32.mrb[0].mxu0
      %v5014 = vadd.f32 %v4775, %v5013
      %v5015 = vpop.f32.mrb[0].mxu0
      %5016 = vmatprep.mubr.f32.mxu0 0.0
      %5017 = vmatmul.mubr.f32.gmra.mrb[0].mxu0 %v4725
      %v5018 = vpop.f32.mrb[0].mxu0
      %v5019 = vadd.f32 %v4775, %v5018
      %v5020 = vpop.f32.mrb[0].mxu0
      %5021 = vmatprep.mubr.f32.mxu0 0.0
      %5022 = vmatmul.mubr.f32.gmra.mrb[0].mxu0 %v4726
      %v5023 = vpop.f32.mrb[0].mxu0
      %v5024 = vadd.f32 %v4775, %v5023
      %v5025 = vpop.f32.mrb[0].mxu0
      %5026 = vmatprep.mubr.f32.mxu0 0.0
      %5027 = vmatmul.mubr.f32.gmra.mrb[0].mxu0 %v4727
      %v5028 = vpop.f32.mrb[0].mxu0
      %v5029 = vadd.f32 %v4775, %v5028
      %v5030 = vpop.f32.mrb[0].mxu0
      %5031 = vmatprep.mubr.f32.mxu0 0.0
      %5032 = vmatmul.mubr.f32.gmra.mrb[0].mxu0 %v4728
      %v5033 = vpop.f32.mrb[0].mxu0
      %v5034 = vadd.f32 %v4775, %v5033
      %v5035 = vpop.f32.mrb[0].mxu0
      %5036 = vmatprep.mubr.f32.mxu0 0.0
      %5037 = vmatmul.mubr.f32.gmra.mrb[0].mxu0 %v4729
      %v5038 = vpop.f32.mrb[0].mxu0
      %v5039 = vadd.f32 %v4775, %v5038
      %v5040 = vpop.f32.mrb[0].mxu0
      %5041 = vmatprep.mubr.f32.mxu0 0.0
      %5042 = vmatmul.mubr.f32.gmra.mrb[0].mxu0 %v4730
      %v5043 = vpop.f32.mrb[0].mxu0
      %v5044 = vadd.f32 %v4775, %v5043
      %v5045 = vpop.f32.mrb[0].mxu0
      %5046 = vmatprep.mubr.f32.mxu0 0.0
      %5047 = vmatmul.mubr.f32.gmra.mrb[0].mxu0 %v4731
      %v5048 = vpop.f32.mrb[0].mxu0
      %v5049 = vadd.f32 %v4775, %v5048
      %v5050 = vpop.f32.mrb[0].mxu0
      %5051 = vmatprep.mubr.f32.mxu0 0.0
      %5052 = vmatmul.mubr.f32.gmra.mrb[0].mxu0 %v4732
      %v5053 = vpop.f32.mrb[0].mxu0
      %v5054 = vadd.f32 %v4775, %v5053
      %v5055 = vpop.f32.mrb[0].mxu0
      %5056 = vmatprep.mubr.f32.mxu0 0.0
      %5057 = vmatmul.mubr.f32.gmra.mrb[0].mxu0 %v4733
      %v5058 = vpop.f32.mrb[0].mxu0
      %v5059 = vadd.f32 %v4775, %v5058
      %v5060 = vpop.f32.mrb[0].mxu0
      %5061 = vmatprep.mubr.f32.mxu0 0.0
      %5062 = vmatmul.mubr.f32.gmra.mrb[0].mxu0 %v4734
      %v5063 = vpop.f32.mrb[0].mxu0
      %v5064 = vadd.f32 %v4775, %v5063
      %v5065 = vpop.f32.mrb[0].mxu0
      %5066 = vmatprep.mubr.f32.mxu0 0.0
      %5067 = vmatmul.mubr.f32.gmra.mrb[0].mxu0 %v4735
      %v5068 = vpop.f32.mrb[0].mxu0
      %v5069 = vadd.f32 %v4775, %v5068
      %v5070 = vpop.f32.mrb[0].mxu0
      %5071 = vmatprep.mubr.f32.mxu0 0.0
      %5072 = vmatmul.mubr.f32.gmra.mrb[0].mxu0 %v4736
      %v5073 = vpop.f32.mrb[0].mxu0
      %v5074 = vadd.f32 %v4775, %v5073
      %v5075 = vpop.f32.mrb[0].mxu0
      %5076 = vmatprep.mubr.f32.mxu0 0.0
      %5077 = vmatmul.mubr.f32.gmra.mrb[0].mxu0 %v4737
      %v5078 = vpop.f32.mrb[0].mxu0
      %v5079 = vadd.f32 %v4775, %v5078
      %v5080 = vpop.f32.mrb[0].mxu0
      %5081 = vmatprep.mubr.f32.mxu0 0.0
      %5082 = vmatmul.mubr.f32.gmra.mrb[0].mxu0 %v4738
      %v5083 = vpop.f32.mrb[0].mxu0
      %v5084 = vadd.f32 %v4775, %v5083
      %v5085 = vpop.f32.mrb[0].mxu0
      %5086 = vmatprep.mubr.f32.mxu0 0.0
      %5087 = vmatmul.mubr.f32.gmra.mrb[0].mxu0 %v4739
      %v5088 = vpop.f32.mrb[0].mxu0
      %v5089 = vadd.f32 %v4775, %v5088
      %v5090 = vpop.f32.mrb[0].mxu0
      %5091 = vmatprep.mubr.f32.mxu0 0.0
      %5092 = vmatmul.mubr.f32.gmra.mrb[0].mxu0 %v4740
      %v5093 = vpop.f32.mrb[0].mxu0
      %v5094 = vadd.f32 %v4775, %v5093
      %v5095 = vpop.f32.mrb[0].mxu0
      %5096 = vmatprep.mubr.f32.mxu0 0.0
      %5097 = vmatmul.mubr.f32.gmra.mrb[0].mxu0 %v4741
      %v5098 = vpop.f32.mrb[0].mxu0
      %v5099 = vadd.f32 %v4775, %v5098
      %v5100 = vpop.f32.mrb[0].mxu0
      %5101 = vmatprep.mubr.f32.mxu0 0.0
      %5102 = vmatmul.mubr.f32.gmra.mrb[0].mxu0 %v4742
      %v5103 = vpop.f32.mrb[0].mxu0
      %v5104 = vadd.f32 %v4775, %v5103
      %v5105 = vpop.f32.mrb[0].mxu0
      %5106 = vmatprep.mubr.f32.mxu0 0.0
      %5107 = vmatmul.mubr.f32.gmra.mrb[0].mxu0 %v4743
      %v5108 = vpop.f32.mrb[0].mxu0
      %v5109 = vadd.f32 %v4775, %v5108
      %v5110 = vpop.f32.mrb[0].mxu0
      %5111 = vmatprep.mubr.f32.mxu0 0.0
      %5112 = vmatmul.mubr.f32.gmra.mrb[0].mxu0 %v4744
      %v5113 = vpop.f32.mrb[0].mxu0
      %v5114 = vadd.f32 %v4775, %v5113
      %v5115 = vpop.f32.mrb[0].mxu0
      %5116 = vmatprep.mubr.f32.mxu0 0.0
      %5117 = vmatmul.mubr.f32.gmra.mrb[0].mxu0 %v4745
      %v5118 = vpop.f32.mrb[0].mxu0
      %v5119 = vadd.f32 %v4775, %v5118
      %v5120 = vpop.f32.mrb[0].mxu0
      %5121 = vmatprep.mubr.f32.mxu0 0.0
      %5122 = vmatmul.mubr.f32.gmra.mrb[0].mxu0 %v4746
      %v5123 = vpop.f32.mrb[0].mxu0
      %v5124 = vadd.f32 %v4775, %v5123
      %v5125 = vpop.f32.mrb[0].mxu0
      %5126 = vmatprep.mubr.f32.mxu0 0.0
      %5127 = vmatmul.mubr.f32.gmra.mrb[0].mxu0 %v4747
      %v5128 = vpop.f32.mrb[0].mxu0
      %v5129 = vadd.f32 %v4775, %v5128
      %v5130 = vpop.f32.mrb[0].mxu0
      %5131 = vmatprep.mubr.f32.mxu0 0.0
      %5132 = vmatmul.mubr.f32.gmra.mrb[0].mxu0 %v4748
      %v5133 = vpop.f32.mrb[0].mxu0
      %v5134 = vadd.f32 %v4775, %v5133
      %v5135 = vpop.f32.mrb[0].mxu0
      %5136 = vmatprep.mubr.f32.mxu0 0.0
      %5137 = vmatmul.mubr.f32.gmra.mrb[0].mxu0 %v4749
      %v5138 = vpop.f32.mrb[0].mxu0
      %v5139 = vadd.f32 %v4775, %v5138
      %v5140 = vpop.f32.mrb[0].mxu0
      %5141 = vmatprep.mubr.f32.mxu0 0.0
      %5142 = vmatmul.mubr.f32.gmra.mrb[0].mxu0 %v4750
      %v5143 = vpop.f32.mrb[0].mxu0
      %v5144 = vadd.f32 %v4775, %v5143
      %v5145 = vpop.f32.mrb[0].mxu0
      %5146 = vmatprep.mubr.f32.mxu0 0.0
      %5147 = vmatmul.mubr.f32.gmra.mrb[0].mxu0 %v4751
      %v5148 = vpop.f32.mrb[0].mxu0
      %v5149 = vadd.f32 %v4775, %v5148
      %v5150 = vpop.f32.mrb[0].mxu0
      %5151 = vmatprep.mubr.f32.mxu0 0.0
      %5152 = vmatmul.mubr.f32.gmra.mrb[0].mxu0 %v4752
      %v5153 = vpop.f32.mrb[0].mxu0
      %v5154 = vadd.f32 %v4775, %v5153
      %v5155 = vpop.f32.mrb[0].mxu0
      %5156 = vmatprep.mubr.f32.mxu0 0.0
      %5157 = vmatmul.mubr.f32.gmra.mrb[0].mxu0 %v4753
      %v5158 = vpop.f32.mrb[0].mxu0
      %v5159 = vadd.f32 %v4775, %v5158
      %v5160 = vpop.f32.mrb[0].mxu0
      %5161 = vdwg.mxu0
      %v5162 = vmax.f32 %v4844, 0.0
      %v5163 = vmax.f32 %v4849, 0.0
      %v5164 = vmax.f32 %v4854, 0.0
      %v5165 = vmax.f32 %v4859, 0.0
      %v5166 = vmax.f32 %v4864, 0.0
      %v5167 = vmax.f32 %v4869, 0.0
      %v5168 = vmax.f32 %v4874, 0.0
      %v5169 = vmax.f32 %v4879, 0.0
      %v5170 = vmax.f32 %v4884, 0.0
      %v5171 = vmax.f32 %v4889, 0.0
      %v5172 = vmax.f32 %v4894, 0.0
      %v5173 = vmax.f32 %v4899, 0.0
      %v5174 = vmax.f32 %v4904, 0.0
      %v5175 = vmax.f32 %v4909, 0.0
      %v5176 = vmax.f32 %v4914, 0.0
      %v5177 = vmax.f32 %v4919, 0.0
      %v5178 = vmax.f32 %v4924, 0.0
      %v5179 = vmax.f32 %v4929, 0.0
      %v5180 = vmax.f32 %v4934, 0.0
      %v5181 = vmax.f32 %v4939, 0.0
      %v5182 = vmax.f32 %v4944, 0.0
      %v5183 = vmax.f32 %v4949, 0.0
      %v5184 = vmax.f32 %v4954, 0.0
      %v5185 = vmax.f32 %v4959, 0.0
      %v5186 = vmax.f32 %v4964, 0.0
      %v5187 = vmax.f32 %v4969, 0.0
      %v5188 = vmax.f32 %v4974, 0.0
      %v5189 = vmax.f32 %v4979, 0.0
      %v5190 = vmax.f32 %v4984, 0.0
      %v5191 = vmax.f32 %v4989, 0.0
      %v5192 = vmax.f32 %v4994, 0.0
      %v5193 = vmax.f32 %v4999, 0.0
      %v5194 = vmax.f32 %v5004, 0.0
      %v5195 = vmax.f32 %v5009, 0.0
      %v5196 = vmax.f32 %v5014, 0.0
      %v5197 = vmax.f32 %v5019, 0.0
      %v5198 = vmax.f32 %v5024, 0.0
      %v5199 = vmax.f32 %v5029, 0.0
      %v5200 = vmax.f32 %v5034, 0.0
      %v5201 = vmax.f32 %v5039, 0.0
      %v5202 = vmax.f32 %v5044, 0.0
      %v5203 = vmax.f32 %v5049, 0.0
      %v5204 = vmax.f32 %v5054, 0.0
      %v5205 = vmax.f32 %v5059, 0.0
      %v5206 = vmax.f32 %v5064, 0.0
      %v5207 = vmax.f32 %v5069, 0.0
      %v5208 = vmax.f32 %v5074, 0.0
      %v5209 = vmax.f32 %v5079, 0.0
      %v5210 = vmax.f32 %v5084, 0.0
      %v5211 = vmax.f32 %v5089, 0.0
      %v5212 = vmax.f32 %v5094, 0.0
      %v5213 = vmax.f32 %v5099, 0.0
      %v5214 = vmax.f32 %v5104, 0.0
      %v5215 = vmax.f32 %v5109, 0.0
      %v5216 = vmax.f32 %v5114, 0.0
      %v5217 = vmax.f32 %v5119, 0.0
      %v5218 = vmax.f32 %v5124, 0.0
      %v5219 = vmax.f32 %v5129, 0.0
      %v5220 = vmax.f32 %v5134, 0.0
      %v5221 = vmax.f32 %v5139, 0.0
      %v5222 = vmax.f32 %v5144, 0.0
      %v5223 = vmax.f32 %v5149, 0.0
      %v5224 = vmax.f32 %v5154, 0.0
      %v5225 = vmax.f32 %v5159, 0.0
      %v5226 = vld [vmem:[%s16] sm:$0xff]
      %v5227 = vld [vmem:[%s16 + $0x8] sm:$0xff]
      %v5228 = vld [vmem:[%s16 + $0x10] sm:$0xff]
      %v5229 = vld [vmem:[%s16 + $0x18] sm:$0xff]
      %v5230 = vld [vmem:[%s16 + $0x20] sm:$0xff]
      %v5231 = vld [vmem:[%s16 + $0x28] sm:$0xff]
      %v5232 = vld [vmem:[%s16 + $0x30] sm:$0xff]
      %v5233 = vld [vmem:[%s16 + $0x38] sm:$0xff]
      %v5234 = vld [vmem:[%s16 + $0x40] sm:$0xff]
      %v5235 = vld [vmem:[%s16 + $0x48] sm:$0xff]
      %v5236 = vld [vmem:[%s16 + $0x50] sm:$0xff]
      %v5237 = vld [vmem:[%s16 + $0x58] sm:$0xff]
      %v5238 = vld [vmem:[%s16 + $0x60] sm:$0xff]
      %v5239 = vld [vmem:[%s16 + $0x68] sm:$0xff]
      %v5240 = vld [vmem:[%s16 + $0x70] sm:$0xff]
      %v5241 = vld [vmem:[%s16 + $0x78] sm:$0xff]
      %v5242 = vld [vmem:[%s17] sm:$0x1]
      %v5244 = vlaneseq
      %v5245 = vshrl.u32 %v5244, 7
      %v5246 = vsub.s32 0, %v5245
      %v5247 = vrot.slane %v5242, %v5246
      %5249 = vmatprep.subr.mxu0 0.0
      %5250 = vmatpush1.msra.mxu0 %v5226
      %5251 = vmatprep.subr.mxu0 0.0
      %5252 = vmatpush1.msra.mxu0 %v5227
      %5253 = vmatprep.subr.mxu0 0.0
      %5254 = vmatpush1.msra.mxu0 %v5228
      %5255 = vmatprep.subr.mxu0 0.0
      %5256 = vmatpush1.msra.mxu0 %v5229
      %5257 = vmatprep.subr.mxu0 0.0
      %5258 = vmatpush1.msra.mxu0 %v5230
      %5259 = vmatprep.subr.mxu0 0.0
      %5260 = vmatpush1.msra.mxu0 %v5231
      %5261 = vmatprep.subr.mxu0 0.0
      %5262 = vmatpush1.msra.mxu0 %v5232
      %5263 = vmatprep.subr.mxu0 0.0
      %5264 = vmatpush1.msra.mxu0 %v5233
      %5265 = vmatprep.subr.mxu0 0.0
      %5266 = vmatpush1.msra.mxu0 %v5234
      %5267 = vmatprep.subr.mxu0 0.0
      %5268 = vmatpush1.msra.mxu0 %v5235
      %5269 = vmatprep.subr.mxu0 0.0
      %5270 = vmatpush1.msra.mxu0 %v5236
      %5271 = vmatprep.subr.mxu0 0.0
      %5272 = vmatpush1.msra.mxu0 %v5237
      %5273 = vmatprep.subr.mxu0 0.0
      %5274 = vmatpush1.msra.mxu0 %v5238
      %5275 = vmatprep.subr.mxu0 0.0
      %5276 = vmatpush1.msra.mxu0 %v5239
      %5277 = vmatprep.subr.mxu0 0.0
      %5278 = vmatpush1.msra.mxu0 %v5240
      %5279 = vmatprep.subr.mxu0 0.0
      %5280 = vmatpush1.msra.mxu0 %v5241
      %5281 = vmatprep.subr.mxu0 0.0
      %5282 = vmatpush1.msra.mxu0 0.0
      %5283 = vmatprep.subr.mxu0 0.0
      %5284 = vmatpush1.msra.mxu0 0.0
      %5285 = vmatprep.subr.mxu0 0.0
      %5286 = vmatpush1.msra.mxu0 0.0
      %5287 = vmatprep.subr.mxu0 0.0
      %5288 = vmatpush1.msra.mxu0 0.0
      %5289 = vmatprep.subr.mxu0 0.0
      %5290 = vmatpush1.msra.mxu0 0.0
      %5291 = vmatprep.subr.mxu0 0.0
      %5292 = vmatpush1.msra.mxu0 0.0
      %5293 = vmatprep.subr.mxu0 0.0
      %5294 = vmatpush1.msra.mxu0 0.0
      %5295 = vmatprep.subr.mxu0 0.0
      %5296 = vmatpush1.msra.mxu0 0.0
      %5297 = vmatprep.subr.mxu0 0.0
      %5298 = vmatpush1.msra.mxu0 0.0
      %5299 = vmatprep.subr.mxu0 0.0
      %5300 = vmatpush1.msra.mxu0 0.0
      %5301 = vmatprep.subr.mxu0 0.0
      %5302 = vmatpush1.msra.mxu0 0.0
      %5303 = vmatprep.subr.mxu0 0.0
      %5304 = vmatpush1.msra.mxu0 0.0
      %5305 = vmatprep.subr.mxu0 0.0
      %5306 = vmatpush1.msra.mxu0 0.0
      %5307 = vmatprep.subr.mxu0 0.0
      %5308 = vmatpush1.msra.mxu0 0.0
      %5309 = vmatprep.subr.mxu0 0.0
      %5310 = vmatpush1.msra.mxu0 0.0
      %5311 = vmatprep.subr.mxu0 0.0
      %5312 = vmatpush1.msra.mxu0 0.0
      %5313 = vmatprep.mubr.f32.mxu0 0.0
      %5314 = vmatmul.mubr.f32.gmra.mrb[0].mxu0 %v5162
      %v5315 = vpop.f32.mrb[0].mxu0
      %v5316 = vadd.f32 %v5247, %v5315
      %v5317 = vpop.f32.mrb[0].mxu0
      %5318 = vmatprep.mubr.f32.mxu0 0.0
      %5319 = vmatmul.mubr.f32.gmra.mrb[0].mxu0 %v5163
      %v5320 = vpop.f32.mrb[0].mxu0
      %v5321 = vadd.f32 %v5247, %v5320
      %v5322 = vpop.f32.mrb[0].mxu0
      %5323 = vmatprep.mubr.f32.mxu0 0.0
      %5324 = vmatmul.mubr.f32.gmra.mrb[0].mxu0 %v5164
      %v5325 = vpop.f32.mrb[0].mxu0
      %v5326 = vadd.f32 %v5247, %v5325
      %v5327 = vpop.f32.mrb[0].mxu0
      %5328 = vmatprep.mubr.f32.mxu0 0.0
      %5329 = vmatmul.mubr.f32.gmra.mrb[0].mxu0 %v5165
      %v5330 = vpop.f32.mrb[0].mxu0
      %v5331 = vadd.f32 %v5247, %v5330
      %v5332 = vpop.f32.mrb[0].mxu0
      %5333 = vmatprep.mubr.f32.mxu0 0.0
      %5334 = vmatmul.mubr.f32.gmra.mrb[0].mxu0 %v5166
      %v5335 = vpop.f32.mrb[0].mxu0
      %v5336 = vadd.f32 %v5247, %v5335
      %v5337 = vpop.f32.mrb[0].mxu0
      %5338 = vmatprep.mubr.f32.mxu0 0.0
      %5339 = vmatmul.mubr.f32.gmra.mrb[0].mxu0 %v5167
      %v5340 = vpop.f32.mrb[0].mxu0
      %v5341 = vadd.f32 %v5247, %v5340
      %v5342 = vpop.f32.mrb[0].mxu0
      %5343 = vmatprep.mubr.f32.mxu0 0.0
      %5344 = vmatmul.mubr.f32.gmra.mrb[0].mxu0 %v5168
      %v5345 = vpop.f32.mrb[0].mxu0
      %v5346 = vadd.f32 %v5247, %v5345
      %v5347 = vpop.f32.mrb[0].mxu0
      %5348 = vmatprep.mubr.f32.mxu0 0.0
      %5349 = vmatmul.mubr.f32.gmra.mrb[0].mxu0 %v5169
      %v5350 = vpop.f32.mrb[0].mxu0
      %v5351 = vadd.f32 %v5247, %v5350
      %v5352 = vpop.f32.mrb[0].mxu0
      %5353 = vmatprep.mubr.f32.mxu0 0.0
      %5354 = vmatmul.mubr.f32.gmra.mrb[0].mxu0 %v5170
      %v5355 = vpop.f32.mrb[0].mxu0
      %v5356 = vadd.f32 %v5247, %v5355
      %v5357 = vpop.f32.mrb[0].mxu0
      %5358 = vmatprep.mubr.f32.mxu0 0.0
      %5359 = vmatmul.mubr.f32.gmra.mrb[0].mxu0 %v5171
      %v5360 = vpop.f32.mrb[0].mxu0
      %v5361 = vadd.f32 %v5247, %v5360
      %v5362 = vpop.f32.mrb[0].mxu0
      %5363 = vmatprep.mubr.f32.mxu0 0.0
      %5364 = vmatmul.mubr.f32.gmra.mrb[0].mxu0 %v5172
      %v5365 = vpop.f32.mrb[0].mxu0
      %v5366 = vadd.f32 %v5247, %v5365
      %v5367 = vpop.f32.mrb[0].mxu0
      %5368 = vmatprep.mubr.f32.mxu0 0.0
      %5369 = vmatmul.mubr.f32.gmra.mrb[0].mxu0 %v5173
      %v5370 = vpop.f32.mrb[0].mxu0
      %v5371 = vadd.f32 %v5247, %v5370
      %v5372 = vpop.f32.mrb[0].mxu0
      %5373 = vmatprep.mubr.f32.mxu0 0.0
      %5374 = vmatmul.mubr.f32.gmra.mrb[0].mxu0 %v5174
      %v5375 = vpop.f32.mrb[0].mxu0
      %v5376 = vadd.f32 %v5247, %v5375
      %v5377 = vpop.f32.mrb[0].mxu0
      %5378 = vmatprep.mubr.f32.mxu0 0.0
      %5379 = vmatmul.mubr.f32.gmra.mrb[0].mxu0 %v5175
      %v5380 = vpop.f32.mrb[0].mxu0
      %v5381 = vadd.f32 %v5247, %v5380
      %v5382 = vpop.f32.mrb[0].mxu0
      %5383 = vmatprep.mubr.f32.mxu0 0.0
      %5384 = vmatmul.mubr.f32.gmra.mrb[0].mxu0 %v5176
      %v5385 = vpop.f32.mrb[0].mxu0
      %v5386 = vadd.f32 %v5247, %v5385
      %v5387 = vpop.f32.mrb[0].mxu0
      %5388 = vmatprep.mubr.f32.mxu0 0.0
      %5389 = vmatmul.mubr.f32.gmra.mrb[0].mxu0 %v5177
      %v5390 = vpop.f32.mrb[0].mxu0
      %v5391 = vadd.f32 %v5247, %v5390
      %v5392 = vpop.f32.mrb[0].mxu0
      %5393 = vmatprep.mubr.f32.mxu0 0.0
      %5394 = vmatmul.mubr.f32.gmra.mrb[0].mxu0 %v5178
      %v5395 = vpop.f32.mrb[0].mxu0
      %v5396 = vadd.f32 %v5247, %v5395
      %v5397 = vpop.f32.mrb[0].mxu0
      %5398 = vmatprep.mubr.f32.mxu0 0.0
      %5399 = vmatmul.mubr.f32.gmra.mrb[0].mxu0 %v5179
      %v5400 = vpop.f32.mrb[0].mxu0
      %v5401 = vadd.f32 %v5247, %v5400
      %v5402 = vpop.f32.mrb[0].mxu0
      %5403 = vmatprep.mubr.f32.mxu0 0.0
      %5404 = vmatmul.mubr.f32.gmra.mrb[0].mxu0 %v5180
      %v5405 = vpop.f32.mrb[0].mxu0
      %v5406 = vadd.f32 %v5247, %v5405
      %v5407 = vpop.f32.mrb[0].mxu0
      %5408 = vmatprep.mubr.f32.mxu0 0.0
      %5409 = vmatmul.mubr.f32.gmra.mrb[0].mxu0 %v5181
      %v5410 = vpop.f32.mrb[0].mxu0
      %v5411 = vadd.f32 %v5247, %v5410
      %v5412 = vpop.f32.mrb[0].mxu0
      %5413 = vmatprep.mubr.f32.mxu0 0.0
      %5414 = vmatmul.mubr.f32.gmra.mrb[0].mxu0 %v5182
      %v5415 = vpop.f32.mrb[0].mxu0
      %v5416 = vadd.f32 %v5247, %v5415
      %v5417 = vpop.f32.mrb[0].mxu0
      %5418 = vmatprep.mubr.f32.mxu0 0.0
      %5419 = vmatmul.mubr.f32.gmra.mrb[0].mxu0 %v5183
      %v5420 = vpop.f32.mrb[0].mxu0
      %v5421 = vadd.f32 %v5247, %v5420
      %v5422 = vpop.f32.mrb[0].mxu0
      %5423 = vmatprep.mubr.f32.mxu0 0.0
      %5424 = vmatmul.mubr.f32.gmra.mrb[0].mxu0 %v5184
      %v5425 = vpop.f32.mrb[0].mxu0
      %v5426 = vadd.f32 %v5247, %v5425
      %v5427 = vpop.f32.mrb[0].mxu0
      %5428 = vmatprep.mubr.f32.mxu0 0.0
      %5429 = vmatmul.mubr.f32.gmra.mrb[0].mxu0 %v5185
      %v5430 = vpop.f32.mrb[0].mxu0
      %v5431 = vadd.f32 %v5247, %v5430
      %v5432 = vpop.f32.mrb[0].mxu0
      %5433 = vmatprep.mubr.f32.mxu0 0.0
      %5434 = vmatmul.mubr.f32.gmra.mrb[0].mxu0 %v5186
      %v5435 = vpop.f32.mrb[0].mxu0
      %v5436 = vadd.f32 %v5247, %v5435
      %v5437 = vpop.f32.mrb[0].mxu0
      %5438 = vmatprep.mubr.f32.mxu0 0.0
      %5439 = vmatmul.mubr.f32.gmra.mrb[0].mxu0 %v5187
      %v5440 = vpop.f32.mrb[0].mxu0
      %v5441 = vadd.f32 %v5247, %v5440
      %v5442 = vpop.f32.mrb[0].mxu0
      %5443 = vmatprep.mubr.f32.mxu0 0.0
      %5444 = vmatmul.mubr.f32.gmra.mrb[0].mxu0 %v5188
      %v5445 = vpop.f32.mrb[0].mxu0
      %v5446 = vadd.f32 %v5247, %v5445
      %v5447 = vpop.f32.mrb[0].mxu0
      %5448 = vmatprep.mubr.f32.mxu0 0.0
      %5449 = vmatmul.mubr.f32.gmra.mrb[0].mxu0 %v5189
      %v5450 = vpop.f32.mrb[0].mxu0
      %v5451 = vadd.f32 %v5247, %v5450
      %v5452 = vpop.f32.mrb[0].mxu0
      %5453 = vmatprep.mubr.f32.mxu0 0.0
      %5454 = vmatmul.mubr.f32.gmra.mrb[0].mxu0 %v5190
      %v5455 = vpop.f32.mrb[0].mxu0
      %v5456 = vadd.f32 %v5247, %v5455
      %v5457 = vpop.f32.mrb[0].mxu0
      %5458 = vmatprep.mubr.f32.mxu0 0.0
      %5459 = vmatmul.mubr.f32.gmra.mrb[0].mxu0 %v5191
      %v5460 = vpop.f32.mrb[0].mxu0
      %v5461 = vadd.f32 %v5247, %v5460
      %v5462 = vpop.f32.mrb[0].mxu0
      %5463 = vmatprep.mubr.f32.mxu0 0.0
      %5464 = vmatmul.mubr.f32.gmra.mrb[0].mxu0 %v5192
      %v5465 = vpop.f32.mrb[0].mxu0
      %v5466 = vadd.f32 %v5247, %v5465
      %v5467 = vpop.f32.mrb[0].mxu0
      %5468 = vmatprep.mubr.f32.mxu0 0.0
      %5469 = vmatmul.mubr.f32.gmra.mrb[0].mxu0 %v5193
      %v5470 = vpop.f32.mrb[0].mxu0
      %v5471 = vadd.f32 %v5247, %v5470
      %v5472 = vpop.f32.mrb[0].mxu0
      %5473 = vmatprep.mubr.f32.mxu0 0.0
      %5474 = vmatmul.mubr.f32.gmra.mrb[0].mxu0 %v5194
      %v5475 = vpop.f32.mrb[0].mxu0
      %v5476 = vadd.f32 %v5247, %v5475
      %v5477 = vpop.f32.mrb[0].mxu0
      %5478 = vmatprep.mubr.f32.mxu0 0.0
      %5479 = vmatmul.mubr.f32.gmra.mrb[0].mxu0 %v5195
      %v5480 = vpop.f32.mrb[0].mxu0
      %v5481 = vadd.f32 %v5247, %v5480
      %v5482 = vpop.f32.mrb[0].mxu0
      %5483 = vmatprep.mubr.f32.mxu0 0.0
      %5484 = vmatmul.mubr.f32.gmra.mrb[0].mxu0 %v5196
      %v5485 = vpop.f32.mrb[0].mxu0
      %v5486 = vadd.f32 %v5247, %v5485
      %v5487 = vpop.f32.mrb[0].mxu0
      %5488 = vmatprep.mubr.f32.mxu0 0.0
      %5489 = vmatmul.mubr.f32.gmra.mrb[0].mxu0 %v5197
      %v5490 = vpop.f32.mrb[0].mxu0
      %v5491 = vadd.f32 %v5247, %v5490
      %v5492 = vpop.f32.mrb[0].mxu0
      %5493 = vmatprep.mubr.f32.mxu0 0.0
      %5494 = vmatmul.mubr.f32.gmra.mrb[0].mxu0 %v5198
      %v5495 = vpop.f32.mrb[0].mxu0
      %v5496 = vadd.f32 %v5247, %v5495
      %v5497 = vpop.f32.mrb[0].mxu0
      %5498 = vmatprep.mubr.f32.mxu0 0.0
      %5499 = vmatmul.mubr.f32.gmra.mrb[0].mxu0 %v5199
      %v5500 = vpop.f32.mrb[0].mxu0
      %v5501 = vadd.f32 %v5247, %v5500
      %v5502 = vpop.f32.mrb[0].mxu0
      %5503 = vmatprep.mubr.f32.mxu0 0.0
      %5504 = vmatmul.mubr.f32.gmra.mrb[0].mxu0 %v5200
      %v5505 = vpop.f32.mrb[0].mxu0
      %v5506 = vadd.f32 %v5247, %v5505
      %v5507 = vpop.f32.mrb[0].mxu0
      %5508 = vmatprep.mubr.f32.mxu0 0.0
      %5509 = vmatmul.mubr.f32.gmra.mrb[0].mxu0 %v5201
      %v5510 = vpop.f32.mrb[0].mxu0
      %v5511 = vadd.f32 %v5247, %v5510
      %v5512 = vpop.f32.mrb[0].mxu0
      %5513 = vmatprep.mubr.f32.mxu0 0.0
      %5514 = vmatmul.mubr.f32.gmra.mrb[0].mxu0 %v5202
      %v5515 = vpop.f32.mrb[0].mxu0
      %v5516 = vadd.f32 %v5247, %v5515
      %v5517 = vpop.f32.mrb[0].mxu0
      %5518 = vmatprep.mubr.f32.mxu0 0.0
      %5519 = vmatmul.mubr.f32.gmra.mrb[0].mxu0 %v5203
      %v5520 = vpop.f32.mrb[0].mxu0
      %v5521 = vadd.f32 %v5247, %v5520
      %v5522 = vpop.f32.mrb[0].mxu0
      %5523 = vmatprep.mubr.f32.mxu0 0.0
      %5524 = vmatmul.mubr.f32.gmra.mrb[0].mxu0 %v5204
      %v5525 = vpop.f32.mrb[0].mxu0
      %v5526 = vadd.f32 %v5247, %v5525
      %v5527 = vpop.f32.mrb[0].mxu0
      %5528 = vmatprep.mubr.f32.mxu0 0.0
      %5529 = vmatmul.mubr.f32.gmra.mrb[0].mxu0 %v5205
      %v5530 = vpop.f32.mrb[0].mxu0
      %v5531 = vadd.f32 %v5247, %v5530
      %v5532 = vpop.f32.mrb[0].mxu0
      %5533 = vmatprep.mubr.f32.mxu0 0.0
      %5534 = vmatmul.mubr.f32.gmra.mrb[0].mxu0 %v5206
      %v5535 = vpop.f32.mrb[0].mxu0
      %v5536 = vadd.f32 %v5247, %v5535
      %v5537 = vpop.f32.mrb[0].mxu0
      %5538 = vmatprep.mubr.f32.mxu0 0.0
      %5539 = vmatmul.mubr.f32.gmra.mrb[0].mxu0 %v5207
      %v5540 = vpop.f32.mrb[0].mxu0
      %v5541 = vadd.f32 %v5247, %v5540
      %v5542 = vpop.f32.mrb[0].mxu0
      %5543 = vmatprep.mubr.f32.mxu0 0.0
      %5544 = vmatmul.mubr.f32.gmra.mrb[0].mxu0 %v5208
      %v5545 = vpop.f32.mrb[0].mxu0
      %v5546 = vadd.f32 %v5247, %v5545
      %v5547 = vpop.f32.mrb[0].mxu0
      %5548 = vmatprep.mubr.f32.mxu0 0.0
      %5549 = vmatmul.mubr.f32.gmra.mrb[0].mxu0 %v5209
      %v5550 = vpop.f32.mrb[0].mxu0
      %v5551 = vadd.f32 %v5247, %v5550
      %v5552 = vpop.f32.mrb[0].mxu0
      %5553 = vmatprep.mubr.f32.mxu0 0.0
      %5554 = vmatmul.mubr.f32.gmra.mrb[0].mxu0 %v5210
      %v5555 = vpop.f32.mrb[0].mxu0
      %v5556 = vadd.f32 %v5247, %v5555
      %v5557 = vpop.f32.mrb[0].mxu0
      %5558 = vmatprep.mubr.f32.mxu0 0.0
      %5559 = vmatmul.mubr.f32.gmra.mrb[0].mxu0 %v5211
      %v5560 = vpop.f32.mrb[0].mxu0
      %v5561 = vadd.f32 %v5247, %v5560
      %v5562 = vpop.f32.mrb[0].mxu0
      %5563 = vmatprep.mubr.f32.mxu0 0.0
      %5564 = vmatmul.mubr.f32.gmra.mrb[0].mxu0 %v5212
      %v5565 = vpop.f32.mrb[0].mxu0
      %v5566 = vadd.f32 %v5247, %v5565
      %v5567 = vpop.f32.mrb[0].mxu0
      %5568 = vmatprep.mubr.f32.mxu0 0.0
      %5569 = vmatmul.mubr.f32.gmra.mrb[0].mxu0 %v5213
      %v5570 = vpop.f32.mrb[0].mxu0
      %v5571 = vadd.f32 %v5247, %v5570
      %v5572 = vpop.f32.mrb[0].mxu0
      %5573 = vmatprep.mubr.f32.mxu0 0.0
      %5574 = vmatmul.mubr.f32.gmra.mrb[0].mxu0 %v5214
      %v5575 = vpop.f32.mrb[0].mxu0
      %v5576 = vadd.f32 %v5247, %v5575
      %v5577 = vpop.f32.mrb[0].mxu0
      %5578 = vmatprep.mubr.f32.mxu0 0.0
      %5579 = vmatmul.mubr.f32.gmra.mrb[0].mxu0 %v5215
      %v5580 = vpop.f32.mrb[0].mxu0
      %v5581 = vadd.f32 %v5247, %v5580
      %v5582 = vpop.f32.mrb[0].mxu0
      %5583 = vmatprep.mubr.f32.mxu0 0.0
      %5584 = vmatmul.mubr.f32.gmra.mrb[0].mxu0 %v5216
      %v5585 = vpop.f32.mrb[0].mxu0
      %v5586 = vadd.f32 %v5247, %v5585
      %v5587 = vpop.f32.mrb[0].mxu0
      %5588 = vmatprep.mubr.f32.mxu0 0.0
      %5589 = vmatmul.mubr.f32.gmra.mrb[0].mxu0 %v5217
      %v5590 = vpop.f32.mrb[0].mxu0
      %v5591 = vadd.f32 %v5247, %v5590
      %v5592 = vpop.f32.mrb[0].mxu0
      %5593 = vmatprep.mubr.f32.mxu0 0.0
      %5594 = vmatmul.mubr.f32.gmra.mrb[0].mxu0 %v5218
      %v5595 = vpop.f32.mrb[0].mxu0
      %v5596 = vadd.f32 %v5247, %v5595
      %v5597 = vpop.f32.mrb[0].mxu0
      %5598 = vmatprep.mubr.f32.mxu0 0.0
      %5599 = vmatmul.mubr.f32.gmra.mrb[0].mxu0 %v5219
      %v5600 = vpop.f32.mrb[0].mxu0
      %v5601 = vadd.f32 %v5247, %v5600
      %v5602 = vpop.f32.mrb[0].mxu0
      %5603 = vmatprep.mubr.f32.mxu0 0.0
      %5604 = vmatmul.mubr.f32.gmra.mrb[0].mxu0 %v5220
      %v5605 = vpop.f32.mrb[0].mxu0
      %v5606 = vadd.f32 %v5247, %v5605
      %v5607 = vpop.f32.mrb[0].mxu0
      %5608 = vmatprep.mubr.f32.mxu0 0.0
      %5609 = vmatmul.mubr.f32.gmra.mrb[0].mxu0 %v5221
      %v5610 = vpop.f32.mrb[0].mxu0
      %v5611 = vadd.f32 %v5247, %v5610
      %v5612 = vpop.f32.mrb[0].mxu0
      %5613 = vmatprep.mubr.f32.mxu0 0.0
      %5614 = vmatmul.mubr.f32.gmra.mrb[0].mxu0 %v5222
      %v5615 = vpop.f32.mrb[0].mxu0
      %v5616 = vadd.f32 %v5247, %v5615
      %v5617 = vpop.f32.mrb[0].mxu0
      %5618 = vmatprep.mubr.f32.mxu0 0.0
      %5619 = vmatmul.mubr.f32.gmra.mrb[0].mxu0 %v5223
      %v5620 = vpop.f32.mrb[0].mxu0
      %v5621 = vadd.f32 %v5247, %v5620
      %v5622 = vpop.f32.mrb[0].mxu0
      %5623 = vmatprep.mubr.f32.mxu0 0.0
      %5624 = vmatmul.mubr.f32.gmra.mrb[0].mxu0 %v5224
      %v5625 = vpop.f32.mrb[0].mxu0
      %v5626 = vadd.f32 %v5247, %v5625
      %v5627 = vpop.f32.mrb[0].mxu0
      %5628 = vmatprep.mubr.f32.mxu0 0.0
      %5629 = vmatmul.mubr.f32.gmra.mrb[0].mxu0 %v5225
      %v5630 = vpop.f32.mrb[0].mxu0
      %v5631 = vadd.f32 %v5247, %v5630
      %v5632 = vpop.f32.mrb[0].mxu0
      %5633 = vdwg.mxu0
      %v5634 = vmax.f32 %v5316, 0.0
      %v5635 = vmax.f32 %v5321, 0.0
      %v5636 = vmax.f32 %v5326, 0.0
      %v5637 = vmax.f32 %v5331, 0.0
      %v5638 = vmax.f32 %v5336, 0.0
      %v5639 = vmax.f32 %v5341, 0.0
      %v5640 = vmax.f32 %v5346, 0.0
      %v5641 = vmax.f32 %v5351, 0.0
      %v5642 = vmax.f32 %v5356, 0.0
      %v5643 = vmax.f32 %v5361, 0.0
      %v5644 = vmax.f32 %v5366, 0.0
      %v5645 = vmax.f32 %v5371, 0.0
      %v5646 = vmax.f32 %v5376, 0.0
      %v5647 = vmax.f32 %v5381, 0.0
      %v5648 = vmax.f32 %v5386, 0.0
      %v5649 = vmax.f32 %v5391, 0.0
      %v5650 = vmax.f32 %v5396, 0.0
      %v5651 = vmax.f32 %v5401, 0.0
      %v5652 = vmax.f32 %v5406, 0.0
      %v5653 = vmax.f32 %v5411, 0.0
      %v5654 = vmax.f32 %v5416, 0.0
      %v5655 = vmax.f32 %v5421, 0.0
      %v5656 = vmax.f32 %v5426, 0.0
      %v5657 = vmax.f32 %v5431, 0.0
      %v5658 = vmax.f32 %v5436, 0.0
      %v5659 = vmax.f32 %v5441, 0.0
      %v5660 = vmax.f32 %v5446, 0.0
      %v5661 = vmax.f32 %v5451, 0.0
      %v5662 = vmax.f32 %v5456, 0.0
      %v5663 = vmax.f32 %v5461, 0.0
      %v5664 = vmax.f32 %v5466, 0.0
      %v5665 = vmax.f32 %v5471, 0.0
      %v5666 = vmax.f32 %v5476, 0.0
      %v5667 = vmax.f32 %v5481, 0.0
      %v5668 = vmax.f32 %v5486, 0.0
      %v5669 = vmax.f32 %v5491, 0.0
      %v5670 = vmax.f32 %v5496, 0.0
      %v5671 = vmax.f32 %v5501, 0.0
      %v5672 = vmax.f32 %v5506, 0.0
      %v5673 = vmax.f32 %v5511, 0.0
      %v5674 = vmax.f32 %v5516, 0.0
      %v5675 = vmax.f32 %v5521, 0.0
      %v5676 = vmax.f32 %v5526, 0.0
      %v5677 = vmax.f32 %v5531, 0.0
      %v5678 = vmax.f32 %v5536, 0.0
      %v5679 = vmax.f32 %v5541, 0.0
      %v5680 = vmax.f32 %v5546, 0.0
      %v5681 = vmax.f32 %v5551, 0.0
      %v5682 = vmax.f32 %v5556, 0.0
      %v5683 = vmax.f32 %v5561, 0.0
      %v5684 = vmax.f32 %v5566, 0.0
      %v5685 = vmax.f32 %v5571, 0.0
      %v5686 = vmax.f32 %v5576, 0.0
      %v5687 = vmax.f32 %v5581, 0.0
      %v5688 = vmax.f32 %v5586, 0.0
      %v5689 = vmax.f32 %v5591, 0.0
      %v5690 = vmax.f32 %v5596, 0.0
      %v5691 = vmax.f32 %v5601, 0.0
      %v5692 = vmax.f32 %v5606, 0.0
      %v5693 = vmax.f32 %v5611, 0.0
      %v5694 = vmax.f32 %v5616, 0.0
      %v5695 = vmax.f32 %v5621, 0.0
      %v5696 = vmax.f32 %v5626, 0.0
      %v5697 = vmax.f32 %v5631, 0.0
      %v5698 = vld [vmem:[%s18] sm:$0xff]
      %v5699 = vld [vmem:[%s18 + $0x8] sm:$0xff]
      %v5700 = vld [vmem:[%s18 + $0x10] sm:$0xff]
      %v5701 = vld [vmem:[%s18 + $0x18] sm:$0xff]
      %v5702 = vld [vmem:[%s18 + $0x20] sm:$0xff]
      %v5703 = vld [vmem:[%s18 + $0x28] sm:$0xff]
      %v5704 = vld [vmem:[%s18 + $0x30] sm:$0xff]
      %v5705 = vld [vmem:[%s18 + $0x38] sm:$0xff]
      %v5706 = vld [vmem:[%s18 + $0x40] sm:$0xff]
      %v5707 = vld [vmem:[%s18 + $0x48] sm:$0xff]
      %v5708 = vld [vmem:[%s18 + $0x50] sm:$0xff]
      %v5709 = vld [vmem:[%s18 + $0x58] sm:$0xff]
      %v5710 = vld [vmem:[%s18 + $0x60] sm:$0xff]
      %v5711 = vld [vmem:[%s18 + $0x68] sm:$0xff]
      %v5712 = vld [vmem:[%s18 + $0x70] sm:$0xff]
      %v5713 = vld [vmem:[%s18 + $0x78] sm:$0xff]
      %v5714 = vld [vmem:[%s19] sm:$0x1]
      %v5716 = vlaneseq
      %v5717 = vshrl.u32 %v5716, 7
      %v5718 = vsub.s32 0, %v5717
      %v5719 = vrot.slane %v5714, %v5718
      %5721 = vmatprep.subr.mxu0 0.0
      %5722 = vmatpush1.msra.mxu0 %v5698
      %5723 = vmatprep.subr.mxu0 0.0
      %5724 = vmatpush1.msra.mxu0 %v5699
      %5725 = vmatprep.subr.mxu0 0.0
      %5726 = vmatpush1.msra.mxu0 %v5700
      %5727 = vmatprep.subr.mxu0 0.0
      %5728 = vmatpush1.msra.mxu0 %v5701
      %5729 = vmatprep.subr.mxu0 0.0
      %5730 = vmatpush1.msra.mxu0 %v5702
      %5731 = vmatprep.subr.mxu0 0.0
      %5732 = vmatpush1.msra.mxu0 %v5703
      %5733 = vmatprep.subr.mxu0 0.0
      %5734 = vmatpush1.msra.mxu0 %v5704
      %5735 = vmatprep.subr.mxu0 0.0
      %5736 = vmatpush1.msra.mxu0 %v5705
      %5737 = vmatprep.subr.mxu0 0.0
      %5738 = vmatpush1.msra.mxu0 %v5706
      %5739 = vmatprep.subr.mxu0 0.0
      %5740 = vmatpush1.msra.mxu0 %v5707
      %5741 = vmatprep.subr.mxu0 0.0
      %5742 = vmatpush1.msra.mxu0 %v5708
      %5743 = vmatprep.subr.mxu0 0.0
      %5744 = vmatpush1.msra.mxu0 %v5709
      %5745 = vmatprep.subr.mxu0 0.0
      %5746 = vmatpush1.msra.mxu0 %v5710
      %5747 = vmatprep.subr.mxu0 0.0
      %5748 = vmatpush1.msra.mxu0 %v5711
      %5749 = vmatprep.subr.mxu0 0.0
      %5750 = vmatpush1.msra.mxu0 %v5712
      %5751 = vmatprep.subr.mxu0 0.0
      %5752 = vmatpush1.msra.mxu0 %v5713
      %5753 = vmatprep.subr.mxu0 0.0
      %5754 = vmatpush1.msra.mxu0 0.0
      %5755 = vmatprep.subr.mxu0 0.0
      %5756 = vmatpush1.msra.mxu0 0.0
      %5757 = vmatprep.subr.mxu0 0.0
      %5758 = vmatpush1.msra.mxu0 0.0
      %5759 = vmatprep.subr.mxu0 0.0
      %5760 = vmatpush1.msra.mxu0 0.0
      %5761 = vmatprep.subr.mxu0 0.0
      %5762 = vmatpush1.msra.mxu0 0.0
      %5763 = vmatprep.subr.mxu0 0.0
      %5764 = vmatpush1.msra.mxu0 0.0
      %5765 = vmatprep.subr.mxu0 0.0
      %5766 = vmatpush1.msra.mxu0 0.0
      %5767 = vmatprep.subr.mxu0 0.0
      %5768 = vmatpush1.msra.mxu0 0.0
      %5769 = vmatprep.subr.mxu0 0.0
      %5770 = vmatpush1.msra.mxu0 0.0
      %5771 = vmatprep.subr.mxu0 0.0
      %5772 = vmatpush1.msra.mxu0 0.0
      %5773 = vmatprep.subr.mxu0 0.0
      %5774 = vmatpush1.msra.mxu0 0.0
      %5775 = vmatprep.subr.mxu0 0.0
      %5776 = vmatpush1.msra.mxu0 0.0
      %5777 = vmatprep.subr.mxu0 0.0
      %5778 = vmatpush1.msra.mxu0 0.0
      %5779 = vmatprep.subr.mxu0 0.0
      %5780 = vmatpush1.msra.mxu0 0.0
      %5781 = vmatprep.subr.mxu0 0.0
      %5782 = vmatpush1.msra.mxu0 0.0
      %5783 = vmatprep.subr.mxu0 0.0
      %5784 = vmatpush1.msra.mxu0 0.0
      %5785 = vmatprep.mubr.f32.mxu0 0.0
      %5786 = vmatmul.mubr.f32.gmra.mrb[0].mxu0 %v5634
      %v5787 = vpop.f32.mrb[0].mxu0
      %v5788 = vadd.f32 %v5719, %v5787
      %v5789 = vpop.f32.mrb[0].mxu0
      %5790 = vmatprep.mubr.f32.mxu0 0.0
      %5791 = vmatmul.mubr.f32.gmra.mrb[0].mxu0 %v5635
      %v5792 = vpop.f32.mrb[0].mxu0
      %v5793 = vadd.f32 %v5719, %v5792
      %v5794 = vpop.f32.mrb[0].mxu0
      %5795 = vmatprep.mubr.f32.mxu0 0.0
      %5796 = vmatmul.mubr.f32.gmra.mrb[0].mxu0 %v5636
      %v5797 = vpop.f32.mrb[0].mxu0
      %v5798 = vadd.f32 %v5719, %v5797
      %v5799 = vpop.f32.mrb[0].mxu0
      %5800 = vmatprep.mubr.f32.mxu0 0.0
      %5801 = vmatmul.mubr.f32.gmra.mrb[0].mxu0 %v5637
      %v5802 = vpop.f32.mrb[0].mxu0
      %v5803 = vadd.f32 %v5719, %v5802
      %v5804 = vpop.f32.mrb[0].mxu0
      %5805 = vmatprep.mubr.f32.mxu0 0.0
      %5806 = vmatmul.mubr.f32.gmra.mrb[0].mxu0 %v5638
      %v5807 = vpop.f32.mrb[0].mxu0
      %v5808 = vadd.f32 %v5719, %v5807
      %v5809 = vpop.f32.mrb[0].mxu0
      %5810 = vmatprep.mubr.f32.mxu0 0.0
      %5811 = vmatmul.mubr.f32.gmra.mrb[0].mxu0 %v5639
      %v5812 = vpop.f32.mrb[0].mxu0
      %v5813 = vadd.f32 %v5719, %v5812
      %v5814 = vpop.f32.mrb[0].mxu0
      %5815 = vmatprep.mubr.f32.mxu0 0.0
      %5816 = vmatmul.mubr.f32.gmra.mrb[0].mxu0 %v5640
      %v5817 = vpop.f32.mrb[0].mxu0
      %v5818 = vadd.f32 %v5719, %v5817
      %v5819 = vpop.f32.mrb[0].mxu0
      %5820 = vmatprep.mubr.f32.mxu0 0.0
      %5821 = vmatmul.mubr.f32.gmra.mrb[0].mxu0 %v5641
      %v5822 = vpop.f32.mrb[0].mxu0
      %v5823 = vadd.f32 %v5719, %v5822
      %v5824 = vpop.f32.mrb[0].mxu0
      %5825 = vmatprep.mubr.f32.mxu0 0.0
      %5826 = vmatmul.mubr.f32.gmra.mrb[0].mxu0 %v5642
      %v5827 = vpop.f32.mrb[0].mxu0
      %v5828 = vadd.f32 %v5719, %v5827
      %v5829 = vpop.f32.mrb[0].mxu0
      %5830 = vmatprep.mubr.f32.mxu0 0.0
      %5831 = vmatmul.mubr.f32.gmra.mrb[0].mxu0 %v5643
      %v5832 = vpop.f32.mrb[0].mxu0
      %v5833 = vadd.f32 %v5719, %v5832
      %v5834 = vpop.f32.mrb[0].mxu0
      %5835 = vmatprep.mubr.f32.mxu0 0.0
      %5836 = vmatmul.mubr.f32.gmra.mrb[0].mxu0 %v5644
      %v5837 = vpop.f32.mrb[0].mxu0
      %v5838 = vadd.f32 %v5719, %v5837
      %v5839 = vpop.f32.mrb[0].mxu0
      %5840 = vmatprep.mubr.f32.mxu0 0.0
      %5841 = vmatmul.mubr.f32.gmra.mrb[0].mxu0 %v5645
      %v5842 = vpop.f32.mrb[0].mxu0
      %v5843 = vadd.f32 %v5719, %v5842
      %v5844 = vpop.f32.mrb[0].mxu0
      %5845 = vmatprep.mubr.f32.mxu0 0.0
      %5846 = vmatmul.mubr.f32.gmra.mrb[0].mxu0 %v5646
      %v5847 = vpop.f32.mrb[0].mxu0
      %v5848 = vadd.f32 %v5719, %v5847
      %v5849 = vpop.f32.mrb[0].mxu0
      %5850 = vmatprep.mubr.f32.mxu0 0.0
      %5851 = vmatmul.mubr.f32.gmra.mrb[0].mxu0 %v5647
      %v5852 = vpop.f32.mrb[0].mxu0
      %v5853 = vadd.f32 %v5719, %v5852
      %v5854 = vpop.f32.mrb[0].mxu0
      %5855 = vmatprep.mubr.f32.mxu0 0.0
      %5856 = vmatmul.mubr.f32.gmra.mrb[0].mxu0 %v5648
      %v5857 = vpop.f32.mrb[0].mxu0
      %v5858 = vadd.f32 %v5719, %v5857
      %v5859 = vpop.f32.mrb[0].mxu0
      %5860 = vmatprep.mubr.f32.mxu0 0.0
      %5861 = vmatmul.mubr.f32.gmra.mrb[0].mxu0 %v5649
      %v5862 = vpop.f32.mrb[0].mxu0
      %v5863 = vadd.f32 %v5719, %v5862
      %v5864 = vpop.f32.mrb[0].mxu0
      %5865 = vmatprep.mubr.f32.mxu0 0.0
      %5866 = vmatmul.mubr.f32.gmra.mrb[0].mxu0 %v5650
      %v5867 = vpop.f32.mrb[0].mxu0
      %v5868 = vadd.f32 %v5719, %v5867
      %v5869 = vpop.f32.mrb[0].mxu0
      %5870 = vmatprep.mubr.f32.mxu0 0.0
      %5871 = vmatmul.mubr.f32.gmra.mrb[0].mxu0 %v5651
      %v5872 = vpop.f32.mrb[0].mxu0
      %v5873 = vadd.f32 %v5719, %v5872
      %v5874 = vpop.f32.mrb[0].mxu0
      %5875 = vmatprep.mubr.f32.mxu0 0.0
      %5876 = vmatmul.mubr.f32.gmra.mrb[0].mxu0 %v5652
      %v5877 = vpop.f32.mrb[0].mxu0
      %v5878 = vadd.f32 %v5719, %v5877
      %v5879 = vpop.f32.mrb[0].mxu0
      %5880 = vmatprep.mubr.f32.mxu0 0.0
      %5881 = vmatmul.mubr.f32.gmra.mrb[0].mxu0 %v5653
      %v5882 = vpop.f32.mrb[0].mxu0
      %v5883 = vadd.f32 %v5719, %v5882
      %v5884 = vpop.f32.mrb[0].mxu0
      %5885 = vmatprep.mubr.f32.mxu0 0.0
      %5886 = vmatmul.mubr.f32.gmra.mrb[0].mxu0 %v5654
      %v5887 = vpop.f32.mrb[0].mxu0
      %v5888 = vadd.f32 %v5719, %v5887
      %v5889 = vpop.f32.mrb[0].mxu0
      %5890 = vmatprep.mubr.f32.mxu0 0.0
      %5891 = vmatmul.mubr.f32.gmra.mrb[0].mxu0 %v5655
      %v5892 = vpop.f32.mrb[0].mxu0
      %v5893 = vadd.f32 %v5719, %v5892
      %v5894 = vpop.f32.mrb[0].mxu0
      %5895 = vmatprep.mubr.f32.mxu0 0.0
      %5896 = vmatmul.mubr.f32.gmra.mrb[0].mxu0 %v5656
      %v5897 = vpop.f32.mrb[0].mxu0
      %v5898 = vadd.f32 %v5719, %v5897
      %v5899 = vpop.f32.mrb[0].mxu0
      %5900 = vmatprep.mubr.f32.mxu0 0.0
      %5901 = vmatmul.mubr.f32.gmra.mrb[0].mxu0 %v5657
      %v5902 = vpop.f32.mrb[0].mxu0
      %v5903 = vadd.f32 %v5719, %v5902
      %v5904 = vpop.f32.mrb[0].mxu0
      %5905 = vmatprep.mubr.f32.mxu0 0.0
      %5906 = vmatmul.mubr.f32.gmra.mrb[0].mxu0 %v5658
      %v5907 = vpop.f32.mrb[0].mxu0
      %v5908 = vadd.f32 %v5719, %v5907
      %v5909 = vpop.f32.mrb[0].mxu0
      %5910 = vmatprep.mubr.f32.mxu0 0.0
      %5911 = vmatmul.mubr.f32.gmra.mrb[0].mxu0 %v5659
      %v5912 = vpop.f32.mrb[0].mxu0
      %v5913 = vadd.f32 %v5719, %v5912
      %v5914 = vpop.f32.mrb[0].mxu0
      %5915 = vmatprep.mubr.f32.mxu0 0.0
      %5916 = vmatmul.mubr.f32.gmra.mrb[0].mxu0 %v5660
      %v5917 = vpop.f32.mrb[0].mxu0
      %v5918 = vadd.f32 %v5719, %v5917
      %v5919 = vpop.f32.mrb[0].mxu0
      %5920 = vmatprep.mubr.f32.mxu0 0.0
      %5921 = vmatmul.mubr.f32.gmra.mrb[0].mxu0 %v5661
      %v5922 = vpop.f32.mrb[0].mxu0
      %v5923 = vadd.f32 %v5719, %v5922
      %v5924 = vpop.f32.mrb[0].mxu0
      %5925 = vmatprep.mubr.f32.mxu0 0.0
      %5926 = vmatmul.mubr.f32.gmra.mrb[0].mxu0 %v5662
      %v5927 = vpop.f32.mrb[0].mxu0
      %v5928 = vadd.f32 %v5719, %v5927
      %v5929 = vpop.f32.mrb[0].mxu0
      %5930 = vmatprep.mubr.f32.mxu0 0.0
      %5931 = vmatmul.mubr.f32.gmra.mrb[0].mxu0 %v5663
      %v5932 = vpop.f32.mrb[0].mxu0
      %v5933 = vadd.f32 %v5719, %v5932
      %v5934 = vpop.f32.mrb[0].mxu0
      %5935 = vmatprep.mubr.f32.mxu0 0.0
      %5936 = vmatmul.mubr.f32.gmra.mrb[0].mxu0 %v5664
      %v5937 = vpop.f32.mrb[0].mxu0
      %v5938 = vadd.f32 %v5719, %v5937
      %v5939 = vpop.f32.mrb[0].mxu0
      %5940 = vmatprep.mubr.f32.mxu0 0.0
      %5941 = vmatmul.mubr.f32.gmra.mrb[0].mxu0 %v5665
      %v5942 = vpop.f32.mrb[0].mxu0
      %v5943 = vadd.f32 %v5719, %v5942
      %v5944 = vpop.f32.mrb[0].mxu0
      %5945 = vmatprep.mubr.f32.mxu0 0.0
      %5946 = vmatmul.mubr.f32.gmra.mrb[0].mxu0 %v5666
      %v5947 = vpop.f32.mrb[0].mxu0
      %v5948 = vadd.f32 %v5719, %v5947
      %v5949 = vpop.f32.mrb[0].mxu0
      %5950 = vmatprep.mubr.f32.mxu0 0.0
      %5951 = vmatmul.mubr.f32.gmra.mrb[0].mxu0 %v5667
      %v5952 = vpop.f32.mrb[0].mxu0
      %v5953 = vadd.f32 %v5719, %v5952
      %v5954 = vpop.f32.mrb[0].mxu0
      %5955 = vmatprep.mubr.f32.mxu0 0.0
      %5956 = vmatmul.mubr.f32.gmra.mrb[0].mxu0 %v5668
      %v5957 = vpop.f32.mrb[0].mxu0
      %v5958 = vadd.f32 %v5719, %v5957
      %v5959 = vpop.f32.mrb[0].mxu0
      %5960 = vmatprep.mubr.f32.mxu0 0.0
      %5961 = vmatmul.mubr.f32.gmra.mrb[0].mxu0 %v5669
      %v5962 = vpop.f32.mrb[0].mxu0
      %v5963 = vadd.f32 %v5719, %v5962
      %v5964 = vpop.f32.mrb[0].mxu0
      %5965 = vmatprep.mubr.f32.mxu0 0.0
      %5966 = vmatmul.mubr.f32.gmra.mrb[0].mxu0 %v5670
      %v5967 = vpop.f32.mrb[0].mxu0
      %v5968 = vadd.f32 %v5719, %v5967
      %v5969 = vpop.f32.mrb[0].mxu0
      %5970 = vmatprep.mubr.f32.mxu0 0.0
      %5971 = vmatmul.mubr.f32.gmra.mrb[0].mxu0 %v5671
      %v5972 = vpop.f32.mrb[0].mxu0
      %v5973 = vadd.f32 %v5719, %v5972
      %v5974 = vpop.f32.mrb[0].mxu0
      %5975 = vmatprep.mubr.f32.mxu0 0.0
      %5976 = vmatmul.mubr.f32.gmra.mrb[0].mxu0 %v5672
      %v5977 = vpop.f32.mrb[0].mxu0
      %v5978 = vadd.f32 %v5719, %v5977
      %v5979 = vpop.f32.mrb[0].mxu0
      %5980 = vmatprep.mubr.f32.mxu0 0.0
      %5981 = vmatmul.mubr.f32.gmra.mrb[0].mxu0 %v5673
      %v5982 = vpop.f32.mrb[0].mxu0
      %v5983 = vadd.f32 %v5719, %v5982
      %v5984 = vpop.f32.mrb[0].mxu0
      %5985 = vmatprep.mubr.f32.mxu0 0.0
      %5986 = vmatmul.mubr.f32.gmra.mrb[0].mxu0 %v5674
      %v5987 = vpop.f32.mrb[0].mxu0
      %v5988 = vadd.f32 %v5719, %v5987
      %v5989 = vpop.f32.mrb[0].mxu0
      %5990 = vmatprep.mubr.f32.mxu0 0.0
      %5991 = vmatmul.mubr.f32.gmra.mrb[0].mxu0 %v5675
      %v5992 = vpop.f32.mrb[0].mxu0
      %v5993 = vadd.f32 %v5719, %v5992
      %v5994 = vpop.f32.mrb[0].mxu0
      %5995 = vmatprep.mubr.f32.mxu0 0.0
      %5996 = vmatmul.mubr.f32.gmra.mrb[0].mxu0 %v5676
      %v5997 = vpop.f32.mrb[0].mxu0
      %v5998 = vadd.f32 %v5719, %v5997
      %v5999 = vpop.f32.mrb[0].mxu0
      %6000 = vmatprep.mubr.f32.mxu0 0.0
      %6001 = vmatmul.mubr.f32.gmra.mrb[0].mxu0 %v5677
      %v6002 = vpop.f32.mrb[0].mxu0
      %v6003 = vadd.f32 %v5719, %v6002
      %v6004 = vpop.f32.mrb[0].mxu0
      %6005 = vmatprep.mubr.f32.mxu0 0.0
      %6006 = vmatmul.mubr.f32.gmra.mrb[0].mxu0 %v5678
      %v6007 = vpop.f32.mrb[0].mxu0
      %v6008 = vadd.f32 %v5719, %v6007
      %v6009 = vpop.f32.mrb[0].mxu0
      %6010 = vmatprep.mubr.f32.mxu0 0.0
      %6011 = vmatmul.mubr.f32.gmra.mrb[0].mxu0 %v5679
      %v6012 = vpop.f32.mrb[0].mxu0
      %v6013 = vadd.f32 %v5719, %v6012
      %v6014 = vpop.f32.mrb[0].mxu0
      %6015 = vmatprep.mubr.f32.mxu0 0.0
      %6016 = vmatmul.mubr.f32.gmra.mrb[0].mxu0 %v5680
      %v6017 = vpop.f32.mrb[0].mxu0
      %v6018 = vadd.f32 %v5719, %v6017
      %v6019 = vpop.f32.mrb[0].mxu0
      %6020 = vmatprep.mubr.f32.mxu0 0.0
      %6021 = vmatmul.mubr.f32.gmra.mrb[0].mxu0 %v5681
      %v6022 = vpop.f32.mrb[0].mxu0
      %v6023 = vadd.f32 %v5719, %v6022
      %v6024 = vpop.f32.mrb[0].mxu0
      %6025 = vmatprep.mubr.f32.mxu0 0.0
      %6026 = vmatmul.mubr.f32.gmra.mrb[0].mxu0 %v5682
      %v6027 = vpop.f32.mrb[0].mxu0
      %v6028 = vadd.f32 %v5719, %v6027
      %v6029 = vpop.f32.mrb[0].mxu0
      %6030 = vmatprep.mubr.f32.mxu0 0.0
      %6031 = vmatmul.mubr.f32.gmra.mrb[0].mxu0 %v5683
      %v6032 = vpop.f32.mrb[0].mxu0
      %v6033 = vadd.f32 %v5719, %v6032
      %v6034 = vpop.f32.mrb[0].mxu0
      %6035 = vmatprep.mubr.f32.mxu0 0.0
      %6036 = vmatmul.mubr.f32.gmra.mrb[0].mxu0 %v5684
      %v6037 = vpop.f32.mrb[0].mxu0
      %v6038 = vadd.f32 %v5719, %v6037
      %v6039 = vpop.f32.mrb[0].mxu0
      %6040 = vmatprep.mubr.f32.mxu0 0.0
      %6041 = vmatmul.mubr.f32.gmra.mrb[0].mxu0 %v5685
      %v6042 = vpop.f32.mrb[0].mxu0
      %v6043 = vadd.f32 %v5719, %v6042
      %v6044 = vpop.f32.mrb[0].mxu0
      %6045 = vmatprep.mubr.f32.mxu0 0.0
      %6046 = vmatmul.mubr.f32.gmra.mrb[0].mxu0 %v5686
      %v6047 = vpop.f32.mrb[0].mxu0
      %v6048 = vadd.f32 %v5719, %v6047
      %v6049 = vpop.f32.mrb[0].mxu0
      %6050 = vmatprep.mubr.f32.mxu0 0.0
      %6051 = vmatmul.mubr.f32.gmra.mrb[0].mxu0 %v5687
      %v6052 = vpop.f32.mrb[0].mxu0
      %v6053 = vadd.f32 %v5719, %v6052
      %v6054 = vpop.f32.mrb[0].mxu0
      %6055 = vmatprep.mubr.f32.mxu0 0.0
      %6056 = vmatmul.mubr.f32.gmra.mrb[0].mxu0 %v5688
      %v6057 = vpop.f32.mrb[0].mxu0
      %v6058 = vadd.f32 %v5719, %v6057
      %v6059 = vpop.f32.mrb[0].mxu0
      %6060 = vmatprep.mubr.f32.mxu0 0.0
      %6061 = vmatmul.mubr.f32.gmra.mrb[0].mxu0 %v5689
      %v6062 = vpop.f32.mrb[0].mxu0
      %v6063 = vadd.f32 %v5719, %v6062
      %v6064 = vpop.f32.mrb[0].mxu0
      %6065 = vmatprep.mubr.f32.mxu0 0.0
      %6066 = vmatmul.mubr.f32.gmra.mrb[0].mxu0 %v5690
      %v6067 = vpop.f32.mrb[0].mxu0
      %v6068 = vadd.f32 %v5719, %v6067
      %v6069 = vpop.f32.mrb[0].mxu0
      %6070 = vmatprep.mubr.f32.mxu0 0.0
      %6071 = vmatmul.mubr.f32.gmra.mrb[0].mxu0 %v5691
      %v6072 = vpop.f32.mrb[0].mxu0
      %v6073 = vadd.f32 %v5719, %v6072
      %v6074 = vpop.f32.mrb[0].mxu0
      %6075 = vmatprep.mubr.f32.mxu0 0.0
      %6076 = vmatmul.mubr.f32.gmra.mrb[0].mxu0 %v5692
      %v6077 = vpop.f32.mrb[0].mxu0
      %v6078 = vadd.f32 %v5719, %v6077
      %v6079 = vpop.f32.mrb[0].mxu0
      %6080 = vmatprep.mubr.f32.mxu0 0.0
      %6081 = vmatmul.mubr.f32.gmra.mrb[0].mxu0 %v5693
      %v6082 = vpop.f32.mrb[0].mxu0
      %v6083 = vadd.f32 %v5719, %v6082
      %v6084 = vpop.f32.mrb[0].mxu0
      %6085 = vmatprep.mubr.f32.mxu0 0.0
      %6086 = vmatmul.mubr.f32.gmra.mrb[0].mxu0 %v5694
      %v6087 = vpop.f32.mrb[0].mxu0
      %v6088 = vadd.f32 %v5719, %v6087
      %v6089 = vpop.f32.mrb[0].mxu0
      %6090 = vmatprep.mubr.f32.mxu0 0.0
      %6091 = vmatmul.mubr.f32.gmra.mrb[0].mxu0 %v5695
      %v6092 = vpop.f32.mrb[0].mxu0
      %v6093 = vadd.f32 %v5719, %v6092
      %v6094 = vpop.f32.mrb[0].mxu0
      %6095 = vmatprep.mubr.f32.mxu0 0.0
      %6096 = vmatmul.mubr.f32.gmra.mrb[0].mxu0 %v5696
      %v6097 = vpop.f32.mrb[0].mxu0
      %v6098 = vadd.f32 %v5719, %v6097
      %v6099 = vpop.f32.mrb[0].mxu0
      %6100 = vmatprep.mubr.f32.mxu0 0.0
      %6101 = vmatmul.mubr.f32.gmra.mrb[0].mxu0 %v5697
      %v6102 = vpop.f32.mrb[0].mxu0
      %v6103 = vadd.f32 %v5719, %v6102
      %v6104 = vpop.f32.mrb[0].mxu0
      %6105 = vdwg.mxu0
      %vm6106 = vcmask 23552
      %6107 = vst.msk [vmem:[%s631] sm:$0xff] %vm6106, %v5788
      %6108 = vst.msk [vmem:[%s631 + $0x8] sm:$0xff] %vm6106, %v5793
      %6109 = vst.msk [vmem:[%s631 + $0x10] sm:$0xff] %vm6106, %v5798
      %6110 = vst.msk [vmem:[%s631 + $0x18] sm:$0xff] %vm6106, %v5803
      %6111 = vst.msk [vmem:[%s631 + $0x20] sm:$0xff] %vm6106, %v5808
      %6112 = vst.msk [vmem:[%s631 + $0x28] sm:$0xff] %vm6106, %v5813
      %6113 = vst.msk [vmem:[%s631 + $0x30] sm:$0xff] %vm6106, %v5818
      %6114 = vst.msk [vmem:[%s631 + $0x38] sm:$0xff] %vm6106, %v5823
      %6115 = vst.msk [vmem:[%s631 + $0x40] sm:$0xff] %vm6106, %v5828
      %6116 = vst.msk [vmem:[%s631 + $0x48] sm:$0xff] %vm6106, %v5833
      %6117 = vst.msk [vmem:[%s631 + $0x50] sm:$0xff] %vm6106, %v5838
      %6118 = vst.msk [vmem:[%s631 + $0x58] sm:$0xff] %vm6106, %v5843
      %6119 = vst.msk [vmem:[%s631 + $0x60] sm:$0xff] %vm6106, %v5848
      %6120 = vst.msk [vmem:[%s631 + $0x68] sm:$0xff] %vm6106, %v5853
      %6121 = vst.msk [vmem:[%s631 + $0x70] sm:$0xff] %vm6106, %v5858
      %6122 = vst.msk [vmem:[%s631 + $0x78] sm:$0xff] %vm6106, %v5863
      %6123 = vst.msk [vmem:[%s631 + $0x80] sm:$0xff] %vm6106, %v5868
      %6124 = vst.msk [vmem:[%s631 + $0x88] sm:$0xff] %vm6106, %v5873
      %6125 = vst.msk [vmem:[%s631 + $0x90] sm:$0xff] %vm6106, %v5878
      %6126 = vst.msk [vmem:[%s631 + $0x98] sm:$0xff] %vm6106, %v5883
      %6127 = vst.msk [vmem:[%s631 + $0xa0] sm:$0xff] %vm6106, %v5888
      %6128 = vst.msk [vmem:[%s631 + $0xa8] sm:$0xff] %vm6106, %v5893
      %6129 = vst.msk [vmem:[%s631 + $0xb0] sm:$0xff] %vm6106, %v5898
      %6130 = vst.msk [vmem:[%s631 + $0xb8] sm:$0xff] %vm6106, %v5903
      %6131 = vst.msk [vmem:[%s631 + $0xc0] sm:$0xff] %vm6106, %v5908
      %6132 = vst.msk [vmem:[%s631 + $0xc8] sm:$0xff] %vm6106, %v5913
      %6133 = vst.msk [vmem:[%s631 + $0xd0] sm:$0xff] %vm6106, %v5918
      %6134 = vst.msk [vmem:[%s631 + $0xd8] sm:$0xff] %vm6106, %v5923
      %6135 = vst.msk [vmem:[%s631 + $0xe0] sm:$0xff] %vm6106, %v5928
      %6136 = vst.msk [vmem:[%s631 + $0xe8] sm:$0xff] %vm6106, %v5933
      %6137 = vst.msk [vmem:[%s631 + $0xf0] sm:$0xff] %vm6106, %v5938
      %6138 = vst.msk [vmem:[%s631 + $0xf8] sm:$0xff] %vm6106, %v5943
      %6139 = vst.msk [vmem:[%s631 + $0x100] sm:$0xff] %vm6106, %v5948
      %6140 = vst.msk [vmem:[%s631 + $0x108] sm:$0xff] %vm6106, %v5953
      %6141 = vst.msk [vmem:[%s631 + $0x110] sm:$0xff] %vm6106, %v5958
      %6142 = vst.msk [vmem:[%s631 + $0x118] sm:$0xff] %vm6106, %v5963
      %6143 = vst.msk [vmem:[%s631 + $0x120] sm:$0xff] %vm6106, %v5968
      %6144 = vst.msk [vmem:[%s631 + $0x128] sm:$0xff] %vm6106, %v5973
      %6145 = vst.msk [vmem:[%s631 + $0x130] sm:$0xff] %vm6106, %v5978
      %6146 = vst.msk [vmem:[%s631 + $0x138] sm:$0xff] %vm6106, %v5983
      %6147 = vst.msk [vmem:[%s631 + $0x140] sm:$0xff] %vm6106, %v5988
      %6148 = vst.msk [vmem:[%s631 + $0x148] sm:$0xff] %vm6106, %v5993
      %6149 = vst.msk [vmem:[%s631 + $0x150] sm:$0xff] %vm6106, %v5998
      %6150 = vst.msk [vmem:[%s631 + $0x158] sm:$0xff] %vm6106, %v6003
      %6151 = vst.msk [vmem:[%s631 + $0x160] sm:$0xff] %vm6106, %v6008
      %6152 = vst.msk [vmem:[%s631 + $0x168] sm:$0xff] %vm6106, %v6013
      %6153 = vst.msk [vmem:[%s631 + $0x170] sm:$0xff] %vm6106, %v6018
      %6154 = vst.msk [vmem:[%s631 + $0x178] sm:$0xff] %vm6106, %v6023
      %6155 = vst.msk [vmem:[%s631 + $0x180] sm:$0xff] %vm6106, %v6028
      %6156 = vst.msk [vmem:[%s631 + $0x188] sm:$0xff] %vm6106, %v6033
      %6157 = vst.msk [vmem:[%s631 + $0x190] sm:$0xff] %vm6106, %v6038
      %6158 = vst.msk [vmem:[%s631 + $0x198] sm:$0xff] %vm6106, %v6043
      %6159 = vst.msk [vmem:[%s631 + $0x1a0] sm:$0xff] %vm6106, %v6048
      %6160 = vst.msk [vmem:[%s631 + $0x1a8] sm:$0xff] %vm6106, %v6053
      %6161 = vst.msk [vmem:[%s631 + $0x1b0] sm:$0xff] %vm6106, %v6058
      %6162 = vst.msk [vmem:[%s631 + $0x1b8] sm:$0xff] %vm6106, %v6063
      %6163 = vst.msk [vmem:[%s631 + $0x1c0] sm:$0xff] %vm6106, %v6068
      %6164 = vst.msk [vmem:[%s631 + $0x1c8] sm:$0xff] %vm6106, %v6073
      %6165 = vst.msk [vmem:[%s631 + $0x1d0] sm:$0xff] %vm6106, %v6078
      %6166 = vst.msk [vmem:[%s631 + $0x1d8] sm:$0xff] %vm6106, %v6083
      %6167 = vst.msk [vmem:[%s631 + $0x1e0] sm:$0xff] %vm6106, %v6088
      %6168 = vst.msk [vmem:[%s631 + $0x1e8] sm:$0xff] %vm6106, %v6093
      %6169 = vst.msk [vmem:[%s631 + $0x1f0] sm:$0xff] %vm6106, %v6098
      %6170 = vst.msk [vmem:[%s631 + $0x1f8] sm:$0xff] %vm6106, %v6103
      %s6171 = smul.u32 64, %s31
      %p6172 = scmp.lt.s32.totalorder %s6171, 255
      %s6173 = scalar_select %p6172, %s6171, 255
      %s6174 = smul.addr %s6173, 8
      %s6175 = scalar_lea.vmem %s20, %s6174
      // Predicated region
      $region101: #{tpu_custom_call.1} parent=99 // pred_check
        %p6176 = pneg %p474
      $region102: #{tpu_custom_call.1} parent=99 // pred_check_branch
        %6178 = sbr.rel (%p6176) target = $region104
      $region103: #{tpu_custom_call.1} parent=99 // pred_region
        %s6179 = smul.u32 64, %s31
      $region104: #{tpu_custom_call.1} parent=99 // pred_fallthru
        _
    $region100: #{tpu_custom_call.1} parent=5 // pred_fallthru
      _
    %p6180 = scmp.le.s32.totalorder 2, %s26
    // Predicated region
    $region105: #{tpu_custom_call.1} parent=5 // pred_check
      %p6181 = pneg %p6180
    $region106: #{tpu_custom_call.1} parent=5 // pred_check_branch
      %6183 = sbr.rel (%p6181) target = $region108
    $region107: #{tpu_custom_call.1} parent=5 // pred_region
      %s6184 = ssub.s32 %s26, 2
      // Predicated region
      $region109: #{tpu_custom_call.1} parent=107 // pred_check
        %p6185 = pneg %p480
      $region110: #{tpu_custom_call.1} parent=107 // pred_check_branch
        %6187 = sbr.rel (%p6185) target = $region112
      $region111: #{tpu_custom_call.1} parent=107 // pred_region
        %s6188 = smul.u32 64, %s32
        %p6189 = scmp.lt.s32.totalorder %s6188, 255
        %s6190 = scalar_select %p6189, %s6188, 255
        %s6191 = smul.addr %s6190, 8
        %s6192 = scalar_lea.vmem %s20, %s6191
      $region112: #{tpu_custom_call.1} parent=107 // pred_fallthru
        _
    $region108: #{tpu_custom_call.1} parent=5 // pred_fallthru
      _
  $region6: #{tpu_custom_call.1} parent=0 // loop_footer
    %s30 = sadd.s32 1, %s26
  $region7: #{tpu_custom_call.1} parent=0 // loop_footer_branch
    %25 = sbr.rel target = $region3
  $region8: #{tpu_custom_call.1} parent=0 // loop_exit
    _

</llo_original>
